<compile_context>
chip_gen: v7x
topology: tpu7x:2x2x1
jax: 0.10.0
libtpu: 0.0.40
codegen_flags: <defaults>
</compile_context>

<pallas_src>
import functools

import jax
import jax.numpy as jnp
from jax import lax
from jax.experimental import pallas as pl
from jax.experimental.pallas import tpu as pltpu

NUM_CLASSES = 6          # typical trash-classification label count
NUM_FEATURES = 2048      # resnet50 fc.in_features
HIDDEN = 1024
BN_EPS = 1e-5
OUT_PAD = 128            # lane-dense padded output width


def head_kernel(x_ref, w1_ref, b1_ref, w2_ref, b2_ref, out_ref):
    # x_ref: (TB, 2048) bf16 pooled features; w1_ref: (2048, 1024) bf16 (BN folded).
    h = jnp.dot(x_ref[...], w1_ref[...], preferred_element_type=jnp.float32)
    h = jnp.maximum(h + b1_ref[...], 0.0)        # folded-BN bias + ReLU (f32)
    # Dropout(0.3) is identity at inference time.
    out_ref[...] = (jnp.dot(h.astype(jnp.bfloat16), w2_ref[...],
                            preferred_element_type=jnp.float32)
                    + b2_ref[...])


def _round_up(x, m):
    return (x + m - 1) // m * m


def _pick_tb(b):
    # Multiples of 16 for bf16 sublane packing; 256 only when the batch is big
    # enough to fill the v6e/v7x 2x256^2 MXU and amortize the padding.
    for tb in (16, 32, 64, 128):
        if b <= tb:
            return tb
    return 256 if b >= 256 else 128


def prepare_params(raw):
    """One-time (model-load-time) weight prep, hoisted out of the forward path.

    Folds eval-mode BatchNorm1d into the first Linear, casts weights to bf16,
    and pads the classifier weights to a lane-dense 128-wide layout.
    """
    scale = raw["gamma"] * lax.rsqrt(raw["var"] + BN_EPS)                # (1, 1024)
    w1f = (raw["w1"] * scale).astype(jnp.bfloat16)                       # (2048,1024)
    b1f = ((raw["b1"] - raw["mean"]) * scale + raw["beta"]).astype(jnp.float32)
    w2p = jnp.zeros((HIDDEN, OUT_PAD), jnp.bfloat16).at[:, :NUM_CLASSES].set(
        raw["w2"].astype(jnp.bfloat16))
    b2p = jnp.zeros((1, OUT_PAD), jnp.float32).at[:, :NUM_CLASSES].set(raw["b2"])
    # TODO(synk): optional fp8 (v7x) / int8 (v5e,v6e) per-channel quantization of
    # w1 would halve the dominant weight DMA; kept bf16 for accuracy parity.
    return {"w1": w1f, "b1": b1f, "w2": w2p, "b2": b2p}


@jax.jit
def trash_classifier_head(feat_nchw, prepared):
    """feat_nchw: (B, 2048, H, W) layer4 feature map (NCHW, PyTorch convention).
    prepared: output of prepare_params()."""
    B, C, H, W = feat_nchw.shape
    assert C == NUM_FEATURES

    # ResNet50 AdaptiveAvgPool2d((1,1)) + flatten, done on NCHW directly
    # (no transpose, no extra HBM pass through the kernel).
    pooled = jnp.mean(feat_nchw.astype(jnp.float32), axis=(2, 3))        # (B, 2048)

    TB = _pick_tb(B)
    B_pad = _round_up(B, TB)
    n_tiles = B_pad // TB

    # Single fused pad+cast (no zeros buffer + .at[].set() round-trip).
    x = jnp.pad(pooled, ((0, B_pad - B), (0, 0))).astype(jnp.bfloat16)   # (B_pad,2048)

    w1f, b1f, w2p, b2p = (prepared["w1"], prepared["b1"],
                          prepared["w2"], prepared["b2"])

    cost = pl.CostEstimate(
        flops=2 * B_pad * NUM_FEATURES * HIDDEN + 2 * B_pad * HIDDEN * OUT_PAD,
        transcendentals=0,
        bytes_accessed=(x.size * 2 + w1f.size * 2 + w2p.size * 2
                        + b1f.size * 4 + b2p.size * 4 + B_pad * OUT_PAD * 4))

    # Constant-index (resident) blocks: single-buffered, DMA'd exactly once.
    resident = pl.Buffered(1)

    out = pl.pallas_call(
        head_kernel,
        out_shape=jax.ShapeDtypeStruct((B_pad, OUT_PAD), jnp.float32),
        grid=(n_tiles,),
        in_specs=[
            pl.BlockSpec((TB, NUM_FEATURES), lambda i: (i, 0)),          # x tile
            pl.BlockSpec((NUM_FEATURES, HIDDEN), lambda i: (0, 0),
                         pipeline_mode=resident),                        # w1 resident
            pl.BlockSpec((1, HIDDEN), lambda i: (0, 0),
                         pipeline_mode=resident),                        # b1 resident
            pl.BlockSpec((HIDDEN, OUT_PAD), lambda i: (0, 0),
                         pipeline_mode=resident),                        # w2 resident
            pl.BlockSpec((1, OUT_PAD), lambda i: (0, 0),
                         pipeline_mode=resident),                        # b2 resident
        ],
        out_specs=pl.BlockSpec((TB, OUT_PAD), lambda i: (i, 0)),
        compiler_params=pltpu.CompilerParams(
            # Megacore split only pays once there are enough batch tiles to
            # amortize duplicating the resident w1 DMA across cores.
            dimension_semantics=("parallel",) if n_tiles >= 4 else ("arbitrary",)),
        cost_estimate=cost,
    )(x, w1f, b1f, w2p, b2p)

    return out[:B, :NUM_CLASSES]


def init_params(key):
    k1, k2, k3, k4, k5, k6, k7, k8 = jax.random.split(key, 8)
    return {
        "w1":    jax.random.normal(k1, (NUM_FEATURES, HIDDEN), jnp.float32) * 0.02,
        "b1":    jax.random.normal(k2, (1, HIDDEN), jnp.float32) * 0.01,
        "gamma": 1.0 + 0.1 * jax.random.normal(k3, (1, HIDDEN), jnp.float32),
        "beta":  0.1 * jax.random.normal(k4, (1, HIDDEN), jnp.float32),
        "mean":  0.1 * jax.random.normal(k5, (1, HIDDEN), jnp.float32),
        "var":   jnp.abs(1.0 + 0.1 * jax.random.normal(k6, (1, HIDDEN), jnp.float32)),
        "w2":    jax.random.normal(k7, (HIDDEN, NUM_CLASSES), jnp.float32) * 0.02,
        "b2":    0.01 * jax.random.normal(k8, (1, NUM_CLASSES), jnp.float32),
    }


def reference(feat_nchw, p):
    """Pure-JAX reference mirroring the kernel's bf16-weight / f32-accumulate path."""
    pooled = jnp.mean(feat_nchw, axis=(2, 3))                            # (B, 2048)
    scale = p["gamma"] * lax.rsqrt(p["var"] + BN_EPS)
    w1f = (p["w1"] * scale).astype(jnp.bfloat16)
    b1f = (p["b1"] - p["mean"]) * scale + p["beta"]
    h = jnp.dot(pooled.astype(jnp.bfloat16), w1f,
                preferred_element_type=jnp.float32) + b1f
    h = jnp.maximum(h, 0.0)
    return (jnp.dot(h.astype(jnp.bfloat16), p["w2"].astype(jnp.bfloat16),
                    preferred_element_type=jnp.float32) + p["b2"])


if __name__ == "__main__":
    key = jax.random.PRNGKey(0)
    k_feat, k_param = jax.random.split(key)

    B, H, W = 2, 4, 4
    # Synthetic layer4 feature map standing in for the frozen pretrained backbone.
    feat = jax.random.normal(k_feat, (B, NUM_FEATURES, H, W), jnp.float32)
    params = init_params(k_param)

    # One-time (load-time) weight preparation, outside the per-call path.
    prepared = jax.tree_util.tree_map(jax.block_until_ready, prepare_params(params))

    out = trash_classifier_head(feat, prepared)
    out = jax.block_until_ready(out)

    ref = reference(feat, params)
    assert out.shape == (B, NUM_CLASSES)
    assert jnp.allclose(out, ref, atol=1e-3, rtol=1e-3), "mismatch vs reference"

    print("KERNEL_OK")
</pallas_src>

<mosaic_0001>
module attributes {stable_mosaic.version = 11 : i64} {
  func.func @head_kernel(%arg0: i32, %arg1: memref<16x2048xbf16, #tpu.memory_space<vmem>>, %arg2: memref<2048x1024xbf16, #tpu.memory_space<vmem>>, %arg3: memref<1x1024xf32, #tpu.memory_space<vmem>>, %arg4: memref<1024x128xbf16, #tpu.memory_space<vmem>>, %arg5: memref<1x128xf32, #tpu.memory_space<vmem>>, %arg6: memref<16x128xf32, #tpu.memory_space<vmem>>) attributes {dimension_semantics = [#tpu.dimension_semantics<arbitrary>], iteration_bounds = array<i64: 1>, scalar_prefetch = 0 : i64, scratch_operands = 0 : i64, tpu.core_type = #tpu.core_type<tc>, window_params = [{transform_indices = @transform_0, window_bounds = array<i64: 16, 2048>}, {pipeline_mode = #tpu.pipeline_mode<synchronous>, transform_indices = @transform_1, window_bounds = array<i64: 2048, 1024>}, {pipeline_mode = #tpu.pipeline_mode<synchronous>, transform_indices = @transform_2, window_bounds = array<i64: 1, 1024>}, {pipeline_mode = #tpu.pipeline_mode<synchronous>, transform_indices = @transform_3, window_bounds = array<i64: 1024, 128>}, {pipeline_mode = #tpu.pipeline_mode<synchronous>, transform_indices = @transform_4, window_bounds = array<i64: 1, 128>}, {transform_indices = @transform_5, window_bounds = array<i64: 16, 128>}]} {
    %c0 = arith.constant 0 : index
    %c0_0 = arith.constant 0 : index
    %0 = vector.load %arg1[%c0, %c0_0] : memref<16x2048xbf16, #tpu.memory_space<vmem>>, vector<16x2048xbf16>
    %c0_1 = arith.constant 0 : index
    %c0_2 = arith.constant 0 : index
    %1 = vector.load %arg2[%c0_1, %c0_2] : memref<2048x1024xbf16, #tpu.memory_space<vmem>>, vector<2048x1024xbf16>
    %cst = arith.constant dense<0.000000e+00> : vector<16x1024xf32>
    %2 = tpu.matmul %0, %1, %cst {dimension_numbers = #tpu.dot_dimension_numbers<[1], [0], [0], [1], [0, 0, 1, 1], [], []>} : vector<16x2048xbf16>, vector<2048x1024xbf16>, vector<16x1024xf32> -> vector<16x1024xf32>
    %c0_3 = arith.constant 0 : index
    %c0_4 = arith.constant 0 : index
    %3 = vector.load %arg3[%c0_3, %c0_4] : memref<1x1024xf32, #tpu.memory_space<vmem>>, vector<1x1024xf32>
    %4 = vector.broadcast %3 : vector<1x1024xf32> to vector<16x1024xf32>
    %5 = arith.addf %2, %4 : vector<16x1024xf32>
    %cst_5 = arith.constant 0.000000e+00 : f32
    %6 = vector.broadcast %cst_5 : f32 to vector<16x1024xf32>
    %7 = arith.maximumf %5, %6 : vector<16x1024xf32>
    %8 = arith.truncf %7 : vector<16x1024xf32> to vector<16x1024xbf16>
    %c0_6 = arith.constant 0 : index
    %c0_7 = arith.constant 0 : index
    %9 = vector.load %arg4[%c0_6, %c0_7] : memref<1024x128xbf16, #tpu.memory_space<vmem>>, vector<1024x128xbf16>
    %cst_8 = arith.constant dense<0.000000e+00> : vector<16x128xf32>
    %10 = tpu.matmul %8, %9, %cst_8 {dimension_numbers = #tpu.dot_dimension_numbers<[1], [0], [0], [1], [0, 0, 1, 1], [], []>} : vector<16x1024xbf16>, vector<1024x128xbf16>, vector<16x128xf32> -> vector<16x128xf32>
    %c0_9 = arith.constant 0 : index
    %c0_10 = arith.constant 0 : index
    %11 = vector.load %arg5[%c0_9, %c0_10] : memref<1x128xf32, #tpu.memory_space<vmem>>, vector<1x128xf32>
    %12 = vector.broadcast %11 : vector<1x128xf32> to vector<16x128xf32>
    %13 = arith.addf %10, %12 : vector<16x128xf32>
    %c0_11 = arith.constant 0 : index
    %c0_12 = arith.constant 0 : index
    %14 = vector.load %arg6[%c0_11, %c0_12] : memref<16x128xf32, #tpu.memory_space<vmem>>, vector<16x128xf32>
    tpu.vector_store %arg6[%c0_11, %c0_12], %13 {strides = array<i32>} : memref<16x128xf32, #tpu.memory_space<vmem>>, vector<16x128xf32>,
    return
  }
  func.func @transform_0(%arg0: i32) -> (i32, i32) {
    %c0_i32 = arith.constant 0 : i32
    %c0_i32_0 = arith.constant 0 : i32
    return %arg0, %c0_i32 : i32, i32
  }
  func.func @transform_1(%arg0: i32) -> (i32, i32) {
    %c0_i32 = arith.constant 0 : i32
    %c0_i32_0 = arith.constant 0 : i32
    %c0_i32_1 = arith.constant 0 : i32
    return %c0_i32, %c0_i32_0 : i32, i32
  }
  func.func @transform_2(%arg0: i32) -> (i32, i32) {
    %c0_i32 = arith.constant 0 : i32
    %c0_i32_0 = arith.constant 0 : i32
    %c0_i32_1 = arith.constant 0 : i32
    return %c0_i32, %c0_i32_0 : i32, i32
  }
  func.func @transform_3(%arg0: i32) -> (i32, i32) {
    %c0_i32 = arith.constant 0 : i32
    %c0_i32_0 = arith.constant 0 : i32
    %c0_i32_1 = arith.constant 0 : i32
    return %c0_i32, %c0_i32_0 : i32, i32
  }
  func.func @transform_4(%arg0: i32) -> (i32, i32) {
    %c0_i32 = arith.constant 0 : i32
    %c0_i32_0 = arith.constant 0 : i32
    %c0_i32_1 = arith.constant 0 : i32
    return %c0_i32, %c0_i32_0 : i32, i32
  }
  func.func @transform_5(%arg0: i32) -> (i32, i32) {
    %c0_i32 = arith.constant 0 : i32
    %c0_i32_0 = arith.constant 0 : i32
    return %arg0, %c0_i32 : i32, i32
  }
}

</mosaic_0001>

<llo_original>
// kernel: trash_classifier_head.1
$region0: #{trash_classifier_head.1}
  #allocation0 [shape = 'u32[]', space=smem, size = 0x4, offset = 0x4, fixed_abs, tag = 'smem constant byte address 0x4 - core index']
  #allocation1 [shape = 'u32[144,128]{1,0:T(1,128)}', space=vmem, size = 0x12000, scoped, tag = 'internal scratch']
  %s0 = inlined_call_operand.vmem [shape: bf16[16,2048], index: 0, kind: input, shape index: {}]
  %s1 = inlined_call_operand.hbm [shape: bf16[2048,1024], index: 1, kind: input, shape index: {}]
  %s2 = inlined_call_operand.hbm [shape: f32[1,1024], index: 2, kind: input, shape index: {}]
  %s3 = inlined_call_operand.hbm [shape: bf16[1024,128], index: 3, kind: input, shape index: {}]
  %s4 = inlined_call_operand.hbm [shape: f32[1,128], index: 4, kind: input, shape index: {}]
  %s5 = inlined_call_operand.vmem [shape: f32[16,128], index: 5, kind: output, shape index: {}]
  %s6 = sld [smem:[#allocation0]]
  $region46: #{trash_classifier_head.1} parent=0
    _
  %s8 = ssub.s32 1, %s6
  %s9 = scalar_select 0, %s8, %s6
  $region1: #{trash_classifier_head.1} parent=0
    #allocation2 [shape = 'u8[4194304]{0}', space=vmem, size = 0x400000, scoped, tag = 'input window, operand 1, single buffered']
    #allocation3 [shape = 's32[1]{0}', space=sflag, size = 0x4, scoped, tag = 'scoped memory for trash_classifier_head.1']
    #allocation4 [shape = 'u8[4096]{0}', space=vmem, size = 0x1000, scoped, tag = 'input window, operand 2, single buffered']
    #allocation5 [shape = 's32[1]{0}', space=sflag, size = 0x4, scoped, tag = 'scoped memory for trash_classifier_head.1']
    #allocation6 [shape = 'u8[262144]{0}', space=vmem, size = 0x40000, scoped, tag = 'input window, operand 3, single buffered']
    #allocation7 [shape = 'u8[512]{0}', space=vmem, size = 0x400, scoped, tag = 'input window, operand 4, single buffered']
    #allocation8 [shape = 's32[1]{0}', space=sflag, size = 0x4, scoped, tag = 'scoped memory for trash_classifier_head.1']
    %10 = vsyncpa [#allocation3], 0
    %11 = vsyncpa [#allocation5], 0
    %12 = vsyncpa [#allocation8], 0
    // Predicated region
    $region2: #{trash_classifier_head.1} parent=1 // pred_check
      _
    $region3: #{trash_classifier_head.1} parent=1 // pred_check_branch
      %14 = sbr.rel (0) target = $region5
    $region4: #{trash_classifier_head.1} parent=1 // pred_region
      _
    $region5: #{trash_classifier_head.1} parent=1 // pred_fallthru
      _
    // Predicated region
    $region6: #{trash_classifier_head.1} parent=1 // pred_check
      _
    $region7: #{trash_classifier_head.1} parent=1 // pred_check_branch
      %16 = sbr.rel (0) target = $region9
    $region8: #{trash_classifier_head.1} parent=1 // pred_region
      %s18 = ssub.s32 131072, 131072
      %19 = vsyncadd [#allocation3], %s18
      %s20 = sshll.u32 [#allocation2], 4
      %s21 = int_to_ptr.vmem [resolvable:$true] %s20
      %26 = dma.hbm_to_vmem [thread:$0]  %s1, 131072, %s21, [#allocation3], 512, 512, 32
    $region9: #{trash_classifier_head.1} parent=1 // pred_fallthru
      _
    // Predicated region
    $region10: #{trash_classifier_head.1} parent=1 // pred_check
      _
    $region11: #{trash_classifier_head.1} parent=1 // pred_check_branch
      %28 = sbr.rel (0) target = $region13
    $region12: #{trash_classifier_head.1} parent=1 // pred_region
      %s30 = ssub.s32 128, 128
      %31 = vsyncadd [#allocation5], %s30
      %s33 = sshll.u32 [#allocation4], 4
      %s34 = int_to_ptr.vmem [resolvable:$true] %s33
      %36 = dma.hbm_to_vmem [thread:$0]  %s2, 128, %s34, [#allocation5]
    $region13: #{trash_classifier_head.1} parent=1 // pred_fallthru
      _
    // Predicated region
    $region14: #{trash_classifier_head.1} parent=1 // pred_check
      _
    $region15: #{trash_classifier_head.1} parent=1 // pred_check_branch
      %38 = sbr.rel (0) target = $region17
    $region16: #{trash_classifier_head.1} parent=1 // pred_region
      %s40 = ssub.s32 8192, 8192
      %41 = vsyncadd [#allocation5], %s40
      %s42 = sshll.u32 [#allocation6], 4
      %s43 = int_to_ptr.vmem [resolvable:$true] %s42
      %48 = dma.hbm_to_vmem [thread:$0]  %s3, 8192, %s43, [#allocation5], 64, 64, 4
    $region17: #{trash_classifier_head.1} parent=1 // pred_fallthru
      _
    // Predicated region
    $region18: #{trash_classifier_head.1} parent=1 // pred_check
      _
    $region19: #{trash_classifier_head.1} parent=1 // pred_check_branch
      %50 = sbr.rel (0) target = $region21
    $region20: #{trash_classifier_head.1} parent=1 // pred_region
      %s52 = ssub.s32 16, 16
      %53 = vsyncadd [#allocation8], %s52
      %s55 = sshll.u32 [#allocation7], 4
      %s56 = int_to_ptr.vmem [resolvable:$true] %s55
      %58 = dma.hbm_to_vmem [thread:$0]  %s4, 16, %s56, [#allocation8]
    $region21: #{trash_classifier_head.1} parent=1 // pred_fallthru
      _
    // Predicated region
    $region22: #{trash_classifier_head.1} parent=1 // pred_check
      _
    $region23: #{trash_classifier_head.1} parent=1 // pred_check_branch
      %60 = sbr.rel (0) target = $region25
    $region24: #{trash_classifier_head.1} parent=1 // pred_region
      %61 = dma.done [#allocation3], 131072
    $region25: #{trash_classifier_head.1} parent=1 // pred_fallthru
      _
    // Predicated region
    $region26: #{trash_classifier_head.1} parent=1 // pred_check
      _
    $region27: #{trash_classifier_head.1} parent=1 // pred_check_branch
      %63 = sbr.rel (0) target = $region29
    $region28: #{trash_classifier_head.1} parent=1 // pred_region
      %64 = dma.done [#allocation5], 128
    $region29: #{trash_classifier_head.1} parent=1 // pred_fallthru
      _
    // Predicated region
    $region30: #{trash_classifier_head.1} parent=1 // pred_check
      _
    $region31: #{trash_classifier_head.1} parent=1 // pred_check_branch
      %66 = sbr.rel (0) target = $region33
    $region32: #{trash_classifier_head.1} parent=1 // pred_region
      %67 = dma.done [#allocation5], 8192
    $region33: #{trash_classifier_head.1} parent=1 // pred_fallthru
      _
    // Predicated region
    $region34: #{trash_classifier_head.1} parent=1 // pred_check
      _
    $region35: #{trash_classifier_head.1} parent=1 // pred_check_branch
      %69 = sbr.rel (0) target = $region37
    $region36: #{trash_classifier_head.1} parent=1 // pred_region
      %70 = dma.done [#allocation8], 16
    $region37: #{trash_classifier_head.1} parent=1 // pred_fallthru
      _
    %v72 = vld [vmem:[%s0] sm:$0xff]
    %v73 = vld [vmem:[%s0 + $0x8] sm:$0xff]
    %v74 = vld [vmem:[%s0 + $0x10] sm:$0xff]
    %v75 = vld [vmem:[%s0 + $0x18] sm:$0xff]
    %v76 = vld [vmem:[%s0 + $0x20] sm:$0xff]
    %v77 = vld [vmem:[%s0 + $0x28] sm:$0xff]
    %v78 = vld [vmem:[%s0 + $0x30] sm:$0xff]
    %v79 = vld [vmem:[%s0 + $0x38] sm:$0xff]
    %v80 = vld [vmem:[%s0 + $0x40] sm:$0xff]
    %v81 = vld [vmem:[%s0 + $0x48] sm:$0xff]
    %v82 = vld [vmem:[%s0 + $0x50] sm:$0xff]
    %v83 = vld [vmem:[%s0 + $0x58] sm:$0xff]
    %v84 = vld [vmem:[%s0 + $0x60] sm:$0xff]
    %v85 = vld [vmem:[%s0 + $0x68] sm:$0xff]
    %v86 = vld [vmem:[%s0 + $0x70] sm:$0xff]
    %v87 = vld [vmem:[%s0 + $0x78] sm:$0xff]
    %v88 = vld [vmem:[#allocation2] sm:$0xff]
    %v89 = vld [vmem:[#allocation2 + $0x8] sm:$0xff]
    %v90 = vld [vmem:[#allocation2 + $0x10] sm:$0xff]
    %v91 = vld [vmem:[#allocation2 + $0x18] sm:$0xff]
    %v92 = vld [vmem:[#allocation2 + $0x20] sm:$0xff]
    %v93 = vld [vmem:[#allocation2 + $0x28] sm:$0xff]
    %v94 = vld [vmem:[#allocation2 + $0x30] sm:$0xff]
    %v95 = vld [vmem:[#allocation2 + $0x38] sm:$0xff]
    %v96 = vld [vmem:[#allocation2 + $0x40] sm:$0xff]
    %v97 = vld [vmem:[#allocation2 + $0x48] sm:$0xff]
    %v98 = vld [vmem:[#allocation2 + $0x50] sm:$0xff]
    %v99 = vld [vmem:[#allocation2 + $0x58] sm:$0xff]
    %v100 = vld [vmem:[#allocation2 + $0x60] sm:$0xff]
    %v101 = vld [vmem:[#allocation2 + $0x68] sm:$0xff]
    %v102 = vld [vmem:[#allocation2 + $0x70] sm:$0xff]
    %v103 = vld [vmem:[#allocation2 + $0x78] sm:$0xff]
    %v104 = vld [vmem:[#allocation2 + $0x80] sm:$0xff]
    %v105 = vld [vmem:[#allocation2 + $0x88] sm:$0xff]
    %v106 = vld [vmem:[#allocation2 + $0x90] sm:$0xff]
    %v107 = vld [vmem:[#allocation2 + $0x98] sm:$0xff]
    %v108 = vld [vmem:[#allocation2 + $0xa0] sm:$0xff]
    %v109 = vld [vmem:[#allocation2 + $0xa8] sm:$0xff]
    %v110 = vld [vmem:[#allocation2 + $0xb0] sm:$0xff]
    %v111 = vld [vmem:[#allocation2 + $0xb8] sm:$0xff]
    %v112 = vld [vmem:[#allocation2 + $0xc0] sm:$0xff]
    %v113 = vld [vmem:[#allocation2 + $0xc8] sm:$0xff]
    %v114 = vld [vmem:[#allocation2 + $0xd0] sm:$0xff]
    %v115 = vld [vmem:[#allocation2 + $0xd8] sm:$0xff]
    %v116 = vld [vmem:[#allocation2 + $0xe0] sm:$0xff]
    %v117 = vld [vmem:[#allocation2 + $0xe8] sm:$0xff]
    %v118 = vld [vmem:[#allocation2 + $0xf0] sm:$0xff]
    %v119 = vld [vmem:[#allocation2 + $0xf8] sm:$0xff]
    %v120 = vld [vmem:[#allocation2 + $0x100] sm:$0xff]
    %v121 = vld [vmem:[#allocation2 + $0x108] sm:$0xff]
    %v122 = vld [vmem:[#allocation2 + $0x110] sm:$0xff]
    %v123 = vld [vmem:[#allocation2 + $0x118] sm:$0xff]
    %v124 = vld [vmem:[#allocation2 + $0x120] sm:$0xff]
    %v125 = vld [vmem:[#allocation2 + $0x128] sm:$0xff]
    %v126 = vld [vmem:[#allocation2 + $0x130] sm:$0xff]
    %v127 = vld [vmem:[#allocation2 + $0x138] sm:$0xff]
    %v128 = vld [vmem:[#allocation2 + $0x140] sm:$0xff]
    %v129 = vld [vmem:[#allocation2 + $0x148] sm:$0xff]
    %v130 = vld [vmem:[#allocation2 + $0x150] sm:$0xff]
    %v131 = vld [vmem:[#allocation2 + $0x158] sm:$0xff]
    %v132 = vld [vmem:[#allocation2 + $0x160] sm:$0xff]
    %v133 = vld [vmem:[#allocation2 + $0x168] sm:$0xff]
    %v134 = vld [vmem:[#allocation2 + $0x170] sm:$0xff]
    %v135 = vld [vmem:[#allocation2 + $0x178] sm:$0xff]
    %v136 = vld [vmem:[#allocation2 + $0x180] sm:$0xff]
    %v137 = vld [vmem:[#allocation2 + $0x188] sm:$0xff]
    %v138 = vld [vmem:[#allocation2 + $0x190] sm:$0xff]
    %v139 = vld [vmem:[#allocation2 + $0x198] sm:$0xff]
    %v140 = vld [vmem:[#allocation2 + $0x1a0] sm:$0xff]
    %v141 = vld [vmem:[#allocation2 + $0x1a8] sm:$0xff]
    %v142 = vld [vmem:[#allocation2 + $0x1b0] sm:$0xff]
    %v143 = vld [vmem:[#allocation2 + $0x1b8] sm:$0xff]
    %v144 = vld [vmem:[#allocation2 + $0x1c0] sm:$0xff]
    %v145 = vld [vmem:[#allocation2 + $0x1c8] sm:$0xff]
    %v146 = vld [vmem:[#allocation2 + $0x1d0] sm:$0xff]
    %v147 = vld [vmem:[#allocation2 + $0x1d8] sm:$0xff]
    %v148 = vld [vmem:[#allocation2 + $0x1e0] sm:$0xff]
    %v149 = vld [vmem:[#allocation2 + $0x1e8] sm:$0xff]
    %v150 = vld [vmem:[#allocation2 + $0x1f0] sm:$0xff]
    %v151 = vld [vmem:[#allocation2 + $0x1f8] sm:$0xff]
    %v152 = vld [vmem:[#allocation2 + $0x200] sm:$0xff]
    %v153 = vld [vmem:[#allocation2 + $0x208] sm:$0xff]
    %v154 = vld [vmem:[#allocation2 + $0x210] sm:$0xff]
    %v155 = vld [vmem:[#allocation2 + $0x218] sm:$0xff]
    %v156 = vld [vmem:[#allocation2 + $0x220] sm:$0xff]
    %v157 = vld [vmem:[#allocation2 + $0x228] sm:$0xff]
    %v158 = vld [vmem:[#allocation2 + $0x230] sm:$0xff]
    %v159 = vld [vmem:[#allocation2 + $0x238] sm:$0xff]
    %v160 = vld [vmem:[#allocation2 + $0x240] sm:$0xff]
    %v161 = vld [vmem:[#allocation2 + $0x248] sm:$0xff]
    %v162 = vld [vmem:[#allocation2 + $0x250] sm:$0xff]
    %v163 = vld [vmem:[#allocation2 + $0x258] sm:$0xff]
    %v164 = vld [vmem:[#allocation2 + $0x260] sm:$0xff]
    %v165 = vld [vmem:[#allocation2 + $0x268] sm:$0xff]
    %v166 = vld [vmem:[#allocation2 + $0x270] sm:$0xff]
    %v167 = vld [vmem:[#allocation2 + $0x278] sm:$0xff]
    %v168 = vld [vmem:[#allocation2 + $0x280] sm:$0xff]
    %v169 = vld [vmem:[#allocation2 + $0x288] sm:$0xff]
    %v170 = vld [vmem:[#allocation2 + $0x290] sm:$0xff]
    %v171 = vld [vmem:[#allocation2 + $0x298] sm:$0xff]
    %v172 = vld [vmem:[#allocation2 + $0x2a0] sm:$0xff]
    %v173 = vld [vmem:[#allocation2 + $0x2a8] sm:$0xff]
    %v174 = vld [vmem:[#allocation2 + $0x2b0] sm:$0xff]
    %v175 = vld [vmem:[#allocation2 + $0x2b8] sm:$0xff]
    %v176 = vld [vmem:[#allocation2 + $0x2c0] sm:$0xff]
    %v177 = vld [vmem:[#allocation2 + $0x2c8] sm:$0xff]
    %v178 = vld [vmem:[#allocation2 + $0x2d0] sm:$0xff]
    %v179 = vld [vmem:[#allocation2 + $0x2d8] sm:$0xff]
    %v180 = vld [vmem:[#allocation2 + $0x2e0] sm:$0xff]
    %v181 = vld [vmem:[#allocation2 + $0x2e8] sm:$0xff]
    %v182 = vld [vmem:[#allocation2 + $0x2f0] sm:$0xff]
    %v183 = vld [vmem:[#allocation2 + $0x2f8] sm:$0xff]
    %v184 = vld [vmem:[#allocation2 + $0x300] sm:$0xff]
    %v185 = vld [vmem:[#allocation2 + $0x308] sm:$0xff]
    %v186 = vld [vmem:[#allocation2 + $0x310] sm:$0xff]
    %v187 = vld [vmem:[#allocation2 + $0x318] sm:$0xff]
    %v188 = vld [vmem:[#allocation2 + $0x320] sm:$0xff]
    %v189 = vld [vmem:[#allocation2 + $0x328] sm:$0xff]
    %v190 = vld [vmem:[#allocation2 + $0x330] sm:$0xff]
    %v191 = vld [vmem:[#allocation2 + $0x338] sm:$0xff]
    %v192 = vld [vmem:[#allocation2 + $0x340] sm:$0xff]
    %v193 = vld [vmem:[#allocation2 + $0x348] sm:$0xff]
    %v194 = vld [vmem:[#allocation2 + $0x350] sm:$0xff]
    %v195 = vld [vmem:[#allocation2 + $0x358] sm:$0xff]
    %v196 = vld [vmem:[#allocation2 + $0x360] sm:$0xff]
    %v197 = vld [vmem:[#allocation2 + $0x368] sm:$0xff]
    %v198 = vld [vmem:[#allocation2 + $0x370] sm:$0xff]
    %v199 = vld [vmem:[#allocation2 + $0x378] sm:$0xff]
    %v200 = vld [vmem:[#allocation2 + $0x380] sm:$0xff]
    %v201 = vld [vmem:[#allocation2 + $0x388] sm:$0xff]
    %v202 = vld [vmem:[#allocation2 + $0x390] sm:$0xff]
    %v203 = vld [vmem:[#allocation2 + $0x398] sm:$0xff]
    %v204 = vld [vmem:[#allocation2 + $0x3a0] sm:$0xff]
    %v205 = vld [vmem:[#allocation2 + $0x3a8] sm:$0xff]
    %v206 = vld [vmem:[#allocation2 + $0x3b0] sm:$0xff]
    %v207 = vld [vmem:[#allocation2 + $0x3b8] sm:$0xff]
    %v208 = vld [vmem:[#allocation2 + $0x3c0] sm:$0xff]
    %v209 = vld [vmem:[#allocation2 + $0x3c8] sm:$0xff]
    %v210 = vld [vmem:[#allocation2 + $0x3d0] sm:$0xff]
    %v211 = vld [vmem:[#allocation2 + $0x3d8] sm:$0xff]
    %v212 = vld [vmem:[#allocation2 + $0x3e0] sm:$0xff]
    %v213 = vld [vmem:[#allocation2 + $0x3e8] sm:$0xff]
    %v214 = vld [vmem:[#allocation2 + $0x3f0] sm:$0xff]
    %v215 = vld [vmem:[#allocation2 + $0x3f8] sm:$0xff]
    %v216 = vld [vmem:[#allocation2 + $0x400] sm:$0xff]
    %v217 = vld [vmem:[#allocation2 + $0x408] sm:$0xff]
    %v218 = vld [vmem:[#allocation2 + $0x410] sm:$0xff]
    %v219 = vld [vmem:[#allocation2 + $0x418] sm:$0xff]
    %v220 = vld [vmem:[#allocation2 + $0x420] sm:$0xff]
    %v221 = vld [vmem:[#allocation2 + $0x428] sm:$0xff]
    %v222 = vld [vmem:[#allocation2 + $0x430] sm:$0xff]
    %v223 = vld [vmem:[#allocation2 + $0x438] sm:$0xff]
    %v224 = vld [vmem:[#allocation2 + $0x440] sm:$0xff]
    %v225 = vld [vmem:[#allocation2 + $0x448] sm:$0xff]
    %v226 = vld [vmem:[#allocation2 + $0x450] sm:$0xff]
    %v227 = vld [vmem:[#allocation2 + $0x458] sm:$0xff]
    %v228 = vld [vmem:[#allocation2 + $0x460] sm:$0xff]
    %v229 = vld [vmem:[#allocation2 + $0x468] sm:$0xff]
    %v230 = vld [vmem:[#allocation2 + $0x470] sm:$0xff]
    %v231 = vld [vmem:[#allocation2 + $0x478] sm:$0xff]
    %v232 = vld [vmem:[#allocation2 + $0x480] sm:$0xff]
    %v233 = vld [vmem:[#allocation2 + $0x488] sm:$0xff]
    %v234 = vld [vmem:[#allocation2 + $0x490] sm:$0xff]
    %v235 = vld [vmem:[#allocation2 + $0x498] sm:$0xff]
    %v236 = vld [vmem:[#allocation2 + $0x4a0] sm:$0xff]
    %v237 = vld [vmem:[#allocation2 + $0x4a8] sm:$0xff]
    %v238 = vld [vmem:[#allocation2 + $0x4b0] sm:$0xff]
    %v239 = vld [vmem:[#allocation2 + $0x4b8] sm:$0xff]
    %v240 = vld [vmem:[#allocation2 + $0x4c0] sm:$0xff]
    %v241 = vld [vmem:[#allocation2 + $0x4c8] sm:$0xff]
    %v242 = vld [vmem:[#allocation2 + $0x4d0] sm:$0xff]
    %v243 = vld [vmem:[#allocation2 + $0x4d8] sm:$0xff]
    %v244 = vld [vmem:[#allocation2 + $0x4e0] sm:$0xff]
    %v245 = vld [vmem:[#allocation2 + $0x4e8] sm:$0xff]
    %v246 = vld [vmem:[#allocation2 + $0x4f0] sm:$0xff]
    %v247 = vld [vmem:[#allocation2 + $0x4f8] sm:$0xff]
    %v248 = vld [vmem:[#allocation2 + $0x500] sm:$0xff]
    %v249 = vld [vmem:[#allocation2 + $0x508] sm:$0xff]
    %v250 = vld [vmem:[#allocation2 + $0x510] sm:$0xff]
    %v251 = vld [vmem:[#allocation2 + $0x518] sm:$0xff]
    %v252 = vld [vmem:[#allocation2 + $0x520] sm:$0xff]
    %v253 = vld [vmem:[#allocation2 + $0x528] sm:$0xff]
    %v254 = vld [vmem:[#allocation2 + $0x530] sm:$0xff]
    %v255 = vld [vmem:[#allocation2 + $0x538] sm:$0xff]
    %v256 = vld [vmem:[#allocation2 + $0x540] sm:$0xff]
    %v257 = vld [vmem:[#allocation2 + $0x548] sm:$0xff]
    %v258 = vld [vmem:[#allocation2 + $0x550] sm:$0xff]
    %v259 = vld [vmem:[#allocation2 + $0x558] sm:$0xff]
    %v260 = vld [vmem:[#allocation2 + $0x560] sm:$0xff]
    %v261 = vld [vmem:[#allocation2 + $0x568] sm:$0xff]
    %v262 = vld [vmem:[#allocation2 + $0x570] sm:$0xff]
    %v263 = vld [vmem:[#allocation2 + $0x578] sm:$0xff]
    %v264 = vld [vmem:[#allocation2 + $0x580] sm:$0xff]
    %v265 = vld [vmem:[#allocation2 + $0x588] sm:$0xff]
    %v266 = vld [vmem:[#allocation2 + $0x590] sm:$0xff]
    %v267 = vld [vmem:[#allocation2 + $0x598] sm:$0xff]
    %v268 = vld [vmem:[#allocation2 + $0x5a0] sm:$0xff]
    %v269 = vld [vmem:[#allocation2 + $0x5a8] sm:$0xff]
    %v270 = vld [vmem:[#allocation2 + $0x5b0] sm:$0xff]
    %v271 = vld [vmem:[#allocation2 + $0x5b8] sm:$0xff]
    %v272 = vld [vmem:[#allocation2 + $0x5c0] sm:$0xff]
    %v273 = vld [vmem:[#allocation2 + $0x5c8] sm:$0xff]
    %v274 = vld [vmem:[#allocation2 + $0x5d0] sm:$0xff]
    %v275 = vld [vmem:[#allocation2 + $0x5d8] sm:$0xff]
    %v276 = vld [vmem:[#allocation2 + $0x5e0] sm:$0xff]
    %v277 = vld [vmem:[#allocation2 + $0x5e8] sm:$0xff]
    %v278 = vld [vmem:[#allocation2 + $0x5f0] sm:$0xff]
    %v279 = vld [vmem:[#allocation2 + $0x5f8] sm:$0xff]
    %v280 = vld [vmem:[#allocation2 + $0x600] sm:$0xff]
    %v281 = vld [vmem:[#allocation2 + $0x608] sm:$0xff]
    %v282 = vld [vmem:[#allocation2 + $0x610] sm:$0xff]
    %v283 = vld [vmem:[#allocation2 + $0x618] sm:$0xff]
    %v284 = vld [vmem:[#allocation2 + $0x620] sm:$0xff]
    %v285 = vld [vmem:[#allocation2 + $0x628] sm:$0xff]
    %v286 = vld [vmem:[#allocation2 + $0x630] sm:$0xff]
    %v287 = vld [vmem:[#allocation2 + $0x638] sm:$0xff]
    %v288 = vld [vmem:[#allocation2 + $0x640] sm:$0xff]
    %v289 = vld [vmem:[#allocation2 + $0x648] sm:$0xff]
    %v290 = vld [vmem:[#allocation2 + $0x650] sm:$0xff]
    %v291 = vld [vmem:[#allocation2 + $0x658] sm:$0xff]
    %v292 = vld [vmem:[#allocation2 + $0x660] sm:$0xff]
    %v293 = vld [vmem:[#allocation2 + $0x668] sm:$0xff]
    %v294 = vld [vmem:[#allocation2 + $0x670] sm:$0xff]
    %v295 = vld [vmem:[#allocation2 + $0x678] sm:$0xff]
    %v296 = vld [vmem:[#allocation2 + $0x680] sm:$0xff]
    %v297 = vld [vmem:[#allocation2 + $0x688] sm:$0xff]
    %v298 = vld [vmem:[#allocation2 + $0x690] sm:$0xff]
    %v299 = vld [vmem:[#allocation2 + $0x698] sm:$0xff]
    %v300 = vld [vmem:[#allocation2 + $0x6a0] sm:$0xff]
    %v301 = vld [vmem:[#allocation2 + $0x6a8] sm:$0xff]
    %v302 = vld [vmem:[#allocation2 + $0x6b0] sm:$0xff]
    %v303 = vld [vmem:[#allocation2 + $0x6b8] sm:$0xff]
    %v304 = vld [vmem:[#allocation2 + $0x6c0] sm:$0xff]
    %v305 = vld [vmem:[#allocation2 + $0x6c8] sm:$0xff]
    %v306 = vld [vmem:[#allocation2 + $0x6d0] sm:$0xff]
    %v307 = vld [vmem:[#allocation2 + $0x6d8] sm:$0xff]
    %v308 = vld [vmem:[#allocation2 + $0x6e0] sm:$0xff]
    %v309 = vld [vmem:[#allocation2 + $0x6e8] sm:$0xff]
    %v310 = vld [vmem:[#allocation2 + $0x6f0] sm:$0xff]
    %v311 = vld [vmem:[#allocation2 + $0x6f8] sm:$0xff]
    %v312 = vld [vmem:[#allocation2 + $0x700] sm:$0xff]
    %v313 = vld [vmem:[#allocation2 + $0x708] sm:$0xff]
    %v314 = vld [vmem:[#allocation2 + $0x710] sm:$0xff]
    %v315 = vld [vmem:[#allocation2 + $0x718] sm:$0xff]
    %v316 = vld [vmem:[#allocation2 + $0x720] sm:$0xff]
    %v317 = vld [vmem:[#allocation2 + $0x728] sm:$0xff]
    %v318 = vld [vmem:[#allocation2 + $0x730] sm:$0xff]
    %v319 = vld [vmem:[#allocation2 + $0x738] sm:$0xff]
    %v320 = vld [vmem:[#allocation2 + $0x740] sm:$0xff]
    %v321 = vld [vmem:[#allocation2 + $0x748] sm:$0xff]
    %v322 = vld [vmem:[#allocation2 + $0x750] sm:$0xff]
    %v323 = vld [vmem:[#allocation2 + $0x758] sm:$0xff]
    %v324 = vld [vmem:[#allocation2 + $0x760] sm:$0xff]
    %v325 = vld [vmem:[#allocation2 + $0x768] sm:$0xff]
    %v326 = vld [vmem:[#allocation2 + $0x770] sm:$0xff]
    %v327 = vld [vmem:[#allocation2 + $0x778] sm:$0xff]
    %v328 = vld [vmem:[#allocation2 + $0x780] sm:$0xff]
    %v329 = vld [vmem:[#allocation2 + $0x788] sm:$0xff]
    %v330 = vld [vmem:[#allocation2 + $0x790] sm:$0xff]
    %v331 = vld [vmem:[#allocation2 + $0x798] sm:$0xff]
    %v332 = vld [vmem:[#allocation2 + $0x7a0] sm:$0xff]
    %v333 = vld [vmem:[#allocation2 + $0x7a8] sm:$0xff]
    %v334 = vld [vmem:[#allocation2 + $0x7b0] sm:$0xff]
    %v335 = vld [vmem:[#allocation2 + $0x7b8] sm:$0xff]
    %v336 = vld [vmem:[#allocation2 + $0x7c0] sm:$0xff]
    %v337 = vld [vmem:[#allocation2 + $0x7c8] sm:$0xff]
    %v338 = vld [vmem:[#allocation2 + $0x7d0] sm:$0xff]
    %v339 = vld [vmem:[#allocation2 + $0x7d8] sm:$0xff]
    %v340 = vld [vmem:[#allocation2 + $0x7e0] sm:$0xff]
    %v341 = vld [vmem:[#allocation2 + $0x7e8] sm:$0xff]
    %v342 = vld [vmem:[#allocation2 + $0x7f0] sm:$0xff]
    %v343 = vld [vmem:[#allocation2 + $0x7f8] sm:$0xff]
    %v344 = vld [vmem:[#allocation2 + $0x800] sm:$0xff]
    %v345 = vld [vmem:[#allocation2 + $0x808] sm:$0xff]
    %v346 = vld [vmem:[#allocation2 + $0x810] sm:$0xff]
    %v347 = vld [vmem:[#allocation2 + $0x818] sm:$0xff]
    %v348 = vld [vmem:[#allocation2 + $0x820] sm:$0xff]
    %v349 = vld [vmem:[#allocation2 + $0x828] sm:$0xff]
    %v350 = vld [vmem:[#allocation2 + $0x830] sm:$0xff]
    %v351 = vld [vmem:[#allocation2 + $0x838] sm:$0xff]
    %v352 = vld [vmem:[#allocation2 + $0x840] sm:$0xff]
    %v353 = vld [vmem:[#allocation2 + $0x848] sm:$0xff]
    %v354 = vld [vmem:[#allocation2 + $0x850] sm:$0xff]
    %v355 = vld [vmem:[#allocation2 + $0x858] sm:$0xff]
    %v356 = vld [vmem:[#allocation2 + $0x860] sm:$0xff]
    %v357 = vld [vmem:[#allocation2 + $0x868] sm:$0xff]
    %v358 = vld [vmem:[#allocation2 + $0x870] sm:$0xff]
    %v359 = vld [vmem:[#allocation2 + $0x878] sm:$0xff]
    %v360 = vld [vmem:[#allocation2 + $0x880] sm:$0xff]
    %v361 = vld [vmem:[#allocation2 + $0x888] sm:$0xff]
    %v362 = vld [vmem:[#allocation2 + $0x890] sm:$0xff]
    %v363 = vld [vmem:[#allocation2 + $0x898] sm:$0xff]
    %v364 = vld [vmem:[#allocation2 + $0x8a0] sm:$0xff]
    %v365 = vld [vmem:[#allocation2 + $0x8a8] sm:$0xff]
    %v366 = vld [vmem:[#allocation2 + $0x8b0] sm:$0xff]
    %v367 = vld [vmem:[#allocation2 + $0x8b8] sm:$0xff]
    %v368 = vld [vmem:[#allocation2 + $0x8c0] sm:$0xff]
    %v369 = vld [vmem:[#allocation2 + $0x8c8] sm:$0xff]
    %v370 = vld [vmem:[#allocation2 + $0x8d0] sm:$0xff]
    %v371 = vld [vmem:[#allocation2 + $0x8d8] sm:$0xff]
    %v372 = vld [vmem:[#allocation2 + $0x8e0] sm:$0xff]
    %v373 = vld [vmem:[#allocation2 + $0x8e8] sm:$0xff]
    %v374 = vld [vmem:[#allocation2 + $0x8f0] sm:$0xff]
    %v375 = vld [vmem:[#allocation2 + $0x8f8] sm:$0xff]
    %v376 = vld [vmem:[#allocation2 + $0x900] sm:$0xff]
    %v377 = vld [vmem:[#allocation2 + $0x908] sm:$0xff]
    %v378 = vld [vmem:[#allocation2 + $0x910] sm:$0xff]
    %v379 = vld [vmem:[#allocation2 + $0x918] sm:$0xff]
    %v380 = vld [vmem:[#allocation2 + $0x920] sm:$0xff]
    %v381 = vld [vmem:[#allocation2 + $0x928] sm:$0xff]
    %v382 = vld [vmem:[#allocation2 + $0x930] sm:$0xff]
    %v383 = vld [vmem:[#allocation2 + $0x938] sm:$0xff]
    %v384 = vld [vmem:[#allocation2 + $0x940] sm:$0xff]
    %v385 = vld [vmem:[#allocation2 + $0x948] sm:$0xff]
    %v386 = vld [vmem:[#allocation2 + $0x950] sm:$0xff]
    %v387 = vld [vmem:[#allocation2 + $0x958] sm:$0xff]
    %v388 = vld [vmem:[#allocation2 + $0x960] sm:$0xff]
    %v389 = vld [vmem:[#allocation2 + $0x968] sm:$0xff]
    %v390 = vld [vmem:[#allocation2 + $0x970] sm:$0xff]
    %v391 = vld [vmem:[#allocation2 + $0x978] sm:$0xff]
    %v392 = vld [vmem:[#allocation2 + $0x980] sm:$0xff]
    %v393 = vld [vmem:[#allocation2 + $0x988] sm:$0xff]
    %v394 = vld [vmem:[#allocation2 + $0x990] sm:$0xff]
    %v395 = vld [vmem:[#allocation2 + $0x998] sm:$0xff]
    %v396 = vld [vmem:[#allocation2 + $0x9a0] sm:$0xff]
    %v397 = vld [vmem:[#allocation2 + $0x9a8] sm:$0xff]
    %v398 = vld [vmem:[#allocation2 + $0x9b0] sm:$0xff]
    %v399 = vld [vmem:[#allocation2 + $0x9b8] sm:$0xff]
    %v400 = vld [vmem:[#allocation2 + $0x9c0] sm:$0xff]
    %v401 = vld [vmem:[#allocation2 + $0x9c8] sm:$0xff]
    %v402 = vld [vmem:[#allocation2 + $0x9d0] sm:$0xff]
    %v403 = vld [vmem:[#allocation2 + $0x9d8] sm:$0xff]
    %v404 = vld [vmem:[#allocation2 + $0x9e0] sm:$0xff]
    %v405 = vld [vmem:[#allocation2 + $0x9e8] sm:$0xff]
    %v406 = vld [vmem:[#allocation2 + $0x9f0] sm:$0xff]
    %v407 = vld [vmem:[#allocation2 + $0x9f8] sm:$0xff]
    %v408 = vld [vmem:[#allocation2 + $0xa00] sm:$0xff]
    %v409 = vld [vmem:[#allocation2 + $0xa08] sm:$0xff]
    %v410 = vld [vmem:[#allocation2 + $0xa10] sm:$0xff]
    %v411 = vld [vmem:[#allocation2 + $0xa18] sm:$0xff]
    %v412 = vld [vmem:[#allocation2 + $0xa20] sm:$0xff]
    %v413 = vld [vmem:[#allocation2 + $0xa28] sm:$0xff]
    %v414 = vld [vmem:[#allocation2 + $0xa30] sm:$0xff]
    %v415 = vld [vmem:[#allocation2 + $0xa38] sm:$0xff]
    %v416 = vld [vmem:[#allocation2 + $0xa40] sm:$0xff]
    %v417 = vld [vmem:[#allocation2 + $0xa48] sm:$0xff]
    %v418 = vld [vmem:[#allocation2 + $0xa50] sm:$0xff]
    %v419 = vld [vmem:[#allocation2 + $0xa58] sm:$0xff]
    %v420 = vld [vmem:[#allocation2 + $0xa60] sm:$0xff]
    %v421 = vld [vmem:[#allocation2 + $0xa68] sm:$0xff]
    %v422 = vld [vmem:[#allocation2 + $0xa70] sm:$0xff]
    %v423 = vld [vmem:[#allocation2 + $0xa78] sm:$0xff]
    %v424 = vld [vmem:[#allocation2 + $0xa80] sm:$0xff]
    %v425 = vld [vmem:[#allocation2 + $0xa88] sm:$0xff]
    %v426 = vld [vmem:[#allocation2 + $0xa90] sm:$0xff]
    %v427 = vld [vmem:[#allocation2 + $0xa98] sm:$0xff]
    %v428 = vld [vmem:[#allocation2 + $0xaa0] sm:$0xff]
    %v429 = vld [vmem:[#allocation2 + $0xaa8] sm:$0xff]
    %v430 = vld [vmem:[#allocation2 + $0xab0] sm:$0xff]
    %v431 = vld [vmem:[#allocation2 + $0xab8] sm:$0xff]
    %v432 = vld [vmem:[#allocation2 + $0xac0] sm:$0xff]
    %v433 = vld [vmem:[#allocation2 + $0xac8] sm:$0xff]
    %v434 = vld [vmem:[#allocation2 + $0xad0] sm:$0xff]
    %v435 = vld [vmem:[#allocation2 + $0xad8] sm:$0xff]
    %v436 = vld [vmem:[#allocation2 + $0xae0] sm:$0xff]
    %v437 = vld [vmem:[#allocation2 + $0xae8] sm:$0xff]
    %v438 = vld [vmem:[#allocation2 + $0xaf0] sm:$0xff]
    %v439 = vld [vmem:[#allocation2 + $0xaf8] sm:$0xff]
    %v440 = vld [vmem:[#allocation2 + $0xb00] sm:$0xff]
    %v441 = vld [vmem:[#allocation2 + $0xb08] sm:$0xff]
    %v442 = vld [vmem:[#allocation2 + $0xb10] sm:$0xff]
    %v443 = vld [vmem:[#allocation2 + $0xb18] sm:$0xff]
    %v444 = vld [vmem:[#allocation2 + $0xb20] sm:$0xff]
    %v445 = vld [vmem:[#allocation2 + $0xb28] sm:$0xff]
    %v446 = vld [vmem:[#allocation2 + $0xb30] sm:$0xff]
    %v447 = vld [vmem:[#allocation2 + $0xb38] sm:$0xff]
    %v448 = vld [vmem:[#allocation2 + $0xb40] sm:$0xff]
    %v449 = vld [vmem:[#allocation2 + $0xb48] sm:$0xff]
    %v450 = vld [vmem:[#allocation2 + $0xb50] sm:$0xff]
    %v451 = vld [vmem:[#allocation2 + $0xb58] sm:$0xff]
    %v452 = vld [vmem:[#allocation2 + $0xb60] sm:$0xff]
    %v453 = vld [vmem:[#allocation2 + $0xb68] sm:$0xff]
    %v454 = vld [vmem:[#allocation2 + $0xb70] sm:$0xff]
    %v455 = vld [vmem:[#allocation2 + $0xb78] sm:$0xff]
    %v456 = vld [vmem:[#allocation2 + $0xb80] sm:$0xff]
    %v457 = vld [vmem:[#allocation2 + $0xb88] sm:$0xff]
    %v458 = vld [vmem:[#allocation2 + $0xb90] sm:$0xff]
    %v459 = vld [vmem:[#allocation2 + $0xb98] sm:$0xff]
    %v460 = vld [vmem:[#allocation2 + $0xba0] sm:$0xff]
    %v461 = vld [vmem:[#allocation2 + $0xba8] sm:$0xff]
    %v462 = vld [vmem:[#allocation2 + $0xbb0] sm:$0xff]
    %v463 = vld [vmem:[#allocation2 + $0xbb8] sm:$0xff]
    %v464 = vld [vmem:[#allocation2 + $0xbc0] sm:$0xff]
    %v465 = vld [vmem:[#allocation2 + $0xbc8] sm:$0xff]
    %v466 = vld [vmem:[#allocation2 + $0xbd0] sm:$0xff]
    %v467 = vld [vmem:[#allocation2 + $0xbd8] sm:$0xff]
    %v468 = vld [vmem:[#allocation2 + $0xbe0] sm:$0xff]
    %v469 = vld [vmem:[#allocation2 + $0xbe8] sm:$0xff]
    %v470 = vld [vmem:[#allocation2 + $0xbf0] sm:$0xff]
    %v471 = vld [vmem:[#allocation2 + $0xbf8] sm:$0xff]
    %v472 = vld [vmem:[#allocation2 + $0xc00] sm:$0xff]
    %v473 = vld [vmem:[#allocation2 + $0xc08] sm:$0xff]
    %v474 = vld [vmem:[#allocation2 + $0xc10] sm:$0xff]
    %v475 = vld [vmem:[#allocation2 + $0xc18] sm:$0xff]
    %v476 = vld [vmem:[#allocation2 + $0xc20] sm:$0xff]
    %v477 = vld [vmem:[#allocation2 + $0xc28] sm:$0xff]
    %v478 = vld [vmem:[#allocation2 + $0xc30] sm:$0xff]
    %v479 = vld [vmem:[#allocation2 + $0xc38] sm:$0xff]
    %v480 = vld [vmem:[#allocation2 + $0xc40] sm:$0xff]
    %v481 = vld [vmem:[#allocation2 + $0xc48] sm:$0xff]
    %v482 = vld [vmem:[#allocation2 + $0xc50] sm:$0xff]
    %v483 = vld [vmem:[#allocation2 + $0xc58] sm:$0xff]
    %v484 = vld [vmem:[#allocation2 + $0xc60] sm:$0xff]
    %v485 = vld [vmem:[#allocation2 + $0xc68] sm:$0xff]
    %v486 = vld [vmem:[#allocation2 + $0xc70] sm:$0xff]
    %v487 = vld [vmem:[#allocation2 + $0xc78] sm:$0xff]
    %v488 = vld [vmem:[#allocation2 + $0xc80] sm:$0xff]
    %v489 = vld [vmem:[#allocation2 + $0xc88] sm:$0xff]
    %v490 = vld [vmem:[#allocation2 + $0xc90] sm:$0xff]
    %v491 = vld [vmem:[#allocation2 + $0xc98] sm:$0xff]
    %v492 = vld [vmem:[#allocation2 + $0xca0] sm:$0xff]
    %v493 = vld [vmem:[#allocation2 + $0xca8] sm:$0xff]
    %v494 = vld [vmem:[#allocation2 + $0xcb0] sm:$0xff]
    %v495 = vld [vmem:[#allocation2 + $0xcb8] sm:$0xff]
    %v496 = vld [vmem:[#allocation2 + $0xcc0] sm:$0xff]
    %v497 = vld [vmem:[#allocation2 + $0xcc8] sm:$0xff]
    %v498 = vld [vmem:[#allocation2 + $0xcd0] sm:$0xff]
    %v499 = vld [vmem:[#allocation2 + $0xcd8] sm:$0xff]
    %v500 = vld [vmem:[#allocation2 + $0xce0] sm:$0xff]
    %v501 = vld [vmem:[#allocation2 + $0xce8] sm:$0xff]
    %v502 = vld [vmem:[#allocation2 + $0xcf0] sm:$0xff]
    %v503 = vld [vmem:[#allocation2 + $0xcf8] sm:$0xff]
    %v504 = vld [vmem:[#allocation2 + $0xd00] sm:$0xff]
    %v505 = vld [vmem:[#allocation2 + $0xd08] sm:$0xff]
    %v506 = vld [vmem:[#allocation2 + $0xd10] sm:$0xff]
    %v507 = vld [vmem:[#allocation2 + $0xd18] sm:$0xff]
    %v508 = vld [vmem:[#allocation2 + $0xd20] sm:$0xff]
    %v509 = vld [vmem:[#allocation2 + $0xd28] sm:$0xff]
    %v510 = vld [vmem:[#allocation2 + $0xd30] sm:$0xff]
    %v511 = vld [vmem:[#allocation2 + $0xd38] sm:$0xff]
    %v512 = vld [vmem:[#allocation2 + $0xd40] sm:$0xff]
    %v513 = vld [vmem:[#allocation2 + $0xd48] sm:$0xff]
    %v514 = vld [vmem:[#allocation2 + $0xd50] sm:$0xff]
    %v515 = vld [vmem:[#allocation2 + $0xd58] sm:$0xff]
    %v516 = vld [vmem:[#allocation2 + $0xd60] sm:$0xff]
    %v517 = vld [vmem:[#allocation2 + $0xd68] sm:$0xff]
    %v518 = vld [vmem:[#allocation2 + $0xd70] sm:$0xff]
    %v519 = vld [vmem:[#allocation2 + $0xd78] sm:$0xff]
    %v520 = vld [vmem:[#allocation2 + $0xd80] sm:$0xff]
    %v521 = vld [vmem:[#allocation2 + $0xd88] sm:$0xff]
    %v522 = vld [vmem:[#allocation2 + $0xd90] sm:$0xff]
    %v523 = vld [vmem:[#allocation2 + $0xd98] sm:$0xff]
    %v524 = vld [vmem:[#allocation2 + $0xda0] sm:$0xff]
    %v525 = vld [vmem:[#allocation2 + $0xda8] sm:$0xff]
    %v526 = vld [vmem:[#allocation2 + $0xdb0] sm:$0xff]
    %v527 = vld [vmem:[#allocation2 + $0xdb8] sm:$0xff]
    %v528 = vld [vmem:[#allocation2 + $0xdc0] sm:$0xff]
    %v529 = vld [vmem:[#allocation2 + $0xdc8] sm:$0xff]
    %v530 = vld [vmem:[#allocation2 + $0xdd0] sm:$0xff]
    %v531 = vld [vmem:[#allocation2 + $0xdd8] sm:$0xff]
    %v532 = vld [vmem:[#allocation2 + $0xde0] sm:$0xff]
    %v533 = vld [vmem:[#allocation2 + $0xde8] sm:$0xff]
    %v534 = vld [vmem:[#allocation2 + $0xdf0] sm:$0xff]
    %v535 = vld [vmem:[#allocation2 + $0xdf8] sm:$0xff]
    %v536 = vld [vmem:[#allocation2 + $0xe00] sm:$0xff]
    %v537 = vld [vmem:[#allocation2 + $0xe08] sm:$0xff]
    %v538 = vld [vmem:[#allocation2 + $0xe10] sm:$0xff]
    %v539 = vld [vmem:[#allocation2 + $0xe18] sm:$0xff]
    %v540 = vld [vmem:[#allocation2 + $0xe20] sm:$0xff]
    %v541 = vld [vmem:[#allocation2 + $0xe28] sm:$0xff]
    %v542 = vld [vmem:[#allocation2 + $0xe30] sm:$0xff]
    %v543 = vld [vmem:[#allocation2 + $0xe38] sm:$0xff]
    %v544 = vld [vmem:[#allocation2 + $0xe40] sm:$0xff]
    %v545 = vld [vmem:[#allocation2 + $0xe48] sm:$0xff]
    %v546 = vld [vmem:[#allocation2 + $0xe50] sm:$0xff]
    %v547 = vld [vmem:[#allocation2 + $0xe58] sm:$0xff]
    %v548 = vld [vmem:[#allocation2 + $0xe60] sm:$0xff]
    %v549 = vld [vmem:[#allocation2 + $0xe68] sm:$0xff]
    %v550 = vld [vmem:[#allocation2 + $0xe70] sm:$0xff]
    %v551 = vld [vmem:[#allocation2 + $0xe78] sm:$0xff]
    %v552 = vld [vmem:[#allocation2 + $0xe80] sm:$0xff]
    %v553 = vld [vmem:[#allocation2 + $0xe88] sm:$0xff]
    %v554 = vld [vmem:[#allocation2 + $0xe90] sm:$0xff]
    %v555 = vld [vmem:[#allocation2 + $0xe98] sm:$0xff]
    %v556 = vld [vmem:[#allocation2 + $0xea0] sm:$0xff]
    %v557 = vld [vmem:[#allocation2 + $0xea8] sm:$0xff]
    %v558 = vld [vmem:[#allocation2 + $0xeb0] sm:$0xff]
    %v559 = vld [vmem:[#allocation2 + $0xeb8] sm:$0xff]
    %v560 = vld [vmem:[#allocation2 + $0xec0] sm:$0xff]
    %v561 = vld [vmem:[#allocation2 + $0xec8] sm:$0xff]
    %v562 = vld [vmem:[#allocation2 + $0xed0] sm:$0xff]
    %v563 = vld [vmem:[#allocation2 + $0xed8] sm:$0xff]
    %v564 = vld [vmem:[#allocation2 + $0xee0] sm:$0xff]
    %v565 = vld [vmem:[#allocation2 + $0xee8] sm:$0xff]
    %v566 = vld [vmem:[#allocation2 + $0xef0] sm:$0xff]
    %v567 = vld [vmem:[#allocation2 + $0xef8] sm:$0xff]
    %v568 = vld [vmem:[#allocation2 + $0xf00] sm:$0xff]
    %v569 = vld [vmem:[#allocation2 + $0xf08] sm:$0xff]
    %v570 = vld [vmem:[#allocation2 + $0xf10] sm:$0xff]
    %v571 = vld [vmem:[#allocation2 + $0xf18] sm:$0xff]
    %v572 = vld [vmem:[#allocation2 + $0xf20] sm:$0xff]
    %v573 = vld [vmem:[#allocation2 + $0xf28] sm:$0xff]
    %v574 = vld [vmem:[#allocation2 + $0xf30] sm:$0xff]
    %v575 = vld [vmem:[#allocation2 + $0xf38] sm:$0xff]
    %v576 = vld [vmem:[#allocation2 + $0xf40] sm:$0xff]
    %v577 = vld [vmem:[#allocation2 + $0xf48] sm:$0xff]
    %v578 = vld [vmem:[#allocation2 + $0xf50] sm:$0xff]
    %v579 = vld [vmem:[#allocation2 + $0xf58] sm:$0xff]
    %v580 = vld [vmem:[#allocation2 + $0xf60] sm:$0xff]
    %v581 = vld [vmem:[#allocation2 + $0xf68] sm:$0xff]
    %v582 = vld [vmem:[#allocation2 + $0xf70] sm:$0xff]
    %v583 = vld [vmem:[#allocation2 + $0xf78] sm:$0xff]
    %v584 = vld [vmem:[#allocation2 + $0xf80] sm:$0xff]
    %v585 = vld [vmem:[#allocation2 + $0xf88] sm:$0xff]
    %v586 = vld [vmem:[#allocation2 + $0xf90] sm:$0xff]
    %v587 = vld [vmem:[#allocation2 + $0xf98] sm:$0xff]
    %v588 = vld [vmem:[#allocation2 + $0xfa0] sm:$0xff]
    %v589 = vld [vmem:[#allocation2 + $0xfa8] sm:$0xff]
    %v590 = vld [vmem:[#allocation2 + $0xfb0] sm:$0xff]
    %v591 = vld [vmem:[#allocation2 + $0xfb8] sm:$0xff]
    %v592 = vld [vmem:[#allocation2 + $0xfc0] sm:$0xff]
    %v593 = vld [vmem:[#allocation2 + $0xfc8] sm:$0xff]
    %v594 = vld [vmem:[#allocation2 + $0xfd0] sm:$0xff]
    %v595 = vld [vmem:[#allocation2 + $0xfd8] sm:$0xff]
    %v596 = vld [vmem:[#allocation2 + $0xfe0] sm:$0xff]
    %v597 = vld [vmem:[#allocation2 + $0xfe8] sm:$0xff]
    %v598 = vld [vmem:[#allocation2 + $0xff0] sm:$0xff]
    %v599 = vld [vmem:[#allocation2 + $0xff8] sm:$0xff]
    %v600 = vld [vmem:[#allocation2 + $0x1000] sm:$0xff]
    %v601 = vld [vmem:[#allocation2 + $0x1008] sm:$0xff]
    %v602 = vld [vmem:[#allocation2 + $0x1010] sm:$0xff]
    %v603 = vld [vmem:[#allocation2 + $0x1018] sm:$0xff]
    %v604 = vld [vmem:[#allocation2 + $0x1020] sm:$0xff]
    %v605 = vld [vmem:[#allocation2 + $0x1028] sm:$0xff]
    %v606 = vld [vmem:[#allocation2 + $0x1030] sm:$0xff]
    %v607 = vld [vmem:[#allocation2 + $0x1038] sm:$0xff]
    %v608 = vld [vmem:[#allocation2 + $0x1040] sm:$0xff]
    %v609 = vld [vmem:[#allocation2 + $0x1048] sm:$0xff]
    %v610 = vld [vmem:[#allocation2 + $0x1050] sm:$0xff]
    %v611 = vld [vmem:[#allocation2 + $0x1058] sm:$0xff]
    %v612 = vld [vmem:[#allocation2 + $0x1060] sm:$0xff]
    %v613 = vld [vmem:[#allocation2 + $0x1068] sm:$0xff]
    %v614 = vld [vmem:[#allocation2 + $0x1070] sm:$0xff]
    %v615 = vld [vmem:[#allocation2 + $0x1078] sm:$0xff]
    %v616 = vld [vmem:[#allocation2 + $0x1080] sm:$0xff]
    %v617 = vld [vmem:[#allocation2 + $0x1088] sm:$0xff]
    %v618 = vld [vmem:[#allocation2 + $0x1090] sm:$0xff]
    %v619 = vld [vmem:[#allocation2 + $0x1098] sm:$0xff]
    %v620 = vld [vmem:[#allocation2 + $0x10a0] sm:$0xff]
    %v621 = vld [vmem:[#allocation2 + $0x10a8] sm:$0xff]
    %v622 = vld [vmem:[#allocation2 + $0x10b0] sm:$0xff]
    %v623 = vld [vmem:[#allocation2 + $0x10b8] sm:$0xff]
    %v624 = vld [vmem:[#allocation2 + $0x10c0] sm:$0xff]
    %v625 = vld [vmem:[#allocation2 + $0x10c8] sm:$0xff]
    %v626 = vld [vmem:[#allocation2 + $0x10d0] sm:$0xff]
    %v627 = vld [vmem:[#allocation2 + $0x10d8] sm:$0xff]
    %v628 = vld [vmem:[#allocation2 + $0x10e0] sm:$0xff]
    %v629 = vld [vmem:[#allocation2 + $0x10e8] sm:$0xff]
    %v630 = vld [vmem:[#allocation2 + $0x10f0] sm:$0xff]
    %v631 = vld [vmem:[#allocation2 + $0x10f8] sm:$0xff]
    %v632 = vld [vmem:[#allocation2 + $0x1100] sm:$0xff]
    %v633 = vld [vmem:[#allocation2 + $0x1108] sm:$0xff]
    %v634 = vld [vmem:[#allocation2 + $0x1110] sm:$0xff]
    %v635 = vld [vmem:[#allocation2 + $0x1118] sm:$0xff]
    %v636 = vld [vmem:[#allocation2 + $0x1120] sm:$0xff]
    %v637 = vld [vmem:[#allocation2 + $0x1128] sm:$0xff]
    %v638 = vld [vmem:[#allocation2 + $0x1130] sm:$0xff]
    %v639 = vld [vmem:[#allocation2 + $0x1138] sm:$0xff]
    %v640 = vld [vmem:[#allocation2 + $0x1140] sm:$0xff]
    %v641 = vld [vmem:[#allocation2 + $0x1148] sm:$0xff]
    %v642 = vld [vmem:[#allocation2 + $0x1150] sm:$0xff]
    %v643 = vld [vmem:[#allocation2 + $0x1158] sm:$0xff]
    %v644 = vld [vmem:[#allocation2 + $0x1160] sm:$0xff]
    %v645 = vld [vmem:[#allocation2 + $0x1168] sm:$0xff]
    %v646 = vld [vmem:[#allocation2 + $0x1170] sm:$0xff]
    %v647 = vld [vmem:[#allocation2 + $0x1178] sm:$0xff]
    %v648 = vld [vmem:[#allocation2 + $0x1180] sm:$0xff]
    %v649 = vld [vmem:[#allocation2 + $0x1188] sm:$0xff]
    %v650 = vld [vmem:[#allocation2 + $0x1190] sm:$0xff]
    %v651 = vld [vmem:[#allocation2 + $0x1198] sm:$0xff]
    %v652 = vld [vmem:[#allocation2 + $0x11a0] sm:$0xff]
    %v653 = vld [vmem:[#allocation2 + $0x11a8] sm:$0xff]
    %v654 = vld [vmem:[#allocation2 + $0x11b0] sm:$0xff]
    %v655 = vld [vmem:[#allocation2 + $0x11b8] sm:$0xff]
    %v656 = vld [vmem:[#allocation2 + $0x11c0] sm:$0xff]
    %v657 = vld [vmem:[#allocation2 + $0x11c8] sm:$0xff]
    %v658 = vld [vmem:[#allocation2 + $0x11d0] sm:$0xff]
    %v659 = vld [vmem:[#allocation2 + $0x11d8] sm:$0xff]
    %v660 = vld [vmem:[#allocation2 + $0x11e0] sm:$0xff]
    %v661 = vld [vmem:[#allocation2 + $0x11e8] sm:$0xff]
    %v662 = vld [vmem:[#allocation2 + $0x11f0] sm:$0xff]
    %v663 = vld [vmem:[#allocation2 + $0x11f8] sm:$0xff]
    %v664 = vld [vmem:[#allocation2 + $0x1200] sm:$0xff]
    %v665 = vld [vmem:[#allocation2 + $0x1208] sm:$0xff]
    %v666 = vld [vmem:[#allocation2 + $0x1210] sm:$0xff]
    %v667 = vld [vmem:[#allocation2 + $0x1218] sm:$0xff]
    %v668 = vld [vmem:[#allocation2 + $0x1220] sm:$0xff]
    %v669 = vld [vmem:[#allocation2 + $0x1228] sm:$0xff]
    %v670 = vld [vmem:[#allocation2 + $0x1230] sm:$0xff]
    %v671 = vld [vmem:[#allocation2 + $0x1238] sm:$0xff]
    %v672 = vld [vmem:[#allocation2 + $0x1240] sm:$0xff]
    %v673 = vld [vmem:[#allocation2 + $0x1248] sm:$0xff]
    %v674 = vld [vmem:[#allocation2 + $0x1250] sm:$0xff]
    %v675 = vld [vmem:[#allocation2 + $0x1258] sm:$0xff]
    %v676 = vld [vmem:[#allocation2 + $0x1260] sm:$0xff]
    %v677 = vld [vmem:[#allocation2 + $0x1268] sm:$0xff]
    %v678 = vld [vmem:[#allocation2 + $0x1270] sm:$0xff]
    %v679 = vld [vmem:[#allocation2 + $0x1278] sm:$0xff]
    %v680 = vld [vmem:[#allocation2 + $0x1280] sm:$0xff]
    %v681 = vld [vmem:[#allocation2 + $0x1288] sm:$0xff]
    %v682 = vld [vmem:[#allocation2 + $0x1290] sm:$0xff]
    %v683 = vld [vmem:[#allocation2 + $0x1298] sm:$0xff]
    %v684 = vld [vmem:[#allocation2 + $0x12a0] sm:$0xff]
    %v685 = vld [vmem:[#allocation2 + $0x12a8] sm:$0xff]
    %v686 = vld [vmem:[#allocation2 + $0x12b0] sm:$0xff]
    %v687 = vld [vmem:[#allocation2 + $0x12b8] sm:$0xff]
    %v688 = vld [vmem:[#allocation2 + $0x12c0] sm:$0xff]
    %v689 = vld [vmem:[#allocation2 + $0x12c8] sm:$0xff]
    %v690 = vld [vmem:[#allocation2 + $0x12d0] sm:$0xff]
    %v691 = vld [vmem:[#allocation2 + $0x12d8] sm:$0xff]
    %v692 = vld [vmem:[#allocation2 + $0x12e0] sm:$0xff]
    %v693 = vld [vmem:[#allocation2 + $0x12e8] sm:$0xff]
    %v694 = vld [vmem:[#allocation2 + $0x12f0] sm:$0xff]
    %v695 = vld [vmem:[#allocation2 + $0x12f8] sm:$0xff]
    %v696 = vld [vmem:[#allocation2 + $0x1300] sm:$0xff]
    %v697 = vld [vmem:[#allocation2 + $0x1308] sm:$0xff]
    %v698 = vld [vmem:[#allocation2 + $0x1310] sm:$0xff]
    %v699 = vld [vmem:[#allocation2 + $0x1318] sm:$0xff]
    %v700 = vld [vmem:[#allocation2 + $0x1320] sm:$0xff]
    %v701 = vld [vmem:[#allocation2 + $0x1328] sm:$0xff]
    %v702 = vld [vmem:[#allocation2 + $0x1330] sm:$0xff]
    %v703 = vld [vmem:[#allocation2 + $0x1338] sm:$0xff]
    %v704 = vld [vmem:[#allocation2 + $0x1340] sm:$0xff]
    %v705 = vld [vmem:[#allocation2 + $0x1348] sm:$0xff]
    %v706 = vld [vmem:[#allocation2 + $0x1350] sm:$0xff]
    %v707 = vld [vmem:[#allocation2 + $0x1358] sm:$0xff]
    %v708 = vld [vmem:[#allocation2 + $0x1360] sm:$0xff]
    %v709 = vld [vmem:[#allocation2 + $0x1368] sm:$0xff]
    %v710 = vld [vmem:[#allocation2 + $0x1370] sm:$0xff]
    %v711 = vld [vmem:[#allocation2 + $0x1378] sm:$0xff]
    %v712 = vld [vmem:[#allocation2 + $0x1380] sm:$0xff]
    %v713 = vld [vmem:[#allocation2 + $0x1388] sm:$0xff]
    %v714 = vld [vmem:[#allocation2 + $0x1390] sm:$0xff]
    %v715 = vld [vmem:[#allocation2 + $0x1398] sm:$0xff]
    %v716 = vld [vmem:[#allocation2 + $0x13a0] sm:$0xff]
    %v717 = vld [vmem:[#allocation2 + $0x13a8] sm:$0xff]
    %v718 = vld [vmem:[#allocation2 + $0x13b0] sm:$0xff]
    %v719 = vld [vmem:[#allocation2 + $0x13b8] sm:$0xff]
    %v720 = vld [vmem:[#allocation2 + $0x13c0] sm:$0xff]
    %v721 = vld [vmem:[#allocation2 + $0x13c8] sm:$0xff]
    %v722 = vld [vmem:[#allocation2 + $0x13d0] sm:$0xff]
    %v723 = vld [vmem:[#allocation2 + $0x13d8] sm:$0xff]
    %v724 = vld [vmem:[#allocation2 + $0x13e0] sm:$0xff]
    %v725 = vld [vmem:[#allocation2 + $0x13e8] sm:$0xff]
    %v726 = vld [vmem:[#allocation2 + $0x13f0] sm:$0xff]
    %v727 = vld [vmem:[#allocation2 + $0x13f8] sm:$0xff]
    %v728 = vld [vmem:[#allocation2 + $0x1400] sm:$0xff]
    %v729 = vld [vmem:[#allocation2 + $0x1408] sm:$0xff]
    %v730 = vld [vmem:[#allocation2 + $0x1410] sm:$0xff]
    %v731 = vld [vmem:[#allocation2 + $0x1418] sm:$0xff]
    %v732 = vld [vmem:[#allocation2 + $0x1420] sm:$0xff]
    %v733 = vld [vmem:[#allocation2 + $0x1428] sm:$0xff]
    %v734 = vld [vmem:[#allocation2 + $0x1430] sm:$0xff]
    %v735 = vld [vmem:[#allocation2 + $0x1438] sm:$0xff]
    %v736 = vld [vmem:[#allocation2 + $0x1440] sm:$0xff]
    %v737 = vld [vmem:[#allocation2 + $0x1448] sm:$0xff]
    %v738 = vld [vmem:[#allocation2 + $0x1450] sm:$0xff]
    %v739 = vld [vmem:[#allocation2 + $0x1458] sm:$0xff]
    %v740 = vld [vmem:[#allocation2 + $0x1460] sm:$0xff]
    %v741 = vld [vmem:[#allocation2 + $0x1468] sm:$0xff]
    %v742 = vld [vmem:[#allocation2 + $0x1470] sm:$0xff]
    %v743 = vld [vmem:[#allocation2 + $0x1478] sm:$0xff]
    %v744 = vld [vmem:[#allocation2 + $0x1480] sm:$0xff]
    %v745 = vld [vmem:[#allocation2 + $0x1488] sm:$0xff]
    %v746 = vld [vmem:[#allocation2 + $0x1490] sm:$0xff]
    %v747 = vld [vmem:[#allocation2 + $0x1498] sm:$0xff]
    %v748 = vld [vmem:[#allocation2 + $0x14a0] sm:$0xff]
    %v749 = vld [vmem:[#allocation2 + $0x14a8] sm:$0xff]
    %v750 = vld [vmem:[#allocation2 + $0x14b0] sm:$0xff]
    %v751 = vld [vmem:[#allocation2 + $0x14b8] sm:$0xff]
    %v752 = vld [vmem:[#allocation2 + $0x14c0] sm:$0xff]
    %v753 = vld [vmem:[#allocation2 + $0x14c8] sm:$0xff]
    %v754 = vld [vmem:[#allocation2 + $0x14d0] sm:$0xff]
    %v755 = vld [vmem:[#allocation2 + $0x14d8] sm:$0xff]
    %v756 = vld [vmem:[#allocation2 + $0x14e0] sm:$0xff]
    %v757 = vld [vmem:[#allocation2 + $0x14e8] sm:$0xff]
    %v758 = vld [vmem:[#allocation2 + $0x14f0] sm:$0xff]
    %v759 = vld [vmem:[#allocation2 + $0x14f8] sm:$0xff]
    %v760 = vld [vmem:[#allocation2 + $0x1500] sm:$0xff]
    %v761 = vld [vmem:[#allocation2 + $0x1508] sm:$0xff]
    %v762 = vld [vmem:[#allocation2 + $0x1510] sm:$0xff]
    %v763 = vld [vmem:[#allocation2 + $0x1518] sm:$0xff]
    %v764 = vld [vmem:[#allocation2 + $0x1520] sm:$0xff]
    %v765 = vld [vmem:[#allocation2 + $0x1528] sm:$0xff]
    %v766 = vld [vmem:[#allocation2 + $0x1530] sm:$0xff]
    %v767 = vld [vmem:[#allocation2 + $0x1538] sm:$0xff]
    %v768 = vld [vmem:[#allocation2 + $0x1540] sm:$0xff]
    %v769 = vld [vmem:[#allocation2 + $0x1548] sm:$0xff]
    %v770 = vld [vmem:[#allocation2 + $0x1550] sm:$0xff]
    %v771 = vld [vmem:[#allocation2 + $0x1558] sm:$0xff]
    %v772 = vld [vmem:[#allocation2 + $0x1560] sm:$0xff]
    %v773 = vld [vmem:[#allocation2 + $0x1568] sm:$0xff]
    %v774 = vld [vmem:[#allocation2 + $0x1570] sm:$0xff]
    %v775 = vld [vmem:[#allocation2 + $0x1578] sm:$0xff]
    %v776 = vld [vmem:[#allocation2 + $0x1580] sm:$0xff]
    %v777 = vld [vmem:[#allocation2 + $0x1588] sm:$0xff]
    %v778 = vld [vmem:[#allocation2 + $0x1590] sm:$0xff]
    %v779 = vld [vmem:[#allocation2 + $0x1598] sm:$0xff]
    %v780 = vld [vmem:[#allocation2 + $0x15a0] sm:$0xff]
    %v781 = vld [vmem:[#allocation2 + $0x15a8] sm:$0xff]
    %v782 = vld [vmem:[#allocation2 + $0x15b0] sm:$0xff]
    %v783 = vld [vmem:[#allocation2 + $0x15b8] sm:$0xff]
    %v784 = vld [vmem:[#allocation2 + $0x15c0] sm:$0xff]
    %v785 = vld [vmem:[#allocation2 + $0x15c8] sm:$0xff]
    %v786 = vld [vmem:[#allocation2 + $0x15d0] sm:$0xff]
    %v787 = vld [vmem:[#allocation2 + $0x15d8] sm:$0xff]
    %v788 = vld [vmem:[#allocation2 + $0x15e0] sm:$0xff]
    %v789 = vld [vmem:[#allocation2 + $0x15e8] sm:$0xff]
    %v790 = vld [vmem:[#allocation2 + $0x15f0] sm:$0xff]
    %v791 = vld [vmem:[#allocation2 + $0x15f8] sm:$0xff]
    %v792 = vld [vmem:[#allocation2 + $0x1600] sm:$0xff]
    %v793 = vld [vmem:[#allocation2 + $0x1608] sm:$0xff]
    %v794 = vld [vmem:[#allocation2 + $0x1610] sm:$0xff]
    %v795 = vld [vmem:[#allocation2 + $0x1618] sm:$0xff]
    %v796 = vld [vmem:[#allocation2 + $0x1620] sm:$0xff]
    %v797 = vld [vmem:[#allocation2 + $0x1628] sm:$0xff]
    %v798 = vld [vmem:[#allocation2 + $0x1630] sm:$0xff]
    %v799 = vld [vmem:[#allocation2 + $0x1638] sm:$0xff]
    %v800 = vld [vmem:[#allocation2 + $0x1640] sm:$0xff]
    %v801 = vld [vmem:[#allocation2 + $0x1648] sm:$0xff]
    %v802 = vld [vmem:[#allocation2 + $0x1650] sm:$0xff]
    %v803 = vld [vmem:[#allocation2 + $0x1658] sm:$0xff]
    %v804 = vld [vmem:[#allocation2 + $0x1660] sm:$0xff]
    %v805 = vld [vmem:[#allocation2 + $0x1668] sm:$0xff]
    %v806 = vld [vmem:[#allocation2 + $0x1670] sm:$0xff]
    %v807 = vld [vmem:[#allocation2 + $0x1678] sm:$0xff]
    %v808 = vld [vmem:[#allocation2 + $0x1680] sm:$0xff]
    %v809 = vld [vmem:[#allocation2 + $0x1688] sm:$0xff]
    %v810 = vld [vmem:[#allocation2 + $0x1690] sm:$0xff]
    %v811 = vld [vmem:[#allocation2 + $0x1698] sm:$0xff]
    %v812 = vld [vmem:[#allocation2 + $0x16a0] sm:$0xff]
    %v813 = vld [vmem:[#allocation2 + $0x16a8] sm:$0xff]
    %v814 = vld [vmem:[#allocation2 + $0x16b0] sm:$0xff]
    %v815 = vld [vmem:[#allocation2 + $0x16b8] sm:$0xff]
    %v816 = vld [vmem:[#allocation2 + $0x16c0] sm:$0xff]
    %v817 = vld [vmem:[#allocation2 + $0x16c8] sm:$0xff]
    %v818 = vld [vmem:[#allocation2 + $0x16d0] sm:$0xff]
    %v819 = vld [vmem:[#allocation2 + $0x16d8] sm:$0xff]
    %v820 = vld [vmem:[#allocation2 + $0x16e0] sm:$0xff]
    %v821 = vld [vmem:[#allocation2 + $0x16e8] sm:$0xff]
    %v822 = vld [vmem:[#allocation2 + $0x16f0] sm:$0xff]
    %v823 = vld [vmem:[#allocation2 + $0x16f8] sm:$0xff]
    %v824 = vld [vmem:[#allocation2 + $0x1700] sm:$0xff]
    %v825 = vld [vmem:[#allocation2 + $0x1708] sm:$0xff]
    %v826 = vld [vmem:[#allocation2 + $0x1710] sm:$0xff]
    %v827 = vld [vmem:[#allocation2 + $0x1718] sm:$0xff]
    %v828 = vld [vmem:[#allocation2 + $0x1720] sm:$0xff]
    %v829 = vld [vmem:[#allocation2 + $0x1728] sm:$0xff]
    %v830 = vld [vmem:[#allocation2 + $0x1730] sm:$0xff]
    %v831 = vld [vmem:[#allocation2 + $0x1738] sm:$0xff]
    %v832 = vld [vmem:[#allocation2 + $0x1740] sm:$0xff]
    %v833 = vld [vmem:[#allocation2 + $0x1748] sm:$0xff]
    %v834 = vld [vmem:[#allocation2 + $0x1750] sm:$0xff]
    %v835 = vld [vmem:[#allocation2 + $0x1758] sm:$0xff]
    %v836 = vld [vmem:[#allocation2 + $0x1760] sm:$0xff]
    %v837 = vld [vmem:[#allocation2 + $0x1768] sm:$0xff]
    %v838 = vld [vmem:[#allocation2 + $0x1770] sm:$0xff]
    %v839 = vld [vmem:[#allocation2 + $0x1778] sm:$0xff]
    %v840 = vld [vmem:[#allocation2 + $0x1780] sm:$0xff]
    %v841 = vld [vmem:[#allocation2 + $0x1788] sm:$0xff]
    %v842 = vld [vmem:[#allocation2 + $0x1790] sm:$0xff]
    %v843 = vld [vmem:[#allocation2 + $0x1798] sm:$0xff]
    %v844 = vld [vmem:[#allocation2 + $0x17a0] sm:$0xff]
    %v845 = vld [vmem:[#allocation2 + $0x17a8] sm:$0xff]
    %v846 = vld [vmem:[#allocation2 + $0x17b0] sm:$0xff]
    %v847 = vld [vmem:[#allocation2 + $0x17b8] sm:$0xff]
    %v848 = vld [vmem:[#allocation2 + $0x17c0] sm:$0xff]
    %v849 = vld [vmem:[#allocation2 + $0x17c8] sm:$0xff]
    %v850 = vld [vmem:[#allocation2 + $0x17d0] sm:$0xff]
    %v851 = vld [vmem:[#allocation2 + $0x17d8] sm:$0xff]
    %v852 = vld [vmem:[#allocation2 + $0x17e0] sm:$0xff]
    %v853 = vld [vmem:[#allocation2 + $0x17e8] sm:$0xff]
    %v854 = vld [vmem:[#allocation2 + $0x17f0] sm:$0xff]
    %v855 = vld [vmem:[#allocation2 + $0x17f8] sm:$0xff]
    %v856 = vld [vmem:[#allocation2 + $0x1800] sm:$0xff]
    %v857 = vld [vmem:[#allocation2 + $0x1808] sm:$0xff]
    %v858 = vld [vmem:[#allocation2 + $0x1810] sm:$0xff]
    %v859 = vld [vmem:[#allocation2 + $0x1818] sm:$0xff]
    %v860 = vld [vmem:[#allocation2 + $0x1820] sm:$0xff]
    %v861 = vld [vmem:[#allocation2 + $0x1828] sm:$0xff]
    %v862 = vld [vmem:[#allocation2 + $0x1830] sm:$0xff]
    %v863 = vld [vmem:[#allocation2 + $0x1838] sm:$0xff]
    %v864 = vld [vmem:[#allocation2 + $0x1840] sm:$0xff]
    %v865 = vld [vmem:[#allocation2 + $0x1848] sm:$0xff]
    %v866 = vld [vmem:[#allocation2 + $0x1850] sm:$0xff]
    %v867 = vld [vmem:[#allocation2 + $0x1858] sm:$0xff]
    %v868 = vld [vmem:[#allocation2 + $0x1860] sm:$0xff]
    %v869 = vld [vmem:[#allocation2 + $0x1868] sm:$0xff]
    %v870 = vld [vmem:[#allocation2 + $0x1870] sm:$0xff]
    %v871 = vld [vmem:[#allocation2 + $0x1878] sm:$0xff]
    %v872 = vld [vmem:[#allocation2 + $0x1880] sm:$0xff]
    %v873 = vld [vmem:[#allocation2 + $0x1888] sm:$0xff]
    %v874 = vld [vmem:[#allocation2 + $0x1890] sm:$0xff]
    %v875 = vld [vmem:[#allocation2 + $0x1898] sm:$0xff]
    %v876 = vld [vmem:[#allocation2 + $0x18a0] sm:$0xff]
    %v877 = vld [vmem:[#allocation2 + $0x18a8] sm:$0xff]
    %v878 = vld [vmem:[#allocation2 + $0x18b0] sm:$0xff]
    %v879 = vld [vmem:[#allocation2 + $0x18b8] sm:$0xff]
    %v880 = vld [vmem:[#allocation2 + $0x18c0] sm:$0xff]
    %v881 = vld [vmem:[#allocation2 + $0x18c8] sm:$0xff]
    %v882 = vld [vmem:[#allocation2 + $0x18d0] sm:$0xff]
    %v883 = vld [vmem:[#allocation2 + $0x18d8] sm:$0xff]
    %v884 = vld [vmem:[#allocation2 + $0x18e0] sm:$0xff]
    %v885 = vld [vmem:[#allocation2 + $0x18e8] sm:$0xff]
    %v886 = vld [vmem:[#allocation2 + $0x18f0] sm:$0xff]
    %v887 = vld [vmem:[#allocation2 + $0x18f8] sm:$0xff]
    %v888 = vld [vmem:[#allocation2 + $0x1900] sm:$0xff]
    %v889 = vld [vmem:[#allocation2 + $0x1908] sm:$0xff]
    %v890 = vld [vmem:[#allocation2 + $0x1910] sm:$0xff]
    %v891 = vld [vmem:[#allocation2 + $0x1918] sm:$0xff]
    %v892 = vld [vmem:[#allocation2 + $0x1920] sm:$0xff]
    %v893 = vld [vmem:[#allocation2 + $0x1928] sm:$0xff]
    %v894 = vld [vmem:[#allocation2 + $0x1930] sm:$0xff]
    %v895 = vld [vmem:[#allocation2 + $0x1938] sm:$0xff]
    %v896 = vld [vmem:[#allocation2 + $0x1940] sm:$0xff]
    %v897 = vld [vmem:[#allocation2 + $0x1948] sm:$0xff]
    %v898 = vld [vmem:[#allocation2 + $0x1950] sm:$0xff]
    %v899 = vld [vmem:[#allocation2 + $0x1958] sm:$0xff]
    %v900 = vld [vmem:[#allocation2 + $0x1960] sm:$0xff]
    %v901 = vld [vmem:[#allocation2 + $0x1968] sm:$0xff]
    %v902 = vld [vmem:[#allocation2 + $0x1970] sm:$0xff]
    %v903 = vld [vmem:[#allocation2 + $0x1978] sm:$0xff]
    %v904 = vld [vmem:[#allocation2 + $0x1980] sm:$0xff]
    %v905 = vld [vmem:[#allocation2 + $0x1988] sm:$0xff]
    %v906 = vld [vmem:[#allocation2 + $0x1990] sm:$0xff]
    %v907 = vld [vmem:[#allocation2 + $0x1998] sm:$0xff]
    %v908 = vld [vmem:[#allocation2 + $0x19a0] sm:$0xff]
    %v909 = vld [vmem:[#allocation2 + $0x19a8] sm:$0xff]
    %v910 = vld [vmem:[#allocation2 + $0x19b0] sm:$0xff]
    %v911 = vld [vmem:[#allocation2 + $0x19b8] sm:$0xff]
    %v912 = vld [vmem:[#allocation2 + $0x19c0] sm:$0xff]
    %v913 = vld [vmem:[#allocation2 + $0x19c8] sm:$0xff]
    %v914 = vld [vmem:[#allocation2 + $0x19d0] sm:$0xff]
    %v915 = vld [vmem:[#allocation2 + $0x19d8] sm:$0xff]
    %v916 = vld [vmem:[#allocation2 + $0x19e0] sm:$0xff]
    %v917 = vld [vmem:[#allocation2 + $0x19e8] sm:$0xff]
    %v918 = vld [vmem:[#allocation2 + $0x19f0] sm:$0xff]
    %v919 = vld [vmem:[#allocation2 + $0x19f8] sm:$0xff]
    %v920 = vld [vmem:[#allocation2 + $0x1a00] sm:$0xff]
    %v921 = vld [vmem:[#allocation2 + $0x1a08] sm:$0xff]
    %v922 = vld [vmem:[#allocation2 + $0x1a10] sm:$0xff]
    %v923 = vld [vmem:[#allocation2 + $0x1a18] sm:$0xff]
    %v924 = vld [vmem:[#allocation2 + $0x1a20] sm:$0xff]
    %v925 = vld [vmem:[#allocation2 + $0x1a28] sm:$0xff]
    %v926 = vld [vmem:[#allocation2 + $0x1a30] sm:$0xff]
    %v927 = vld [vmem:[#allocation2 + $0x1a38] sm:$0xff]
    %v928 = vld [vmem:[#allocation2 + $0x1a40] sm:$0xff]
    %v929 = vld [vmem:[#allocation2 + $0x1a48] sm:$0xff]
    %v930 = vld [vmem:[#allocation2 + $0x1a50] sm:$0xff]
    %v931 = vld [vmem:[#allocation2 + $0x1a58] sm:$0xff]
    %v932 = vld [vmem:[#allocation2 + $0x1a60] sm:$0xff]
    %v933 = vld [vmem:[#allocation2 + $0x1a68] sm:$0xff]
    %v934 = vld [vmem:[#allocation2 + $0x1a70] sm:$0xff]
    %v935 = vld [vmem:[#allocation2 + $0x1a78] sm:$0xff]
    %v936 = vld [vmem:[#allocation2 + $0x1a80] sm:$0xff]
    %v937 = vld [vmem:[#allocation2 + $0x1a88] sm:$0xff]
    %v938 = vld [vmem:[#allocation2 + $0x1a90] sm:$0xff]
    %v939 = vld [vmem:[#allocation2 + $0x1a98] sm:$0xff]
    %v940 = vld [vmem:[#allocation2 + $0x1aa0] sm:$0xff]
    %v941 = vld [vmem:[#allocation2 + $0x1aa8] sm:$0xff]
    %v942 = vld [vmem:[#allocation2 + $0x1ab0] sm:$0xff]
    %v943 = vld [vmem:[#allocation2 + $0x1ab8] sm:$0xff]
    %v944 = vld [vmem:[#allocation2 + $0x1ac0] sm:$0xff]
    %v945 = vld [vmem:[#allocation2 + $0x1ac8] sm:$0xff]
    %v946 = vld [vmem:[#allocation2 + $0x1ad0] sm:$0xff]
    %v947 = vld [vmem:[#allocation2 + $0x1ad8] sm:$0xff]
    %v948 = vld [vmem:[#allocation2 + $0x1ae0] sm:$0xff]
    %v949 = vld [vmem:[#allocation2 + $0x1ae8] sm:$0xff]
    %v950 = vld [vmem:[#allocation2 + $0x1af0] sm:$0xff]
    %v951 = vld [vmem:[#allocation2 + $0x1af8] sm:$0xff]
    %v952 = vld [vmem:[#allocation2 + $0x1b00] sm:$0xff]
    %v953 = vld [vmem:[#allocation2 + $0x1b08] sm:$0xff]
    %v954 = vld [vmem:[#allocation2 + $0x1b10] sm:$0xff]
    %v955 = vld [vmem:[#allocation2 + $0x1b18] sm:$0xff]
    %v956 = vld [vmem:[#allocation2 + $0x1b20] sm:$0xff]
    %v957 = vld [vmem:[#allocation2 + $0x1b28] sm:$0xff]
    %v958 = vld [vmem:[#allocation2 + $0x1b30] sm:$0xff]
    %v959 = vld [vmem:[#allocation2 + $0x1b38] sm:$0xff]
    %v960 = vld [vmem:[#allocation2 + $0x1b40] sm:$0xff]
    %v961 = vld [vmem:[#allocation2 + $0x1b48] sm:$0xff]
    %v962 = vld [vmem:[#allocation2 + $0x1b50] sm:$0xff]
    %v963 = vld [vmem:[#allocation2 + $0x1b58] sm:$0xff]
    %v964 = vld [vmem:[#allocation2 + $0x1b60] sm:$0xff]
    %v965 = vld [vmem:[#allocation2 + $0x1b68] sm:$0xff]
    %v966 = vld [vmem:[#allocation2 + $0x1b70] sm:$0xff]
    %v967 = vld [vmem:[#allocation2 + $0x1b78] sm:$0xff]
    %v968 = vld [vmem:[#allocation2 + $0x1b80] sm:$0xff]
    %v969 = vld [vmem:[#allocation2 + $0x1b88] sm:$0xff]
    %v970 = vld [vmem:[#allocation2 + $0x1b90] sm:$0xff]
    %v971 = vld [vmem:[#allocation2 + $0x1b98] sm:$0xff]
    %v972 = vld [vmem:[#allocation2 + $0x1ba0] sm:$0xff]
    %v973 = vld [vmem:[#allocation2 + $0x1ba8] sm:$0xff]
    %v974 = vld [vmem:[#allocation2 + $0x1bb0] sm:$0xff]
    %v975 = vld [vmem:[#allocation2 + $0x1bb8] sm:$0xff]
    %v976 = vld [vmem:[#allocation2 + $0x1bc0] sm:$0xff]
    %v977 = vld [vmem:[#allocation2 + $0x1bc8] sm:$0xff]
    %v978 = vld [vmem:[#allocation2 + $0x1bd0] sm:$0xff]
    %v979 = vld [vmem:[#allocation2 + $0x1bd8] sm:$0xff]
    %v980 = vld [vmem:[#allocation2 + $0x1be0] sm:$0xff]
    %v981 = vld [vmem:[#allocation2 + $0x1be8] sm:$0xff]
    %v982 = vld [vmem:[#allocation2 + $0x1bf0] sm:$0xff]
    %v983 = vld [vmem:[#allocation2 + $0x1bf8] sm:$0xff]
    %v984 = vld [vmem:[#allocation2 + $0x1c00] sm:$0xff]
    %v985 = vld [vmem:[#allocation2 + $0x1c08] sm:$0xff]
    %v986 = vld [vmem:[#allocation2 + $0x1c10] sm:$0xff]
    %v987 = vld [vmem:[#allocation2 + $0x1c18] sm:$0xff]
    %v988 = vld [vmem:[#allocation2 + $0x1c20] sm:$0xff]
    %v989 = vld [vmem:[#allocation2 + $0x1c28] sm:$0xff]
    %v990 = vld [vmem:[#allocation2 + $0x1c30] sm:$0xff]
    %v991 = vld [vmem:[#allocation2 + $0x1c38] sm:$0xff]
    %v992 = vld [vmem:[#allocation2 + $0x1c40] sm:$0xff]
    %v993 = vld [vmem:[#allocation2 + $0x1c48] sm:$0xff]
    %v994 = vld [vmem:[#allocation2 + $0x1c50] sm:$0xff]
    %v995 = vld [vmem:[#allocation2 + $0x1c58] sm:$0xff]
    %v996 = vld [vmem:[#allocation2 + $0x1c60] sm:$0xff]
    %v997 = vld [vmem:[#allocation2 + $0x1c68] sm:$0xff]
    %v998 = vld [vmem:[#allocation2 + $0x1c70] sm:$0xff]
    %v999 = vld [vmem:[#allocation2 + $0x1c78] sm:$0xff]
    %v1000 = vld [vmem:[#allocation2 + $0x1c80] sm:$0xff]
    %v1001 = vld [vmem:[#allocation2 + $0x1c88] sm:$0xff]
    %v1002 = vld [vmem:[#allocation2 + $0x1c90] sm:$0xff]
    %v1003 = vld [vmem:[#allocation2 + $0x1c98] sm:$0xff]
    %v1004 = vld [vmem:[#allocation2 + $0x1ca0] sm:$0xff]
    %v1005 = vld [vmem:[#allocation2 + $0x1ca8] sm:$0xff]
    %v1006 = vld [vmem:[#allocation2 + $0x1cb0] sm:$0xff]
    %v1007 = vld [vmem:[#allocation2 + $0x1cb8] sm:$0xff]
    %v1008 = vld [vmem:[#allocation2 + $0x1cc0] sm:$0xff]
    %v1009 = vld [vmem:[#allocation2 + $0x1cc8] sm:$0xff]
    %v1010 = vld [vmem:[#allocation2 + $0x1cd0] sm:$0xff]
    %v1011 = vld [vmem:[#allocation2 + $0x1cd8] sm:$0xff]
    %v1012 = vld [vmem:[#allocation2 + $0x1ce0] sm:$0xff]
    %v1013 = vld [vmem:[#allocation2 + $0x1ce8] sm:$0xff]
    %v1014 = vld [vmem:[#allocation2 + $0x1cf0] sm:$0xff]
    %v1015 = vld [vmem:[#allocation2 + $0x1cf8] sm:$0xff]
    %v1016 = vld [vmem:[#allocation2 + $0x1d00] sm:$0xff]
    %v1017 = vld [vmem:[#allocation2 + $0x1d08] sm:$0xff]
    %v1018 = vld [vmem:[#allocation2 + $0x1d10] sm:$0xff]
    %v1019 = vld [vmem:[#allocation2 + $0x1d18] sm:$0xff]
    %v1020 = vld [vmem:[#allocation2 + $0x1d20] sm:$0xff]
    %v1021 = vld [vmem:[#allocation2 + $0x1d28] sm:$0xff]
    %v1022 = vld [vmem:[#allocation2 + $0x1d30] sm:$0xff]
    %v1023 = vld [vmem:[#allocation2 + $0x1d38] sm:$0xff]
    %v1024 = vld [vmem:[#allocation2 + $0x1d40] sm:$0xff]
    %v1025 = vld [vmem:[#allocation2 + $0x1d48] sm:$0xff]
    %v1026 = vld [vmem:[#allocation2 + $0x1d50] sm:$0xff]
    %v1027 = vld [vmem:[#allocation2 + $0x1d58] sm:$0xff]
    %v1028 = vld [vmem:[#allocation2 + $0x1d60] sm:$0xff]
    %v1029 = vld [vmem:[#allocation2 + $0x1d68] sm:$0xff]
    %v1030 = vld [vmem:[#allocation2 + $0x1d70] sm:$0xff]
    %v1031 = vld [vmem:[#allocation2 + $0x1d78] sm:$0xff]
    %v1032 = vld [vmem:[#allocation2 + $0x1d80] sm:$0xff]
    %v1033 = vld [vmem:[#allocation2 + $0x1d88] sm:$0xff]
    %v1034 = vld [vmem:[#allocation2 + $0x1d90] sm:$0xff]
    %v1035 = vld [vmem:[#allocation2 + $0x1d98] sm:$0xff]
    %v1036 = vld [vmem:[#allocation2 + $0x1da0] sm:$0xff]
    %v1037 = vld [vmem:[#allocation2 + $0x1da8] sm:$0xff]
    %v1038 = vld [vmem:[#allocation2 + $0x1db0] sm:$0xff]
    %v1039 = vld [vmem:[#allocation2 + $0x1db8] sm:$0xff]
    %v1040 = vld [vmem:[#allocation2 + $0x1dc0] sm:$0xff]
    %v1041 = vld [vmem:[#allocation2 + $0x1dc8] sm:$0xff]
    %v1042 = vld [vmem:[#allocation2 + $0x1dd0] sm:$0xff]
    %v1043 = vld [vmem:[#allocation2 + $0x1dd8] sm:$0xff]
    %v1044 = vld [vmem:[#allocation2 + $0x1de0] sm:$0xff]
    %v1045 = vld [vmem:[#allocation2 + $0x1de8] sm:$0xff]
    %v1046 = vld [vmem:[#allocation2 + $0x1df0] sm:$0xff]
    %v1047 = vld [vmem:[#allocation2 + $0x1df8] sm:$0xff]
    %v1048 = vld [vmem:[#allocation2 + $0x1e00] sm:$0xff]
    %v1049 = vld [vmem:[#allocation2 + $0x1e08] sm:$0xff]
    %v1050 = vld [vmem:[#allocation2 + $0x1e10] sm:$0xff]
    %v1051 = vld [vmem:[#allocation2 + $0x1e18] sm:$0xff]
    %v1052 = vld [vmem:[#allocation2 + $0x1e20] sm:$0xff]
    %v1053 = vld [vmem:[#allocation2 + $0x1e28] sm:$0xff]
    %v1054 = vld [vmem:[#allocation2 + $0x1e30] sm:$0xff]
    %v1055 = vld [vmem:[#allocation2 + $0x1e38] sm:$0xff]
    %v1056 = vld [vmem:[#allocation2 + $0x1e40] sm:$0xff]
    %v1057 = vld [vmem:[#allocation2 + $0x1e48] sm:$0xff]
    %v1058 = vld [vmem:[#allocation2 + $0x1e50] sm:$0xff]
    %v1059 = vld [vmem:[#allocation2 + $0x1e58] sm:$0xff]
    %v1060 = vld [vmem:[#allocation2 + $0x1e60] sm:$0xff]
    %v1061 = vld [vmem:[#allocation2 + $0x1e68] sm:$0xff]
    %v1062 = vld [vmem:[#allocation2 + $0x1e70] sm:$0xff]
    %v1063 = vld [vmem:[#allocation2 + $0x1e78] sm:$0xff]
    %v1064 = vld [vmem:[#allocation2 + $0x1e80] sm:$0xff]
    %v1065 = vld [vmem:[#allocation2 + $0x1e88] sm:$0xff]
    %v1066 = vld [vmem:[#allocation2 + $0x1e90] sm:$0xff]
    %v1067 = vld [vmem:[#allocation2 + $0x1e98] sm:$0xff]
    %v1068 = vld [vmem:[#allocation2 + $0x1ea0] sm:$0xff]
    %v1069 = vld [vmem:[#allocation2 + $0x1ea8] sm:$0xff]
    %v1070 = vld [vmem:[#allocation2 + $0x1eb0] sm:$0xff]
    %v1071 = vld [vmem:[#allocation2 + $0x1eb8] sm:$0xff]
    %v1072 = vld [vmem:[#allocation2 + $0x1ec0] sm:$0xff]
    %v1073 = vld [vmem:[#allocation2 + $0x1ec8] sm:$0xff]
    %v1074 = vld [vmem:[#allocation2 + $0x1ed0] sm:$0xff]
    %v1075 = vld [vmem:[#allocation2 + $0x1ed8] sm:$0xff]
    %v1076 = vld [vmem:[#allocation2 + $0x1ee0] sm:$0xff]
    %v1077 = vld [vmem:[#allocation2 + $0x1ee8] sm:$0xff]
    %v1078 = vld [vmem:[#allocation2 + $0x1ef0] sm:$0xff]
    %v1079 = vld [vmem:[#allocation2 + $0x1ef8] sm:$0xff]
    %v1080 = vld [vmem:[#allocation2 + $0x1f00] sm:$0xff]
    %v1081 = vld [vmem:[#allocation2 + $0x1f08] sm:$0xff]
    %v1082 = vld [vmem:[#allocation2 + $0x1f10] sm:$0xff]
    %v1083 = vld [vmem:[#allocation2 + $0x1f18] sm:$0xff]
    %v1084 = vld [vmem:[#allocation2 + $0x1f20] sm:$0xff]
    %v1085 = vld [vmem:[#allocation2 + $0x1f28] sm:$0xff]
    %v1086 = vld [vmem:[#allocation2 + $0x1f30] sm:$0xff]
    %v1087 = vld [vmem:[#allocation2 + $0x1f38] sm:$0xff]
    %v1088 = vld [vmem:[#allocation2 + $0x1f40] sm:$0xff]
    %v1089 = vld [vmem:[#allocation2 + $0x1f48] sm:$0xff]
    %v1090 = vld [vmem:[#allocation2 + $0x1f50] sm:$0xff]
    %v1091 = vld [vmem:[#allocation2 + $0x1f58] sm:$0xff]
    %v1092 = vld [vmem:[#allocation2 + $0x1f60] sm:$0xff]
    %v1093 = vld [vmem:[#allocation2 + $0x1f68] sm:$0xff]
    %v1094 = vld [vmem:[#allocation2 + $0x1f70] sm:$0xff]
    %v1095 = vld [vmem:[#allocation2 + $0x1f78] sm:$0xff]
    %v1096 = vld [vmem:[#allocation2 + $0x1f80] sm:$0xff]
    %v1097 = vld [vmem:[#allocation2 + $0x1f88] sm:$0xff]
    %v1098 = vld [vmem:[#allocation2 + $0x1f90] sm:$0xff]
    %v1099 = vld [vmem:[#allocation2 + $0x1f98] sm:$0xff]
    %v1100 = vld [vmem:[#allocation2 + $0x1fa0] sm:$0xff]
    %v1101 = vld [vmem:[#allocation2 + $0x1fa8] sm:$0xff]
    %v1102 = vld [vmem:[#allocation2 + $0x1fb0] sm:$0xff]
    %v1103 = vld [vmem:[#allocation2 + $0x1fb8] sm:$0xff]
    %v1104 = vld [vmem:[#allocation2 + $0x1fc0] sm:$0xff]
    %v1105 = vld [vmem:[#allocation2 + $0x1fc8] sm:$0xff]
    %v1106 = vld [vmem:[#allocation2 + $0x1fd0] sm:$0xff]
    %v1107 = vld [vmem:[#allocation2 + $0x1fd8] sm:$0xff]
    %v1108 = vld [vmem:[#allocation2 + $0x1fe0] sm:$0xff]
    %v1109 = vld [vmem:[#allocation2 + $0x1fe8] sm:$0xff]
    %v1110 = vld [vmem:[#allocation2 + $0x1ff0] sm:$0xff]
    %v1111 = vld [vmem:[#allocation2 + $0x1ff8] sm:$0xff]
    %v1112 = vld [vmem:[#allocation4] sm:$0xff]
    %v1114 = vlaneseq
    %v1115 = vshrl.u32 %v1114, 7
    %v1116 = vsub.s32 0, %v1115
    %v1117 = vrot.slane %v1112, %v1116
    %v1118 = vlaneseq
    %v1119 = vshrl.u32 %v1118, 7
    %v1120 = vsub.s32 1, %v1119
    %v1121 = vrot.slane %v1112, %v1120
    %v1122 = vlaneseq
    %v1123 = vshrl.u32 %v1122, 7
    %v1124 = vsub.s32 2, %v1123
    %v1125 = vrot.slane %v1112, %v1124
    %v1126 = vlaneseq
    %v1127 = vshrl.u32 %v1126, 7
    %v1128 = vsub.s32 3, %v1127
    %v1129 = vrot.slane %v1112, %v1128
    %v1130 = vlaneseq
    %v1131 = vshrl.u32 %v1130, 7
    %v1132 = vsub.s32 4, %v1131
    %v1133 = vrot.slane %v1112, %v1132
    %v1134 = vlaneseq
    %v1135 = vshrl.u32 %v1134, 7
    %v1136 = vsub.s32 5, %v1135
    %v1137 = vrot.slane %v1112, %v1136
    %v1138 = vlaneseq
    %v1139 = vshrl.u32 %v1138, 7
    %v1140 = vsub.s32 6, %v1139
    %v1141 = vrot.slane %v1112, %v1140
    %v1142 = vlaneseq
    %v1143 = vshrl.u32 %v1142, 7
    %v1144 = vsub.s32 7, %v1143
    %v1145 = vrot.slane %v1112, %v1144
    %v1170 = vunpack.c.l.b16 %v72
    %v1171 = vunpack.c.h.b16 %v72
    %v1172 = vunpack.c.l.b16 %v73
    %v1173 = vunpack.c.h.b16 %v73
    %v1174 = vunpack.c.l.b16 %v74
    %v1175 = vunpack.c.h.b16 %v74
    %v1176 = vunpack.c.l.b16 %v75
    %v1177 = vunpack.c.h.b16 %v75
    %v1178 = vunpack.c.l.b16 %v76
    %v1179 = vunpack.c.h.b16 %v76
    %v1180 = vunpack.c.l.b16 %v77
    %v1181 = vunpack.c.h.b16 %v77
    %v1182 = vunpack.c.l.b16 %v78
    %v1183 = vunpack.c.h.b16 %v78
    %v1184 = vunpack.c.l.b16 %v79
    %v1185 = vunpack.c.h.b16 %v79
    %v1186 = vunpack.c.l.b16 %v80
    %v1187 = vunpack.c.h.b16 %v80
    %v1188 = vunpack.c.l.b16 %v81
    %v1189 = vunpack.c.h.b16 %v81
    %v1190 = vunpack.c.l.b16 %v82
    %v1191 = vunpack.c.h.b16 %v82
    %v1192 = vunpack.c.l.b16 %v83
    %v1193 = vunpack.c.h.b16 %v83
    %v1194 = vunpack.c.l.b16 %v84
    %v1195 = vunpack.c.h.b16 %v84
    %v1196 = vunpack.c.l.b16 %v85
    %v1197 = vunpack.c.h.b16 %v85
    %v1198 = vunpack.c.l.b16 %v86
    %v1199 = vunpack.c.h.b16 %v86
    %v1200 = vunpack.c.l.b16 %v87
    %v1201 = vunpack.c.h.b16 %v87
    %v1202 = vpack.c.b16 %v1186, %v1170
    %v1203 = vpack.c.b16 %v1187, %v1171
    %v1204 = vpack.c.b16 %v1188, %v1172
    %v1205 = vpack.c.b16 %v1189, %v1173
    %v1206 = vpack.c.b16 %v1190, %v1174
    %v1207 = vpack.c.b16 %v1191, %v1175
    %v1208 = vpack.c.b16 %v1192, %v1176
    %v1209 = vpack.c.b16 %v1193, %v1177
    %v1210 = vpack.c.b16 %v1194, %v1178
    %v1211 = vpack.c.b16 %v1195, %v1179
    %v1212 = vpack.c.b16 %v1196, %v1180
    %v1213 = vpack.c.b16 %v1197, %v1181
    %v1214 = vpack.c.b16 %v1198, %v1182
    %v1215 = vpack.c.b16 %v1199, %v1183
    %v1216 = vpack.c.b16 %v1200, %v1184
    %v1217 = vpack.c.b16 %v1201, %v1185
    %v2258 = vunpack.c.l.b16 %v88
    %v2259 = vunpack.c.h.b16 %v88
    %v2260 = vunpack.c.l.b16 %v89
    %v2261 = vunpack.c.h.b16 %v89
    %v2262 = vunpack.c.l.b16 %v90
    %v2263 = vunpack.c.h.b16 %v90
    %v2264 = vunpack.c.l.b16 %v91
    %v2265 = vunpack.c.h.b16 %v91
    %v2266 = vunpack.c.l.b16 %v92
    %v2267 = vunpack.c.h.b16 %v92
    %v2268 = vunpack.c.l.b16 %v93
    %v2269 = vunpack.c.h.b16 %v93
    %v2270 = vunpack.c.l.b16 %v94
    %v2271 = vunpack.c.h.b16 %v94
    %v2272 = vunpack.c.l.b16 %v95
    %v2273 = vunpack.c.h.b16 %v95
    %v2274 = vunpack.c.l.b16 %v96
    %v2275 = vunpack.c.h.b16 %v96
    %v2276 = vunpack.c.l.b16 %v97
    %v2277 = vunpack.c.h.b16 %v97
    %v2278 = vunpack.c.l.b16 %v98
    %v2279 = vunpack.c.h.b16 %v98
    %v2280 = vunpack.c.l.b16 %v99
    %v2281 = vunpack.c.h.b16 %v99
    %v2282 = vunpack.c.l.b16 %v100
    %v2283 = vunpack.c.h.b16 %v100
    %v2284 = vunpack.c.l.b16 %v101
    %v2285 = vunpack.c.h.b16 %v101
    %v2286 = vunpack.c.l.b16 %v102
    %v2287 = vunpack.c.h.b16 %v102
    %v2288 = vunpack.c.l.b16 %v103
    %v2289 = vunpack.c.h.b16 %v103
    %v2290 = vunpack.c.l.b16 %v104
    %v2291 = vunpack.c.h.b16 %v104
    %v2292 = vunpack.c.l.b16 %v105
    %v2293 = vunpack.c.h.b16 %v105
    %v2294 = vunpack.c.l.b16 %v106
    %v2295 = vunpack.c.h.b16 %v106
    %v2296 = vunpack.c.l.b16 %v107
    %v2297 = vunpack.c.h.b16 %v107
    %v2298 = vunpack.c.l.b16 %v108
    %v2299 = vunpack.c.h.b16 %v108
    %v2300 = vunpack.c.l.b16 %v109
    %v2301 = vunpack.c.h.b16 %v109
    %v2302 = vunpack.c.l.b16 %v110
    %v2303 = vunpack.c.h.b16 %v110
    %v2304 = vunpack.c.l.b16 %v111
    %v2305 = vunpack.c.h.b16 %v111
    %v2306 = vunpack.c.l.b16 %v112
    %v2307 = vunpack.c.h.b16 %v112
    %v2308 = vunpack.c.l.b16 %v113
    %v2309 = vunpack.c.h.b16 %v113
    %v2310 = vunpack.c.l.b16 %v114
    %v2311 = vunpack.c.h.b16 %v114
    %v2312 = vunpack.c.l.b16 %v115
    %v2313 = vunpack.c.h.b16 %v115
    %v2314 = vunpack.c.l.b16 %v116
    %v2315 = vunpack.c.h.b16 %v116
    %v2316 = vunpack.c.l.b16 %v117
    %v2317 = vunpack.c.h.b16 %v117
    %v2318 = vunpack.c.l.b16 %v118
    %v2319 = vunpack.c.h.b16 %v118
    %v2320 = vunpack.c.l.b16 %v119
    %v2321 = vunpack.c.h.b16 %v119
    %v2322 = vunpack.c.l.b16 %v120
    %v2323 = vunpack.c.h.b16 %v120
    %v2324 = vunpack.c.l.b16 %v121
    %v2325 = vunpack.c.h.b16 %v121
    %v2326 = vunpack.c.l.b16 %v122
    %v2327 = vunpack.c.h.b16 %v122
    %v2328 = vunpack.c.l.b16 %v123
    %v2329 = vunpack.c.h.b16 %v123
    %v2330 = vunpack.c.l.b16 %v124
    %v2331 = vunpack.c.h.b16 %v124
    %v2332 = vunpack.c.l.b16 %v125
    %v2333 = vunpack.c.h.b16 %v125
    %v2334 = vunpack.c.l.b16 %v126
    %v2335 = vunpack.c.h.b16 %v126
    %v2336 = vunpack.c.l.b16 %v127
    %v2337 = vunpack.c.h.b16 %v127
    %v2338 = vunpack.c.l.b16 %v128
    %v2339 = vunpack.c.h.b16 %v128
    %v2340 = vunpack.c.l.b16 %v129
    %v2341 = vunpack.c.h.b16 %v129
    %v2342 = vunpack.c.l.b16 %v130
    %v2343 = vunpack.c.h.b16 %v130
    %v2344 = vunpack.c.l.b16 %v131
    %v2345 = vunpack.c.h.b16 %v131
    %v2346 = vunpack.c.l.b16 %v132
    %v2347 = vunpack.c.h.b16 %v132
    %v2348 = vunpack.c.l.b16 %v133
    %v2349 = vunpack.c.h.b16 %v133
    %v2350 = vunpack.c.l.b16 %v134
    %v2351 = vunpack.c.h.b16 %v134
    %v2352 = vunpack.c.l.b16 %v135
    %v2353 = vunpack.c.h.b16 %v135
    %v2354 = vunpack.c.l.b16 %v136
    %v2355 = vunpack.c.h.b16 %v136
    %v2356 = vunpack.c.l.b16 %v137
    %v2357 = vunpack.c.h.b16 %v137
    %v2358 = vunpack.c.l.b16 %v138
    %v2359 = vunpack.c.h.b16 %v138
    %v2360 = vunpack.c.l.b16 %v139
    %v2361 = vunpack.c.h.b16 %v139
    %v2362 = vunpack.c.l.b16 %v140
    %v2363 = vunpack.c.h.b16 %v140
    %v2364 = vunpack.c.l.b16 %v141
    %v2365 = vunpack.c.h.b16 %v141
    %v2366 = vunpack.c.l.b16 %v142
    %v2367 = vunpack.c.h.b16 %v142
    %v2368 = vunpack.c.l.b16 %v143
    %v2369 = vunpack.c.h.b16 %v143
    %v2370 = vunpack.c.l.b16 %v144
    %v2371 = vunpack.c.h.b16 %v144
    %v2372 = vunpack.c.l.b16 %v145
    %v2373 = vunpack.c.h.b16 %v145
    %v2374 = vunpack.c.l.b16 %v146
    %v2375 = vunpack.c.h.b16 %v146
    %v2376 = vunpack.c.l.b16 %v147
    %v2377 = vunpack.c.h.b16 %v147
    %v2378 = vunpack.c.l.b16 %v148
    %v2379 = vunpack.c.h.b16 %v148
    %v2380 = vunpack.c.l.b16 %v149
    %v2381 = vunpack.c.h.b16 %v149
    %v2382 = vunpack.c.l.b16 %v150
    %v2383 = vunpack.c.h.b16 %v150
    %v2384 = vunpack.c.l.b16 %v151
    %v2385 = vunpack.c.h.b16 %v151
    %v2386 = vunpack.c.l.b16 %v152
    %v2387 = vunpack.c.h.b16 %v152
    %v2388 = vunpack.c.l.b16 %v153
    %v2389 = vunpack.c.h.b16 %v153
    %v2390 = vunpack.c.l.b16 %v154
    %v2391 = vunpack.c.h.b16 %v154
    %v2392 = vunpack.c.l.b16 %v155
    %v2393 = vunpack.c.h.b16 %v155
    %v2394 = vunpack.c.l.b16 %v156
    %v2395 = vunpack.c.h.b16 %v156
    %v2396 = vunpack.c.l.b16 %v157
    %v2397 = vunpack.c.h.b16 %v157
    %v2398 = vunpack.c.l.b16 %v158
    %v2399 = vunpack.c.h.b16 %v158
    %v2400 = vunpack.c.l.b16 %v159
    %v2401 = vunpack.c.h.b16 %v159
    %v2402 = vunpack.c.l.b16 %v160
    %v2403 = vunpack.c.h.b16 %v160
    %v2404 = vunpack.c.l.b16 %v161
    %v2405 = vunpack.c.h.b16 %v161
    %v2406 = vunpack.c.l.b16 %v162
    %v2407 = vunpack.c.h.b16 %v162
    %v2408 = vunpack.c.l.b16 %v163
    %v2409 = vunpack.c.h.b16 %v163
    %v2410 = vunpack.c.l.b16 %v164
    %v2411 = vunpack.c.h.b16 %v164
    %v2412 = vunpack.c.l.b16 %v165
    %v2413 = vunpack.c.h.b16 %v165
    %v2414 = vunpack.c.l.b16 %v166
    %v2415 = vunpack.c.h.b16 %v166
    %v2416 = vunpack.c.l.b16 %v167
    %v2417 = vunpack.c.h.b16 %v167
    %v2418 = vunpack.c.l.b16 %v168
    %v2419 = vunpack.c.h.b16 %v168
    %v2420 = vunpack.c.l.b16 %v169
    %v2421 = vunpack.c.h.b16 %v169
    %v2422 = vunpack.c.l.b16 %v170
    %v2423 = vunpack.c.h.b16 %v170
    %v2424 = vunpack.c.l.b16 %v171
    %v2425 = vunpack.c.h.b16 %v171
    %v2426 = vunpack.c.l.b16 %v172
    %v2427 = vunpack.c.h.b16 %v172
    %v2428 = vunpack.c.l.b16 %v173
    %v2429 = vunpack.c.h.b16 %v173
    %v2430 = vunpack.c.l.b16 %v174
    %v2431 = vunpack.c.h.b16 %v174
    %v2432 = vunpack.c.l.b16 %v175
    %v2433 = vunpack.c.h.b16 %v175
    %v2434 = vunpack.c.l.b16 %v176
    %v2435 = vunpack.c.h.b16 %v176
    %v2436 = vunpack.c.l.b16 %v177
    %v2437 = vunpack.c.h.b16 %v177
    %v2438 = vunpack.c.l.b16 %v178
    %v2439 = vunpack.c.h.b16 %v178
    %v2440 = vunpack.c.l.b16 %v179
    %v2441 = vunpack.c.h.b16 %v179
    %v2442 = vunpack.c.l.b16 %v180
    %v2443 = vunpack.c.h.b16 %v180
    %v2444 = vunpack.c.l.b16 %v181
    %v2445 = vunpack.c.h.b16 %v181
    %v2446 = vunpack.c.l.b16 %v182
    %v2447 = vunpack.c.h.b16 %v182
    %v2448 = vunpack.c.l.b16 %v183
    %v2449 = vunpack.c.h.b16 %v183
    %v2450 = vunpack.c.l.b16 %v184
    %v2451 = vunpack.c.h.b16 %v184
    %v2452 = vunpack.c.l.b16 %v185
    %v2453 = vunpack.c.h.b16 %v185
    %v2454 = vunpack.c.l.b16 %v186
    %v2455 = vunpack.c.h.b16 %v186
    %v2456 = vunpack.c.l.b16 %v187
    %v2457 = vunpack.c.h.b16 %v187
    %v2458 = vunpack.c.l.b16 %v188
    %v2459 = vunpack.c.h.b16 %v188
    %v2460 = vunpack.c.l.b16 %v189
    %v2461 = vunpack.c.h.b16 %v189
    %v2462 = vunpack.c.l.b16 %v190
    %v2463 = vunpack.c.h.b16 %v190
    %v2464 = vunpack.c.l.b16 %v191
    %v2465 = vunpack.c.h.b16 %v191
    %v2466 = vunpack.c.l.b16 %v192
    %v2467 = vunpack.c.h.b16 %v192
    %v2468 = vunpack.c.l.b16 %v193
    %v2469 = vunpack.c.h.b16 %v193
    %v2470 = vunpack.c.l.b16 %v194
    %v2471 = vunpack.c.h.b16 %v194
    %v2472 = vunpack.c.l.b16 %v195
    %v2473 = vunpack.c.h.b16 %v195
    %v2474 = vunpack.c.l.b16 %v196
    %v2475 = vunpack.c.h.b16 %v196
    %v2476 = vunpack.c.l.b16 %v197
    %v2477 = vunpack.c.h.b16 %v197
    %v2478 = vunpack.c.l.b16 %v198
    %v2479 = vunpack.c.h.b16 %v198
    %v2480 = vunpack.c.l.b16 %v199
    %v2481 = vunpack.c.h.b16 %v199
    %v2482 = vunpack.c.l.b16 %v200
    %v2483 = vunpack.c.h.b16 %v200
    %v2484 = vunpack.c.l.b16 %v201
    %v2485 = vunpack.c.h.b16 %v201
    %v2486 = vunpack.c.l.b16 %v202
    %v2487 = vunpack.c.h.b16 %v202
    %v2488 = vunpack.c.l.b16 %v203
    %v2489 = vunpack.c.h.b16 %v203
    %v2490 = vunpack.c.l.b16 %v204
    %v2491 = vunpack.c.h.b16 %v204
    %v2492 = vunpack.c.l.b16 %v205
    %v2493 = vunpack.c.h.b16 %v205
    %v2494 = vunpack.c.l.b16 %v206
    %v2495 = vunpack.c.h.b16 %v206
    %v2496 = vunpack.c.l.b16 %v207
    %v2497 = vunpack.c.h.b16 %v207
    %v2498 = vunpack.c.l.b16 %v208
    %v2499 = vunpack.c.h.b16 %v208
    %v2500 = vunpack.c.l.b16 %v209
    %v2501 = vunpack.c.h.b16 %v209
    %v2502 = vunpack.c.l.b16 %v210
    %v2503 = vunpack.c.h.b16 %v210
    %v2504 = vunpack.c.l.b16 %v211
    %v2505 = vunpack.c.h.b16 %v211
    %v2506 = vunpack.c.l.b16 %v212
    %v2507 = vunpack.c.h.b16 %v212
    %v2508 = vunpack.c.l.b16 %v213
    %v2509 = vunpack.c.h.b16 %v213
    %v2510 = vunpack.c.l.b16 %v214
    %v2511 = vunpack.c.h.b16 %v214
    %v2512 = vunpack.c.l.b16 %v215
    %v2513 = vunpack.c.h.b16 %v215
    %v2514 = vunpack.c.l.b16 %v216
    %v2515 = vunpack.c.h.b16 %v216
    %v2516 = vunpack.c.l.b16 %v217
    %v2517 = vunpack.c.h.b16 %v217
    %v2518 = vunpack.c.l.b16 %v218
    %v2519 = vunpack.c.h.b16 %v218
    %v2520 = vunpack.c.l.b16 %v219
    %v2521 = vunpack.c.h.b16 %v219
    %v2522 = vunpack.c.l.b16 %v220
    %v2523 = vunpack.c.h.b16 %v220
    %v2524 = vunpack.c.l.b16 %v221
    %v2525 = vunpack.c.h.b16 %v221
    %v2526 = vunpack.c.l.b16 %v222
    %v2527 = vunpack.c.h.b16 %v222
    %v2528 = vunpack.c.l.b16 %v223
    %v2529 = vunpack.c.h.b16 %v223
    %v2530 = vunpack.c.l.b16 %v224
    %v2531 = vunpack.c.h.b16 %v224
    %v2532 = vunpack.c.l.b16 %v225
    %v2533 = vunpack.c.h.b16 %v225
    %v2534 = vunpack.c.l.b16 %v226
    %v2535 = vunpack.c.h.b16 %v226
    %v2536 = vunpack.c.l.b16 %v227
    %v2537 = vunpack.c.h.b16 %v227
    %v2538 = vunpack.c.l.b16 %v228
    %v2539 = vunpack.c.h.b16 %v228
    %v2540 = vunpack.c.l.b16 %v229
    %v2541 = vunpack.c.h.b16 %v229
    %v2542 = vunpack.c.l.b16 %v230
    %v2543 = vunpack.c.h.b16 %v230
    %v2544 = vunpack.c.l.b16 %v231
    %v2545 = vunpack.c.h.b16 %v231
    %v2546 = vunpack.c.l.b16 %v232
    %v2547 = vunpack.c.h.b16 %v232
    %v2548 = vunpack.c.l.b16 %v233
    %v2549 = vunpack.c.h.b16 %v233
    %v2550 = vunpack.c.l.b16 %v234
    %v2551 = vunpack.c.h.b16 %v234
    %v2552 = vunpack.c.l.b16 %v235
    %v2553 = vunpack.c.h.b16 %v235
    %v2554 = vunpack.c.l.b16 %v236
    %v2555 = vunpack.c.h.b16 %v236
    %v2556 = vunpack.c.l.b16 %v237
    %v2557 = vunpack.c.h.b16 %v237
    %v2558 = vunpack.c.l.b16 %v238
    %v2559 = vunpack.c.h.b16 %v238
    %v2560 = vunpack.c.l.b16 %v239
    %v2561 = vunpack.c.h.b16 %v239
    %v2562 = vunpack.c.l.b16 %v240
    %v2563 = vunpack.c.h.b16 %v240
    %v2564 = vunpack.c.l.b16 %v241
    %v2565 = vunpack.c.h.b16 %v241
    %v2566 = vunpack.c.l.b16 %v242
    %v2567 = vunpack.c.h.b16 %v242
    %v2568 = vunpack.c.l.b16 %v243
    %v2569 = vunpack.c.h.b16 %v243
    %v2570 = vunpack.c.l.b16 %v244
    %v2571 = vunpack.c.h.b16 %v244
    %v2572 = vunpack.c.l.b16 %v245
    %v2573 = vunpack.c.h.b16 %v245
    %v2574 = vunpack.c.l.b16 %v246
    %v2575 = vunpack.c.h.b16 %v246
    %v2576 = vunpack.c.l.b16 %v247
    %v2577 = vunpack.c.h.b16 %v247
    %v2578 = vunpack.c.l.b16 %v248
    %v2579 = vunpack.c.h.b16 %v248
    %v2580 = vunpack.c.l.b16 %v249
    %v2581 = vunpack.c.h.b16 %v249
    %v2582 = vunpack.c.l.b16 %v250
    %v2583 = vunpack.c.h.b16 %v250
    %v2584 = vunpack.c.l.b16 %v251
    %v2585 = vunpack.c.h.b16 %v251
    %v2586 = vunpack.c.l.b16 %v252
    %v2587 = vunpack.c.h.b16 %v252
    %v2588 = vunpack.c.l.b16 %v253
    %v2589 = vunpack.c.h.b16 %v253
    %v2590 = vunpack.c.l.b16 %v254
    %v2591 = vunpack.c.h.b16 %v254
    %v2592 = vunpack.c.l.b16 %v255
    %v2593 = vunpack.c.h.b16 %v255
    %v2594 = vunpack.c.l.b16 %v256
    %v2595 = vunpack.c.h.b16 %v256
    %v2596 = vunpack.c.l.b16 %v257
    %v2597 = vunpack.c.h.b16 %v257
    %v2598 = vunpack.c.l.b16 %v258
    %v2599 = vunpack.c.h.b16 %v258
    %v2600 = vunpack.c.l.b16 %v259
    %v2601 = vunpack.c.h.b16 %v259
    %v2602 = vunpack.c.l.b16 %v260
    %v2603 = vunpack.c.h.b16 %v260
    %v2604 = vunpack.c.l.b16 %v261
    %v2605 = vunpack.c.h.b16 %v261
    %v2606 = vunpack.c.l.b16 %v262
    %v2607 = vunpack.c.h.b16 %v262
    %v2608 = vunpack.c.l.b16 %v263
    %v2609 = vunpack.c.h.b16 %v263
    %v2610 = vunpack.c.l.b16 %v264
    %v2611 = vunpack.c.h.b16 %v264
    %v2612 = vunpack.c.l.b16 %v265
    %v2613 = vunpack.c.h.b16 %v265
    %v2614 = vunpack.c.l.b16 %v266
    %v2615 = vunpack.c.h.b16 %v266
    %v2616 = vunpack.c.l.b16 %v267
    %v2617 = vunpack.c.h.b16 %v267
    %v2618 = vunpack.c.l.b16 %v268
    %v2619 = vunpack.c.h.b16 %v268
    %v2620 = vunpack.c.l.b16 %v269
    %v2621 = vunpack.c.h.b16 %v269
    %v2622 = vunpack.c.l.b16 %v270
    %v2623 = vunpack.c.h.b16 %v270
    %v2624 = vunpack.c.l.b16 %v271
    %v2625 = vunpack.c.h.b16 %v271
    %v2626 = vunpack.c.l.b16 %v272
    %v2627 = vunpack.c.h.b16 %v272
    %v2628 = vunpack.c.l.b16 %v273
    %v2629 = vunpack.c.h.b16 %v273
    %v2630 = vunpack.c.l.b16 %v274
    %v2631 = vunpack.c.h.b16 %v274
    %v2632 = vunpack.c.l.b16 %v275
    %v2633 = vunpack.c.h.b16 %v275
    %v2634 = vunpack.c.l.b16 %v276
    %v2635 = vunpack.c.h.b16 %v276
    %v2636 = vunpack.c.l.b16 %v277
    %v2637 = vunpack.c.h.b16 %v277
    %v2638 = vunpack.c.l.b16 %v278
    %v2639 = vunpack.c.h.b16 %v278
    %v2640 = vunpack.c.l.b16 %v279
    %v2641 = vunpack.c.h.b16 %v279
    %v2642 = vunpack.c.l.b16 %v280
    %v2643 = vunpack.c.h.b16 %v280
    %v2644 = vunpack.c.l.b16 %v281
    %v2645 = vunpack.c.h.b16 %v281
    %v2646 = vunpack.c.l.b16 %v282
    %v2647 = vunpack.c.h.b16 %v282
    %v2648 = vunpack.c.l.b16 %v283
    %v2649 = vunpack.c.h.b16 %v283
    %v2650 = vunpack.c.l.b16 %v284
    %v2651 = vunpack.c.h.b16 %v284
    %v2652 = vunpack.c.l.b16 %v285
    %v2653 = vunpack.c.h.b16 %v285
    %v2654 = vunpack.c.l.b16 %v286
    %v2655 = vunpack.c.h.b16 %v286
    %v2656 = vunpack.c.l.b16 %v287
    %v2657 = vunpack.c.h.b16 %v287
    %v2658 = vunpack.c.l.b16 %v288
    %v2659 = vunpack.c.h.b16 %v288
    %v2660 = vunpack.c.l.b16 %v289
    %v2661 = vunpack.c.h.b16 %v289
    %v2662 = vunpack.c.l.b16 %v290
    %v2663 = vunpack.c.h.b16 %v290
    %v2664 = vunpack.c.l.b16 %v291
    %v2665 = vunpack.c.h.b16 %v291
    %v2666 = vunpack.c.l.b16 %v292
    %v2667 = vunpack.c.h.b16 %v292
    %v2668 = vunpack.c.l.b16 %v293
    %v2669 = vunpack.c.h.b16 %v293
    %v2670 = vunpack.c.l.b16 %v294
    %v2671 = vunpack.c.h.b16 %v294
    %v2672 = vunpack.c.l.b16 %v295
    %v2673 = vunpack.c.h.b16 %v295
    %v2674 = vunpack.c.l.b16 %v296
    %v2675 = vunpack.c.h.b16 %v296
    %v2676 = vunpack.c.l.b16 %v297
    %v2677 = vunpack.c.h.b16 %v297
    %v2678 = vunpack.c.l.b16 %v298
    %v2679 = vunpack.c.h.b16 %v298
    %v2680 = vunpack.c.l.b16 %v299
    %v2681 = vunpack.c.h.b16 %v299
    %v2682 = vunpack.c.l.b16 %v300
    %v2683 = vunpack.c.h.b16 %v300
    %v2684 = vunpack.c.l.b16 %v301
    %v2685 = vunpack.c.h.b16 %v301
    %v2686 = vunpack.c.l.b16 %v302
    %v2687 = vunpack.c.h.b16 %v302
    %v2688 = vunpack.c.l.b16 %v303
    %v2689 = vunpack.c.h.b16 %v303
    %v2690 = vunpack.c.l.b16 %v304
    %v2691 = vunpack.c.h.b16 %v304
    %v2692 = vunpack.c.l.b16 %v305
    %v2693 = vunpack.c.h.b16 %v305
    %v2694 = vunpack.c.l.b16 %v306
    %v2695 = vunpack.c.h.b16 %v306
    %v2696 = vunpack.c.l.b16 %v307
    %v2697 = vunpack.c.h.b16 %v307
    %v2698 = vunpack.c.l.b16 %v308
    %v2699 = vunpack.c.h.b16 %v308
    %v2700 = vunpack.c.l.b16 %v309
    %v2701 = vunpack.c.h.b16 %v309
    %v2702 = vunpack.c.l.b16 %v310
    %v2703 = vunpack.c.h.b16 %v310
    %v2704 = vunpack.c.l.b16 %v311
    %v2705 = vunpack.c.h.b16 %v311
    %v2706 = vunpack.c.l.b16 %v312
    %v2707 = vunpack.c.h.b16 %v312
    %v2708 = vunpack.c.l.b16 %v313
    %v2709 = vunpack.c.h.b16 %v313
    %v2710 = vunpack.c.l.b16 %v314
    %v2711 = vunpack.c.h.b16 %v314
    %v2712 = vunpack.c.l.b16 %v315
    %v2713 = vunpack.c.h.b16 %v315
    %v2714 = vunpack.c.l.b16 %v316
    %v2715 = vunpack.c.h.b16 %v316
    %v2716 = vunpack.c.l.b16 %v317
    %v2717 = vunpack.c.h.b16 %v317
    %v2718 = vunpack.c.l.b16 %v318
    %v2719 = vunpack.c.h.b16 %v318
    %v2720 = vunpack.c.l.b16 %v319
    %v2721 = vunpack.c.h.b16 %v319
    %v2722 = vunpack.c.l.b16 %v320
    %v2723 = vunpack.c.h.b16 %v320
    %v2724 = vunpack.c.l.b16 %v321
    %v2725 = vunpack.c.h.b16 %v321
    %v2726 = vunpack.c.l.b16 %v322
    %v2727 = vunpack.c.h.b16 %v322
    %v2728 = vunpack.c.l.b16 %v323
    %v2729 = vunpack.c.h.b16 %v323
    %v2730 = vunpack.c.l.b16 %v324
    %v2731 = vunpack.c.h.b16 %v324
    %v2732 = vunpack.c.l.b16 %v325
    %v2733 = vunpack.c.h.b16 %v325
    %v2734 = vunpack.c.l.b16 %v326
    %v2735 = vunpack.c.h.b16 %v326
    %v2736 = vunpack.c.l.b16 %v327
    %v2737 = vunpack.c.h.b16 %v327
    %v2738 = vunpack.c.l.b16 %v328
    %v2739 = vunpack.c.h.b16 %v328
    %v2740 = vunpack.c.l.b16 %v329
    %v2741 = vunpack.c.h.b16 %v329
    %v2742 = vunpack.c.l.b16 %v330
    %v2743 = vunpack.c.h.b16 %v330
    %v2744 = vunpack.c.l.b16 %v331
    %v2745 = vunpack.c.h.b16 %v331
    %v2746 = vunpack.c.l.b16 %v332
    %v2747 = vunpack.c.h.b16 %v332
    %v2748 = vunpack.c.l.b16 %v333
    %v2749 = vunpack.c.h.b16 %v333
    %v2750 = vunpack.c.l.b16 %v334
    %v2751 = vunpack.c.h.b16 %v334
    %v2752 = vunpack.c.l.b16 %v335
    %v2753 = vunpack.c.h.b16 %v335
    %v2754 = vunpack.c.l.b16 %v336
    %v2755 = vunpack.c.h.b16 %v336
    %v2756 = vunpack.c.l.b16 %v337
    %v2757 = vunpack.c.h.b16 %v337
    %v2758 = vunpack.c.l.b16 %v338
    %v2759 = vunpack.c.h.b16 %v338
    %v2760 = vunpack.c.l.b16 %v339
    %v2761 = vunpack.c.h.b16 %v339
    %v2762 = vunpack.c.l.b16 %v340
    %v2763 = vunpack.c.h.b16 %v340
    %v2764 = vunpack.c.l.b16 %v341
    %v2765 = vunpack.c.h.b16 %v341
    %v2766 = vunpack.c.l.b16 %v342
    %v2767 = vunpack.c.h.b16 %v342
    %v2768 = vunpack.c.l.b16 %v343
    %v2769 = vunpack.c.h.b16 %v343
    %v2770 = vunpack.c.l.b16 %v344
    %v2771 = vunpack.c.h.b16 %v344
    %v2772 = vunpack.c.l.b16 %v345
    %v2773 = vunpack.c.h.b16 %v345
    %v2774 = vunpack.c.l.b16 %v346
    %v2775 = vunpack.c.h.b16 %v346
    %v2776 = vunpack.c.l.b16 %v347
    %v2777 = vunpack.c.h.b16 %v347
    %v2778 = vunpack.c.l.b16 %v348
    %v2779 = vunpack.c.h.b16 %v348
    %v2780 = vunpack.c.l.b16 %v349
    %v2781 = vunpack.c.h.b16 %v349
    %v2782 = vunpack.c.l.b16 %v350
    %v2783 = vunpack.c.h.b16 %v350
    %v2784 = vunpack.c.l.b16 %v351
    %v2785 = vunpack.c.h.b16 %v351
    %v2786 = vunpack.c.l.b16 %v352
    %v2787 = vunpack.c.h.b16 %v352
    %v2788 = vunpack.c.l.b16 %v353
    %v2789 = vunpack.c.h.b16 %v353
    %v2790 = vunpack.c.l.b16 %v354
    %v2791 = vunpack.c.h.b16 %v354
    %v2792 = vunpack.c.l.b16 %v355
    %v2793 = vunpack.c.h.b16 %v355
    %v2794 = vunpack.c.l.b16 %v356
    %v2795 = vunpack.c.h.b16 %v356
    %v2796 = vunpack.c.l.b16 %v357
    %v2797 = vunpack.c.h.b16 %v357
    %v2798 = vunpack.c.l.b16 %v358
    %v2799 = vunpack.c.h.b16 %v358
    %v2800 = vunpack.c.l.b16 %v359
    %v2801 = vunpack.c.h.b16 %v359
    %v2802 = vunpack.c.l.b16 %v360
    %v2803 = vunpack.c.h.b16 %v360
    %v2804 = vunpack.c.l.b16 %v361
    %v2805 = vunpack.c.h.b16 %v361
    %v2806 = vunpack.c.l.b16 %v362
    %v2807 = vunpack.c.h.b16 %v362
    %v2808 = vunpack.c.l.b16 %v363
    %v2809 = vunpack.c.h.b16 %v363
    %v2810 = vunpack.c.l.b16 %v364
    %v2811 = vunpack.c.h.b16 %v364
    %v2812 = vunpack.c.l.b16 %v365
    %v2813 = vunpack.c.h.b16 %v365
    %v2814 = vunpack.c.l.b16 %v366
    %v2815 = vunpack.c.h.b16 %v366
    %v2816 = vunpack.c.l.b16 %v367
    %v2817 = vunpack.c.h.b16 %v367
    %v2818 = vunpack.c.l.b16 %v368
    %v2819 = vunpack.c.h.b16 %v368
    %v2820 = vunpack.c.l.b16 %v369
    %v2821 = vunpack.c.h.b16 %v369
    %v2822 = vunpack.c.l.b16 %v370
    %v2823 = vunpack.c.h.b16 %v370
    %v2824 = vunpack.c.l.b16 %v371
    %v2825 = vunpack.c.h.b16 %v371
    %v2826 = vunpack.c.l.b16 %v372
    %v2827 = vunpack.c.h.b16 %v372
    %v2828 = vunpack.c.l.b16 %v373
    %v2829 = vunpack.c.h.b16 %v373
    %v2830 = vunpack.c.l.b16 %v374
    %v2831 = vunpack.c.h.b16 %v374
    %v2832 = vunpack.c.l.b16 %v375
    %v2833 = vunpack.c.h.b16 %v375
    %v2834 = vunpack.c.l.b16 %v376
    %v2835 = vunpack.c.h.b16 %v376
    %v2836 = vunpack.c.l.b16 %v377
    %v2837 = vunpack.c.h.b16 %v377
    %v2838 = vunpack.c.l.b16 %v378
    %v2839 = vunpack.c.h.b16 %v378
    %v2840 = vunpack.c.l.b16 %v379
    %v2841 = vunpack.c.h.b16 %v379
    %v2842 = vunpack.c.l.b16 %v380
    %v2843 = vunpack.c.h.b16 %v380
    %v2844 = vunpack.c.l.b16 %v381
    %v2845 = vunpack.c.h.b16 %v381
    %v2846 = vunpack.c.l.b16 %v382
    %v2847 = vunpack.c.h.b16 %v382
    %v2848 = vunpack.c.l.b16 %v383
    %v2849 = vunpack.c.h.b16 %v383
    %v2850 = vunpack.c.l.b16 %v384
    %v2851 = vunpack.c.h.b16 %v384
    %v2852 = vunpack.c.l.b16 %v385
    %v2853 = vunpack.c.h.b16 %v385
    %v2854 = vunpack.c.l.b16 %v386
    %v2855 = vunpack.c.h.b16 %v386
    %v2856 = vunpack.c.l.b16 %v387
    %v2857 = vunpack.c.h.b16 %v387
    %v2858 = vunpack.c.l.b16 %v388
    %v2859 = vunpack.c.h.b16 %v388
    %v2860 = vunpack.c.l.b16 %v389
    %v2861 = vunpack.c.h.b16 %v389
    %v2862 = vunpack.c.l.b16 %v390
    %v2863 = vunpack.c.h.b16 %v390
    %v2864 = vunpack.c.l.b16 %v391
    %v2865 = vunpack.c.h.b16 %v391
    %v2866 = vunpack.c.l.b16 %v392
    %v2867 = vunpack.c.h.b16 %v392
    %v2868 = vunpack.c.l.b16 %v393
    %v2869 = vunpack.c.h.b16 %v393
    %v2870 = vunpack.c.l.b16 %v394
    %v2871 = vunpack.c.h.b16 %v394
    %v2872 = vunpack.c.l.b16 %v395
    %v2873 = vunpack.c.h.b16 %v395
    %v2874 = vunpack.c.l.b16 %v396
    %v2875 = vunpack.c.h.b16 %v396
    %v2876 = vunpack.c.l.b16 %v397
    %v2877 = vunpack.c.h.b16 %v397
    %v2878 = vunpack.c.l.b16 %v398
    %v2879 = vunpack.c.h.b16 %v398
    %v2880 = vunpack.c.l.b16 %v399
    %v2881 = vunpack.c.h.b16 %v399
    %v2882 = vunpack.c.l.b16 %v400
    %v2883 = vunpack.c.h.b16 %v400
    %v2884 = vunpack.c.l.b16 %v401
    %v2885 = vunpack.c.h.b16 %v401
    %v2886 = vunpack.c.l.b16 %v402
    %v2887 = vunpack.c.h.b16 %v402
    %v2888 = vunpack.c.l.b16 %v403
    %v2889 = vunpack.c.h.b16 %v403
    %v2890 = vunpack.c.l.b16 %v404
    %v2891 = vunpack.c.h.b16 %v404
    %v2892 = vunpack.c.l.b16 %v405
    %v2893 = vunpack.c.h.b16 %v405
    %v2894 = vunpack.c.l.b16 %v406
    %v2895 = vunpack.c.h.b16 %v406
    %v2896 = vunpack.c.l.b16 %v407
    %v2897 = vunpack.c.h.b16 %v407
    %v2898 = vunpack.c.l.b16 %v408
    %v2899 = vunpack.c.h.b16 %v408
    %v2900 = vunpack.c.l.b16 %v409
    %v2901 = vunpack.c.h.b16 %v409
    %v2902 = vunpack.c.l.b16 %v410
    %v2903 = vunpack.c.h.b16 %v410
    %v2904 = vunpack.c.l.b16 %v411
    %v2905 = vunpack.c.h.b16 %v411
    %v2906 = vunpack.c.l.b16 %v412
    %v2907 = vunpack.c.h.b16 %v412
    %v2908 = vunpack.c.l.b16 %v413
    %v2909 = vunpack.c.h.b16 %v413
    %v2910 = vunpack.c.l.b16 %v414
    %v2911 = vunpack.c.h.b16 %v414
    %v2912 = vunpack.c.l.b16 %v415
    %v2913 = vunpack.c.h.b16 %v415
    %v2914 = vunpack.c.l.b16 %v416
    %v2915 = vunpack.c.h.b16 %v416
    %v2916 = vunpack.c.l.b16 %v417
    %v2917 = vunpack.c.h.b16 %v417
    %v2918 = vunpack.c.l.b16 %v418
    %v2919 = vunpack.c.h.b16 %v418
    %v2920 = vunpack.c.l.b16 %v419
    %v2921 = vunpack.c.h.b16 %v419
    %v2922 = vunpack.c.l.b16 %v420
    %v2923 = vunpack.c.h.b16 %v420
    %v2924 = vunpack.c.l.b16 %v421
    %v2925 = vunpack.c.h.b16 %v421
    %v2926 = vunpack.c.l.b16 %v422
    %v2927 = vunpack.c.h.b16 %v422
    %v2928 = vunpack.c.l.b16 %v423
    %v2929 = vunpack.c.h.b16 %v423
    %v2930 = vunpack.c.l.b16 %v424
    %v2931 = vunpack.c.h.b16 %v424
    %v2932 = vunpack.c.l.b16 %v425
    %v2933 = vunpack.c.h.b16 %v425
    %v2934 = vunpack.c.l.b16 %v426
    %v2935 = vunpack.c.h.b16 %v426
    %v2936 = vunpack.c.l.b16 %v427
    %v2937 = vunpack.c.h.b16 %v427
    %v2938 = vunpack.c.l.b16 %v428
    %v2939 = vunpack.c.h.b16 %v428
    %v2940 = vunpack.c.l.b16 %v429
    %v2941 = vunpack.c.h.b16 %v429
    %v2942 = vunpack.c.l.b16 %v430
    %v2943 = vunpack.c.h.b16 %v430
    %v2944 = vunpack.c.l.b16 %v431
    %v2945 = vunpack.c.h.b16 %v431
    %v2946 = vunpack.c.l.b16 %v432
    %v2947 = vunpack.c.h.b16 %v432
    %v2948 = vunpack.c.l.b16 %v433
    %v2949 = vunpack.c.h.b16 %v433
    %v2950 = vunpack.c.l.b16 %v434
    %v2951 = vunpack.c.h.b16 %v434
    %v2952 = vunpack.c.l.b16 %v435
    %v2953 = vunpack.c.h.b16 %v435
    %v2954 = vunpack.c.l.b16 %v436
    %v2955 = vunpack.c.h.b16 %v436
    %v2956 = vunpack.c.l.b16 %v437
    %v2957 = vunpack.c.h.b16 %v437
    %v2958 = vunpack.c.l.b16 %v438
    %v2959 = vunpack.c.h.b16 %v438
    %v2960 = vunpack.c.l.b16 %v439
    %v2961 = vunpack.c.h.b16 %v439
    %v2962 = vunpack.c.l.b16 %v440
    %v2963 = vunpack.c.h.b16 %v440
    %v2964 = vunpack.c.l.b16 %v441
    %v2965 = vunpack.c.h.b16 %v441
    %v2966 = vunpack.c.l.b16 %v442
    %v2967 = vunpack.c.h.b16 %v442
    %v2968 = vunpack.c.l.b16 %v443
    %v2969 = vunpack.c.h.b16 %v443
    %v2970 = vunpack.c.l.b16 %v444
    %v2971 = vunpack.c.h.b16 %v444
    %v2972 = vunpack.c.l.b16 %v445
    %v2973 = vunpack.c.h.b16 %v445
    %v2974 = vunpack.c.l.b16 %v446
    %v2975 = vunpack.c.h.b16 %v446
    %v2976 = vunpack.c.l.b16 %v447
    %v2977 = vunpack.c.h.b16 %v447
    %v2978 = vunpack.c.l.b16 %v448
    %v2979 = vunpack.c.h.b16 %v448
    %v2980 = vunpack.c.l.b16 %v449
    %v2981 = vunpack.c.h.b16 %v449
    %v2982 = vunpack.c.l.b16 %v450
    %v2983 = vunpack.c.h.b16 %v450
    %v2984 = vunpack.c.l.b16 %v451
    %v2985 = vunpack.c.h.b16 %v451
    %v2986 = vunpack.c.l.b16 %v452
    %v2987 = vunpack.c.h.b16 %v452
    %v2988 = vunpack.c.l.b16 %v453
    %v2989 = vunpack.c.h.b16 %v453
    %v2990 = vunpack.c.l.b16 %v454
    %v2991 = vunpack.c.h.b16 %v454
    %v2992 = vunpack.c.l.b16 %v455
    %v2993 = vunpack.c.h.b16 %v455
    %v2994 = vunpack.c.l.b16 %v456
    %v2995 = vunpack.c.h.b16 %v456
    %v2996 = vunpack.c.l.b16 %v457
    %v2997 = vunpack.c.h.b16 %v457
    %v2998 = vunpack.c.l.b16 %v458
    %v2999 = vunpack.c.h.b16 %v458
    %v3000 = vunpack.c.l.b16 %v459
    %v3001 = vunpack.c.h.b16 %v459
    %v3002 = vunpack.c.l.b16 %v460
    %v3003 = vunpack.c.h.b16 %v460
    %v3004 = vunpack.c.l.b16 %v461
    %v3005 = vunpack.c.h.b16 %v461
    %v3006 = vunpack.c.l.b16 %v462
    %v3007 = vunpack.c.h.b16 %v462
    %v3008 = vunpack.c.l.b16 %v463
    %v3009 = vunpack.c.h.b16 %v463
    %v3010 = vunpack.c.l.b16 %v464
    %v3011 = vunpack.c.h.b16 %v464
    %v3012 = vunpack.c.l.b16 %v465
    %v3013 = vunpack.c.h.b16 %v465
    %v3014 = vunpack.c.l.b16 %v466
    %v3015 = vunpack.c.h.b16 %v466
    %v3016 = vunpack.c.l.b16 %v467
    %v3017 = vunpack.c.h.b16 %v467
    %v3018 = vunpack.c.l.b16 %v468
    %v3019 = vunpack.c.h.b16 %v468
    %v3020 = vunpack.c.l.b16 %v469
    %v3021 = vunpack.c.h.b16 %v469
    %v3022 = vunpack.c.l.b16 %v470
    %v3023 = vunpack.c.h.b16 %v470
    %v3024 = vunpack.c.l.b16 %v471
    %v3025 = vunpack.c.h.b16 %v471
    %v3026 = vunpack.c.l.b16 %v472
    %v3027 = vunpack.c.h.b16 %v472
    %v3028 = vunpack.c.l.b16 %v473
    %v3029 = vunpack.c.h.b16 %v473
    %v3030 = vunpack.c.l.b16 %v474
    %v3031 = vunpack.c.h.b16 %v474
    %v3032 = vunpack.c.l.b16 %v475
    %v3033 = vunpack.c.h.b16 %v475
    %v3034 = vunpack.c.l.b16 %v476
    %v3035 = vunpack.c.h.b16 %v476
    %v3036 = vunpack.c.l.b16 %v477
    %v3037 = vunpack.c.h.b16 %v477
    %v3038 = vunpack.c.l.b16 %v478
    %v3039 = vunpack.c.h.b16 %v478
    %v3040 = vunpack.c.l.b16 %v479
    %v3041 = vunpack.c.h.b16 %v479
    %v3042 = vunpack.c.l.b16 %v480
    %v3043 = vunpack.c.h.b16 %v480
    %v3044 = vunpack.c.l.b16 %v481
    %v3045 = vunpack.c.h.b16 %v481
    %v3046 = vunpack.c.l.b16 %v482
    %v3047 = vunpack.c.h.b16 %v482
    %v3048 = vunpack.c.l.b16 %v483
    %v3049 = vunpack.c.h.b16 %v483
    %v3050 = vunpack.c.l.b16 %v484
    %v3051 = vunpack.c.h.b16 %v484
    %v3052 = vunpack.c.l.b16 %v485
    %v3053 = vunpack.c.h.b16 %v485
    %v3054 = vunpack.c.l.b16 %v486
    %v3055 = vunpack.c.h.b16 %v486
    %v3056 = vunpack.c.l.b16 %v487
    %v3057 = vunpack.c.h.b16 %v487
    %v3058 = vunpack.c.l.b16 %v488
    %v3059 = vunpack.c.h.b16 %v488
    %v3060 = vunpack.c.l.b16 %v489
    %v3061 = vunpack.c.h.b16 %v489
    %v3062 = vunpack.c.l.b16 %v490
    %v3063 = vunpack.c.h.b16 %v490
    %v3064 = vunpack.c.l.b16 %v491
    %v3065 = vunpack.c.h.b16 %v491
    %v3066 = vunpack.c.l.b16 %v492
    %v3067 = vunpack.c.h.b16 %v492
    %v3068 = vunpack.c.l.b16 %v493
    %v3069 = vunpack.c.h.b16 %v493
    %v3070 = vunpack.c.l.b16 %v494
    %v3071 = vunpack.c.h.b16 %v494
    %v3072 = vunpack.c.l.b16 %v495
    %v3073 = vunpack.c.h.b16 %v495
    %v3074 = vunpack.c.l.b16 %v496
    %v3075 = vunpack.c.h.b16 %v496
    %v3076 = vunpack.c.l.b16 %v497
    %v3077 = vunpack.c.h.b16 %v497
    %v3078 = vunpack.c.l.b16 %v498
    %v3079 = vunpack.c.h.b16 %v498
    %v3080 = vunpack.c.l.b16 %v499
    %v3081 = vunpack.c.h.b16 %v499
    %v3082 = vunpack.c.l.b16 %v500
    %v3083 = vunpack.c.h.b16 %v500
    %v3084 = vunpack.c.l.b16 %v501
    %v3085 = vunpack.c.h.b16 %v501
    %v3086 = vunpack.c.l.b16 %v502
    %v3087 = vunpack.c.h.b16 %v502
    %v3088 = vunpack.c.l.b16 %v503
    %v3089 = vunpack.c.h.b16 %v503
    %v3090 = vunpack.c.l.b16 %v504
    %v3091 = vunpack.c.h.b16 %v504
    %v3092 = vunpack.c.l.b16 %v505
    %v3093 = vunpack.c.h.b16 %v505
    %v3094 = vunpack.c.l.b16 %v506
    %v3095 = vunpack.c.h.b16 %v506
    %v3096 = vunpack.c.l.b16 %v507
    %v3097 = vunpack.c.h.b16 %v507
    %v3098 = vunpack.c.l.b16 %v508
    %v3099 = vunpack.c.h.b16 %v508
    %v3100 = vunpack.c.l.b16 %v509
    %v3101 = vunpack.c.h.b16 %v509
    %v3102 = vunpack.c.l.b16 %v510
    %v3103 = vunpack.c.h.b16 %v510
    %v3104 = vunpack.c.l.b16 %v511
    %v3105 = vunpack.c.h.b16 %v511
    %v3106 = vunpack.c.l.b16 %v512
    %v3107 = vunpack.c.h.b16 %v512
    %v3108 = vunpack.c.l.b16 %v513
    %v3109 = vunpack.c.h.b16 %v513
    %v3110 = vunpack.c.l.b16 %v514
    %v3111 = vunpack.c.h.b16 %v514
    %v3112 = vunpack.c.l.b16 %v515
    %v3113 = vunpack.c.h.b16 %v515
    %v3114 = vunpack.c.l.b16 %v516
    %v3115 = vunpack.c.h.b16 %v516
    %v3116 = vunpack.c.l.b16 %v517
    %v3117 = vunpack.c.h.b16 %v517
    %v3118 = vunpack.c.l.b16 %v518
    %v3119 = vunpack.c.h.b16 %v518
    %v3120 = vunpack.c.l.b16 %v519
    %v3121 = vunpack.c.h.b16 %v519
    %v3122 = vunpack.c.l.b16 %v520
    %v3123 = vunpack.c.h.b16 %v520
    %v3124 = vunpack.c.l.b16 %v521
    %v3125 = vunpack.c.h.b16 %v521
    %v3126 = vunpack.c.l.b16 %v522
    %v3127 = vunpack.c.h.b16 %v522
    %v3128 = vunpack.c.l.b16 %v523
    %v3129 = vunpack.c.h.b16 %v523
    %v3130 = vunpack.c.l.b16 %v524
    %v3131 = vunpack.c.h.b16 %v524
    %v3132 = vunpack.c.l.b16 %v525
    %v3133 = vunpack.c.h.b16 %v525
    %v3134 = vunpack.c.l.b16 %v526
    %v3135 = vunpack.c.h.b16 %v526
    %v3136 = vunpack.c.l.b16 %v527
    %v3137 = vunpack.c.h.b16 %v527
    %v3138 = vunpack.c.l.b16 %v528
    %v3139 = vunpack.c.h.b16 %v528
    %v3140 = vunpack.c.l.b16 %v529
    %v3141 = vunpack.c.h.b16 %v529
    %v3142 = vunpack.c.l.b16 %v530
    %v3143 = vunpack.c.h.b16 %v530
    %v3144 = vunpack.c.l.b16 %v531
    %v3145 = vunpack.c.h.b16 %v531
    %v3146 = vunpack.c.l.b16 %v532
    %v3147 = vunpack.c.h.b16 %v532
    %v3148 = vunpack.c.l.b16 %v533
    %v3149 = vunpack.c.h.b16 %v533
    %v3150 = vunpack.c.l.b16 %v534
    %v3151 = vunpack.c.h.b16 %v534
    %v3152 = vunpack.c.l.b16 %v535
    %v3153 = vunpack.c.h.b16 %v535
    %v3154 = vunpack.c.l.b16 %v536
    %v3155 = vunpack.c.h.b16 %v536
    %v3156 = vunpack.c.l.b16 %v537
    %v3157 = vunpack.c.h.b16 %v537
    %v3158 = vunpack.c.l.b16 %v538
    %v3159 = vunpack.c.h.b16 %v538
    %v3160 = vunpack.c.l.b16 %v539
    %v3161 = vunpack.c.h.b16 %v539
    %v3162 = vunpack.c.l.b16 %v540
    %v3163 = vunpack.c.h.b16 %v540
    %v3164 = vunpack.c.l.b16 %v541
    %v3165 = vunpack.c.h.b16 %v541
    %v3166 = vunpack.c.l.b16 %v542
    %v3167 = vunpack.c.h.b16 %v542
    %v3168 = vunpack.c.l.b16 %v543
    %v3169 = vunpack.c.h.b16 %v543
    %v3170 = vunpack.c.l.b16 %v544
    %v3171 = vunpack.c.h.b16 %v544
    %v3172 = vunpack.c.l.b16 %v545
    %v3173 = vunpack.c.h.b16 %v545
    %v3174 = vunpack.c.l.b16 %v546
    %v3175 = vunpack.c.h.b16 %v546
    %v3176 = vunpack.c.l.b16 %v547
    %v3177 = vunpack.c.h.b16 %v547
    %v3178 = vunpack.c.l.b16 %v548
    %v3179 = vunpack.c.h.b16 %v548
    %v3180 = vunpack.c.l.b16 %v549
    %v3181 = vunpack.c.h.b16 %v549
    %v3182 = vunpack.c.l.b16 %v550
    %v3183 = vunpack.c.h.b16 %v550
    %v3184 = vunpack.c.l.b16 %v551
    %v3185 = vunpack.c.h.b16 %v551
    %v3186 = vunpack.c.l.b16 %v552
    %v3187 = vunpack.c.h.b16 %v552
    %v3188 = vunpack.c.l.b16 %v553
    %v3189 = vunpack.c.h.b16 %v553
    %v3190 = vunpack.c.l.b16 %v554
    %v3191 = vunpack.c.h.b16 %v554
    %v3192 = vunpack.c.l.b16 %v555
    %v3193 = vunpack.c.h.b16 %v555
    %v3194 = vunpack.c.l.b16 %v556
    %v3195 = vunpack.c.h.b16 %v556
    %v3196 = vunpack.c.l.b16 %v557
    %v3197 = vunpack.c.h.b16 %v557
    %v3198 = vunpack.c.l.b16 %v558
    %v3199 = vunpack.c.h.b16 %v558
    %v3200 = vunpack.c.l.b16 %v559
    %v3201 = vunpack.c.h.b16 %v559
    %v3202 = vunpack.c.l.b16 %v560
    %v3203 = vunpack.c.h.b16 %v560
    %v3204 = vunpack.c.l.b16 %v561
    %v3205 = vunpack.c.h.b16 %v561
    %v3206 = vunpack.c.l.b16 %v562
    %v3207 = vunpack.c.h.b16 %v562
    %v3208 = vunpack.c.l.b16 %v563
    %v3209 = vunpack.c.h.b16 %v563
    %v3210 = vunpack.c.l.b16 %v564
    %v3211 = vunpack.c.h.b16 %v564
    %v3212 = vunpack.c.l.b16 %v565
    %v3213 = vunpack.c.h.b16 %v565
    %v3214 = vunpack.c.l.b16 %v566
    %v3215 = vunpack.c.h.b16 %v566
    %v3216 = vunpack.c.l.b16 %v567
    %v3217 = vunpack.c.h.b16 %v567
    %v3218 = vunpack.c.l.b16 %v568
    %v3219 = vunpack.c.h.b16 %v568
    %v3220 = vunpack.c.l.b16 %v569
    %v3221 = vunpack.c.h.b16 %v569
    %v3222 = vunpack.c.l.b16 %v570
    %v3223 = vunpack.c.h.b16 %v570
    %v3224 = vunpack.c.l.b16 %v571
    %v3225 = vunpack.c.h.b16 %v571
    %v3226 = vunpack.c.l.b16 %v572
    %v3227 = vunpack.c.h.b16 %v572
    %v3228 = vunpack.c.l.b16 %v573
    %v3229 = vunpack.c.h.b16 %v573
    %v3230 = vunpack.c.l.b16 %v574
    %v3231 = vunpack.c.h.b16 %v574
    %v3232 = vunpack.c.l.b16 %v575
    %v3233 = vunpack.c.h.b16 %v575
    %v3234 = vunpack.c.l.b16 %v576
    %v3235 = vunpack.c.h.b16 %v576
    %v3236 = vunpack.c.l.b16 %v577
    %v3237 = vunpack.c.h.b16 %v577
    %v3238 = vunpack.c.l.b16 %v578
    %v3239 = vunpack.c.h.b16 %v578
    %v3240 = vunpack.c.l.b16 %v579
    %v3241 = vunpack.c.h.b16 %v579
    %v3242 = vunpack.c.l.b16 %v580
    %v3243 = vunpack.c.h.b16 %v580
    %v3244 = vunpack.c.l.b16 %v581
    %v3245 = vunpack.c.h.b16 %v581
    %v3246 = vunpack.c.l.b16 %v582
    %v3247 = vunpack.c.h.b16 %v582
    %v3248 = vunpack.c.l.b16 %v583
    %v3249 = vunpack.c.h.b16 %v583
    %v3250 = vunpack.c.l.b16 %v584
    %v3251 = vunpack.c.h.b16 %v584
    %v3252 = vunpack.c.l.b16 %v585
    %v3253 = vunpack.c.h.b16 %v585
    %v3254 = vunpack.c.l.b16 %v586
    %v3255 = vunpack.c.h.b16 %v586
    %v3256 = vunpack.c.l.b16 %v587
    %v3257 = vunpack.c.h.b16 %v587
    %v3258 = vunpack.c.l.b16 %v588
    %v3259 = vunpack.c.h.b16 %v588
    %v3260 = vunpack.c.l.b16 %v589
    %v3261 = vunpack.c.h.b16 %v589
    %v3262 = vunpack.c.l.b16 %v590
    %v3263 = vunpack.c.h.b16 %v590
    %v3264 = vunpack.c.l.b16 %v591
    %v3265 = vunpack.c.h.b16 %v591
    %v3266 = vunpack.c.l.b16 %v592
    %v3267 = vunpack.c.h.b16 %v592
    %v3268 = vunpack.c.l.b16 %v593
    %v3269 = vunpack.c.h.b16 %v593
    %v3270 = vunpack.c.l.b16 %v594
    %v3271 = vunpack.c.h.b16 %v594
    %v3272 = vunpack.c.l.b16 %v595
    %v3273 = vunpack.c.h.b16 %v595
    %v3274 = vunpack.c.l.b16 %v596
    %v3275 = vunpack.c.h.b16 %v596
    %v3276 = vunpack.c.l.b16 %v597
    %v3277 = vunpack.c.h.b16 %v597
    %v3278 = vunpack.c.l.b16 %v598
    %v3279 = vunpack.c.h.b16 %v598
    %v3280 = vunpack.c.l.b16 %v599
    %v3281 = vunpack.c.h.b16 %v599
    %v3282 = vunpack.c.l.b16 %v600
    %v3283 = vunpack.c.h.b16 %v600
    %v3284 = vunpack.c.l.b16 %v601
    %v3285 = vunpack.c.h.b16 %v601
    %v3286 = vunpack.c.l.b16 %v602
    %v3287 = vunpack.c.h.b16 %v602
    %v3288 = vunpack.c.l.b16 %v603
    %v3289 = vunpack.c.h.b16 %v603
    %v3290 = vunpack.c.l.b16 %v604
    %v3291 = vunpack.c.h.b16 %v604
    %v3292 = vunpack.c.l.b16 %v605
    %v3293 = vunpack.c.h.b16 %v605
    %v3294 = vunpack.c.l.b16 %v606
    %v3295 = vunpack.c.h.b16 %v606
    %v3296 = vunpack.c.l.b16 %v607
    %v3297 = vunpack.c.h.b16 %v607
    %v3298 = vunpack.c.l.b16 %v608
    %v3299 = vunpack.c.h.b16 %v608
    %v3300 = vunpack.c.l.b16 %v609
    %v3301 = vunpack.c.h.b16 %v609
    %v3302 = vunpack.c.l.b16 %v610
    %v3303 = vunpack.c.h.b16 %v610
    %v3304 = vunpack.c.l.b16 %v611
    %v3305 = vunpack.c.h.b16 %v611
    %v3306 = vunpack.c.l.b16 %v612
    %v3307 = vunpack.c.h.b16 %v612
    %v3308 = vunpack.c.l.b16 %v613
    %v3309 = vunpack.c.h.b16 %v613
    %v3310 = vunpack.c.l.b16 %v614
    %v3311 = vunpack.c.h.b16 %v614
    %v3312 = vunpack.c.l.b16 %v615
    %v3313 = vunpack.c.h.b16 %v615
    %v3314 = vunpack.c.l.b16 %v616
    %v3315 = vunpack.c.h.b16 %v616
    %v3316 = vunpack.c.l.b16 %v617
    %v3317 = vunpack.c.h.b16 %v617
    %v3318 = vunpack.c.l.b16 %v618
    %v3319 = vunpack.c.h.b16 %v618
    %v3320 = vunpack.c.l.b16 %v619
    %v3321 = vunpack.c.h.b16 %v619
    %v3322 = vunpack.c.l.b16 %v620
    %v3323 = vunpack.c.h.b16 %v620
    %v3324 = vunpack.c.l.b16 %v621
    %v3325 = vunpack.c.h.b16 %v621
    %v3326 = vunpack.c.l.b16 %v622
    %v3327 = vunpack.c.h.b16 %v622
    %v3328 = vunpack.c.l.b16 %v623
    %v3329 = vunpack.c.h.b16 %v623
    %v3330 = vunpack.c.l.b16 %v624
    %v3331 = vunpack.c.h.b16 %v624
    %v3332 = vunpack.c.l.b16 %v625
    %v3333 = vunpack.c.h.b16 %v625
    %v3334 = vunpack.c.l.b16 %v626
    %v3335 = vunpack.c.h.b16 %v626
    %v3336 = vunpack.c.l.b16 %v627
    %v3337 = vunpack.c.h.b16 %v627
    %v3338 = vunpack.c.l.b16 %v628
    %v3339 = vunpack.c.h.b16 %v628
    %v3340 = vunpack.c.l.b16 %v629
    %v3341 = vunpack.c.h.b16 %v629
    %v3342 = vunpack.c.l.b16 %v630
    %v3343 = vunpack.c.h.b16 %v630
    %v3344 = vunpack.c.l.b16 %v631
    %v3345 = vunpack.c.h.b16 %v631
    %v3346 = vunpack.c.l.b16 %v632
    %v3347 = vunpack.c.h.b16 %v632
    %v3348 = vunpack.c.l.b16 %v633
    %v3349 = vunpack.c.h.b16 %v633
    %v3350 = vunpack.c.l.b16 %v634
    %v3351 = vunpack.c.h.b16 %v634
    %v3352 = vunpack.c.l.b16 %v635
    %v3353 = vunpack.c.h.b16 %v635
    %v3354 = vunpack.c.l.b16 %v636
    %v3355 = vunpack.c.h.b16 %v636
    %v3356 = vunpack.c.l.b16 %v637
    %v3357 = vunpack.c.h.b16 %v637
    %v3358 = vunpack.c.l.b16 %v638
    %v3359 = vunpack.c.h.b16 %v638
    %v3360 = vunpack.c.l.b16 %v639
    %v3361 = vunpack.c.h.b16 %v639
    %v3362 = vunpack.c.l.b16 %v640
    %v3363 = vunpack.c.h.b16 %v640
    %v3364 = vunpack.c.l.b16 %v641
    %v3365 = vunpack.c.h.b16 %v641
    %v3366 = vunpack.c.l.b16 %v642
    %v3367 = vunpack.c.h.b16 %v642
    %v3368 = vunpack.c.l.b16 %v643
    %v3369 = vunpack.c.h.b16 %v643
    %v3370 = vunpack.c.l.b16 %v644
    %v3371 = vunpack.c.h.b16 %v644
    %v3372 = vunpack.c.l.b16 %v645
    %v3373 = vunpack.c.h.b16 %v645
    %v3374 = vunpack.c.l.b16 %v646
    %v3375 = vunpack.c.h.b16 %v646
    %v3376 = vunpack.c.l.b16 %v647
    %v3377 = vunpack.c.h.b16 %v647
    %v3378 = vunpack.c.l.b16 %v648
    %v3379 = vunpack.c.h.b16 %v648
    %v3380 = vunpack.c.l.b16 %v649
    %v3381 = vunpack.c.h.b16 %v649
    %v3382 = vunpack.c.l.b16 %v650
    %v3383 = vunpack.c.h.b16 %v650
    %v3384 = vunpack.c.l.b16 %v651
    %v3385 = vunpack.c.h.b16 %v651
    %v3386 = vunpack.c.l.b16 %v652
    %v3387 = vunpack.c.h.b16 %v652
    %v3388 = vunpack.c.l.b16 %v653
    %v3389 = vunpack.c.h.b16 %v653
    %v3390 = vunpack.c.l.b16 %v654
    %v3391 = vunpack.c.h.b16 %v654
    %v3392 = vunpack.c.l.b16 %v655
    %v3393 = vunpack.c.h.b16 %v655
    %v3394 = vunpack.c.l.b16 %v656
    %v3395 = vunpack.c.h.b16 %v656
    %v3396 = vunpack.c.l.b16 %v657
    %v3397 = vunpack.c.h.b16 %v657
    %v3398 = vunpack.c.l.b16 %v658
    %v3399 = vunpack.c.h.b16 %v658
    %v3400 = vunpack.c.l.b16 %v659
    %v3401 = vunpack.c.h.b16 %v659
    %v3402 = vunpack.c.l.b16 %v660
    %v3403 = vunpack.c.h.b16 %v660
    %v3404 = vunpack.c.l.b16 %v661
    %v3405 = vunpack.c.h.b16 %v661
    %v3406 = vunpack.c.l.b16 %v662
    %v3407 = vunpack.c.h.b16 %v662
    %v3408 = vunpack.c.l.b16 %v663
    %v3409 = vunpack.c.h.b16 %v663
    %v3410 = vunpack.c.l.b16 %v664
    %v3411 = vunpack.c.h.b16 %v664
    %v3412 = vunpack.c.l.b16 %v665
    %v3413 = vunpack.c.h.b16 %v665
    %v3414 = vunpack.c.l.b16 %v666
    %v3415 = vunpack.c.h.b16 %v666
    %v3416 = vunpack.c.l.b16 %v667
    %v3417 = vunpack.c.h.b16 %v667
    %v3418 = vunpack.c.l.b16 %v668
    %v3419 = vunpack.c.h.b16 %v668
    %v3420 = vunpack.c.l.b16 %v669
    %v3421 = vunpack.c.h.b16 %v669
    %v3422 = vunpack.c.l.b16 %v670
    %v3423 = vunpack.c.h.b16 %v670
    %v3424 = vunpack.c.l.b16 %v671
    %v3425 = vunpack.c.h.b16 %v671
    %v3426 = vunpack.c.l.b16 %v672
    %v3427 = vunpack.c.h.b16 %v672
    %v3428 = vunpack.c.l.b16 %v673
    %v3429 = vunpack.c.h.b16 %v673
    %v3430 = vunpack.c.l.b16 %v674
    %v3431 = vunpack.c.h.b16 %v674
    %v3432 = vunpack.c.l.b16 %v675
    %v3433 = vunpack.c.h.b16 %v675
    %v3434 = vunpack.c.l.b16 %v676
    %v3435 = vunpack.c.h.b16 %v676
    %v3436 = vunpack.c.l.b16 %v677
    %v3437 = vunpack.c.h.b16 %v677
    %v3438 = vunpack.c.l.b16 %v678
    %v3439 = vunpack.c.h.b16 %v678
    %v3440 = vunpack.c.l.b16 %v679
    %v3441 = vunpack.c.h.b16 %v679
    %v3442 = vunpack.c.l.b16 %v680
    %v3443 = vunpack.c.h.b16 %v680
    %v3444 = vunpack.c.l.b16 %v681
    %v3445 = vunpack.c.h.b16 %v681
    %v3446 = vunpack.c.l.b16 %v682
    %v3447 = vunpack.c.h.b16 %v682
    %v3448 = vunpack.c.l.b16 %v683
    %v3449 = vunpack.c.h.b16 %v683
    %v3450 = vunpack.c.l.b16 %v684
    %v3451 = vunpack.c.h.b16 %v684
    %v3452 = vunpack.c.l.b16 %v685
    %v3453 = vunpack.c.h.b16 %v685
    %v3454 = vunpack.c.l.b16 %v686
    %v3455 = vunpack.c.h.b16 %v686
    %v3456 = vunpack.c.l.b16 %v687
    %v3457 = vunpack.c.h.b16 %v687
    %v3458 = vunpack.c.l.b16 %v688
    %v3459 = vunpack.c.h.b16 %v688
    %v3460 = vunpack.c.l.b16 %v689
    %v3461 = vunpack.c.h.b16 %v689
    %v3462 = vunpack.c.l.b16 %v690
    %v3463 = vunpack.c.h.b16 %v690
    %v3464 = vunpack.c.l.b16 %v691
    %v3465 = vunpack.c.h.b16 %v691
    %v3466 = vunpack.c.l.b16 %v692
    %v3467 = vunpack.c.h.b16 %v692
    %v3468 = vunpack.c.l.b16 %v693
    %v3469 = vunpack.c.h.b16 %v693
    %v3470 = vunpack.c.l.b16 %v694
    %v3471 = vunpack.c.h.b16 %v694
    %v3472 = vunpack.c.l.b16 %v695
    %v3473 = vunpack.c.h.b16 %v695
    %v3474 = vunpack.c.l.b16 %v696
    %v3475 = vunpack.c.h.b16 %v696
    %v3476 = vunpack.c.l.b16 %v697
    %v3477 = vunpack.c.h.b16 %v697
    %v3478 = vunpack.c.l.b16 %v698
    %v3479 = vunpack.c.h.b16 %v698
    %v3480 = vunpack.c.l.b16 %v699
    %v3481 = vunpack.c.h.b16 %v699
    %v3482 = vunpack.c.l.b16 %v700
    %v3483 = vunpack.c.h.b16 %v700
    %v3484 = vunpack.c.l.b16 %v701
    %v3485 = vunpack.c.h.b16 %v701
    %v3486 = vunpack.c.l.b16 %v702
    %v3487 = vunpack.c.h.b16 %v702
    %v3488 = vunpack.c.l.b16 %v703
    %v3489 = vunpack.c.h.b16 %v703
    %v3490 = vunpack.c.l.b16 %v704
    %v3491 = vunpack.c.h.b16 %v704
    %v3492 = vunpack.c.l.b16 %v705
    %v3493 = vunpack.c.h.b16 %v705
    %v3494 = vunpack.c.l.b16 %v706
    %v3495 = vunpack.c.h.b16 %v706
    %v3496 = vunpack.c.l.b16 %v707
    %v3497 = vunpack.c.h.b16 %v707
    %v3498 = vunpack.c.l.b16 %v708
    %v3499 = vunpack.c.h.b16 %v708
    %v3500 = vunpack.c.l.b16 %v709
    %v3501 = vunpack.c.h.b16 %v709
    %v3502 = vunpack.c.l.b16 %v710
    %v3503 = vunpack.c.h.b16 %v710
    %v3504 = vunpack.c.l.b16 %v711
    %v3505 = vunpack.c.h.b16 %v711
    %v3506 = vunpack.c.l.b16 %v712
    %v3507 = vunpack.c.h.b16 %v712
    %v3508 = vunpack.c.l.b16 %v713
    %v3509 = vunpack.c.h.b16 %v713
    %v3510 = vunpack.c.l.b16 %v714
    %v3511 = vunpack.c.h.b16 %v714
    %v3512 = vunpack.c.l.b16 %v715
    %v3513 = vunpack.c.h.b16 %v715
    %v3514 = vunpack.c.l.b16 %v716
    %v3515 = vunpack.c.h.b16 %v716
    %v3516 = vunpack.c.l.b16 %v717
    %v3517 = vunpack.c.h.b16 %v717
    %v3518 = vunpack.c.l.b16 %v718
    %v3519 = vunpack.c.h.b16 %v718
    %v3520 = vunpack.c.l.b16 %v719
    %v3521 = vunpack.c.h.b16 %v719
    %v3522 = vunpack.c.l.b16 %v720
    %v3523 = vunpack.c.h.b16 %v720
    %v3524 = vunpack.c.l.b16 %v721
    %v3525 = vunpack.c.h.b16 %v721
    %v3526 = vunpack.c.l.b16 %v722
    %v3527 = vunpack.c.h.b16 %v722
    %v3528 = vunpack.c.l.b16 %v723
    %v3529 = vunpack.c.h.b16 %v723
    %v3530 = vunpack.c.l.b16 %v724
    %v3531 = vunpack.c.h.b16 %v724
    %v3532 = vunpack.c.l.b16 %v725
    %v3533 = vunpack.c.h.b16 %v725
    %v3534 = vunpack.c.l.b16 %v726
    %v3535 = vunpack.c.h.b16 %v726
    %v3536 = vunpack.c.l.b16 %v727
    %v3537 = vunpack.c.h.b16 %v727
    %v3538 = vunpack.c.l.b16 %v728
    %v3539 = vunpack.c.h.b16 %v728
    %v3540 = vunpack.c.l.b16 %v729
    %v3541 = vunpack.c.h.b16 %v729
    %v3542 = vunpack.c.l.b16 %v730
    %v3543 = vunpack.c.h.b16 %v730
    %v3544 = vunpack.c.l.b16 %v731
    %v3545 = vunpack.c.h.b16 %v731
    %v3546 = vunpack.c.l.b16 %v732
    %v3547 = vunpack.c.h.b16 %v732
    %v3548 = vunpack.c.l.b16 %v733
    %v3549 = vunpack.c.h.b16 %v733
    %v3550 = vunpack.c.l.b16 %v734
    %v3551 = vunpack.c.h.b16 %v734
    %v3552 = vunpack.c.l.b16 %v735
    %v3553 = vunpack.c.h.b16 %v735
    %v3554 = vunpack.c.l.b16 %v736
    %v3555 = vunpack.c.h.b16 %v736
    %v3556 = vunpack.c.l.b16 %v737
    %v3557 = vunpack.c.h.b16 %v737
    %v3558 = vunpack.c.l.b16 %v738
    %v3559 = vunpack.c.h.b16 %v738
    %v3560 = vunpack.c.l.b16 %v739
    %v3561 = vunpack.c.h.b16 %v739
    %v3562 = vunpack.c.l.b16 %v740
    %v3563 = vunpack.c.h.b16 %v740
    %v3564 = vunpack.c.l.b16 %v741
    %v3565 = vunpack.c.h.b16 %v741
    %v3566 = vunpack.c.l.b16 %v742
    %v3567 = vunpack.c.h.b16 %v742
    %v3568 = vunpack.c.l.b16 %v743
    %v3569 = vunpack.c.h.b16 %v743
    %v3570 = vunpack.c.l.b16 %v744
    %v3571 = vunpack.c.h.b16 %v744
    %v3572 = vunpack.c.l.b16 %v745
    %v3573 = vunpack.c.h.b16 %v745
    %v3574 = vunpack.c.l.b16 %v746
    %v3575 = vunpack.c.h.b16 %v746
    %v3576 = vunpack.c.l.b16 %v747
    %v3577 = vunpack.c.h.b16 %v747
    %v3578 = vunpack.c.l.b16 %v748
    %v3579 = vunpack.c.h.b16 %v748
    %v3580 = vunpack.c.l.b16 %v749
    %v3581 = vunpack.c.h.b16 %v749
    %v3582 = vunpack.c.l.b16 %v750
    %v3583 = vunpack.c.h.b16 %v750
    %v3584 = vunpack.c.l.b16 %v751
    %v3585 = vunpack.c.h.b16 %v751
    %v3586 = vunpack.c.l.b16 %v752
    %v3587 = vunpack.c.h.b16 %v752
    %v3588 = vunpack.c.l.b16 %v753
    %v3589 = vunpack.c.h.b16 %v753
    %v3590 = vunpack.c.l.b16 %v754
    %v3591 = vunpack.c.h.b16 %v754
    %v3592 = vunpack.c.l.b16 %v755
    %v3593 = vunpack.c.h.b16 %v755
    %v3594 = vunpack.c.l.b16 %v756
    %v3595 = vunpack.c.h.b16 %v756
    %v3596 = vunpack.c.l.b16 %v757
    %v3597 = vunpack.c.h.b16 %v757
    %v3598 = vunpack.c.l.b16 %v758
    %v3599 = vunpack.c.h.b16 %v758
    %v3600 = vunpack.c.l.b16 %v759
    %v3601 = vunpack.c.h.b16 %v759
    %v3602 = vunpack.c.l.b16 %v760
    %v3603 = vunpack.c.h.b16 %v760
    %v3604 = vunpack.c.l.b16 %v761
    %v3605 = vunpack.c.h.b16 %v761
    %v3606 = vunpack.c.l.b16 %v762
    %v3607 = vunpack.c.h.b16 %v762
    %v3608 = vunpack.c.l.b16 %v763
    %v3609 = vunpack.c.h.b16 %v763
    %v3610 = vunpack.c.l.b16 %v764
    %v3611 = vunpack.c.h.b16 %v764
    %v3612 = vunpack.c.l.b16 %v765
    %v3613 = vunpack.c.h.b16 %v765
    %v3614 = vunpack.c.l.b16 %v766
    %v3615 = vunpack.c.h.b16 %v766
    %v3616 = vunpack.c.l.b16 %v767
    %v3617 = vunpack.c.h.b16 %v767
    %v3618 = vunpack.c.l.b16 %v768
    %v3619 = vunpack.c.h.b16 %v768
    %v3620 = vunpack.c.l.b16 %v769
    %v3621 = vunpack.c.h.b16 %v769
    %v3622 = vunpack.c.l.b16 %v770
    %v3623 = vunpack.c.h.b16 %v770
    %v3624 = vunpack.c.l.b16 %v771
    %v3625 = vunpack.c.h.b16 %v771
    %v3626 = vunpack.c.l.b16 %v772
    %v3627 = vunpack.c.h.b16 %v772
    %v3628 = vunpack.c.l.b16 %v773
    %v3629 = vunpack.c.h.b16 %v773
    %v3630 = vunpack.c.l.b16 %v774
    %v3631 = vunpack.c.h.b16 %v774
    %v3632 = vunpack.c.l.b16 %v775
    %v3633 = vunpack.c.h.b16 %v775
    %v3634 = vunpack.c.l.b16 %v776
    %v3635 = vunpack.c.h.b16 %v776
    %v3636 = vunpack.c.l.b16 %v777
    %v3637 = vunpack.c.h.b16 %v777
    %v3638 = vunpack.c.l.b16 %v778
    %v3639 = vunpack.c.h.b16 %v778
    %v3640 = vunpack.c.l.b16 %v779
    %v3641 = vunpack.c.h.b16 %v779
    %v3642 = vunpack.c.l.b16 %v780
    %v3643 = vunpack.c.h.b16 %v780
    %v3644 = vunpack.c.l.b16 %v781
    %v3645 = vunpack.c.h.b16 %v781
    %v3646 = vunpack.c.l.b16 %v782
    %v3647 = vunpack.c.h.b16 %v782
    %v3648 = vunpack.c.l.b16 %v783
    %v3649 = vunpack.c.h.b16 %v783
    %v3650 = vunpack.c.l.b16 %v784
    %v3651 = vunpack.c.h.b16 %v784
    %v3652 = vunpack.c.l.b16 %v785
    %v3653 = vunpack.c.h.b16 %v785
    %v3654 = vunpack.c.l.b16 %v786
    %v3655 = vunpack.c.h.b16 %v786
    %v3656 = vunpack.c.l.b16 %v787
    %v3657 = vunpack.c.h.b16 %v787
    %v3658 = vunpack.c.l.b16 %v788
    %v3659 = vunpack.c.h.b16 %v788
    %v3660 = vunpack.c.l.b16 %v789
    %v3661 = vunpack.c.h.b16 %v789
    %v3662 = vunpack.c.l.b16 %v790
    %v3663 = vunpack.c.h.b16 %v790
    %v3664 = vunpack.c.l.b16 %v791
    %v3665 = vunpack.c.h.b16 %v791
    %v3666 = vunpack.c.l.b16 %v792
    %v3667 = vunpack.c.h.b16 %v792
    %v3668 = vunpack.c.l.b16 %v793
    %v3669 = vunpack.c.h.b16 %v793
    %v3670 = vunpack.c.l.b16 %v794
    %v3671 = vunpack.c.h.b16 %v794
    %v3672 = vunpack.c.l.b16 %v795
    %v3673 = vunpack.c.h.b16 %v795
    %v3674 = vunpack.c.l.b16 %v796
    %v3675 = vunpack.c.h.b16 %v796
    %v3676 = vunpack.c.l.b16 %v797
    %v3677 = vunpack.c.h.b16 %v797
    %v3678 = vunpack.c.l.b16 %v798
    %v3679 = vunpack.c.h.b16 %v798
    %v3680 = vunpack.c.l.b16 %v799
    %v3681 = vunpack.c.h.b16 %v799
    %v3682 = vunpack.c.l.b16 %v800
    %v3683 = vunpack.c.h.b16 %v800
    %v3684 = vunpack.c.l.b16 %v801
    %v3685 = vunpack.c.h.b16 %v801
    %v3686 = vunpack.c.l.b16 %v802
    %v3687 = vunpack.c.h.b16 %v802
    %v3688 = vunpack.c.l.b16 %v803
    %v3689 = vunpack.c.h.b16 %v803
    %v3690 = vunpack.c.l.b16 %v804
    %v3691 = vunpack.c.h.b16 %v804
    %v3692 = vunpack.c.l.b16 %v805
    %v3693 = vunpack.c.h.b16 %v805
    %v3694 = vunpack.c.l.b16 %v806
    %v3695 = vunpack.c.h.b16 %v806
    %v3696 = vunpack.c.l.b16 %v807
    %v3697 = vunpack.c.h.b16 %v807
    %v3698 = vunpack.c.l.b16 %v808
    %v3699 = vunpack.c.h.b16 %v808
    %v3700 = vunpack.c.l.b16 %v809
    %v3701 = vunpack.c.h.b16 %v809
    %v3702 = vunpack.c.l.b16 %v810
    %v3703 = vunpack.c.h.b16 %v810
    %v3704 = vunpack.c.l.b16 %v811
    %v3705 = vunpack.c.h.b16 %v811
    %v3706 = vunpack.c.l.b16 %v812
    %v3707 = vunpack.c.h.b16 %v812
    %v3708 = vunpack.c.l.b16 %v813
    %v3709 = vunpack.c.h.b16 %v813
    %v3710 = vunpack.c.l.b16 %v814
    %v3711 = vunpack.c.h.b16 %v814
    %v3712 = vunpack.c.l.b16 %v815
    %v3713 = vunpack.c.h.b16 %v815
    %v3714 = vunpack.c.l.b16 %v816
    %v3715 = vunpack.c.h.b16 %v816
    %v3716 = vunpack.c.l.b16 %v817
    %v3717 = vunpack.c.h.b16 %v817
    %v3718 = vunpack.c.l.b16 %v818
    %v3719 = vunpack.c.h.b16 %v818
    %v3720 = vunpack.c.l.b16 %v819
    %v3721 = vunpack.c.h.b16 %v819
    %v3722 = vunpack.c.l.b16 %v820
    %v3723 = vunpack.c.h.b16 %v820
    %v3724 = vunpack.c.l.b16 %v821
    %v3725 = vunpack.c.h.b16 %v821
    %v3726 = vunpack.c.l.b16 %v822
    %v3727 = vunpack.c.h.b16 %v822
    %v3728 = vunpack.c.l.b16 %v823
    %v3729 = vunpack.c.h.b16 %v823
    %v3730 = vunpack.c.l.b16 %v824
    %v3731 = vunpack.c.h.b16 %v824
    %v3732 = vunpack.c.l.b16 %v825
    %v3733 = vunpack.c.h.b16 %v825
    %v3734 = vunpack.c.l.b16 %v826
    %v3735 = vunpack.c.h.b16 %v826
    %v3736 = vunpack.c.l.b16 %v827
    %v3737 = vunpack.c.h.b16 %v827
    %v3738 = vunpack.c.l.b16 %v828
    %v3739 = vunpack.c.h.b16 %v828
    %v3740 = vunpack.c.l.b16 %v829
    %v3741 = vunpack.c.h.b16 %v829
    %v3742 = vunpack.c.l.b16 %v830
    %v3743 = vunpack.c.h.b16 %v830
    %v3744 = vunpack.c.l.b16 %v831
    %v3745 = vunpack.c.h.b16 %v831
    %v3746 = vunpack.c.l.b16 %v832
    %v3747 = vunpack.c.h.b16 %v832
    %v3748 = vunpack.c.l.b16 %v833
    %v3749 = vunpack.c.h.b16 %v833
    %v3750 = vunpack.c.l.b16 %v834
    %v3751 = vunpack.c.h.b16 %v834
    %v3752 = vunpack.c.l.b16 %v835
    %v3753 = vunpack.c.h.b16 %v835
    %v3754 = vunpack.c.l.b16 %v836
    %v3755 = vunpack.c.h.b16 %v836
    %v3756 = vunpack.c.l.b16 %v837
    %v3757 = vunpack.c.h.b16 %v837
    %v3758 = vunpack.c.l.b16 %v838
    %v3759 = vunpack.c.h.b16 %v838
    %v3760 = vunpack.c.l.b16 %v839
    %v3761 = vunpack.c.h.b16 %v839
    %v3762 = vunpack.c.l.b16 %v840
    %v3763 = vunpack.c.h.b16 %v840
    %v3764 = vunpack.c.l.b16 %v841
    %v3765 = vunpack.c.h.b16 %v841
    %v3766 = vunpack.c.l.b16 %v842
    %v3767 = vunpack.c.h.b16 %v842
    %v3768 = vunpack.c.l.b16 %v843
    %v3769 = vunpack.c.h.b16 %v843
    %v3770 = vunpack.c.l.b16 %v844
    %v3771 = vunpack.c.h.b16 %v844
    %v3772 = vunpack.c.l.b16 %v845
    %v3773 = vunpack.c.h.b16 %v845
    %v3774 = vunpack.c.l.b16 %v846
    %v3775 = vunpack.c.h.b16 %v846
    %v3776 = vunpack.c.l.b16 %v847
    %v3777 = vunpack.c.h.b16 %v847
    %v3778 = vunpack.c.l.b16 %v848
    %v3779 = vunpack.c.h.b16 %v848
    %v3780 = vunpack.c.l.b16 %v849
    %v3781 = vunpack.c.h.b16 %v849
    %v3782 = vunpack.c.l.b16 %v850
    %v3783 = vunpack.c.h.b16 %v850
    %v3784 = vunpack.c.l.b16 %v851
    %v3785 = vunpack.c.h.b16 %v851
    %v3786 = vunpack.c.l.b16 %v852
    %v3787 = vunpack.c.h.b16 %v852
    %v3788 = vunpack.c.l.b16 %v853
    %v3789 = vunpack.c.h.b16 %v853
    %v3790 = vunpack.c.l.b16 %v854
    %v3791 = vunpack.c.h.b16 %v854
    %v3792 = vunpack.c.l.b16 %v855
    %v3793 = vunpack.c.h.b16 %v855
    %v3794 = vunpack.c.l.b16 %v856
    %v3795 = vunpack.c.h.b16 %v856
    %v3796 = vunpack.c.l.b16 %v857
    %v3797 = vunpack.c.h.b16 %v857
    %v3798 = vunpack.c.l.b16 %v858
    %v3799 = vunpack.c.h.b16 %v858
    %v3800 = vunpack.c.l.b16 %v859
    %v3801 = vunpack.c.h.b16 %v859
    %v3802 = vunpack.c.l.b16 %v860
    %v3803 = vunpack.c.h.b16 %v860
    %v3804 = vunpack.c.l.b16 %v861
    %v3805 = vunpack.c.h.b16 %v861
    %v3806 = vunpack.c.l.b16 %v862
    %v3807 = vunpack.c.h.b16 %v862
    %v3808 = vunpack.c.l.b16 %v863
    %v3809 = vunpack.c.h.b16 %v863
    %v3810 = vunpack.c.l.b16 %v864
    %v3811 = vunpack.c.h.b16 %v864
    %v3812 = vunpack.c.l.b16 %v865
    %v3813 = vunpack.c.h.b16 %v865
    %v3814 = vunpack.c.l.b16 %v866
    %v3815 = vunpack.c.h.b16 %v866
    %v3816 = vunpack.c.l.b16 %v867
    %v3817 = vunpack.c.h.b16 %v867
    %v3818 = vunpack.c.l.b16 %v868
    %v3819 = vunpack.c.h.b16 %v868
    %v3820 = vunpack.c.l.b16 %v869
    %v3821 = vunpack.c.h.b16 %v869
    %v3822 = vunpack.c.l.b16 %v870
    %v3823 = vunpack.c.h.b16 %v870
    %v3824 = vunpack.c.l.b16 %v871
    %v3825 = vunpack.c.h.b16 %v871
    %v3826 = vunpack.c.l.b16 %v872
    %v3827 = vunpack.c.h.b16 %v872
    %v3828 = vunpack.c.l.b16 %v873
    %v3829 = vunpack.c.h.b16 %v873
    %v3830 = vunpack.c.l.b16 %v874
    %v3831 = vunpack.c.h.b16 %v874
    %v3832 = vunpack.c.l.b16 %v875
    %v3833 = vunpack.c.h.b16 %v875
    %v3834 = vunpack.c.l.b16 %v876
    %v3835 = vunpack.c.h.b16 %v876
    %v3836 = vunpack.c.l.b16 %v877
    %v3837 = vunpack.c.h.b16 %v877
    %v3838 = vunpack.c.l.b16 %v878
    %v3839 = vunpack.c.h.b16 %v878
    %v3840 = vunpack.c.l.b16 %v879
    %v3841 = vunpack.c.h.b16 %v879
    %v3842 = vunpack.c.l.b16 %v880
    %v3843 = vunpack.c.h.b16 %v880
    %v3844 = vunpack.c.l.b16 %v881
    %v3845 = vunpack.c.h.b16 %v881
    %v3846 = vunpack.c.l.b16 %v882
    %v3847 = vunpack.c.h.b16 %v882
    %v3848 = vunpack.c.l.b16 %v883
    %v3849 = vunpack.c.h.b16 %v883
    %v3850 = vunpack.c.l.b16 %v884
    %v3851 = vunpack.c.h.b16 %v884
    %v3852 = vunpack.c.l.b16 %v885
    %v3853 = vunpack.c.h.b16 %v885
    %v3854 = vunpack.c.l.b16 %v886
    %v3855 = vunpack.c.h.b16 %v886
    %v3856 = vunpack.c.l.b16 %v887
    %v3857 = vunpack.c.h.b16 %v887
    %v3858 = vunpack.c.l.b16 %v888
    %v3859 = vunpack.c.h.b16 %v888
    %v3860 = vunpack.c.l.b16 %v889
    %v3861 = vunpack.c.h.b16 %v889
    %v3862 = vunpack.c.l.b16 %v890
    %v3863 = vunpack.c.h.b16 %v890
    %v3864 = vunpack.c.l.b16 %v891
    %v3865 = vunpack.c.h.b16 %v891
    %v3866 = vunpack.c.l.b16 %v892
    %v3867 = vunpack.c.h.b16 %v892
    %v3868 = vunpack.c.l.b16 %v893
    %v3869 = vunpack.c.h.b16 %v893
    %v3870 = vunpack.c.l.b16 %v894
    %v3871 = vunpack.c.h.b16 %v894
    %v3872 = vunpack.c.l.b16 %v895
    %v3873 = vunpack.c.h.b16 %v895
    %v3874 = vunpack.c.l.b16 %v896
    %v3875 = vunpack.c.h.b16 %v896
    %v3876 = vunpack.c.l.b16 %v897
    %v3877 = vunpack.c.h.b16 %v897
    %v3878 = vunpack.c.l.b16 %v898
    %v3879 = vunpack.c.h.b16 %v898
    %v3880 = vunpack.c.l.b16 %v899
    %v3881 = vunpack.c.h.b16 %v899
    %v3882 = vunpack.c.l.b16 %v900
    %v3883 = vunpack.c.h.b16 %v900
    %v3884 = vunpack.c.l.b16 %v901
    %v3885 = vunpack.c.h.b16 %v901
    %v3886 = vunpack.c.l.b16 %v902
    %v3887 = vunpack.c.h.b16 %v902
    %v3888 = vunpack.c.l.b16 %v903
    %v3889 = vunpack.c.h.b16 %v903
    %v3890 = vunpack.c.l.b16 %v904
    %v3891 = vunpack.c.h.b16 %v904
    %v3892 = vunpack.c.l.b16 %v905
    %v3893 = vunpack.c.h.b16 %v905
    %v3894 = vunpack.c.l.b16 %v906
    %v3895 = vunpack.c.h.b16 %v906
    %v3896 = vunpack.c.l.b16 %v907
    %v3897 = vunpack.c.h.b16 %v907
    %v3898 = vunpack.c.l.b16 %v908
    %v3899 = vunpack.c.h.b16 %v908
    %v3900 = vunpack.c.l.b16 %v909
    %v3901 = vunpack.c.h.b16 %v909
    %v3902 = vunpack.c.l.b16 %v910
    %v3903 = vunpack.c.h.b16 %v910
    %v3904 = vunpack.c.l.b16 %v911
    %v3905 = vunpack.c.h.b16 %v911
    %v3906 = vunpack.c.l.b16 %v912
    %v3907 = vunpack.c.h.b16 %v912
    %v3908 = vunpack.c.l.b16 %v913
    %v3909 = vunpack.c.h.b16 %v913
    %v3910 = vunpack.c.l.b16 %v914
    %v3911 = vunpack.c.h.b16 %v914
    %v3912 = vunpack.c.l.b16 %v915
    %v3913 = vunpack.c.h.b16 %v915
    %v3914 = vunpack.c.l.b16 %v916
    %v3915 = vunpack.c.h.b16 %v916
    %v3916 = vunpack.c.l.b16 %v917
    %v3917 = vunpack.c.h.b16 %v917
    %v3918 = vunpack.c.l.b16 %v918
    %v3919 = vunpack.c.h.b16 %v918
    %v3920 = vunpack.c.l.b16 %v919
    %v3921 = vunpack.c.h.b16 %v919
    %v3922 = vunpack.c.l.b16 %v920
    %v3923 = vunpack.c.h.b16 %v920
    %v3924 = vunpack.c.l.b16 %v921
    %v3925 = vunpack.c.h.b16 %v921
    %v3926 = vunpack.c.l.b16 %v922
    %v3927 = vunpack.c.h.b16 %v922
    %v3928 = vunpack.c.l.b16 %v923
    %v3929 = vunpack.c.h.b16 %v923
    %v3930 = vunpack.c.l.b16 %v924
    %v3931 = vunpack.c.h.b16 %v924
    %v3932 = vunpack.c.l.b16 %v925
    %v3933 = vunpack.c.h.b16 %v925
    %v3934 = vunpack.c.l.b16 %v926
    %v3935 = vunpack.c.h.b16 %v926
    %v3936 = vunpack.c.l.b16 %v927
    %v3937 = vunpack.c.h.b16 %v927
    %v3938 = vunpack.c.l.b16 %v928
    %v3939 = vunpack.c.h.b16 %v928
    %v3940 = vunpack.c.l.b16 %v929
    %v3941 = vunpack.c.h.b16 %v929
    %v3942 = vunpack.c.l.b16 %v930
    %v3943 = vunpack.c.h.b16 %v930
    %v3944 = vunpack.c.l.b16 %v931
    %v3945 = vunpack.c.h.b16 %v931
    %v3946 = vunpack.c.l.b16 %v932
    %v3947 = vunpack.c.h.b16 %v932
    %v3948 = vunpack.c.l.b16 %v933
    %v3949 = vunpack.c.h.b16 %v933
    %v3950 = vunpack.c.l.b16 %v934
    %v3951 = vunpack.c.h.b16 %v934
    %v3952 = vunpack.c.l.b16 %v935
    %v3953 = vunpack.c.h.b16 %v935
    %v3954 = vunpack.c.l.b16 %v936
    %v3955 = vunpack.c.h.b16 %v936
    %v3956 = vunpack.c.l.b16 %v937
    %v3957 = vunpack.c.h.b16 %v937
    %v3958 = vunpack.c.l.b16 %v938
    %v3959 = vunpack.c.h.b16 %v938
    %v3960 = vunpack.c.l.b16 %v939
    %v3961 = vunpack.c.h.b16 %v939
    %v3962 = vunpack.c.l.b16 %v940
    %v3963 = vunpack.c.h.b16 %v940
    %v3964 = vunpack.c.l.b16 %v941
    %v3965 = vunpack.c.h.b16 %v941
    %v3966 = vunpack.c.l.b16 %v942
    %v3967 = vunpack.c.h.b16 %v942
    %v3968 = vunpack.c.l.b16 %v943
    %v3969 = vunpack.c.h.b16 %v943
    %v3970 = vunpack.c.l.b16 %v944
    %v3971 = vunpack.c.h.b16 %v944
    %v3972 = vunpack.c.l.b16 %v945
    %v3973 = vunpack.c.h.b16 %v945
    %v3974 = vunpack.c.l.b16 %v946
    %v3975 = vunpack.c.h.b16 %v946
    %v3976 = vunpack.c.l.b16 %v947
    %v3977 = vunpack.c.h.b16 %v947
    %v3978 = vunpack.c.l.b16 %v948
    %v3979 = vunpack.c.h.b16 %v948
    %v3980 = vunpack.c.l.b16 %v949
    %v3981 = vunpack.c.h.b16 %v949
    %v3982 = vunpack.c.l.b16 %v950
    %v3983 = vunpack.c.h.b16 %v950
    %v3984 = vunpack.c.l.b16 %v951
    %v3985 = vunpack.c.h.b16 %v951
    %v3986 = vunpack.c.l.b16 %v952
    %v3987 = vunpack.c.h.b16 %v952
    %v3988 = vunpack.c.l.b16 %v953
    %v3989 = vunpack.c.h.b16 %v953
    %v3990 = vunpack.c.l.b16 %v954
    %v3991 = vunpack.c.h.b16 %v954
    %v3992 = vunpack.c.l.b16 %v955
    %v3993 = vunpack.c.h.b16 %v955
    %v3994 = vunpack.c.l.b16 %v956
    %v3995 = vunpack.c.h.b16 %v956
    %v3996 = vunpack.c.l.b16 %v957
    %v3997 = vunpack.c.h.b16 %v957
    %v3998 = vunpack.c.l.b16 %v958
    %v3999 = vunpack.c.h.b16 %v958
    %v4000 = vunpack.c.l.b16 %v959
    %v4001 = vunpack.c.h.b16 %v959
    %v4002 = vunpack.c.l.b16 %v960
    %v4003 = vunpack.c.h.b16 %v960
    %v4004 = vunpack.c.l.b16 %v961
    %v4005 = vunpack.c.h.b16 %v961
    %v4006 = vunpack.c.l.b16 %v962
    %v4007 = vunpack.c.h.b16 %v962
    %v4008 = vunpack.c.l.b16 %v963
    %v4009 = vunpack.c.h.b16 %v963
    %v4010 = vunpack.c.l.b16 %v964
    %v4011 = vunpack.c.h.b16 %v964
    %v4012 = vunpack.c.l.b16 %v965
    %v4013 = vunpack.c.h.b16 %v965
    %v4014 = vunpack.c.l.b16 %v966
    %v4015 = vunpack.c.h.b16 %v966
    %v4016 = vunpack.c.l.b16 %v967
    %v4017 = vunpack.c.h.b16 %v967
    %v4018 = vunpack.c.l.b16 %v968
    %v4019 = vunpack.c.h.b16 %v968
    %v4020 = vunpack.c.l.b16 %v969
    %v4021 = vunpack.c.h.b16 %v969
    %v4022 = vunpack.c.l.b16 %v970
    %v4023 = vunpack.c.h.b16 %v970
    %v4024 = vunpack.c.l.b16 %v971
    %v4025 = vunpack.c.h.b16 %v971
    %v4026 = vunpack.c.l.b16 %v972
    %v4027 = vunpack.c.h.b16 %v972
    %v4028 = vunpack.c.l.b16 %v973
    %v4029 = vunpack.c.h.b16 %v973
    %v4030 = vunpack.c.l.b16 %v974
    %v4031 = vunpack.c.h.b16 %v974
    %v4032 = vunpack.c.l.b16 %v975
    %v4033 = vunpack.c.h.b16 %v975
    %v4034 = vunpack.c.l.b16 %v976
    %v4035 = vunpack.c.h.b16 %v976
    %v4036 = vunpack.c.l.b16 %v977
    %v4037 = vunpack.c.h.b16 %v977
    %v4038 = vunpack.c.l.b16 %v978
    %v4039 = vunpack.c.h.b16 %v978
    %v4040 = vunpack.c.l.b16 %v979
    %v4041 = vunpack.c.h.b16 %v979
    %v4042 = vunpack.c.l.b16 %v980
    %v4043 = vunpack.c.h.b16 %v980
    %v4044 = vunpack.c.l.b16 %v981
    %v4045 = vunpack.c.h.b16 %v981
    %v4046 = vunpack.c.l.b16 %v982
    %v4047 = vunpack.c.h.b16 %v982
    %v4048 = vunpack.c.l.b16 %v983
    %v4049 = vunpack.c.h.b16 %v983
    %v4050 = vunpack.c.l.b16 %v984
    %v4051 = vunpack.c.h.b16 %v984
    %v4052 = vunpack.c.l.b16 %v985
    %v4053 = vunpack.c.h.b16 %v985
    %v4054 = vunpack.c.l.b16 %v986
    %v4055 = vunpack.c.h.b16 %v986
    %v4056 = vunpack.c.l.b16 %v987
    %v4057 = vunpack.c.h.b16 %v987
    %v4058 = vunpack.c.l.b16 %v988
    %v4059 = vunpack.c.h.b16 %v988
    %v4060 = vunpack.c.l.b16 %v989
    %v4061 = vunpack.c.h.b16 %v989
    %v4062 = vunpack.c.l.b16 %v990
    %v4063 = vunpack.c.h.b16 %v990
    %v4064 = vunpack.c.l.b16 %v991
    %v4065 = vunpack.c.h.b16 %v991
    %v4066 = vunpack.c.l.b16 %v992
    %v4067 = vunpack.c.h.b16 %v992
    %v4068 = vunpack.c.l.b16 %v993
    %v4069 = vunpack.c.h.b16 %v993
    %v4070 = vunpack.c.l.b16 %v994
    %v4071 = vunpack.c.h.b16 %v994
    %v4072 = vunpack.c.l.b16 %v995
    %v4073 = vunpack.c.h.b16 %v995
    %v4074 = vunpack.c.l.b16 %v996
    %v4075 = vunpack.c.h.b16 %v996
    %v4076 = vunpack.c.l.b16 %v997
    %v4077 = vunpack.c.h.b16 %v997
    %v4078 = vunpack.c.l.b16 %v998
    %v4079 = vunpack.c.h.b16 %v998
    %v4080 = vunpack.c.l.b16 %v999
    %v4081 = vunpack.c.h.b16 %v999
    %v4082 = vunpack.c.l.b16 %v1000
    %v4083 = vunpack.c.h.b16 %v1000
    %v4084 = vunpack.c.l.b16 %v1001
    %v4085 = vunpack.c.h.b16 %v1001
    %v4086 = vunpack.c.l.b16 %v1002
    %v4087 = vunpack.c.h.b16 %v1002
    %v4088 = vunpack.c.l.b16 %v1003
    %v4089 = vunpack.c.h.b16 %v1003
    %v4090 = vunpack.c.l.b16 %v1004
    %v4091 = vunpack.c.h.b16 %v1004
    %v4092 = vunpack.c.l.b16 %v1005
    %v4093 = vunpack.c.h.b16 %v1005
    %v4094 = vunpack.c.l.b16 %v1006
    %v4095 = vunpack.c.h.b16 %v1006
    %v4096 = vunpack.c.l.b16 %v1007
    %v4097 = vunpack.c.h.b16 %v1007
    %v4098 = vunpack.c.l.b16 %v1008
    %v4099 = vunpack.c.h.b16 %v1008
    %v4100 = vunpack.c.l.b16 %v1009
    %v4101 = vunpack.c.h.b16 %v1009
    %v4102 = vunpack.c.l.b16 %v1010
    %v4103 = vunpack.c.h.b16 %v1010
    %v4104 = vunpack.c.l.b16 %v1011
    %v4105 = vunpack.c.h.b16 %v1011
    %v4106 = vunpack.c.l.b16 %v1012
    %v4107 = vunpack.c.h.b16 %v1012
    %v4108 = vunpack.c.l.b16 %v1013
    %v4109 = vunpack.c.h.b16 %v1013
    %v4110 = vunpack.c.l.b16 %v1014
    %v4111 = vunpack.c.h.b16 %v1014
    %v4112 = vunpack.c.l.b16 %v1015
    %v4113 = vunpack.c.h.b16 %v1015
    %v4114 = vunpack.c.l.b16 %v1016
    %v4115 = vunpack.c.h.b16 %v1016
    %v4116 = vunpack.c.l.b16 %v1017
    %v4117 = vunpack.c.h.b16 %v1017
    %v4118 = vunpack.c.l.b16 %v1018
    %v4119 = vunpack.c.h.b16 %v1018
    %v4120 = vunpack.c.l.b16 %v1019
    %v4121 = vunpack.c.h.b16 %v1019
    %v4122 = vunpack.c.l.b16 %v1020
    %v4123 = vunpack.c.h.b16 %v1020
    %v4124 = vunpack.c.l.b16 %v1021
    %v4125 = vunpack.c.h.b16 %v1021
    %v4126 = vunpack.c.l.b16 %v1022
    %v4127 = vunpack.c.h.b16 %v1022
    %v4128 = vunpack.c.l.b16 %v1023
    %v4129 = vunpack.c.h.b16 %v1023
    %v4130 = vunpack.c.l.b16 %v1024
    %v4131 = vunpack.c.h.b16 %v1024
    %v4132 = vunpack.c.l.b16 %v1025
    %v4133 = vunpack.c.h.b16 %v1025
    %v4134 = vunpack.c.l.b16 %v1026
    %v4135 = vunpack.c.h.b16 %v1026
    %v4136 = vunpack.c.l.b16 %v1027
    %v4137 = vunpack.c.h.b16 %v1027
    %v4138 = vunpack.c.l.b16 %v1028
    %v4139 = vunpack.c.h.b16 %v1028
    %v4140 = vunpack.c.l.b16 %v1029
    %v4141 = vunpack.c.h.b16 %v1029
    %v4142 = vunpack.c.l.b16 %v1030
    %v4143 = vunpack.c.h.b16 %v1030
    %v4144 = vunpack.c.l.b16 %v1031
    %v4145 = vunpack.c.h.b16 %v1031
    %v4146 = vunpack.c.l.b16 %v1032
    %v4147 = vunpack.c.h.b16 %v1032
    %v4148 = vunpack.c.l.b16 %v1033
    %v4149 = vunpack.c.h.b16 %v1033
    %v4150 = vunpack.c.l.b16 %v1034
    %v4151 = vunpack.c.h.b16 %v1034
    %v4152 = vunpack.c.l.b16 %v1035
    %v4153 = vunpack.c.h.b16 %v1035
    %v4154 = vunpack.c.l.b16 %v1036
    %v4155 = vunpack.c.h.b16 %v1036
    %v4156 = vunpack.c.l.b16 %v1037
    %v4157 = vunpack.c.h.b16 %v1037
    %v4158 = vunpack.c.l.b16 %v1038
    %v4159 = vunpack.c.h.b16 %v1038
    %v4160 = vunpack.c.l.b16 %v1039
    %v4161 = vunpack.c.h.b16 %v1039
    %v4162 = vunpack.c.l.b16 %v1040
    %v4163 = vunpack.c.h.b16 %v1040
    %v4164 = vunpack.c.l.b16 %v1041
    %v4165 = vunpack.c.h.b16 %v1041
    %v4166 = vunpack.c.l.b16 %v1042
    %v4167 = vunpack.c.h.b16 %v1042
    %v4168 = vunpack.c.l.b16 %v1043
    %v4169 = vunpack.c.h.b16 %v1043
    %v4170 = vunpack.c.l.b16 %v1044
    %v4171 = vunpack.c.h.b16 %v1044
    %v4172 = vunpack.c.l.b16 %v1045
    %v4173 = vunpack.c.h.b16 %v1045
    %v4174 = vunpack.c.l.b16 %v1046
    %v4175 = vunpack.c.h.b16 %v1046
    %v4176 = vunpack.c.l.b16 %v1047
    %v4177 = vunpack.c.h.b16 %v1047
    %v4178 = vunpack.c.l.b16 %v1048
    %v4179 = vunpack.c.h.b16 %v1048
    %v4180 = vunpack.c.l.b16 %v1049
    %v4181 = vunpack.c.h.b16 %v1049
    %v4182 = vunpack.c.l.b16 %v1050
    %v4183 = vunpack.c.h.b16 %v1050
    %v4184 = vunpack.c.l.b16 %v1051
    %v4185 = vunpack.c.h.b16 %v1051
    %v4186 = vunpack.c.l.b16 %v1052
    %v4187 = vunpack.c.h.b16 %v1052
    %v4188 = vunpack.c.l.b16 %v1053
    %v4189 = vunpack.c.h.b16 %v1053
    %v4190 = vunpack.c.l.b16 %v1054
    %v4191 = vunpack.c.h.b16 %v1054
    %v4192 = vunpack.c.l.b16 %v1055
    %v4193 = vunpack.c.h.b16 %v1055
    %v4194 = vunpack.c.l.b16 %v1056
    %v4195 = vunpack.c.h.b16 %v1056
    %v4196 = vunpack.c.l.b16 %v1057
    %v4197 = vunpack.c.h.b16 %v1057
    %v4198 = vunpack.c.l.b16 %v1058
    %v4199 = vunpack.c.h.b16 %v1058
    %v4200 = vunpack.c.l.b16 %v1059
    %v4201 = vunpack.c.h.b16 %v1059
    %v4202 = vunpack.c.l.b16 %v1060
    %v4203 = vunpack.c.h.b16 %v1060
    %v4204 = vunpack.c.l.b16 %v1061
    %v4205 = vunpack.c.h.b16 %v1061
    %v4206 = vunpack.c.l.b16 %v1062
    %v4207 = vunpack.c.h.b16 %v1062
    %v4208 = vunpack.c.l.b16 %v1063
    %v4209 = vunpack.c.h.b16 %v1063
    %v4210 = vunpack.c.l.b16 %v1064
    %v4211 = vunpack.c.h.b16 %v1064
    %v4212 = vunpack.c.l.b16 %v1065
    %v4213 = vunpack.c.h.b16 %v1065
    %v4214 = vunpack.c.l.b16 %v1066
    %v4215 = vunpack.c.h.b16 %v1066
    %v4216 = vunpack.c.l.b16 %v1067
    %v4217 = vunpack.c.h.b16 %v1067
    %v4218 = vunpack.c.l.b16 %v1068
    %v4219 = vunpack.c.h.b16 %v1068
    %v4220 = vunpack.c.l.b16 %v1069
    %v4221 = vunpack.c.h.b16 %v1069
    %v4222 = vunpack.c.l.b16 %v1070
    %v4223 = vunpack.c.h.b16 %v1070
    %v4224 = vunpack.c.l.b16 %v1071
    %v4225 = vunpack.c.h.b16 %v1071
    %v4226 = vunpack.c.l.b16 %v1072
    %v4227 = vunpack.c.h.b16 %v1072
    %v4228 = vunpack.c.l.b16 %v1073
    %v4229 = vunpack.c.h.b16 %v1073
    %v4230 = vunpack.c.l.b16 %v1074
    %v4231 = vunpack.c.h.b16 %v1074
    %v4232 = vunpack.c.l.b16 %v1075
    %v4233 = vunpack.c.h.b16 %v1075
    %v4234 = vunpack.c.l.b16 %v1076
    %v4235 = vunpack.c.h.b16 %v1076
    %v4236 = vunpack.c.l.b16 %v1077
    %v4237 = vunpack.c.h.b16 %v1077
    %v4238 = vunpack.c.l.b16 %v1078
    %v4239 = vunpack.c.h.b16 %v1078
    %v4240 = vunpack.c.l.b16 %v1079
    %v4241 = vunpack.c.h.b16 %v1079
    %v4242 = vunpack.c.l.b16 %v1080
    %v4243 = vunpack.c.h.b16 %v1080
    %v4244 = vunpack.c.l.b16 %v1081
    %v4245 = vunpack.c.h.b16 %v1081
    %v4246 = vunpack.c.l.b16 %v1082
    %v4247 = vunpack.c.h.b16 %v1082
    %v4248 = vunpack.c.l.b16 %v1083
    %v4249 = vunpack.c.h.b16 %v1083
    %v4250 = vunpack.c.l.b16 %v1084
    %v4251 = vunpack.c.h.b16 %v1084
    %v4252 = vunpack.c.l.b16 %v1085
    %v4253 = vunpack.c.h.b16 %v1085
    %v4254 = vunpack.c.l.b16 %v1086
    %v4255 = vunpack.c.h.b16 %v1086
    %v4256 = vunpack.c.l.b16 %v1087
    %v4257 = vunpack.c.h.b16 %v1087
    %v4258 = vunpack.c.l.b16 %v1088
    %v4259 = vunpack.c.h.b16 %v1088
    %v4260 = vunpack.c.l.b16 %v1089
    %v4261 = vunpack.c.h.b16 %v1089
    %v4262 = vunpack.c.l.b16 %v1090
    %v4263 = vunpack.c.h.b16 %v1090
    %v4264 = vunpack.c.l.b16 %v1091
    %v4265 = vunpack.c.h.b16 %v1091
    %v4266 = vunpack.c.l.b16 %v1092
    %v4267 = vunpack.c.h.b16 %v1092
    %v4268 = vunpack.c.l.b16 %v1093
    %v4269 = vunpack.c.h.b16 %v1093
    %v4270 = vunpack.c.l.b16 %v1094
    %v4271 = vunpack.c.h.b16 %v1094
    %v4272 = vunpack.c.l.b16 %v1095
    %v4273 = vunpack.c.h.b16 %v1095
    %v4274 = vunpack.c.l.b16 %v1096
    %v4275 = vunpack.c.h.b16 %v1096
    %v4276 = vunpack.c.l.b16 %v1097
    %v4277 = vunpack.c.h.b16 %v1097
    %v4278 = vunpack.c.l.b16 %v1098
    %v4279 = vunpack.c.h.b16 %v1098
    %v4280 = vunpack.c.l.b16 %v1099
    %v4281 = vunpack.c.h.b16 %v1099
    %v4282 = vunpack.c.l.b16 %v1100
    %v4283 = vunpack.c.h.b16 %v1100
    %v4284 = vunpack.c.l.b16 %v1101
    %v4285 = vunpack.c.h.b16 %v1101
    %v4286 = vunpack.c.l.b16 %v1102
    %v4287 = vunpack.c.h.b16 %v1102
    %v4288 = vunpack.c.l.b16 %v1103
    %v4289 = vunpack.c.h.b16 %v1103
    %v4290 = vunpack.c.l.b16 %v1104
    %v4291 = vunpack.c.h.b16 %v1104
    %v4292 = vunpack.c.l.b16 %v1105
    %v4293 = vunpack.c.h.b16 %v1105
    %v4294 = vunpack.c.l.b16 %v1106
    %v4295 = vunpack.c.h.b16 %v1106
    %v4296 = vunpack.c.l.b16 %v1107
    %v4297 = vunpack.c.h.b16 %v1107
    %v4298 = vunpack.c.l.b16 %v1108
    %v4299 = vunpack.c.h.b16 %v1108
    %v4300 = vunpack.c.l.b16 %v1109
    %v4301 = vunpack.c.h.b16 %v1109
    %v4302 = vunpack.c.l.b16 %v1110
    %v4303 = vunpack.c.h.b16 %v1110
    %v4304 = vunpack.c.l.b16 %v1111
    %v4305 = vunpack.c.h.b16 %v1111
    %v4306 = vpack.c.b16 %v2266, %v2258
    %v4307 = vpack.c.b16 %v2267, %v2259
    %v4308 = vpack.c.b16 %v2268, %v2260
    %v4309 = vpack.c.b16 %v2269, %v2261
    %v4310 = vpack.c.b16 %v2270, %v2262
    %v4311 = vpack.c.b16 %v2271, %v2263
    %v4312 = vpack.c.b16 %v2272, %v2264
    %v4313 = vpack.c.b16 %v2273, %v2265
    %v4314 = vpack.c.b16 %v2282, %v2274
    %v4315 = vpack.c.b16 %v2283, %v2275
    %v4316 = vpack.c.b16 %v2284, %v2276
    %v4317 = vpack.c.b16 %v2285, %v2277
    %v4318 = vpack.c.b16 %v2286, %v2278
    %v4319 = vpack.c.b16 %v2287, %v2279
    %v4320 = vpack.c.b16 %v2288, %v2280
    %v4321 = vpack.c.b16 %v2289, %v2281
    %v4322 = vpack.c.b16 %v2298, %v2290
    %v4323 = vpack.c.b16 %v2299, %v2291
    %v4324 = vpack.c.b16 %v2300, %v2292
    %v4325 = vpack.c.b16 %v2301, %v2293
    %v4326 = vpack.c.b16 %v2302, %v2294
    %v4327 = vpack.c.b16 %v2303, %v2295
    %v4328 = vpack.c.b16 %v2304, %v2296
    %v4329 = vpack.c.b16 %v2305, %v2297
    %v4330 = vpack.c.b16 %v2314, %v2306
    %v4331 = vpack.c.b16 %v2315, %v2307
    %v4332 = vpack.c.b16 %v2316, %v2308
    %v4333 = vpack.c.b16 %v2317, %v2309
    %v4334 = vpack.c.b16 %v2318, %v2310
    %v4335 = vpack.c.b16 %v2319, %v2311
    %v4336 = vpack.c.b16 %v2320, %v2312
    %v4337 = vpack.c.b16 %v2321, %v2313
    %v4338 = vpack.c.b16 %v2330, %v2322
    %v4339 = vpack.c.b16 %v2331, %v2323
    %v4340 = vpack.c.b16 %v2332, %v2324
    %v4341 = vpack.c.b16 %v2333, %v2325
    %v4342 = vpack.c.b16 %v2334, %v2326
    %v4343 = vpack.c.b16 %v2335, %v2327
    %v4344 = vpack.c.b16 %v2336, %v2328
    %v4345 = vpack.c.b16 %v2337, %v2329
    %v4346 = vpack.c.b16 %v2346, %v2338
    %v4347 = vpack.c.b16 %v2347, %v2339
    %v4348 = vpack.c.b16 %v2348, %v2340
    %v4349 = vpack.c.b16 %v2349, %v2341
    %v4350 = vpack.c.b16 %v2350, %v2342
    %v4351 = vpack.c.b16 %v2351, %v2343
    %v4352 = vpack.c.b16 %v2352, %v2344
    %v4353 = vpack.c.b16 %v2353, %v2345
    %v4354 = vpack.c.b16 %v2362, %v2354
    %v4355 = vpack.c.b16 %v2363, %v2355
    %v4356 = vpack.c.b16 %v2364, %v2356
    %v4357 = vpack.c.b16 %v2365, %v2357
    %v4358 = vpack.c.b16 %v2366, %v2358
    %v4359 = vpack.c.b16 %v2367, %v2359
    %v4360 = vpack.c.b16 %v2368, %v2360
    %v4361 = vpack.c.b16 %v2369, %v2361
    %v4362 = vpack.c.b16 %v2378, %v2370
    %v4363 = vpack.c.b16 %v2379, %v2371
    %v4364 = vpack.c.b16 %v2380, %v2372
    %v4365 = vpack.c.b16 %v2381, %v2373
    %v4366 = vpack.c.b16 %v2382, %v2374
    %v4367 = vpack.c.b16 %v2383, %v2375
    %v4368 = vpack.c.b16 %v2384, %v2376
    %v4369 = vpack.c.b16 %v2385, %v2377
    %v4370 = vpack.c.b16 %v2394, %v2386
    %v4371 = vpack.c.b16 %v2395, %v2387
    %v4372 = vpack.c.b16 %v2396, %v2388
    %v4373 = vpack.c.b16 %v2397, %v2389
    %v4374 = vpack.c.b16 %v2398, %v2390
    %v4375 = vpack.c.b16 %v2399, %v2391
    %v4376 = vpack.c.b16 %v2400, %v2392
    %v4377 = vpack.c.b16 %v2401, %v2393
    %v4378 = vpack.c.b16 %v2410, %v2402
    %v4379 = vpack.c.b16 %v2411, %v2403
    %v4380 = vpack.c.b16 %v2412, %v2404
    %v4381 = vpack.c.b16 %v2413, %v2405
    %v4382 = vpack.c.b16 %v2414, %v2406
    %v4383 = vpack.c.b16 %v2415, %v2407
    %v4384 = vpack.c.b16 %v2416, %v2408
    %v4385 = vpack.c.b16 %v2417, %v2409
    %v4386 = vpack.c.b16 %v2426, %v2418
    %v4387 = vpack.c.b16 %v2427, %v2419
    %v4388 = vpack.c.b16 %v2428, %v2420
    %v4389 = vpack.c.b16 %v2429, %v2421
    %v4390 = vpack.c.b16 %v2430, %v2422
    %v4391 = vpack.c.b16 %v2431, %v2423
    %v4392 = vpack.c.b16 %v2432, %v2424
    %v4393 = vpack.c.b16 %v2433, %v2425
    %v4394 = vpack.c.b16 %v2442, %v2434
    %v4395 = vpack.c.b16 %v2443, %v2435
    %v4396 = vpack.c.b16 %v2444, %v2436
    %v4397 = vpack.c.b16 %v2445, %v2437
    %v4398 = vpack.c.b16 %v2446, %v2438
    %v4399 = vpack.c.b16 %v2447, %v2439
    %v4400 = vpack.c.b16 %v2448, %v2440
    %v4401 = vpack.c.b16 %v2449, %v2441
    %v4402 = vpack.c.b16 %v2458, %v2450
    %v4403 = vpack.c.b16 %v2459, %v2451
    %v4404 = vpack.c.b16 %v2460, %v2452
    %v4405 = vpack.c.b16 %v2461, %v2453
    %v4406 = vpack.c.b16 %v2462, %v2454
    %v4407 = vpack.c.b16 %v2463, %v2455
    %v4408 = vpack.c.b16 %v2464, %v2456
    %v4409 = vpack.c.b16 %v2465, %v2457
    %v4410 = vpack.c.b16 %v2474, %v2466
    %v4411 = vpack.c.b16 %v2475, %v2467
    %v4412 = vpack.c.b16 %v2476, %v2468
    %v4413 = vpack.c.b16 %v2477, %v2469
    %v4414 = vpack.c.b16 %v2478, %v2470
    %v4415 = vpack.c.b16 %v2479, %v2471
    %v4416 = vpack.c.b16 %v2480, %v2472
    %v4417 = vpack.c.b16 %v2481, %v2473
    %v4418 = vpack.c.b16 %v2490, %v2482
    %v4419 = vpack.c.b16 %v2491, %v2483
    %v4420 = vpack.c.b16 %v2492, %v2484
    %v4421 = vpack.c.b16 %v2493, %v2485
    %v4422 = vpack.c.b16 %v2494, %v2486
    %v4423 = vpack.c.b16 %v2495, %v2487
    %v4424 = vpack.c.b16 %v2496, %v2488
    %v4425 = vpack.c.b16 %v2497, %v2489
    %v4426 = vpack.c.b16 %v2506, %v2498
    %v4427 = vpack.c.b16 %v2507, %v2499
    %v4428 = vpack.c.b16 %v2508, %v2500
    %v4429 = vpack.c.b16 %v2509, %v2501
    %v4430 = vpack.c.b16 %v2510, %v2502
    %v4431 = vpack.c.b16 %v2511, %v2503
    %v4432 = vpack.c.b16 %v2512, %v2504
    %v4433 = vpack.c.b16 %v2513, %v2505
    %v4434 = vpack.c.b16 %v2522, %v2514
    %v4435 = vpack.c.b16 %v2523, %v2515
    %v4436 = vpack.c.b16 %v2524, %v2516
    %v4437 = vpack.c.b16 %v2525, %v2517
    %v4438 = vpack.c.b16 %v2526, %v2518
    %v4439 = vpack.c.b16 %v2527, %v2519
    %v4440 = vpack.c.b16 %v2528, %v2520
    %v4441 = vpack.c.b16 %v2529, %v2521
    %v4442 = vpack.c.b16 %v2538, %v2530
    %v4443 = vpack.c.b16 %v2539, %v2531
    %v4444 = vpack.c.b16 %v2540, %v2532
    %v4445 = vpack.c.b16 %v2541, %v2533
    %v4446 = vpack.c.b16 %v2542, %v2534
    %v4447 = vpack.c.b16 %v2543, %v2535
    %v4448 = vpack.c.b16 %v2544, %v2536
    %v4449 = vpack.c.b16 %v2545, %v2537
    %v4450 = vpack.c.b16 %v2554, %v2546
    %v4451 = vpack.c.b16 %v2555, %v2547
    %v4452 = vpack.c.b16 %v2556, %v2548
    %v4453 = vpack.c.b16 %v2557, %v2549
    %v4454 = vpack.c.b16 %v2558, %v2550
    %v4455 = vpack.c.b16 %v2559, %v2551
    %v4456 = vpack.c.b16 %v2560, %v2552
    %v4457 = vpack.c.b16 %v2561, %v2553
    %v4458 = vpack.c.b16 %v2570, %v2562
    %v4459 = vpack.c.b16 %v2571, %v2563
    %v4460 = vpack.c.b16 %v2572, %v2564
    %v4461 = vpack.c.b16 %v2573, %v2565
    %v4462 = vpack.c.b16 %v2574, %v2566
    %v4463 = vpack.c.b16 %v2575, %v2567
    %v4464 = vpack.c.b16 %v2576, %v2568
    %v4465 = vpack.c.b16 %v2577, %v2569
    %v4466 = vpack.c.b16 %v2586, %v2578
    %v4467 = vpack.c.b16 %v2587, %v2579
    %v4468 = vpack.c.b16 %v2588, %v2580
    %v4469 = vpack.c.b16 %v2589, %v2581
    %v4470 = vpack.c.b16 %v2590, %v2582
    %v4471 = vpack.c.b16 %v2591, %v2583
    %v4472 = vpack.c.b16 %v2592, %v2584
    %v4473 = vpack.c.b16 %v2593, %v2585
    %v4474 = vpack.c.b16 %v2602, %v2594
    %v4475 = vpack.c.b16 %v2603, %v2595
    %v4476 = vpack.c.b16 %v2604, %v2596
    %v4477 = vpack.c.b16 %v2605, %v2597
    %v4478 = vpack.c.b16 %v2606, %v2598
    %v4479 = vpack.c.b16 %v2607, %v2599
    %v4480 = vpack.c.b16 %v2608, %v2600
    %v4481 = vpack.c.b16 %v2609, %v2601
    %v4482 = vpack.c.b16 %v2618, %v2610
    %v4483 = vpack.c.b16 %v2619, %v2611
    %v4484 = vpack.c.b16 %v2620, %v2612
    %v4485 = vpack.c.b16 %v2621, %v2613
    %v4486 = vpack.c.b16 %v2622, %v2614
    %v4487 = vpack.c.b16 %v2623, %v2615
    %v4488 = vpack.c.b16 %v2624, %v2616
    %v4489 = vpack.c.b16 %v2625, %v2617
    %v4490 = vpack.c.b16 %v2634, %v2626
    %v4491 = vpack.c.b16 %v2635, %v2627
    %v4492 = vpack.c.b16 %v2636, %v2628
    %v4493 = vpack.c.b16 %v2637, %v2629
    %v4494 = vpack.c.b16 %v2638, %v2630
    %v4495 = vpack.c.b16 %v2639, %v2631
    %v4496 = vpack.c.b16 %v2640, %v2632
    %v4497 = vpack.c.b16 %v2641, %v2633
    %v4498 = vpack.c.b16 %v2650, %v2642
    %v4499 = vpack.c.b16 %v2651, %v2643
    %v4500 = vpack.c.b16 %v2652, %v2644
    %v4501 = vpack.c.b16 %v2653, %v2645
    %v4502 = vpack.c.b16 %v2654, %v2646
    %v4503 = vpack.c.b16 %v2655, %v2647
    %v4504 = vpack.c.b16 %v2656, %v2648
    %v4505 = vpack.c.b16 %v2657, %v2649
    %v4506 = vpack.c.b16 %v2666, %v2658
    %v4507 = vpack.c.b16 %v2667, %v2659
    %v4508 = vpack.c.b16 %v2668, %v2660
    %v4509 = vpack.c.b16 %v2669, %v2661
    %v4510 = vpack.c.b16 %v2670, %v2662
    %v4511 = vpack.c.b16 %v2671, %v2663
    %v4512 = vpack.c.b16 %v2672, %v2664
    %v4513 = vpack.c.b16 %v2673, %v2665
    %v4514 = vpack.c.b16 %v2682, %v2674
    %v4515 = vpack.c.b16 %v2683, %v2675
    %v4516 = vpack.c.b16 %v2684, %v2676
    %v4517 = vpack.c.b16 %v2685, %v2677
    %v4518 = vpack.c.b16 %v2686, %v2678
    %v4519 = vpack.c.b16 %v2687, %v2679
    %v4520 = vpack.c.b16 %v2688, %v2680
    %v4521 = vpack.c.b16 %v2689, %v2681
    %v4522 = vpack.c.b16 %v2698, %v2690
    %v4523 = vpack.c.b16 %v2699, %v2691
    %v4524 = vpack.c.b16 %v2700, %v2692
    %v4525 = vpack.c.b16 %v2701, %v2693
    %v4526 = vpack.c.b16 %v2702, %v2694
    %v4527 = vpack.c.b16 %v2703, %v2695
    %v4528 = vpack.c.b16 %v2704, %v2696
    %v4529 = vpack.c.b16 %v2705, %v2697
    %v4530 = vpack.c.b16 %v2714, %v2706
    %v4531 = vpack.c.b16 %v2715, %v2707
    %v4532 = vpack.c.b16 %v2716, %v2708
    %v4533 = vpack.c.b16 %v2717, %v2709
    %v4534 = vpack.c.b16 %v2718, %v2710
    %v4535 = vpack.c.b16 %v2719, %v2711
    %v4536 = vpack.c.b16 %v2720, %v2712
    %v4537 = vpack.c.b16 %v2721, %v2713
    %v4538 = vpack.c.b16 %v2730, %v2722
    %v4539 = vpack.c.b16 %v2731, %v2723
    %v4540 = vpack.c.b16 %v2732, %v2724
    %v4541 = vpack.c.b16 %v2733, %v2725
    %v4542 = vpack.c.b16 %v2734, %v2726
    %v4543 = vpack.c.b16 %v2735, %v2727
    %v4544 = vpack.c.b16 %v2736, %v2728
    %v4545 = vpack.c.b16 %v2737, %v2729
    %v4546 = vpack.c.b16 %v2746, %v2738
    %v4547 = vpack.c.b16 %v2747, %v2739
    %v4548 = vpack.c.b16 %v2748, %v2740
    %v4549 = vpack.c.b16 %v2749, %v2741
    %v4550 = vpack.c.b16 %v2750, %v2742
    %v4551 = vpack.c.b16 %v2751, %v2743
    %v4552 = vpack.c.b16 %v2752, %v2744
    %v4553 = vpack.c.b16 %v2753, %v2745
    %v4554 = vpack.c.b16 %v2762, %v2754
    %v4555 = vpack.c.b16 %v2763, %v2755
    %v4556 = vpack.c.b16 %v2764, %v2756
    %v4557 = vpack.c.b16 %v2765, %v2757
    %v4558 = vpack.c.b16 %v2766, %v2758
    %v4559 = vpack.c.b16 %v2767, %v2759
    %v4560 = vpack.c.b16 %v2768, %v2760
    %v4561 = vpack.c.b16 %v2769, %v2761
    %v4562 = vpack.c.b16 %v2778, %v2770
    %v4563 = vpack.c.b16 %v2779, %v2771
    %v4564 = vpack.c.b16 %v2780, %v2772
    %v4565 = vpack.c.b16 %v2781, %v2773
    %v4566 = vpack.c.b16 %v2782, %v2774
    %v4567 = vpack.c.b16 %v2783, %v2775
    %v4568 = vpack.c.b16 %v2784, %v2776
    %v4569 = vpack.c.b16 %v2785, %v2777
    %v4570 = vpack.c.b16 %v2794, %v2786
    %v4571 = vpack.c.b16 %v2795, %v2787
    %v4572 = vpack.c.b16 %v2796, %v2788
    %v4573 = vpack.c.b16 %v2797, %v2789
    %v4574 = vpack.c.b16 %v2798, %v2790
    %v4575 = vpack.c.b16 %v2799, %v2791
    %v4576 = vpack.c.b16 %v2800, %v2792
    %v4577 = vpack.c.b16 %v2801, %v2793
    %v4578 = vpack.c.b16 %v2810, %v2802
    %v4579 = vpack.c.b16 %v2811, %v2803
    %v4580 = vpack.c.b16 %v2812, %v2804
    %v4581 = vpack.c.b16 %v2813, %v2805
    %v4582 = vpack.c.b16 %v2814, %v2806
    %v4583 = vpack.c.b16 %v2815, %v2807
    %v4584 = vpack.c.b16 %v2816, %v2808
    %v4585 = vpack.c.b16 %v2817, %v2809
    %v4586 = vpack.c.b16 %v2826, %v2818
    %v4587 = vpack.c.b16 %v2827, %v2819
    %v4588 = vpack.c.b16 %v2828, %v2820
    %v4589 = vpack.c.b16 %v2829, %v2821
    %v4590 = vpack.c.b16 %v2830, %v2822
    %v4591 = vpack.c.b16 %v2831, %v2823
    %v4592 = vpack.c.b16 %v2832, %v2824
    %v4593 = vpack.c.b16 %v2833, %v2825
    %v4594 = vpack.c.b16 %v2842, %v2834
    %v4595 = vpack.c.b16 %v2843, %v2835
    %v4596 = vpack.c.b16 %v2844, %v2836
    %v4597 = vpack.c.b16 %v2845, %v2837
    %v4598 = vpack.c.b16 %v2846, %v2838
    %v4599 = vpack.c.b16 %v2847, %v2839
    %v4600 = vpack.c.b16 %v2848, %v2840
    %v4601 = vpack.c.b16 %v2849, %v2841
    %v4602 = vpack.c.b16 %v2858, %v2850
    %v4603 = vpack.c.b16 %v2859, %v2851
    %v4604 = vpack.c.b16 %v2860, %v2852
    %v4605 = vpack.c.b16 %v2861, %v2853
    %v4606 = vpack.c.b16 %v2862, %v2854
    %v4607 = vpack.c.b16 %v2863, %v2855
    %v4608 = vpack.c.b16 %v2864, %v2856
    %v4609 = vpack.c.b16 %v2865, %v2857
    %v4610 = vpack.c.b16 %v2874, %v2866
    %v4611 = vpack.c.b16 %v2875, %v2867
    %v4612 = vpack.c.b16 %v2876, %v2868
    %v4613 = vpack.c.b16 %v2877, %v2869
    %v4614 = vpack.c.b16 %v2878, %v2870
    %v4615 = vpack.c.b16 %v2879, %v2871
    %v4616 = vpack.c.b16 %v2880, %v2872
    %v4617 = vpack.c.b16 %v2881, %v2873
    %v4618 = vpack.c.b16 %v2890, %v2882
    %v4619 = vpack.c.b16 %v2891, %v2883
    %v4620 = vpack.c.b16 %v2892, %v2884
    %v4621 = vpack.c.b16 %v2893, %v2885
    %v4622 = vpack.c.b16 %v2894, %v2886
    %v4623 = vpack.c.b16 %v2895, %v2887
    %v4624 = vpack.c.b16 %v2896, %v2888
    %v4625 = vpack.c.b16 %v2897, %v2889
    %v4626 = vpack.c.b16 %v2906, %v2898
    %v4627 = vpack.c.b16 %v2907, %v2899
    %v4628 = vpack.c.b16 %v2908, %v2900
    %v4629 = vpack.c.b16 %v2909, %v2901
    %v4630 = vpack.c.b16 %v2910, %v2902
    %v4631 = vpack.c.b16 %v2911, %v2903
    %v4632 = vpack.c.b16 %v2912, %v2904
    %v4633 = vpack.c.b16 %v2913, %v2905
    %v4634 = vpack.c.b16 %v2922, %v2914
    %v4635 = vpack.c.b16 %v2923, %v2915
    %v4636 = vpack.c.b16 %v2924, %v2916
    %v4637 = vpack.c.b16 %v2925, %v2917
    %v4638 = vpack.c.b16 %v2926, %v2918
    %v4639 = vpack.c.b16 %v2927, %v2919
    %v4640 = vpack.c.b16 %v2928, %v2920
    %v4641 = vpack.c.b16 %v2929, %v2921
    %v4642 = vpack.c.b16 %v2938, %v2930
    %v4643 = vpack.c.b16 %v2939, %v2931
    %v4644 = vpack.c.b16 %v2940, %v2932
    %v4645 = vpack.c.b16 %v2941, %v2933
    %v4646 = vpack.c.b16 %v2942, %v2934
    %v4647 = vpack.c.b16 %v2943, %v2935
    %v4648 = vpack.c.b16 %v2944, %v2936
    %v4649 = vpack.c.b16 %v2945, %v2937
    %v4650 = vpack.c.b16 %v2954, %v2946
    %v4651 = vpack.c.b16 %v2955, %v2947
    %v4652 = vpack.c.b16 %v2956, %v2948
    %v4653 = vpack.c.b16 %v2957, %v2949
    %v4654 = vpack.c.b16 %v2958, %v2950
    %v4655 = vpack.c.b16 %v2959, %v2951
    %v4656 = vpack.c.b16 %v2960, %v2952
    %v4657 = vpack.c.b16 %v2961, %v2953
    %v4658 = vpack.c.b16 %v2970, %v2962
    %v4659 = vpack.c.b16 %v2971, %v2963
    %v4660 = vpack.c.b16 %v2972, %v2964
    %v4661 = vpack.c.b16 %v2973, %v2965
    %v4662 = vpack.c.b16 %v2974, %v2966
    %v4663 = vpack.c.b16 %v2975, %v2967
    %v4664 = vpack.c.b16 %v2976, %v2968
    %v4665 = vpack.c.b16 %v2977, %v2969
    %v4666 = vpack.c.b16 %v2986, %v2978
    %v4667 = vpack.c.b16 %v2987, %v2979
    %v4668 = vpack.c.b16 %v2988, %v2980
    %v4669 = vpack.c.b16 %v2989, %v2981
    %v4670 = vpack.c.b16 %v2990, %v2982
    %v4671 = vpack.c.b16 %v2991, %v2983
    %v4672 = vpack.c.b16 %v2992, %v2984
    %v4673 = vpack.c.b16 %v2993, %v2985
    %v4674 = vpack.c.b16 %v3002, %v2994
    %v4675 = vpack.c.b16 %v3003, %v2995
    %v4676 = vpack.c.b16 %v3004, %v2996
    %v4677 = vpack.c.b16 %v3005, %v2997
    %v4678 = vpack.c.b16 %v3006, %v2998
    %v4679 = vpack.c.b16 %v3007, %v2999
    %v4680 = vpack.c.b16 %v3008, %v3000
    %v4681 = vpack.c.b16 %v3009, %v3001
    %v4682 = vpack.c.b16 %v3018, %v3010
    %v4683 = vpack.c.b16 %v3019, %v3011
    %v4684 = vpack.c.b16 %v3020, %v3012
    %v4685 = vpack.c.b16 %v3021, %v3013
    %v4686 = vpack.c.b16 %v3022, %v3014
    %v4687 = vpack.c.b16 %v3023, %v3015
    %v4688 = vpack.c.b16 %v3024, %v3016
    %v4689 = vpack.c.b16 %v3025, %v3017
    %v4690 = vpack.c.b16 %v3034, %v3026
    %v4691 = vpack.c.b16 %v3035, %v3027
    %v4692 = vpack.c.b16 %v3036, %v3028
    %v4693 = vpack.c.b16 %v3037, %v3029
    %v4694 = vpack.c.b16 %v3038, %v3030
    %v4695 = vpack.c.b16 %v3039, %v3031
    %v4696 = vpack.c.b16 %v3040, %v3032
    %v4697 = vpack.c.b16 %v3041, %v3033
    %v4698 = vpack.c.b16 %v3050, %v3042
    %v4699 = vpack.c.b16 %v3051, %v3043
    %v4700 = vpack.c.b16 %v3052, %v3044
    %v4701 = vpack.c.b16 %v3053, %v3045
    %v4702 = vpack.c.b16 %v3054, %v3046
    %v4703 = vpack.c.b16 %v3055, %v3047
    %v4704 = vpack.c.b16 %v3056, %v3048
    %v4705 = vpack.c.b16 %v3057, %v3049
    %v4706 = vpack.c.b16 %v3066, %v3058
    %v4707 = vpack.c.b16 %v3067, %v3059
    %v4708 = vpack.c.b16 %v3068, %v3060
    %v4709 = vpack.c.b16 %v3069, %v3061
    %v4710 = vpack.c.b16 %v3070, %v3062
    %v4711 = vpack.c.b16 %v3071, %v3063
    %v4712 = vpack.c.b16 %v3072, %v3064
    %v4713 = vpack.c.b16 %v3073, %v3065
    %v4714 = vpack.c.b16 %v3082, %v3074
    %v4715 = vpack.c.b16 %v3083, %v3075
    %v4716 = vpack.c.b16 %v3084, %v3076
    %v4717 = vpack.c.b16 %v3085, %v3077
    %v4718 = vpack.c.b16 %v3086, %v3078
    %v4719 = vpack.c.b16 %v3087, %v3079
    %v4720 = vpack.c.b16 %v3088, %v3080
    %v4721 = vpack.c.b16 %v3089, %v3081
    %v4722 = vpack.c.b16 %v3098, %v3090
    %v4723 = vpack.c.b16 %v3099, %v3091
    %v4724 = vpack.c.b16 %v3100, %v3092
    %v4725 = vpack.c.b16 %v3101, %v3093
    %v4726 = vpack.c.b16 %v3102, %v3094
    %v4727 = vpack.c.b16 %v3103, %v3095
    %v4728 = vpack.c.b16 %v3104, %v3096
    %v4729 = vpack.c.b16 %v3105, %v3097
    %v4730 = vpack.c.b16 %v3114, %v3106
    %v4731 = vpack.c.b16 %v3115, %v3107
    %v4732 = vpack.c.b16 %v3116, %v3108
    %v4733 = vpack.c.b16 %v3117, %v3109
    %v4734 = vpack.c.b16 %v3118, %v3110
    %v4735 = vpack.c.b16 %v3119, %v3111
    %v4736 = vpack.c.b16 %v3120, %v3112
    %v4737 = vpack.c.b16 %v3121, %v3113
    %v4738 = vpack.c.b16 %v3130, %v3122
    %v4739 = vpack.c.b16 %v3131, %v3123
    %v4740 = vpack.c.b16 %v3132, %v3124
    %v4741 = vpack.c.b16 %v3133, %v3125
    %v4742 = vpack.c.b16 %v3134, %v3126
    %v4743 = vpack.c.b16 %v3135, %v3127
    %v4744 = vpack.c.b16 %v3136, %v3128
    %v4745 = vpack.c.b16 %v3137, %v3129
    %v4746 = vpack.c.b16 %v3146, %v3138
    %v4747 = vpack.c.b16 %v3147, %v3139
    %v4748 = vpack.c.b16 %v3148, %v3140
    %v4749 = vpack.c.b16 %v3149, %v3141
    %v4750 = vpack.c.b16 %v3150, %v3142
    %v4751 = vpack.c.b16 %v3151, %v3143
    %v4752 = vpack.c.b16 %v3152, %v3144
    %v4753 = vpack.c.b16 %v3153, %v3145
    %v4754 = vpack.c.b16 %v3162, %v3154
    %v4755 = vpack.c.b16 %v3163, %v3155
    %v4756 = vpack.c.b16 %v3164, %v3156
    %v4757 = vpack.c.b16 %v3165, %v3157
    %v4758 = vpack.c.b16 %v3166, %v3158
    %v4759 = vpack.c.b16 %v3167, %v3159
    %v4760 = vpack.c.b16 %v3168, %v3160
    %v4761 = vpack.c.b16 %v3169, %v3161
    %v4762 = vpack.c.b16 %v3178, %v3170
    %v4763 = vpack.c.b16 %v3179, %v3171
    %v4764 = vpack.c.b16 %v3180, %v3172
    %v4765 = vpack.c.b16 %v3181, %v3173
    %v4766 = vpack.c.b16 %v3182, %v3174
    %v4767 = vpack.c.b16 %v3183, %v3175
    %v4768 = vpack.c.b16 %v3184, %v3176
    %v4769 = vpack.c.b16 %v3185, %v3177
    %v4770 = vpack.c.b16 %v3194, %v3186
    %v4771 = vpack.c.b16 %v3195, %v3187
    %v4772 = vpack.c.b16 %v3196, %v3188
    %v4773 = vpack.c.b16 %v3197, %v3189
    %v4774 = vpack.c.b16 %v3198, %v3190
    %v4775 = vpack.c.b16 %v3199, %v3191
    %v4776 = vpack.c.b16 %v3200, %v3192
    %v4777 = vpack.c.b16 %v3201, %v3193
    %v4778 = vpack.c.b16 %v3210, %v3202
    %v4779 = vpack.c.b16 %v3211, %v3203
    %v4780 = vpack.c.b16 %v3212, %v3204
    %v4781 = vpack.c.b16 %v3213, %v3205
    %v4782 = vpack.c.b16 %v3214, %v3206
    %v4783 = vpack.c.b16 %v3215, %v3207
    %v4784 = vpack.c.b16 %v3216, %v3208
    %v4785 = vpack.c.b16 %v3217, %v3209
    %v4786 = vpack.c.b16 %v3226, %v3218
    %v4787 = vpack.c.b16 %v3227, %v3219
    %v4788 = vpack.c.b16 %v3228, %v3220
    %v4789 = vpack.c.b16 %v3229, %v3221
    %v4790 = vpack.c.b16 %v3230, %v3222
    %v4791 = vpack.c.b16 %v3231, %v3223
    %v4792 = vpack.c.b16 %v3232, %v3224
    %v4793 = vpack.c.b16 %v3233, %v3225
    %v4794 = vpack.c.b16 %v3242, %v3234
    %v4795 = vpack.c.b16 %v3243, %v3235
    %v4796 = vpack.c.b16 %v3244, %v3236
    %v4797 = vpack.c.b16 %v3245, %v3237
    %v4798 = vpack.c.b16 %v3246, %v3238
    %v4799 = vpack.c.b16 %v3247, %v3239
    %v4800 = vpack.c.b16 %v3248, %v3240
    %v4801 = vpack.c.b16 %v3249, %v3241
    %v4802 = vpack.c.b16 %v3258, %v3250
    %v4803 = vpack.c.b16 %v3259, %v3251
    %v4804 = vpack.c.b16 %v3260, %v3252
    %v4805 = vpack.c.b16 %v3261, %v3253
    %v4806 = vpack.c.b16 %v3262, %v3254
    %v4807 = vpack.c.b16 %v3263, %v3255
    %v4808 = vpack.c.b16 %v3264, %v3256
    %v4809 = vpack.c.b16 %v3265, %v3257
    %v4810 = vpack.c.b16 %v3274, %v3266
    %v4811 = vpack.c.b16 %v3275, %v3267
    %v4812 = vpack.c.b16 %v3276, %v3268
    %v4813 = vpack.c.b16 %v3277, %v3269
    %v4814 = vpack.c.b16 %v3278, %v3270
    %v4815 = vpack.c.b16 %v3279, %v3271
    %v4816 = vpack.c.b16 %v3280, %v3272
    %v4817 = vpack.c.b16 %v3281, %v3273
    %v4818 = vpack.c.b16 %v3290, %v3282
    %v4819 = vpack.c.b16 %v3291, %v3283
    %v4820 = vpack.c.b16 %v3292, %v3284
    %v4821 = vpack.c.b16 %v3293, %v3285
    %v4822 = vpack.c.b16 %v3294, %v3286
    %v4823 = vpack.c.b16 %v3295, %v3287
    %v4824 = vpack.c.b16 %v3296, %v3288
    %v4825 = vpack.c.b16 %v3297, %v3289
    %v4826 = vpack.c.b16 %v3306, %v3298
    %v4827 = vpack.c.b16 %v3307, %v3299
    %v4828 = vpack.c.b16 %v3308, %v3300
    %v4829 = vpack.c.b16 %v3309, %v3301
    %v4830 = vpack.c.b16 %v3310, %v3302
    %v4831 = vpack.c.b16 %v3311, %v3303
    %v4832 = vpack.c.b16 %v3312, %v3304
    %v4833 = vpack.c.b16 %v3313, %v3305
    %v4834 = vpack.c.b16 %v3322, %v3314
    %v4835 = vpack.c.b16 %v3323, %v3315
    %v4836 = vpack.c.b16 %v3324, %v3316
    %v4837 = vpack.c.b16 %v3325, %v3317
    %v4838 = vpack.c.b16 %v3326, %v3318
    %v4839 = vpack.c.b16 %v3327, %v3319
    %v4840 = vpack.c.b16 %v3328, %v3320
    %v4841 = vpack.c.b16 %v3329, %v3321
    %v4842 = vpack.c.b16 %v3338, %v3330
    %v4843 = vpack.c.b16 %v3339, %v3331
    %v4844 = vpack.c.b16 %v3340, %v3332
    %v4845 = vpack.c.b16 %v3341, %v3333
    %v4846 = vpack.c.b16 %v3342, %v3334
    %v4847 = vpack.c.b16 %v3343, %v3335
    %v4848 = vpack.c.b16 %v3344, %v3336
    %v4849 = vpack.c.b16 %v3345, %v3337
    %v4850 = vpack.c.b16 %v3354, %v3346
    %v4851 = vpack.c.b16 %v3355, %v3347
    %v4852 = vpack.c.b16 %v3356, %v3348
    %v4853 = vpack.c.b16 %v3357, %v3349
    %v4854 = vpack.c.b16 %v3358, %v3350
    %v4855 = vpack.c.b16 %v3359, %v3351
    %v4856 = vpack.c.b16 %v3360, %v3352
    %v4857 = vpack.c.b16 %v3361, %v3353
    %v4858 = vpack.c.b16 %v3370, %v3362
    %v4859 = vpack.c.b16 %v3371, %v3363
    %v4860 = vpack.c.b16 %v3372, %v3364
    %v4861 = vpack.c.b16 %v3373, %v3365
    %v4862 = vpack.c.b16 %v3374, %v3366
    %v4863 = vpack.c.b16 %v3375, %v3367
    %v4864 = vpack.c.b16 %v3376, %v3368
    %v4865 = vpack.c.b16 %v3377, %v3369
    %v4866 = vpack.c.b16 %v3386, %v3378
    %v4867 = vpack.c.b16 %v3387, %v3379
    %v4868 = vpack.c.b16 %v3388, %v3380
    %v4869 = vpack.c.b16 %v3389, %v3381
    %v4870 = vpack.c.b16 %v3390, %v3382
    %v4871 = vpack.c.b16 %v3391, %v3383
    %v4872 = vpack.c.b16 %v3392, %v3384
    %v4873 = vpack.c.b16 %v3393, %v3385
    %v4874 = vpack.c.b16 %v3402, %v3394
    %v4875 = vpack.c.b16 %v3403, %v3395
    %v4876 = vpack.c.b16 %v3404, %v3396
    %v4877 = vpack.c.b16 %v3405, %v3397
    %v4878 = vpack.c.b16 %v3406, %v3398
    %v4879 = vpack.c.b16 %v3407, %v3399
    %v4880 = vpack.c.b16 %v3408, %v3400
    %v4881 = vpack.c.b16 %v3409, %v3401
    %v4882 = vpack.c.b16 %v3418, %v3410
    %v4883 = vpack.c.b16 %v3419, %v3411
    %v4884 = vpack.c.b16 %v3420, %v3412
    %v4885 = vpack.c.b16 %v3421, %v3413
    %v4886 = vpack.c.b16 %v3422, %v3414
    %v4887 = vpack.c.b16 %v3423, %v3415
    %v4888 = vpack.c.b16 %v3424, %v3416
    %v4889 = vpack.c.b16 %v3425, %v3417
    %v4890 = vpack.c.b16 %v3434, %v3426
    %v4891 = vpack.c.b16 %v3435, %v3427
    %v4892 = vpack.c.b16 %v3436, %v3428
    %v4893 = vpack.c.b16 %v3437, %v3429
    %v4894 = vpack.c.b16 %v3438, %v3430
    %v4895 = vpack.c.b16 %v3439, %v3431
    %v4896 = vpack.c.b16 %v3440, %v3432
    %v4897 = vpack.c.b16 %v3441, %v3433
    %v4898 = vpack.c.b16 %v3450, %v3442
    %v4899 = vpack.c.b16 %v3451, %v3443
    %v4900 = vpack.c.b16 %v3452, %v3444
    %v4901 = vpack.c.b16 %v3453, %v3445
    %v4902 = vpack.c.b16 %v3454, %v3446
    %v4903 = vpack.c.b16 %v3455, %v3447
    %v4904 = vpack.c.b16 %v3456, %v3448
    %v4905 = vpack.c.b16 %v3457, %v3449
    %v4906 = vpack.c.b16 %v3466, %v3458
    %v4907 = vpack.c.b16 %v3467, %v3459
    %v4908 = vpack.c.b16 %v3468, %v3460
    %v4909 = vpack.c.b16 %v3469, %v3461
    %v4910 = vpack.c.b16 %v3470, %v3462
    %v4911 = vpack.c.b16 %v3471, %v3463
    %v4912 = vpack.c.b16 %v3472, %v3464
    %v4913 = vpack.c.b16 %v3473, %v3465
    %v4914 = vpack.c.b16 %v3482, %v3474
    %v4915 = vpack.c.b16 %v3483, %v3475
    %v4916 = vpack.c.b16 %v3484, %v3476
    %v4917 = vpack.c.b16 %v3485, %v3477
    %v4918 = vpack.c.b16 %v3486, %v3478
    %v4919 = vpack.c.b16 %v3487, %v3479
    %v4920 = vpack.c.b16 %v3488, %v3480
    %v4921 = vpack.c.b16 %v3489, %v3481
    %v4922 = vpack.c.b16 %v3498, %v3490
    %v4923 = vpack.c.b16 %v3499, %v3491
    %v4924 = vpack.c.b16 %v3500, %v3492
    %v4925 = vpack.c.b16 %v3501, %v3493
    %v4926 = vpack.c.b16 %v3502, %v3494
    %v4927 = vpack.c.b16 %v3503, %v3495
    %v4928 = vpack.c.b16 %v3504, %v3496
    %v4929 = vpack.c.b16 %v3505, %v3497
    %v4930 = vpack.c.b16 %v3514, %v3506
    %v4931 = vpack.c.b16 %v3515, %v3507
    %v4932 = vpack.c.b16 %v3516, %v3508
    %v4933 = vpack.c.b16 %v3517, %v3509
    %v4934 = vpack.c.b16 %v3518, %v3510
    %v4935 = vpack.c.b16 %v3519, %v3511
    %v4936 = vpack.c.b16 %v3520, %v3512
    %v4937 = vpack.c.b16 %v3521, %v3513
    %v4938 = vpack.c.b16 %v3530, %v3522
    %v4939 = vpack.c.b16 %v3531, %v3523
    %v4940 = vpack.c.b16 %v3532, %v3524
    %v4941 = vpack.c.b16 %v3533, %v3525
    %v4942 = vpack.c.b16 %v3534, %v3526
    %v4943 = vpack.c.b16 %v3535, %v3527
    %v4944 = vpack.c.b16 %v3536, %v3528
    %v4945 = vpack.c.b16 %v3537, %v3529
    %v4946 = vpack.c.b16 %v3546, %v3538
    %v4947 = vpack.c.b16 %v3547, %v3539
    %v4948 = vpack.c.b16 %v3548, %v3540
    %v4949 = vpack.c.b16 %v3549, %v3541
    %v4950 = vpack.c.b16 %v3550, %v3542
    %v4951 = vpack.c.b16 %v3551, %v3543
    %v4952 = vpack.c.b16 %v3552, %v3544
    %v4953 = vpack.c.b16 %v3553, %v3545
    %v4954 = vpack.c.b16 %v3562, %v3554
    %v4955 = vpack.c.b16 %v3563, %v3555
    %v4956 = vpack.c.b16 %v3564, %v3556
    %v4957 = vpack.c.b16 %v3565, %v3557
    %v4958 = vpack.c.b16 %v3566, %v3558
    %v4959 = vpack.c.b16 %v3567, %v3559
    %v4960 = vpack.c.b16 %v3568, %v3560
    %v4961 = vpack.c.b16 %v3569, %v3561
    %v4962 = vpack.c.b16 %v3578, %v3570
    %v4963 = vpack.c.b16 %v3579, %v3571
    %v4964 = vpack.c.b16 %v3580, %v3572
    %v4965 = vpack.c.b16 %v3581, %v3573
    %v4966 = vpack.c.b16 %v3582, %v3574
    %v4967 = vpack.c.b16 %v3583, %v3575
    %v4968 = vpack.c.b16 %v3584, %v3576
    %v4969 = vpack.c.b16 %v3585, %v3577
    %v4970 = vpack.c.b16 %v3594, %v3586
    %v4971 = vpack.c.b16 %v3595, %v3587
    %v4972 = vpack.c.b16 %v3596, %v3588
    %v4973 = vpack.c.b16 %v3597, %v3589
    %v4974 = vpack.c.b16 %v3598, %v3590
    %v4975 = vpack.c.b16 %v3599, %v3591
    %v4976 = vpack.c.b16 %v3600, %v3592
    %v4977 = vpack.c.b16 %v3601, %v3593
    %v4978 = vpack.c.b16 %v3610, %v3602
    %v4979 = vpack.c.b16 %v3611, %v3603
    %v4980 = vpack.c.b16 %v3612, %v3604
    %v4981 = vpack.c.b16 %v3613, %v3605
    %v4982 = vpack.c.b16 %v3614, %v3606
    %v4983 = vpack.c.b16 %v3615, %v3607
    %v4984 = vpack.c.b16 %v3616, %v3608
    %v4985 = vpack.c.b16 %v3617, %v3609
    %v4986 = vpack.c.b16 %v3626, %v3618
    %v4987 = vpack.c.b16 %v3627, %v3619
    %v4988 = vpack.c.b16 %v3628, %v3620
    %v4989 = vpack.c.b16 %v3629, %v3621
    %v4990 = vpack.c.b16 %v3630, %v3622
    %v4991 = vpack.c.b16 %v3631, %v3623
    %v4992 = vpack.c.b16 %v3632, %v3624
    %v4993 = vpack.c.b16 %v3633, %v3625
    %v4994 = vpack.c.b16 %v3642, %v3634
    %v4995 = vpack.c.b16 %v3643, %v3635
    %v4996 = vpack.c.b16 %v3644, %v3636
    %v4997 = vpack.c.b16 %v3645, %v3637
    %v4998 = vpack.c.b16 %v3646, %v3638
    %v4999 = vpack.c.b16 %v3647, %v3639
    %v5000 = vpack.c.b16 %v3648, %v3640
    %v5001 = vpack.c.b16 %v3649, %v3641
    %v5002 = vpack.c.b16 %v3658, %v3650
    %v5003 = vpack.c.b16 %v3659, %v3651
    %v5004 = vpack.c.b16 %v3660, %v3652
    %v5005 = vpack.c.b16 %v3661, %v3653
    %v5006 = vpack.c.b16 %v3662, %v3654
    %v5007 = vpack.c.b16 %v3663, %v3655
    %v5008 = vpack.c.b16 %v3664, %v3656
    %v5009 = vpack.c.b16 %v3665, %v3657
    %v5010 = vpack.c.b16 %v3674, %v3666
    %v5011 = vpack.c.b16 %v3675, %v3667
    %v5012 = vpack.c.b16 %v3676, %v3668
    %v5013 = vpack.c.b16 %v3677, %v3669
    %v5014 = vpack.c.b16 %v3678, %v3670
    %v5015 = vpack.c.b16 %v3679, %v3671
    %v5016 = vpack.c.b16 %v3680, %v3672
    %v5017 = vpack.c.b16 %v3681, %v3673
    %v5018 = vpack.c.b16 %v3690, %v3682
    %v5019 = vpack.c.b16 %v3691, %v3683
    %v5020 = vpack.c.b16 %v3692, %v3684
    %v5021 = vpack.c.b16 %v3693, %v3685
    %v5022 = vpack.c.b16 %v3694, %v3686
    %v5023 = vpack.c.b16 %v3695, %v3687
    %v5024 = vpack.c.b16 %v3696, %v3688
    %v5025 = vpack.c.b16 %v3697, %v3689
    %v5026 = vpack.c.b16 %v3706, %v3698
    %v5027 = vpack.c.b16 %v3707, %v3699
    %v5028 = vpack.c.b16 %v3708, %v3700
    %v5029 = vpack.c.b16 %v3709, %v3701
    %v5030 = vpack.c.b16 %v3710, %v3702
    %v5031 = vpack.c.b16 %v3711, %v3703
    %v5032 = vpack.c.b16 %v3712, %v3704
    %v5033 = vpack.c.b16 %v3713, %v3705
    %v5034 = vpack.c.b16 %v3722, %v3714
    %v5035 = vpack.c.b16 %v3723, %v3715
    %v5036 = vpack.c.b16 %v3724, %v3716
    %v5037 = vpack.c.b16 %v3725, %v3717
    %v5038 = vpack.c.b16 %v3726, %v3718
    %v5039 = vpack.c.b16 %v3727, %v3719
    %v5040 = vpack.c.b16 %v3728, %v3720
    %v5041 = vpack.c.b16 %v3729, %v3721
    %v5042 = vpack.c.b16 %v3738, %v3730
    %v5043 = vpack.c.b16 %v3739, %v3731
    %v5044 = vpack.c.b16 %v3740, %v3732
    %v5045 = vpack.c.b16 %v3741, %v3733
    %v5046 = vpack.c.b16 %v3742, %v3734
    %v5047 = vpack.c.b16 %v3743, %v3735
    %v5048 = vpack.c.b16 %v3744, %v3736
    %v5049 = vpack.c.b16 %v3745, %v3737
    %v5050 = vpack.c.b16 %v3754, %v3746
    %v5051 = vpack.c.b16 %v3755, %v3747
    %v5052 = vpack.c.b16 %v3756, %v3748
    %v5053 = vpack.c.b16 %v3757, %v3749
    %v5054 = vpack.c.b16 %v3758, %v3750
    %v5055 = vpack.c.b16 %v3759, %v3751
    %v5056 = vpack.c.b16 %v3760, %v3752
    %v5057 = vpack.c.b16 %v3761, %v3753
    %v5058 = vpack.c.b16 %v3770, %v3762
    %v5059 = vpack.c.b16 %v3771, %v3763
    %v5060 = vpack.c.b16 %v3772, %v3764
    %v5061 = vpack.c.b16 %v3773, %v3765
    %v5062 = vpack.c.b16 %v3774, %v3766
    %v5063 = vpack.c.b16 %v3775, %v3767
    %v5064 = vpack.c.b16 %v3776, %v3768
    %v5065 = vpack.c.b16 %v3777, %v3769
    %v5066 = vpack.c.b16 %v3786, %v3778
    %v5067 = vpack.c.b16 %v3787, %v3779
    %v5068 = vpack.c.b16 %v3788, %v3780
    %v5069 = vpack.c.b16 %v3789, %v3781
    %v5070 = vpack.c.b16 %v3790, %v3782
    %v5071 = vpack.c.b16 %v3791, %v3783
    %v5072 = vpack.c.b16 %v3792, %v3784
    %v5073 = vpack.c.b16 %v3793, %v3785
    %v5074 = vpack.c.b16 %v3802, %v3794
    %v5075 = vpack.c.b16 %v3803, %v3795
    %v5076 = vpack.c.b16 %v3804, %v3796
    %v5077 = vpack.c.b16 %v3805, %v3797
    %v5078 = vpack.c.b16 %v3806, %v3798
    %v5079 = vpack.c.b16 %v3807, %v3799
    %v5080 = vpack.c.b16 %v3808, %v3800
    %v5081 = vpack.c.b16 %v3809, %v3801
    %v5082 = vpack.c.b16 %v3818, %v3810
    %v5083 = vpack.c.b16 %v3819, %v3811
    %v5084 = vpack.c.b16 %v3820, %v3812
    %v5085 = vpack.c.b16 %v3821, %v3813
    %v5086 = vpack.c.b16 %v3822, %v3814
    %v5087 = vpack.c.b16 %v3823, %v3815
    %v5088 = vpack.c.b16 %v3824, %v3816
    %v5089 = vpack.c.b16 %v3825, %v3817
    %v5090 = vpack.c.b16 %v3834, %v3826
    %v5091 = vpack.c.b16 %v3835, %v3827
    %v5092 = vpack.c.b16 %v3836, %v3828
    %v5093 = vpack.c.b16 %v3837, %v3829
    %v5094 = vpack.c.b16 %v3838, %v3830
    %v5095 = vpack.c.b16 %v3839, %v3831
    %v5096 = vpack.c.b16 %v3840, %v3832
    %v5097 = vpack.c.b16 %v3841, %v3833
    %v5098 = vpack.c.b16 %v3850, %v3842
    %v5099 = vpack.c.b16 %v3851, %v3843
    %v5100 = vpack.c.b16 %v3852, %v3844
    %v5101 = vpack.c.b16 %v3853, %v3845
    %v5102 = vpack.c.b16 %v3854, %v3846
    %v5103 = vpack.c.b16 %v3855, %v3847
    %v5104 = vpack.c.b16 %v3856, %v3848
    %v5105 = vpack.c.b16 %v3857, %v3849
    %v5106 = vpack.c.b16 %v3866, %v3858
    %v5107 = vpack.c.b16 %v3867, %v3859
    %v5108 = vpack.c.b16 %v3868, %v3860
    %v5109 = vpack.c.b16 %v3869, %v3861
    %v5110 = vpack.c.b16 %v3870, %v3862
    %v5111 = vpack.c.b16 %v3871, %v3863
    %v5112 = vpack.c.b16 %v3872, %v3864
    %v5113 = vpack.c.b16 %v3873, %v3865
    %v5114 = vpack.c.b16 %v3882, %v3874
    %v5115 = vpack.c.b16 %v3883, %v3875
    %v5116 = vpack.c.b16 %v3884, %v3876
    %v5117 = vpack.c.b16 %v3885, %v3877
    %v5118 = vpack.c.b16 %v3886, %v3878
    %v5119 = vpack.c.b16 %v3887, %v3879
    %v5120 = vpack.c.b16 %v3888, %v3880
    %v5121 = vpack.c.b16 %v3889, %v3881
    %v5122 = vpack.c.b16 %v3898, %v3890
    %v5123 = vpack.c.b16 %v3899, %v3891
    %v5124 = vpack.c.b16 %v3900, %v3892
    %v5125 = vpack.c.b16 %v3901, %v3893
    %v5126 = vpack.c.b16 %v3902, %v3894
    %v5127 = vpack.c.b16 %v3903, %v3895
    %v5128 = vpack.c.b16 %v3904, %v3896
    %v5129 = vpack.c.b16 %v3905, %v3897
    %v5130 = vpack.c.b16 %v3914, %v3906
    %v5131 = vpack.c.b16 %v3915, %v3907
    %v5132 = vpack.c.b16 %v3916, %v3908
    %v5133 = vpack.c.b16 %v3917, %v3909
    %v5134 = vpack.c.b16 %v3918, %v3910
    %v5135 = vpack.c.b16 %v3919, %v3911
    %v5136 = vpack.c.b16 %v3920, %v3912
    %v5137 = vpack.c.b16 %v3921, %v3913
    %v5138 = vpack.c.b16 %v3930, %v3922
    %v5139 = vpack.c.b16 %v3931, %v3923
    %v5140 = vpack.c.b16 %v3932, %v3924
    %v5141 = vpack.c.b16 %v3933, %v3925
    %v5142 = vpack.c.b16 %v3934, %v3926
    %v5143 = vpack.c.b16 %v3935, %v3927
    %v5144 = vpack.c.b16 %v3936, %v3928
    %v5145 = vpack.c.b16 %v3937, %v3929
    %v5146 = vpack.c.b16 %v3946, %v3938
    %v5147 = vpack.c.b16 %v3947, %v3939
    %v5148 = vpack.c.b16 %v3948, %v3940
    %v5149 = vpack.c.b16 %v3949, %v3941
    %v5150 = vpack.c.b16 %v3950, %v3942
    %v5151 = vpack.c.b16 %v3951, %v3943
    %v5152 = vpack.c.b16 %v3952, %v3944
    %v5153 = vpack.c.b16 %v3953, %v3945
    %v5154 = vpack.c.b16 %v3962, %v3954
    %v5155 = vpack.c.b16 %v3963, %v3955
    %v5156 = vpack.c.b16 %v3964, %v3956
    %v5157 = vpack.c.b16 %v3965, %v3957
    %v5158 = vpack.c.b16 %v3966, %v3958
    %v5159 = vpack.c.b16 %v3967, %v3959
    %v5160 = vpack.c.b16 %v3968, %v3960
    %v5161 = vpack.c.b16 %v3969, %v3961
    %v5162 = vpack.c.b16 %v3978, %v3970
    %v5163 = vpack.c.b16 %v3979, %v3971
    %v5164 = vpack.c.b16 %v3980, %v3972
    %v5165 = vpack.c.b16 %v3981, %v3973
    %v5166 = vpack.c.b16 %v3982, %v3974
    %v5167 = vpack.c.b16 %v3983, %v3975
    %v5168 = vpack.c.b16 %v3984, %v3976
    %v5169 = vpack.c.b16 %v3985, %v3977
    %v5170 = vpack.c.b16 %v3994, %v3986
    %v5171 = vpack.c.b16 %v3995, %v3987
    %v5172 = vpack.c.b16 %v3996, %v3988
    %v5173 = vpack.c.b16 %v3997, %v3989
    %v5174 = vpack.c.b16 %v3998, %v3990
    %v5175 = vpack.c.b16 %v3999, %v3991
    %v5176 = vpack.c.b16 %v4000, %v3992
    %v5177 = vpack.c.b16 %v4001, %v3993
    %v5178 = vpack.c.b16 %v4010, %v4002
    %v5179 = vpack.c.b16 %v4011, %v4003
    %v5180 = vpack.c.b16 %v4012, %v4004
    %v5181 = vpack.c.b16 %v4013, %v4005
    %v5182 = vpack.c.b16 %v4014, %v4006
    %v5183 = vpack.c.b16 %v4015, %v4007
    %v5184 = vpack.c.b16 %v4016, %v4008
    %v5185 = vpack.c.b16 %v4017, %v4009
    %v5186 = vpack.c.b16 %v4026, %v4018
    %v5187 = vpack.c.b16 %v4027, %v4019
    %v5188 = vpack.c.b16 %v4028, %v4020
    %v5189 = vpack.c.b16 %v4029, %v4021
    %v5190 = vpack.c.b16 %v4030, %v4022
    %v5191 = vpack.c.b16 %v4031, %v4023
    %v5192 = vpack.c.b16 %v4032, %v4024
    %v5193 = vpack.c.b16 %v4033, %v4025
    %v5194 = vpack.c.b16 %v4042, %v4034
    %v5195 = vpack.c.b16 %v4043, %v4035
    %v5196 = vpack.c.b16 %v4044, %v4036
    %v5197 = vpack.c.b16 %v4045, %v4037
    %v5198 = vpack.c.b16 %v4046, %v4038
    %v5199 = vpack.c.b16 %v4047, %v4039
    %v5200 = vpack.c.b16 %v4048, %v4040
    %v5201 = vpack.c.b16 %v4049, %v4041
    %v5202 = vpack.c.b16 %v4058, %v4050
    %v5203 = vpack.c.b16 %v4059, %v4051
    %v5204 = vpack.c.b16 %v4060, %v4052
    %v5205 = vpack.c.b16 %v4061, %v4053
    %v5206 = vpack.c.b16 %v4062, %v4054
    %v5207 = vpack.c.b16 %v4063, %v4055
    %v5208 = vpack.c.b16 %v4064, %v4056
    %v5209 = vpack.c.b16 %v4065, %v4057
    %v5210 = vpack.c.b16 %v4074, %v4066
    %v5211 = vpack.c.b16 %v4075, %v4067
    %v5212 = vpack.c.b16 %v4076, %v4068
    %v5213 = vpack.c.b16 %v4077, %v4069
    %v5214 = vpack.c.b16 %v4078, %v4070
    %v5215 = vpack.c.b16 %v4079, %v4071
    %v5216 = vpack.c.b16 %v4080, %v4072
    %v5217 = vpack.c.b16 %v4081, %v4073
    %v5218 = vpack.c.b16 %v4090, %v4082
    %v5219 = vpack.c.b16 %v4091, %v4083
    %v5220 = vpack.c.b16 %v4092, %v4084
    %v5221 = vpack.c.b16 %v4093, %v4085
    %v5222 = vpack.c.b16 %v4094, %v4086
    %v5223 = vpack.c.b16 %v4095, %v4087
    %v5224 = vpack.c.b16 %v4096, %v4088
    %v5225 = vpack.c.b16 %v4097, %v4089
    %v5226 = vpack.c.b16 %v4106, %v4098
    %v5227 = vpack.c.b16 %v4107, %v4099
    %v5228 = vpack.c.b16 %v4108, %v4100
    %v5229 = vpack.c.b16 %v4109, %v4101
    %v5230 = vpack.c.b16 %v4110, %v4102
    %v5231 = vpack.c.b16 %v4111, %v4103
    %v5232 = vpack.c.b16 %v4112, %v4104
    %v5233 = vpack.c.b16 %v4113, %v4105
    %v5234 = vpack.c.b16 %v4122, %v4114
    %v5235 = vpack.c.b16 %v4123, %v4115
    %v5236 = vpack.c.b16 %v4124, %v4116
    %v5237 = vpack.c.b16 %v4125, %v4117
    %v5238 = vpack.c.b16 %v4126, %v4118
    %v5239 = vpack.c.b16 %v4127, %v4119
    %v5240 = vpack.c.b16 %v4128, %v4120
    %v5241 = vpack.c.b16 %v4129, %v4121
    %v5242 = vpack.c.b16 %v4138, %v4130
    %v5243 = vpack.c.b16 %v4139, %v4131
    %v5244 = vpack.c.b16 %v4140, %v4132
    %v5245 = vpack.c.b16 %v4141, %v4133
    %v5246 = vpack.c.b16 %v4142, %v4134
    %v5247 = vpack.c.b16 %v4143, %v4135
    %v5248 = vpack.c.b16 %v4144, %v4136
    %v5249 = vpack.c.b16 %v4145, %v4137
    %v5250 = vpack.c.b16 %v4154, %v4146
    %v5251 = vpack.c.b16 %v4155, %v4147
    %v5252 = vpack.c.b16 %v4156, %v4148
    %v5253 = vpack.c.b16 %v4157, %v4149
    %v5254 = vpack.c.b16 %v4158, %v4150
    %v5255 = vpack.c.b16 %v4159, %v4151
    %v5256 = vpack.c.b16 %v4160, %v4152
    %v5257 = vpack.c.b16 %v4161, %v4153
    %v5258 = vpack.c.b16 %v4170, %v4162
    %v5259 = vpack.c.b16 %v4171, %v4163
    %v5260 = vpack.c.b16 %v4172, %v4164
    %v5261 = vpack.c.b16 %v4173, %v4165
    %v5262 = vpack.c.b16 %v4174, %v4166
    %v5263 = vpack.c.b16 %v4175, %v4167
    %v5264 = vpack.c.b16 %v4176, %v4168
    %v5265 = vpack.c.b16 %v4177, %v4169
    %v5266 = vpack.c.b16 %v4186, %v4178
    %v5267 = vpack.c.b16 %v4187, %v4179
    %v5268 = vpack.c.b16 %v4188, %v4180
    %v5269 = vpack.c.b16 %v4189, %v4181
    %v5270 = vpack.c.b16 %v4190, %v4182
    %v5271 = vpack.c.b16 %v4191, %v4183
    %v5272 = vpack.c.b16 %v4192, %v4184
    %v5273 = vpack.c.b16 %v4193, %v4185
    %v5274 = vpack.c.b16 %v4202, %v4194
    %v5275 = vpack.c.b16 %v4203, %v4195
    %v5276 = vpack.c.b16 %v4204, %v4196
    %v5277 = vpack.c.b16 %v4205, %v4197
    %v5278 = vpack.c.b16 %v4206, %v4198
    %v5279 = vpack.c.b16 %v4207, %v4199
    %v5280 = vpack.c.b16 %v4208, %v4200
    %v5281 = vpack.c.b16 %v4209, %v4201
    %v5282 = vpack.c.b16 %v4218, %v4210
    %v5283 = vpack.c.b16 %v4219, %v4211
    %v5284 = vpack.c.b16 %v4220, %v4212
    %v5285 = vpack.c.b16 %v4221, %v4213
    %v5286 = vpack.c.b16 %v4222, %v4214
    %v5287 = vpack.c.b16 %v4223, %v4215
    %v5288 = vpack.c.b16 %v4224, %v4216
    %v5289 = vpack.c.b16 %v4225, %v4217
    %v5290 = vpack.c.b16 %v4234, %v4226
    %v5291 = vpack.c.b16 %v4235, %v4227
    %v5292 = vpack.c.b16 %v4236, %v4228
    %v5293 = vpack.c.b16 %v4237, %v4229
    %v5294 = vpack.c.b16 %v4238, %v4230
    %v5295 = vpack.c.b16 %v4239, %v4231
    %v5296 = vpack.c.b16 %v4240, %v4232
    %v5297 = vpack.c.b16 %v4241, %v4233
    %v5298 = vpack.c.b16 %v4250, %v4242
    %v5299 = vpack.c.b16 %v4251, %v4243
    %v5300 = vpack.c.b16 %v4252, %v4244
    %v5301 = vpack.c.b16 %v4253, %v4245
    %v5302 = vpack.c.b16 %v4254, %v4246
    %v5303 = vpack.c.b16 %v4255, %v4247
    %v5304 = vpack.c.b16 %v4256, %v4248
    %v5305 = vpack.c.b16 %v4257, %v4249
    %v5306 = vpack.c.b16 %v4266, %v4258
    %v5307 = vpack.c.b16 %v4267, %v4259
    %v5308 = vpack.c.b16 %v4268, %v4260
    %v5309 = vpack.c.b16 %v4269, %v4261
    %v5310 = vpack.c.b16 %v4270, %v4262
    %v5311 = vpack.c.b16 %v4271, %v4263
    %v5312 = vpack.c.b16 %v4272, %v4264
    %v5313 = vpack.c.b16 %v4273, %v4265
    %v5314 = vpack.c.b16 %v4282, %v4274
    %v5315 = vpack.c.b16 %v4283, %v4275
    %v5316 = vpack.c.b16 %v4284, %v4276
    %v5317 = vpack.c.b16 %v4285, %v4277
    %v5318 = vpack.c.b16 %v4286, %v4278
    %v5319 = vpack.c.b16 %v4287, %v4279
    %v5320 = vpack.c.b16 %v4288, %v4280
    %v5321 = vpack.c.b16 %v4289, %v4281
    %v5322 = vpack.c.b16 %v4298, %v4290
    %v5323 = vpack.c.b16 %v4299, %v4291
    %v5324 = vpack.c.b16 %v4300, %v4292
    %v5325 = vpack.c.b16 %v4301, %v4293
    %v5326 = vpack.c.b16 %v4302, %v4294
    %v5327 = vpack.c.b16 %v4303, %v4295
    %v5328 = vpack.c.b16 %v4304, %v4296
    %v5329 = vpack.c.b16 %v4305, %v4297
    %6354 = vmatprep.subr.bf16.mxu0 %v4307
    %6355 = vmatpush1.bf16.msra.mxu0 %v4306
    %6356 = vmatprep.subr.bf16.mxu0 %v4315
    %6357 = vmatpush1.bf16.msra.mxu0 %v4314
    %6358 = vmatprep.subr.bf16.mxu0 %v4323
    %6359 = vmatpush1.bf16.msra.mxu0 %v4322
    %6360 = vmatprep.subr.bf16.mxu0 %v4331
    %6361 = vmatpush1.bf16.msra.mxu0 %v4330
    %6362 = vmatprep.subr.bf16.mxu0 %v4339
    %6363 = vmatpush1.bf16.msra.mxu0 %v4338
    %6364 = vmatprep.subr.bf16.mxu0 %v4347
    %6365 = vmatpush1.bf16.msra.mxu0 %v4346
    %6366 = vmatprep.subr.bf16.mxu0 %v4355
    %6367 = vmatpush1.bf16.msra.mxu0 %v4354
    %6368 = vmatprep.subr.bf16.mxu0 %v4363
    %6369 = vmatpush1.bf16.msra.mxu0 %v4362
    %6370 = vmatprep.subr.bf16.mxu0 %v4371
    %6371 = vmatpush1.bf16.msra.mxu0 %v4370
    %6372 = vmatprep.subr.bf16.mxu0 %v4379
    %6373 = vmatpush1.bf16.msra.mxu0 %v4378
    %6374 = vmatprep.subr.bf16.mxu0 %v4387
    %6375 = vmatpush1.bf16.msra.mxu0 %v4386
    %6376 = vmatprep.subr.bf16.mxu0 %v4395
    %6377 = vmatpush1.bf16.msra.mxu0 %v4394
    %6378 = vmatprep.subr.bf16.mxu0 %v4403
    %6379 = vmatpush1.bf16.msra.mxu0 %v4402
    %6380 = vmatprep.subr.bf16.mxu0 %v4411
    %6381 = vmatpush1.bf16.msra.mxu0 %v4410
    %6382 = vmatprep.subr.bf16.mxu0 %v4419
    %6383 = vmatpush1.bf16.msra.mxu0 %v4418
    %6384 = vmatprep.subr.bf16.mxu0 %v4427
    %6385 = vmatpush1.bf16.msra.mxu0 %v4426
    %6386 = vmatprep.mubr.bf16.mxu0 %v1203
    %6387 = vmatmul.mubr.bf16.gmra.mrb[0].mxu0 %v1202
    %v6388 = vpop.f32.mrb[0].mxu0
    %v6389 = vadd.f32 %v1117, %v6388
    %v6390 = vpop.f32.mrb[0].mxu0
    %v6391 = vadd.f32 %v1121, %v6390
    %v6392 = vpop.f32.mrb[0].mxu0
    %v6393 = vadd.f32 %v1117, %v6392
    %v6394 = vpop.f32.mrb[0].mxu0
    %v6395 = vadd.f32 %v1121, %v6394
    %6396 = vdwg.mxu0
    %6397 = vmatprep.subr.bf16.mxu0 %v4435
    %6398 = vmatpush1.bf16.msra.mxu0 %v4434
    %6399 = vmatprep.subr.bf16.mxu0 %v4443
    %6400 = vmatpush1.bf16.msra.mxu0 %v4442
    %6401 = vmatprep.subr.bf16.mxu0 %v4451
    %6402 = vmatpush1.bf16.msra.mxu0 %v4450
    %6403 = vmatprep.subr.bf16.mxu0 %v4459
    %6404 = vmatpush1.bf16.msra.mxu0 %v4458
    %6405 = vmatprep.subr.bf16.mxu0 %v4467
    %6406 = vmatpush1.bf16.msra.mxu0 %v4466
    %6407 = vmatprep.subr.bf16.mxu0 %v4475
    %6408 = vmatpush1.bf16.msra.mxu0 %v4474
    %6409 = vmatprep.subr.bf16.mxu0 %v4483
    %6410 = vmatpush1.bf16.msra.mxu0 %v4482
    %6411 = vmatprep.subr.bf16.mxu0 %v4491
    %6412 = vmatpush1.bf16.msra.mxu0 %v4490
    %6413 = vmatprep.subr.bf16.mxu0 %v4499
    %6414 = vmatpush1.bf16.msra.mxu0 %v4498
    %6415 = vmatprep.subr.bf16.mxu0 %v4507
    %6416 = vmatpush1.bf16.msra.mxu0 %v4506
    %6417 = vmatprep.subr.bf16.mxu0 %v4515
    %6418 = vmatpush1.bf16.msra.mxu0 %v4514
    %6419 = vmatprep.subr.bf16.mxu0 %v4523
    %6420 = vmatpush1.bf16.msra.mxu0 %v4522
    %6421 = vmatprep.subr.bf16.mxu0 %v4531
    %6422 = vmatpush1.bf16.msra.mxu0 %v4530
    %6423 = vmatprep.subr.bf16.mxu0 %v4539
    %6424 = vmatpush1.bf16.msra.mxu0 %v4538
    %6425 = vmatprep.subr.bf16.mxu0 %v4547
    %6426 = vmatpush1.bf16.msra.mxu0 %v4546
    %6427 = vmatprep.subr.bf16.mxu0 %v4555
    %6428 = vmatpush1.bf16.msra.mxu0 %v4554
    %6429 = vmatprep.mubr.bf16.mxu0 %v1205
    %6430 = vmatmul.mubr.bf16.gmra.mrb[0].mxu0 %v1204
    %v6431 = vpop.f32.mrb[0].mxu0
    %v6432 = vadd.f32 %v6389, %v6431
    %v6433 = vpop.f32.mrb[0].mxu0
    %v6434 = vadd.f32 %v6391, %v6433
    %v6435 = vpop.f32.mrb[0].mxu0
    %v6436 = vadd.f32 %v6393, %v6435
    %v6437 = vpop.f32.mrb[0].mxu0
    %v6438 = vadd.f32 %v6395, %v6437
    %6439 = vdwg.mxu0
    %6440 = vmatprep.subr.bf16.mxu0 %v4563
    %6441 = vmatpush1.bf16.msra.mxu0 %v4562
    %6442 = vmatprep.subr.bf16.mxu0 %v4571
    %6443 = vmatpush1.bf16.msra.mxu0 %v4570
    %6444 = vmatprep.subr.bf16.mxu0 %v4579
    %6445 = vmatpush1.bf16.msra.mxu0 %v4578
    %6446 = vmatprep.subr.bf16.mxu0 %v4587
    %6447 = vmatpush1.bf16.msra.mxu0 %v4586
    %6448 = vmatprep.subr.bf16.mxu0 %v4595
    %6449 = vmatpush1.bf16.msra.mxu0 %v4594
    %6450 = vmatprep.subr.bf16.mxu0 %v4603
    %6451 = vmatpush1.bf16.msra.mxu0 %v4602
    %6452 = vmatprep.subr.bf16.mxu0 %v4611
    %6453 = vmatpush1.bf16.msra.mxu0 %v4610
    %6454 = vmatprep.subr.bf16.mxu0 %v4619
    %6455 = vmatpush1.bf16.msra.mxu0 %v4618
    %6456 = vmatprep.subr.bf16.mxu0 %v4627
    %6457 = vmatpush1.bf16.msra.mxu0 %v4626
    %6458 = vmatprep.subr.bf16.mxu0 %v4635
    %6459 = vmatpush1.bf16.msra.mxu0 %v4634
    %6460 = vmatprep.subr.bf16.mxu0 %v4643
    %6461 = vmatpush1.bf16.msra.mxu0 %v4642
    %6462 = vmatprep.subr.bf16.mxu0 %v4651
    %6463 = vmatpush1.bf16.msra.mxu0 %v4650
    %6464 = vmatprep.subr.bf16.mxu0 %v4659
    %6465 = vmatpush1.bf16.msra.mxu0 %v4658
    %6466 = vmatprep.subr.bf16.mxu0 %v4667
    %6467 = vmatpush1.bf16.msra.mxu0 %v4666
    %6468 = vmatprep.subr.bf16.mxu0 %v4675
    %6469 = vmatpush1.bf16.msra.mxu0 %v4674
    %6470 = vmatprep.subr.bf16.mxu0 %v4683
    %6471 = vmatpush1.bf16.msra.mxu0 %v4682
    %6472 = vmatprep.mubr.bf16.mxu0 %v1207
    %6473 = vmatmul.mubr.bf16.gmra.mrb[0].mxu0 %v1206
    %v6474 = vpop.f32.mrb[0].mxu0
    %v6475 = vadd.f32 %v6432, %v6474
    %v6476 = vpop.f32.mrb[0].mxu0
    %v6477 = vadd.f32 %v6434, %v6476
    %v6478 = vpop.f32.mrb[0].mxu0
    %v6479 = vadd.f32 %v6436, %v6478
    %v6480 = vpop.f32.mrb[0].mxu0
    %v6481 = vadd.f32 %v6438, %v6480
    %6482 = vdwg.mxu0
    %6483 = vmatprep.subr.bf16.mxu0 %v4691
    %6484 = vmatpush1.bf16.msra.mxu0 %v4690
    %6485 = vmatprep.subr.bf16.mxu0 %v4699
    %6486 = vmatpush1.bf16.msra.mxu0 %v4698
    %6487 = vmatprep.subr.bf16.mxu0 %v4707
    %6488 = vmatpush1.bf16.msra.mxu0 %v4706
    %6489 = vmatprep.subr.bf16.mxu0 %v4715
    %6490 = vmatpush1.bf16.msra.mxu0 %v4714
    %6491 = vmatprep.subr.bf16.mxu0 %v4723
    %6492 = vmatpush1.bf16.msra.mxu0 %v4722
    %6493 = vmatprep.subr.bf16.mxu0 %v4731
    %6494 = vmatpush1.bf16.msra.mxu0 %v4730
    %6495 = vmatprep.subr.bf16.mxu0 %v4739
    %6496 = vmatpush1.bf16.msra.mxu0 %v4738
    %6497 = vmatprep.subr.bf16.mxu0 %v4747
    %6498 = vmatpush1.bf16.msra.mxu0 %v4746
    %6499 = vmatprep.subr.bf16.mxu0 %v4755
    %6500 = vmatpush1.bf16.msra.mxu0 %v4754
    %6501 = vmatprep.subr.bf16.mxu0 %v4763
    %6502 = vmatpush1.bf16.msra.mxu0 %v4762
    %6503 = vmatprep.subr.bf16.mxu0 %v4771
    %6504 = vmatpush1.bf16.msra.mxu0 %v4770
    %6505 = vmatprep.subr.bf16.mxu0 %v4779
    %6506 = vmatpush1.bf16.msra.mxu0 %v4778
    %6507 = vmatprep.subr.bf16.mxu0 %v4787
    %6508 = vmatpush1.bf16.msra.mxu0 %v4786
    %6509 = vmatprep.subr.bf16.mxu0 %v4795
    %6510 = vmatpush1.bf16.msra.mxu0 %v4794
    %6511 = vmatprep.subr.bf16.mxu0 %v4803
    %6512 = vmatpush1.bf16.msra.mxu0 %v4802
    %6513 = vmatprep.subr.bf16.mxu0 %v4811
    %6514 = vmatpush1.bf16.msra.mxu0 %v4810
    %6515 = vmatprep.mubr.bf16.mxu0 %v1209
    %6516 = vmatmul.mubr.bf16.gmra.mrb[0].mxu0 %v1208
    %v6517 = vpop.f32.mrb[0].mxu0
    %v6518 = vadd.f32 %v6475, %v6517
    %v6519 = vpop.f32.mrb[0].mxu0
    %v6520 = vadd.f32 %v6477, %v6519
    %v6521 = vpop.f32.mrb[0].mxu0
    %v6522 = vadd.f32 %v6479, %v6521
    %v6523 = vpop.f32.mrb[0].mxu0
    %v6524 = vadd.f32 %v6481, %v6523
    %6525 = vdwg.mxu0
    %6526 = vmatprep.subr.bf16.mxu0 %v4819
    %6527 = vmatpush1.bf16.msra.mxu0 %v4818
    %6528 = vmatprep.subr.bf16.mxu0 %v4827
    %6529 = vmatpush1.bf16.msra.mxu0 %v4826
    %6530 = vmatprep.subr.bf16.mxu0 %v4835
    %6531 = vmatpush1.bf16.msra.mxu0 %v4834
    %6532 = vmatprep.subr.bf16.mxu0 %v4843
    %6533 = vmatpush1.bf16.msra.mxu0 %v4842
    %6534 = vmatprep.subr.bf16.mxu0 %v4851
    %6535 = vmatpush1.bf16.msra.mxu0 %v4850
    %6536 = vmatprep.subr.bf16.mxu0 %v4859
    %6537 = vmatpush1.bf16.msra.mxu0 %v4858
    %6538 = vmatprep.subr.bf16.mxu0 %v4867
    %6539 = vmatpush1.bf16.msra.mxu0 %v4866
    %6540 = vmatprep.subr.bf16.mxu0 %v4875
    %6541 = vmatpush1.bf16.msra.mxu0 %v4874
    %6542 = vmatprep.subr.bf16.mxu0 %v4883
    %6543 = vmatpush1.bf16.msra.mxu0 %v4882
    %6544 = vmatprep.subr.bf16.mxu0 %v4891
    %6545 = vmatpush1.bf16.msra.mxu0 %v4890
    %6546 = vmatprep.subr.bf16.mxu0 %v4899
    %6547 = vmatpush1.bf16.msra.mxu0 %v4898
    %6548 = vmatprep.subr.bf16.mxu0 %v4907
    %6549 = vmatpush1.bf16.msra.mxu0 %v4906
    %6550 = vmatprep.subr.bf16.mxu0 %v4915
    %6551 = vmatpush1.bf16.msra.mxu0 %v4914
    %6552 = vmatprep.subr.bf16.mxu0 %v4923
    %6553 = vmatpush1.bf16.msra.mxu0 %v4922
    %6554 = vmatprep.subr.bf16.mxu0 %v4931
    %6555 = vmatpush1.bf16.msra.mxu0 %v4930
    %6556 = vmatprep.subr.bf16.mxu0 %v4939
    %6557 = vmatpush1.bf16.msra.mxu0 %v4938
    %6558 = vmatprep.mubr.bf16.mxu0 %v1211
    %6559 = vmatmul.mubr.bf16.gmra.mrb[0].mxu0 %v1210
    %v6560 = vpop.f32.mrb[0].mxu0
    %v6561 = vadd.f32 %v6518, %v6560
    %v6562 = vpop.f32.mrb[0].mxu0
    %v6563 = vadd.f32 %v6520, %v6562
    %v6564 = vpop.f32.mrb[0].mxu0
    %v6565 = vadd.f32 %v6522, %v6564
    %v6566 = vpop.f32.mrb[0].mxu0
    %v6567 = vadd.f32 %v6524, %v6566
    %6568 = vdwg.mxu0
    %6569 = vmatprep.subr.bf16.mxu0 %v4947
    %6570 = vmatpush1.bf16.msra.mxu0 %v4946
    %6571 = vmatprep.subr.bf16.mxu0 %v4955
    %6572 = vmatpush1.bf16.msra.mxu0 %v4954
    %6573 = vmatprep.subr.bf16.mxu0 %v4963
    %6574 = vmatpush1.bf16.msra.mxu0 %v4962
    %6575 = vmatprep.subr.bf16.mxu0 %v4971
    %6576 = vmatpush1.bf16.msra.mxu0 %v4970
    %6577 = vmatprep.subr.bf16.mxu0 %v4979
    %6578 = vmatpush1.bf16.msra.mxu0 %v4978
    %6579 = vmatprep.subr.bf16.mxu0 %v4987
    %6580 = vmatpush1.bf16.msra.mxu0 %v4986
    %6581 = vmatprep.subr.bf16.mxu0 %v4995
    %6582 = vmatpush1.bf16.msra.mxu0 %v4994
    %6583 = vmatprep.subr.bf16.mxu0 %v5003
    %6584 = vmatpush1.bf16.msra.mxu0 %v5002
    %6585 = vmatprep.subr.bf16.mxu0 %v5011
    %6586 = vmatpush1.bf16.msra.mxu0 %v5010
    %6587 = vmatprep.subr.bf16.mxu0 %v5019
    %6588 = vmatpush1.bf16.msra.mxu0 %v5018
    %6589 = vmatprep.subr.bf16.mxu0 %v5027
    %6590 = vmatpush1.bf16.msra.mxu0 %v5026
    %6591 = vmatprep.subr.bf16.mxu0 %v5035
    %6592 = vmatpush1.bf16.msra.mxu0 %v5034
    %6593 = vmatprep.subr.bf16.mxu0 %v5043
    %6594 = vmatpush1.bf16.msra.mxu0 %v5042
    %6595 = vmatprep.subr.bf16.mxu0 %v5051
    %6596 = vmatpush1.bf16.msra.mxu0 %v5050
    %6597 = vmatprep.subr.bf16.mxu0 %v5059
    %6598 = vmatpush1.bf16.msra.mxu0 %v5058
    %6599 = vmatprep.subr.bf16.mxu0 %v5067
    %6600 = vmatpush1.bf16.msra.mxu0 %v5066
    %6601 = vmatprep.mubr.bf16.mxu0 %v1213
    %6602 = vmatmul.mubr.bf16.gmra.mrb[0].mxu0 %v1212
    %v6603 = vpop.f32.mrb[0].mxu0
    %v6604 = vadd.f32 %v6561, %v6603
    %v6605 = vpop.f32.mrb[0].mxu0
    %v6606 = vadd.f32 %v6563, %v6605
    %v6607 = vpop.f32.mrb[0].mxu0
    %v6608 = vadd.f32 %v6565, %v6607
    %v6609 = vpop.f32.mrb[0].mxu0
    %v6610 = vadd.f32 %v6567, %v6609
    %6611 = vdwg.mxu0
    %6612 = vmatprep.subr.bf16.mxu0 %v5075
    %6613 = vmatpush1.bf16.msra.mxu0 %v5074
    %6614 = vmatprep.subr.bf16.mxu0 %v5083
    %6615 = vmatpush1.bf16.msra.mxu0 %v5082
    %6616 = vmatprep.subr.bf16.mxu0 %v5091
    %6617 = vmatpush1.bf16.msra.mxu0 %v5090
    %6618 = vmatprep.subr.bf16.mxu0 %v5099
    %6619 = vmatpush1.bf16.msra.mxu0 %v5098
    %6620 = vmatprep.subr.bf16.mxu0 %v5107
    %6621 = vmatpush1.bf16.msra.mxu0 %v5106
    %6622 = vmatprep.subr.bf16.mxu0 %v5115
    %6623 = vmatpush1.bf16.msra.mxu0 %v5114
    %6624 = vmatprep.subr.bf16.mxu0 %v5123
    %6625 = vmatpush1.bf16.msra.mxu0 %v5122
    %6626 = vmatprep.subr.bf16.mxu0 %v5131
    %6627 = vmatpush1.bf16.msra.mxu0 %v5130
    %6628 = vmatprep.subr.bf16.mxu0 %v5139
    %6629 = vmatpush1.bf16.msra.mxu0 %v5138
    %6630 = vmatprep.subr.bf16.mxu0 %v5147
    %6631 = vmatpush1.bf16.msra.mxu0 %v5146
    %6632 = vmatprep.subr.bf16.mxu0 %v5155
    %6633 = vmatpush1.bf16.msra.mxu0 %v5154
    %6634 = vmatprep.subr.bf16.mxu0 %v5163
    %6635 = vmatpush1.bf16.msra.mxu0 %v5162
    %6636 = vmatprep.subr.bf16.mxu0 %v5171
    %6637 = vmatpush1.bf16.msra.mxu0 %v5170
    %6638 = vmatprep.subr.bf16.mxu0 %v5179
    %6639 = vmatpush1.bf16.msra.mxu0 %v5178
    %6640 = vmatprep.subr.bf16.mxu0 %v5187
    %6641 = vmatpush1.bf16.msra.mxu0 %v5186
    %6642 = vmatprep.subr.bf16.mxu0 %v5195
    %6643 = vmatpush1.bf16.msra.mxu0 %v5194
    %6644 = vmatprep.mubr.bf16.mxu0 %v1215
    %6645 = vmatmul.mubr.bf16.gmra.mrb[0].mxu0 %v1214
    %v6646 = vpop.f32.mrb[0].mxu0
    %v6647 = vadd.f32 %v6604, %v6646
    %v6648 = vpop.f32.mrb[0].mxu0
    %v6649 = vadd.f32 %v6606, %v6648
    %v6650 = vpop.f32.mrb[0].mxu0
    %v6651 = vadd.f32 %v6608, %v6650
    %v6652 = vpop.f32.mrb[0].mxu0
    %v6653 = vadd.f32 %v6610, %v6652
    %6654 = vdwg.mxu0
    %6655 = vmatprep.subr.bf16.mxu0 %v5203
    %6656 = vmatpush1.bf16.msra.mxu0 %v5202
    %6657 = vmatprep.subr.bf16.mxu0 %v5211
    %6658 = vmatpush1.bf16.msra.mxu0 %v5210
    %6659 = vmatprep.subr.bf16.mxu0 %v5219
    %6660 = vmatpush1.bf16.msra.mxu0 %v5218
    %6661 = vmatprep.subr.bf16.mxu0 %v5227
    %6662 = vmatpush1.bf16.msra.mxu0 %v5226
    %6663 = vmatprep.subr.bf16.mxu0 %v5235
    %6664 = vmatpush1.bf16.msra.mxu0 %v5234
    %6665 = vmatprep.subr.bf16.mxu0 %v5243
    %6666 = vmatpush1.bf16.msra.mxu0 %v5242
    %6667 = vmatprep.subr.bf16.mxu0 %v5251
    %6668 = vmatpush1.bf16.msra.mxu0 %v5250
    %6669 = vmatprep.subr.bf16.mxu0 %v5259
    %6670 = vmatpush1.bf16.msra.mxu0 %v5258
    %6671 = vmatprep.subr.bf16.mxu0 %v5267
    %6672 = vmatpush1.bf16.msra.mxu0 %v5266
    %6673 = vmatprep.subr.bf16.mxu0 %v5275
    %6674 = vmatpush1.bf16.msra.mxu0 %v5274
    %6675 = vmatprep.subr.bf16.mxu0 %v5283
    %6676 = vmatpush1.bf16.msra.mxu0 %v5282
    %6677 = vmatprep.subr.bf16.mxu0 %v5291
    %6678 = vmatpush1.bf16.msra.mxu0 %v5290
    %6679 = vmatprep.subr.bf16.mxu0 %v5299
    %6680 = vmatpush1.bf16.msra.mxu0 %v5298
    %6681 = vmatprep.subr.bf16.mxu0 %v5307
    %6682 = vmatpush1.bf16.msra.mxu0 %v5306
    %6683 = vmatprep.subr.bf16.mxu0 %v5315
    %6684 = vmatpush1.bf16.msra.mxu0 %v5314
    %6685 = vmatprep.subr.bf16.mxu0 %v5323
    %6686 = vmatpush1.bf16.msra.mxu0 %v5322
    %6687 = vmatprep.mubr.bf16.mxu0 %v1217
    %6688 = vmatmul.mubr.bf16.gmra.mrb[0].mxu0 %v1216
    %v6689 = vpop.f32.mrb[0].mxu0
    %v6690 = vadd.f32 %v6647, %v6689
    %v6691 = vpop.f32.mrb[0].mxu0
    %v6692 = vadd.f32 %v6649, %v6691
    %v6693 = vpop.f32.mrb[0].mxu0
    %v6694 = vadd.f32 %v6651, %v6693
    %v6695 = vpop.f32.mrb[0].mxu0
    %v6696 = vadd.f32 %v6653, %v6695
    %6697 = vdwg.mxu0
    %6698 = vmatprep.subr.bf16.mxu0 %v4309
    %6699 = vmatpush1.bf16.msra.mxu0 %v4308
    %6700 = vmatprep.subr.bf16.mxu0 %v4317
    %6701 = vmatpush1.bf16.msra.mxu0 %v4316
    %6702 = vmatprep.subr.bf16.mxu0 %v4325
    %6703 = vmatpush1.bf16.msra.mxu0 %v4324
    %6704 = vmatprep.subr.bf16.mxu0 %v4333
    %6705 = vmatpush1.bf16.msra.mxu0 %v4332
    %6706 = vmatprep.subr.bf16.mxu0 %v4341
    %6707 = vmatpush1.bf16.msra.mxu0 %v4340
    %6708 = vmatprep.subr.bf16.mxu0 %v4349
    %6709 = vmatpush1.bf16.msra.mxu0 %v4348
    %6710 = vmatprep.subr.bf16.mxu0 %v4357
    %6711 = vmatpush1.bf16.msra.mxu0 %v4356
    %6712 = vmatprep.subr.bf16.mxu0 %v4365
    %6713 = vmatpush1.bf16.msra.mxu0 %v4364
    %6714 = vmatprep.subr.bf16.mxu0 %v4373
    %6715 = vmatpush1.bf16.msra.mxu0 %v4372
    %6716 = vmatprep.subr.bf16.mxu0 %v4381
    %6717 = vmatpush1.bf16.msra.mxu0 %v4380
    %6718 = vmatprep.subr.bf16.mxu0 %v4389
    %6719 = vmatpush1.bf16.msra.mxu0 %v4388
    %6720 = vmatprep.subr.bf16.mxu0 %v4397
    %6721 = vmatpush1.bf16.msra.mxu0 %v4396
    %6722 = vmatprep.subr.bf16.mxu0 %v4405
    %6723 = vmatpush1.bf16.msra.mxu0 %v4404
    %6724 = vmatprep.subr.bf16.mxu0 %v4413
    %6725 = vmatpush1.bf16.msra.mxu0 %v4412
    %6726 = vmatprep.subr.bf16.mxu0 %v4421
    %6727 = vmatpush1.bf16.msra.mxu0 %v4420
    %6728 = vmatprep.subr.bf16.mxu0 %v4429
    %6729 = vmatpush1.bf16.msra.mxu0 %v4428
    %6730 = vmatprep.mubr.bf16.mxu0 %v1203
    %6731 = vmatmul.mubr.bf16.gmra.mrb[0].mxu0 %v1202
    %v6732 = vpop.f32.mrb[0].mxu0
    %v6733 = vadd.f32 %v1125, %v6732
    %v6734 = vpop.f32.mrb[0].mxu0
    %v6735 = vadd.f32 %v1129, %v6734
    %v6736 = vpop.f32.mrb[0].mxu0
    %v6737 = vadd.f32 %v1125, %v6736
    %v6738 = vpop.f32.mrb[0].mxu0
    %v6739 = vadd.f32 %v1129, %v6738
    %6740 = vdwg.mxu0
    %6741 = vmatprep.subr.bf16.mxu0 %v4437
    %6742 = vmatpush1.bf16.msra.mxu0 %v4436
    %6743 = vmatprep.subr.bf16.mxu0 %v4445
    %6744 = vmatpush1.bf16.msra.mxu0 %v4444
    %6745 = vmatprep.subr.bf16.mxu0 %v4453
    %6746 = vmatpush1.bf16.msra.mxu0 %v4452
    %6747 = vmatprep.subr.bf16.mxu0 %v4461
    %6748 = vmatpush1.bf16.msra.mxu0 %v4460
    %6749 = vmatprep.subr.bf16.mxu0 %v4469
    %6750 = vmatpush1.bf16.msra.mxu0 %v4468
    %6751 = vmatprep.subr.bf16.mxu0 %v4477
    %6752 = vmatpush1.bf16.msra.mxu0 %v4476
    %6753 = vmatprep.subr.bf16.mxu0 %v4485
    %6754 = vmatpush1.bf16.msra.mxu0 %v4484
    %6755 = vmatprep.subr.bf16.mxu0 %v4493
    %6756 = vmatpush1.bf16.msra.mxu0 %v4492
    %6757 = vmatprep.subr.bf16.mxu0 %v4501
    %6758 = vmatpush1.bf16.msra.mxu0 %v4500
    %6759 = vmatprep.subr.bf16.mxu0 %v4509
    %6760 = vmatpush1.bf16.msra.mxu0 %v4508
    %6761 = vmatprep.subr.bf16.mxu0 %v4517
    %6762 = vmatpush1.bf16.msra.mxu0 %v4516
    %6763 = vmatprep.subr.bf16.mxu0 %v4525
    %6764 = vmatpush1.bf16.msra.mxu0 %v4524
    %6765 = vmatprep.subr.bf16.mxu0 %v4533
    %6766 = vmatpush1.bf16.msra.mxu0 %v4532
    %6767 = vmatprep.subr.bf16.mxu0 %v4541
    %6768 = vmatpush1.bf16.msra.mxu0 %v4540
    %6769 = vmatprep.subr.bf16.mxu0 %v4549
    %6770 = vmatpush1.bf16.msra.mxu0 %v4548
    %6771 = vmatprep.subr.bf16.mxu0 %v4557
    %6772 = vmatpush1.bf16.msra.mxu0 %v4556
    %6773 = vmatprep.mubr.bf16.mxu0 %v1205
    %6774 = vmatmul.mubr.bf16.gmra.mrb[0].mxu0 %v1204
    %v6775 = vpop.f32.mrb[0].mxu0
    %v6776 = vadd.f32 %v6733, %v6775
    %v6777 = vpop.f32.mrb[0].mxu0
    %v6778 = vadd.f32 %v6735, %v6777
    %v6779 = vpop.f32.mrb[0].mxu0
    %v6780 = vadd.f32 %v6737, %v6779
    %v6781 = vpop.f32.mrb[0].mxu0
    %v6782 = vadd.f32 %v6739, %v6781
    %6783 = vdwg.mxu0
    %6784 = vmatprep.subr.bf16.mxu0 %v4565
    %6785 = vmatpush1.bf16.msra.mxu0 %v4564
    %6786 = vmatprep.subr.bf16.mxu0 %v4573
    %6787 = vmatpush1.bf16.msra.mxu0 %v4572
    %6788 = vmatprep.subr.bf16.mxu0 %v4581
    %6789 = vmatpush1.bf16.msra.mxu0 %v4580
    %6790 = vmatprep.subr.bf16.mxu0 %v4589
    %6791 = vmatpush1.bf16.msra.mxu0 %v4588
    %6792 = vmatprep.subr.bf16.mxu0 %v4597
    %6793 = vmatpush1.bf16.msra.mxu0 %v4596
    %6794 = vmatprep.subr.bf16.mxu0 %v4605
    %6795 = vmatpush1.bf16.msra.mxu0 %v4604
    %6796 = vmatprep.subr.bf16.mxu0 %v4613
    %6797 = vmatpush1.bf16.msra.mxu0 %v4612
    %6798 = vmatprep.subr.bf16.mxu0 %v4621
    %6799 = vmatpush1.bf16.msra.mxu0 %v4620
    %6800 = vmatprep.subr.bf16.mxu0 %v4629
    %6801 = vmatpush1.bf16.msra.mxu0 %v4628
    %6802 = vmatprep.subr.bf16.mxu0 %v4637
    %6803 = vmatpush1.bf16.msra.mxu0 %v4636
    %6804 = vmatprep.subr.bf16.mxu0 %v4645
    %6805 = vmatpush1.bf16.msra.mxu0 %v4644
    %6806 = vmatprep.subr.bf16.mxu0 %v4653
    %6807 = vmatpush1.bf16.msra.mxu0 %v4652
    %6808 = vmatprep.subr.bf16.mxu0 %v4661
    %6809 = vmatpush1.bf16.msra.mxu0 %v4660
    %6810 = vmatprep.subr.bf16.mxu0 %v4669
    %6811 = vmatpush1.bf16.msra.mxu0 %v4668
    %6812 = vmatprep.subr.bf16.mxu0 %v4677
    %6813 = vmatpush1.bf16.msra.mxu0 %v4676
    %6814 = vmatprep.subr.bf16.mxu0 %v4685
    %6815 = vmatpush1.bf16.msra.mxu0 %v4684
    %6816 = vmatprep.mubr.bf16.mxu0 %v1207
    %6817 = vmatmul.mubr.bf16.gmra.mrb[0].mxu0 %v1206
    %v6818 = vpop.f32.mrb[0].mxu0
    %v6819 = vadd.f32 %v6776, %v6818
    %v6820 = vpop.f32.mrb[0].mxu0
    %v6821 = vadd.f32 %v6778, %v6820
    %v6822 = vpop.f32.mrb[0].mxu0
    %v6823 = vadd.f32 %v6780, %v6822
    %v6824 = vpop.f32.mrb[0].mxu0
    %v6825 = vadd.f32 %v6782, %v6824
    %6826 = vdwg.mxu0
    %6827 = vmatprep.subr.bf16.mxu0 %v4693
    %6828 = vmatpush1.bf16.msra.mxu0 %v4692
    %6829 = vmatprep.subr.bf16.mxu0 %v4701
    %6830 = vmatpush1.bf16.msra.mxu0 %v4700
    %6831 = vmatprep.subr.bf16.mxu0 %v4709
    %6832 = vmatpush1.bf16.msra.mxu0 %v4708
    %6833 = vmatprep.subr.bf16.mxu0 %v4717
    %6834 = vmatpush1.bf16.msra.mxu0 %v4716
    %6835 = vmatprep.subr.bf16.mxu0 %v4725
    %6836 = vmatpush1.bf16.msra.mxu0 %v4724
    %6837 = vmatprep.subr.bf16.mxu0 %v4733
    %6838 = vmatpush1.bf16.msra.mxu0 %v4732
    %6839 = vmatprep.subr.bf16.mxu0 %v4741
    %6840 = vmatpush1.bf16.msra.mxu0 %v4740
    %6841 = vmatprep.subr.bf16.mxu0 %v4749
    %6842 = vmatpush1.bf16.msra.mxu0 %v4748
    %6843 = vmatprep.subr.bf16.mxu0 %v4757
    %6844 = vmatpush1.bf16.msra.mxu0 %v4756
    %6845 = vmatprep.subr.bf16.mxu0 %v4765
    %6846 = vmatpush1.bf16.msra.mxu0 %v4764
    %6847 = vmatprep.subr.bf16.mxu0 %v4773
    %6848 = vmatpush1.bf16.msra.mxu0 %v4772
    %6849 = vmatprep.subr.bf16.mxu0 %v4781
    %6850 = vmatpush1.bf16.msra.mxu0 %v4780
    %6851 = vmatprep.subr.bf16.mxu0 %v4789
    %6852 = vmatpush1.bf16.msra.mxu0 %v4788
    %6853 = vmatprep.subr.bf16.mxu0 %v4797
    %6854 = vmatpush1.bf16.msra.mxu0 %v4796
    %6855 = vmatprep.subr.bf16.mxu0 %v4805
    %6856 = vmatpush1.bf16.msra.mxu0 %v4804
    %6857 = vmatprep.subr.bf16.mxu0 %v4813
    %6858 = vmatpush1.bf16.msra.mxu0 %v4812
    %6859 = vmatprep.mubr.bf16.mxu0 %v1209
    %6860 = vmatmul.mubr.bf16.gmra.mrb[0].mxu0 %v1208
    %v6861 = vpop.f32.mrb[0].mxu0
    %v6862 = vadd.f32 %v6819, %v6861
    %v6863 = vpop.f32.mrb[0].mxu0
    %v6864 = vadd.f32 %v6821, %v6863
    %v6865 = vpop.f32.mrb[0].mxu0
    %v6866 = vadd.f32 %v6823, %v6865
    %v6867 = vpop.f32.mrb[0].mxu0
    %v6868 = vadd.f32 %v6825, %v6867
    %6869 = vdwg.mxu0
    %6870 = vmatprep.subr.bf16.mxu0 %v4821
    %6871 = vmatpush1.bf16.msra.mxu0 %v4820
    %6872 = vmatprep.subr.bf16.mxu0 %v4829
    %6873 = vmatpush1.bf16.msra.mxu0 %v4828
    %6874 = vmatprep.subr.bf16.mxu0 %v4837
    %6875 = vmatpush1.bf16.msra.mxu0 %v4836
    %6876 = vmatprep.subr.bf16.mxu0 %v4845
    %6877 = vmatpush1.bf16.msra.mxu0 %v4844
    %6878 = vmatprep.subr.bf16.mxu0 %v4853
    %6879 = vmatpush1.bf16.msra.mxu0 %v4852
    %6880 = vmatprep.subr.bf16.mxu0 %v4861
    %6881 = vmatpush1.bf16.msra.mxu0 %v4860
    %6882 = vmatprep.subr.bf16.mxu0 %v4869
    %6883 = vmatpush1.bf16.msra.mxu0 %v4868
    %6884 = vmatprep.subr.bf16.mxu0 %v4877
    %6885 = vmatpush1.bf16.msra.mxu0 %v4876
    %6886 = vmatprep.subr.bf16.mxu0 %v4885
    %6887 = vmatpush1.bf16.msra.mxu0 %v4884
    %6888 = vmatprep.subr.bf16.mxu0 %v4893
    %6889 = vmatpush1.bf16.msra.mxu0 %v4892
    %6890 = vmatprep.subr.bf16.mxu0 %v4901
    %6891 = vmatpush1.bf16.msra.mxu0 %v4900
    %6892 = vmatprep.subr.bf16.mxu0 %v4909
    %6893 = vmatpush1.bf16.msra.mxu0 %v4908
    %6894 = vmatprep.subr.bf16.mxu0 %v4917
    %6895 = vmatpush1.bf16.msra.mxu0 %v4916
    %6896 = vmatprep.subr.bf16.mxu0 %v4925
    %6897 = vmatpush1.bf16.msra.mxu0 %v4924
    %6898 = vmatprep.subr.bf16.mxu0 %v4933
    %6899 = vmatpush1.bf16.msra.mxu0 %v4932
    %6900 = vmatprep.subr.bf16.mxu0 %v4941
    %6901 = vmatpush1.bf16.msra.mxu0 %v4940
    %6902 = vmatprep.mubr.bf16.mxu0 %v1211
    %6903 = vmatmul.mubr.bf16.gmra.mrb[0].mxu0 %v1210
    %v6904 = vpop.f32.mrb[0].mxu0
    %v6905 = vadd.f32 %v6862, %v6904
    %v6906 = vpop.f32.mrb[0].mxu0
    %v6907 = vadd.f32 %v6864, %v6906
    %v6908 = vpop.f32.mrb[0].mxu0
    %v6909 = vadd.f32 %v6866, %v6908
    %v6910 = vpop.f32.mrb[0].mxu0
    %v6911 = vadd.f32 %v6868, %v6910
    %6912 = vdwg.mxu0
    %6913 = vmatprep.subr.bf16.mxu0 %v4949
    %6914 = vmatpush1.bf16.msra.mxu0 %v4948
    %6915 = vmatprep.subr.bf16.mxu0 %v4957
    %6916 = vmatpush1.bf16.msra.mxu0 %v4956
    %6917 = vmatprep.subr.bf16.mxu0 %v4965
    %6918 = vmatpush1.bf16.msra.mxu0 %v4964
    %6919 = vmatprep.subr.bf16.mxu0 %v4973
    %6920 = vmatpush1.bf16.msra.mxu0 %v4972
    %6921 = vmatprep.subr.bf16.mxu0 %v4981
    %6922 = vmatpush1.bf16.msra.mxu0 %v4980
    %6923 = vmatprep.subr.bf16.mxu0 %v4989
    %6924 = vmatpush1.bf16.msra.mxu0 %v4988
    %6925 = vmatprep.subr.bf16.mxu0 %v4997
    %6926 = vmatpush1.bf16.msra.mxu0 %v4996
    %6927 = vmatprep.subr.bf16.mxu0 %v5005
    %6928 = vmatpush1.bf16.msra.mxu0 %v5004
    %6929 = vmatprep.subr.bf16.mxu0 %v5013
    %6930 = vmatpush1.bf16.msra.mxu0 %v5012
    %6931 = vmatprep.subr.bf16.mxu0 %v5021
    %6932 = vmatpush1.bf16.msra.mxu0 %v5020
    %6933 = vmatprep.subr.bf16.mxu0 %v5029
    %6934 = vmatpush1.bf16.msra.mxu0 %v5028
    %6935 = vmatprep.subr.bf16.mxu0 %v5037
    %6936 = vmatpush1.bf16.msra.mxu0 %v5036
    %6937 = vmatprep.subr.bf16.mxu0 %v5045
    %6938 = vmatpush1.bf16.msra.mxu0 %v5044
    %6939 = vmatprep.subr.bf16.mxu0 %v5053
    %6940 = vmatpush1.bf16.msra.mxu0 %v5052
    %6941 = vmatprep.subr.bf16.mxu0 %v5061
    %6942 = vmatpush1.bf16.msra.mxu0 %v5060
    %6943 = vmatprep.subr.bf16.mxu0 %v5069
    %6944 = vmatpush1.bf16.msra.mxu0 %v5068
    %6945 = vmatprep.mubr.bf16.mxu0 %v1213
    %6946 = vmatmul.mubr.bf16.gmra.mrb[0].mxu0 %v1212
    %v6947 = vpop.f32.mrb[0].mxu0
    %v6948 = vadd.f32 %v6905, %v6947
    %v6949 = vpop.f32.mrb[0].mxu0
    %v6950 = vadd.f32 %v6907, %v6949
    %v6951 = vpop.f32.mrb[0].mxu0
    %v6952 = vadd.f32 %v6909, %v6951
    %v6953 = vpop.f32.mrb[0].mxu0
    %v6954 = vadd.f32 %v6911, %v6953
    %6955 = vdwg.mxu0
    %6956 = vmatprep.subr.bf16.mxu0 %v5077
    %6957 = vmatpush1.bf16.msra.mxu0 %v5076
    %6958 = vmatprep.subr.bf16.mxu0 %v5085
    %6959 = vmatpush1.bf16.msra.mxu0 %v5084
    %6960 = vmatprep.subr.bf16.mxu0 %v5093
    %6961 = vmatpush1.bf16.msra.mxu0 %v5092
    %6962 = vmatprep.subr.bf16.mxu0 %v5101
    %6963 = vmatpush1.bf16.msra.mxu0 %v5100
    %6964 = vmatprep.subr.bf16.mxu0 %v5109
    %6965 = vmatpush1.bf16.msra.mxu0 %v5108
    %6966 = vmatprep.subr.bf16.mxu0 %v5117
    %6967 = vmatpush1.bf16.msra.mxu0 %v5116
    %6968 = vmatprep.subr.bf16.mxu0 %v5125
    %6969 = vmatpush1.bf16.msra.mxu0 %v5124
    %6970 = vmatprep.subr.bf16.mxu0 %v5133
    %6971 = vmatpush1.bf16.msra.mxu0 %v5132
    %6972 = vmatprep.subr.bf16.mxu0 %v5141
    %6973 = vmatpush1.bf16.msra.mxu0 %v5140
    %6974 = vmatprep.subr.bf16.mxu0 %v5149
    %6975 = vmatpush1.bf16.msra.mxu0 %v5148
    %6976 = vmatprep.subr.bf16.mxu0 %v5157
    %6977 = vmatpush1.bf16.msra.mxu0 %v5156
    %6978 = vmatprep.subr.bf16.mxu0 %v5165
    %6979 = vmatpush1.bf16.msra.mxu0 %v5164
    %6980 = vmatprep.subr.bf16.mxu0 %v5173
    %6981 = vmatpush1.bf16.msra.mxu0 %v5172
    %6982 = vmatprep.subr.bf16.mxu0 %v5181
    %6983 = vmatpush1.bf16.msra.mxu0 %v5180
    %6984 = vmatprep.subr.bf16.mxu0 %v5189
    %6985 = vmatpush1.bf16.msra.mxu0 %v5188
    %6986 = vmatprep.subr.bf16.mxu0 %v5197
    %6987 = vmatpush1.bf16.msra.mxu0 %v5196
    %6988 = vmatprep.mubr.bf16.mxu0 %v1215
    %6989 = vmatmul.mubr.bf16.gmra.mrb[0].mxu0 %v1214
    %v6990 = vpop.f32.mrb[0].mxu0
    %v6991 = vadd.f32 %v6948, %v6990
    %v6992 = vpop.f32.mrb[0].mxu0
    %v6993 = vadd.f32 %v6950, %v6992
    %v6994 = vpop.f32.mrb[0].mxu0
    %v6995 = vadd.f32 %v6952, %v6994
    %v6996 = vpop.f32.mrb[0].mxu0
    %v6997 = vadd.f32 %v6954, %v6996
    %6998 = vdwg.mxu0
    %6999 = vmatprep.subr.bf16.mxu0 %v5205
    %7000 = vmatpush1.bf16.msra.mxu0 %v5204
    %7001 = vmatprep.subr.bf16.mxu0 %v5213
    %7002 = vmatpush1.bf16.msra.mxu0 %v5212
    %7003 = vmatprep.subr.bf16.mxu0 %v5221
    %7004 = vmatpush1.bf16.msra.mxu0 %v5220
    %7005 = vmatprep.subr.bf16.mxu0 %v5229
    %7006 = vmatpush1.bf16.msra.mxu0 %v5228
    %7007 = vmatprep.subr.bf16.mxu0 %v5237
    %7008 = vmatpush1.bf16.msra.mxu0 %v5236
    %7009 = vmatprep.subr.bf16.mxu0 %v5245
    %7010 = vmatpush1.bf16.msra.mxu0 %v5244
    %7011 = vmatprep.subr.bf16.mxu0 %v5253
    %7012 = vmatpush1.bf16.msra.mxu0 %v5252
    %7013 = vmatprep.subr.bf16.mxu0 %v5261
    %7014 = vmatpush1.bf16.msra.mxu0 %v5260
    %7015 = vmatprep.subr.bf16.mxu0 %v5269
    %7016 = vmatpush1.bf16.msra.mxu0 %v5268
    %7017 = vmatprep.subr.bf16.mxu0 %v5277
    %7018 = vmatpush1.bf16.msra.mxu0 %v5276
    %7019 = vmatprep.subr.bf16.mxu0 %v5285
    %7020 = vmatpush1.bf16.msra.mxu0 %v5284
    %7021 = vmatprep.subr.bf16.mxu0 %v5293
    %7022 = vmatpush1.bf16.msra.mxu0 %v5292
    %7023 = vmatprep.subr.bf16.mxu0 %v5301
    %7024 = vmatpush1.bf16.msra.mxu0 %v5300
    %7025 = vmatprep.subr.bf16.mxu0 %v5309
    %7026 = vmatpush1.bf16.msra.mxu0 %v5308
    %7027 = vmatprep.subr.bf16.mxu0 %v5317
    %7028 = vmatpush1.bf16.msra.mxu0 %v5316
    %7029 = vmatprep.subr.bf16.mxu0 %v5325
    %7030 = vmatpush1.bf16.msra.mxu0 %v5324
    %7031 = vmatprep.mubr.bf16.mxu0 %v1217
    %7032 = vmatmul.mubr.bf16.gmra.mrb[0].mxu0 %v1216
    %v7033 = vpop.f32.mrb[0].mxu0
    %v7034 = vadd.f32 %v6991, %v7033
    %v7035 = vpop.f32.mrb[0].mxu0
    %v7036 = vadd.f32 %v6993, %v7035
    %v7037 = vpop.f32.mrb[0].mxu0
    %v7038 = vadd.f32 %v6995, %v7037
    %v7039 = vpop.f32.mrb[0].mxu0
    %v7040 = vadd.f32 %v6997, %v7039
    %7041 = vdwg.mxu0
    %7042 = vmatprep.subr.bf16.mxu0 %v4311
    %7043 = vmatpush1.bf16.msra.mxu0 %v4310
    %7044 = vmatprep.subr.bf16.mxu0 %v4319
    %7045 = vmatpush1.bf16.msra.mxu0 %v4318
    %7046 = vmatprep.subr.bf16.mxu0 %v4327
    %7047 = vmatpush1.bf16.msra.mxu0 %v4326
    %7048 = vmatprep.subr.bf16.mxu0 %v4335
    %7049 = vmatpush1.bf16.msra.mxu0 %v4334
    %7050 = vmatprep.subr.bf16.mxu0 %v4343
    %7051 = vmatpush1.bf16.msra.mxu0 %v4342
    %7052 = vmatprep.subr.bf16.mxu0 %v4351
    %7053 = vmatpush1.bf16.msra.mxu0 %v4350
    %7054 = vmatprep.subr.bf16.mxu0 %v4359
    %7055 = vmatpush1.bf16.msra.mxu0 %v4358
    %7056 = vmatprep.subr.bf16.mxu0 %v4367
    %7057 = vmatpush1.bf16.msra.mxu0 %v4366
    %7058 = vmatprep.subr.bf16.mxu0 %v4375
    %7059 = vmatpush1.bf16.msra.mxu0 %v4374
    %7060 = vmatprep.subr.bf16.mxu0 %v4383
    %7061 = vmatpush1.bf16.msra.mxu0 %v4382
    %7062 = vmatprep.subr.bf16.mxu0 %v4391
    %7063 = vmatpush1.bf16.msra.mxu0 %v4390
    %7064 = vmatprep.subr.bf16.mxu0 %v4399
    %7065 = vmatpush1.bf16.msra.mxu0 %v4398
    %7066 = vmatprep.subr.bf16.mxu0 %v4407
    %7067 = vmatpush1.bf16.msra.mxu0 %v4406
    %7068 = vmatprep.subr.bf16.mxu0 %v4415
    %7069 = vmatpush1.bf16.msra.mxu0 %v4414
    %7070 = vmatprep.subr.bf16.mxu0 %v4423
    %7071 = vmatpush1.bf16.msra.mxu0 %v4422
    %7072 = vmatprep.subr.bf16.mxu0 %v4431
    %7073 = vmatpush1.bf16.msra.mxu0 %v4430
    %7074 = vmatprep.mubr.bf16.mxu0 %v1203
    %7075 = vmatmul.mubr.bf16.gmra.mrb[0].mxu0 %v1202
    %v7076 = vpop.f32.mrb[0].mxu0
    %v7077 = vadd.f32 %v1133, %v7076
    %v7078 = vpop.f32.mrb[0].mxu0
    %v7079 = vadd.f32 %v1137, %v7078
    %v7080 = vpop.f32.mrb[0].mxu0
    %v7081 = vadd.f32 %v1133, %v7080
    %v7082 = vpop.f32.mrb[0].mxu0
    %v7083 = vadd.f32 %v1137, %v7082
    %7084 = vdwg.mxu0
    %7085 = vmatprep.subr.bf16.mxu0 %v4439
    %7086 = vmatpush1.bf16.msra.mxu0 %v4438
    %7087 = vmatprep.subr.bf16.mxu0 %v4447
    %7088 = vmatpush1.bf16.msra.mxu0 %v4446
    %7089 = vmatprep.subr.bf16.mxu0 %v4455
    %7090 = vmatpush1.bf16.msra.mxu0 %v4454
    %7091 = vmatprep.subr.bf16.mxu0 %v4463
    %7092 = vmatpush1.bf16.msra.mxu0 %v4462
    %7093 = vmatprep.subr.bf16.mxu0 %v4471
    %7094 = vmatpush1.bf16.msra.mxu0 %v4470
    %7095 = vmatprep.subr.bf16.mxu0 %v4479
    %7096 = vmatpush1.bf16.msra.mxu0 %v4478
    %7097 = vmatprep.subr.bf16.mxu0 %v4487
    %7098 = vmatpush1.bf16.msra.mxu0 %v4486
    %7099 = vmatprep.subr.bf16.mxu0 %v4495
    %7100 = vmatpush1.bf16.msra.mxu0 %v4494
    %7101 = vmatprep.subr.bf16.mxu0 %v4503
    %7102 = vmatpush1.bf16.msra.mxu0 %v4502
    %7103 = vmatprep.subr.bf16.mxu0 %v4511
    %7104 = vmatpush1.bf16.msra.mxu0 %v4510
    %7105 = vmatprep.subr.bf16.mxu0 %v4519
    %7106 = vmatpush1.bf16.msra.mxu0 %v4518
    %7107 = vmatprep.subr.bf16.mxu0 %v4527
    %7108 = vmatpush1.bf16.msra.mxu0 %v4526
    %7109 = vmatprep.subr.bf16.mxu0 %v4535
    %7110 = vmatpush1.bf16.msra.mxu0 %v4534
    %7111 = vmatprep.subr.bf16.mxu0 %v4543
    %7112 = vmatpush1.bf16.msra.mxu0 %v4542
    %7113 = vmatprep.subr.bf16.mxu0 %v4551
    %7114 = vmatpush1.bf16.msra.mxu0 %v4550
    %7115 = vmatprep.subr.bf16.mxu0 %v4559
    %7116 = vmatpush1.bf16.msra.mxu0 %v4558
    %7117 = vmatprep.mubr.bf16.mxu0 %v1205
    %7118 = vmatmul.mubr.bf16.gmra.mrb[0].mxu0 %v1204
    %v7119 = vpop.f32.mrb[0].mxu0
    %v7120 = vadd.f32 %v7077, %v7119
    %v7121 = vpop.f32.mrb[0].mxu0
    %v7122 = vadd.f32 %v7079, %v7121
    %v7123 = vpop.f32.mrb[0].mxu0
    %v7124 = vadd.f32 %v7081, %v7123
    %v7125 = vpop.f32.mrb[0].mxu0
    %v7126 = vadd.f32 %v7083, %v7125
    %7127 = vdwg.mxu0
    %7128 = vmatprep.subr.bf16.mxu0 %v4567
    %7129 = vmatpush1.bf16.msra.mxu0 %v4566
    %7130 = vmatprep.subr.bf16.mxu0 %v4575
    %7131 = vmatpush1.bf16.msra.mxu0 %v4574
    %7132 = vmatprep.subr.bf16.mxu0 %v4583
    %7133 = vmatpush1.bf16.msra.mxu0 %v4582
    %7134 = vmatprep.subr.bf16.mxu0 %v4591
    %7135 = vmatpush1.bf16.msra.mxu0 %v4590
    %7136 = vmatprep.subr.bf16.mxu0 %v4599
    %7137 = vmatpush1.bf16.msra.mxu0 %v4598
    %7138 = vmatprep.subr.bf16.mxu0 %v4607
    %7139 = vmatpush1.bf16.msra.mxu0 %v4606
    %7140 = vmatprep.subr.bf16.mxu0 %v4615
    %7141 = vmatpush1.bf16.msra.mxu0 %v4614
    %7142 = vmatprep.subr.bf16.mxu0 %v4623
    %7143 = vmatpush1.bf16.msra.mxu0 %v4622
    %7144 = vmatprep.subr.bf16.mxu0 %v4631
    %7145 = vmatpush1.bf16.msra.mxu0 %v4630
    %7146 = vmatprep.subr.bf16.mxu0 %v4639
    %7147 = vmatpush1.bf16.msra.mxu0 %v4638
    %7148 = vmatprep.subr.bf16.mxu0 %v4647
    %7149 = vmatpush1.bf16.msra.mxu0 %v4646
    %7150 = vmatprep.subr.bf16.mxu0 %v4655
    %7151 = vmatpush1.bf16.msra.mxu0 %v4654
    %7152 = vmatprep.subr.bf16.mxu0 %v4663
    %7153 = vmatpush1.bf16.msra.mxu0 %v4662
    %7154 = vmatprep.subr.bf16.mxu0 %v4671
    %7155 = vmatpush1.bf16.msra.mxu0 %v4670
    %7156 = vmatprep.subr.bf16.mxu0 %v4679
    %7157 = vmatpush1.bf16.msra.mxu0 %v4678
    %7158 = vmatprep.subr.bf16.mxu0 %v4687
    %7159 = vmatpush1.bf16.msra.mxu0 %v4686
    %7160 = vmatprep.mubr.bf16.mxu0 %v1207
    %7161 = vmatmul.mubr.bf16.gmra.mrb[0].mxu0 %v1206
    %v7162 = vpop.f32.mrb[0].mxu0
    %v7163 = vadd.f32 %v7120, %v7162
    %v7164 = vpop.f32.mrb[0].mxu0
    %v7165 = vadd.f32 %v7122, %v7164
    %v7166 = vpop.f32.mrb[0].mxu0
    %v7167 = vadd.f32 %v7124, %v7166
    %v7168 = vpop.f32.mrb[0].mxu0
    %v7169 = vadd.f32 %v7126, %v7168
    %7170 = vdwg.mxu0
    %7171 = vmatprep.subr.bf16.mxu0 %v4695
    %7172 = vmatpush1.bf16.msra.mxu0 %v4694
    %7173 = vmatprep.subr.bf16.mxu0 %v4703
    %7174 = vmatpush1.bf16.msra.mxu0 %v4702
    %7175 = vmatprep.subr.bf16.mxu0 %v4711
    %7176 = vmatpush1.bf16.msra.mxu0 %v4710
    %7177 = vmatprep.subr.bf16.mxu0 %v4719
    %7178 = vmatpush1.bf16.msra.mxu0 %v4718
    %7179 = vmatprep.subr.bf16.mxu0 %v4727
    %7180 = vmatpush1.bf16.msra.mxu0 %v4726
    %7181 = vmatprep.subr.bf16.mxu0 %v4735
    %7182 = vmatpush1.bf16.msra.mxu0 %v4734
    %7183 = vmatprep.subr.bf16.mxu0 %v4743
    %7184 = vmatpush1.bf16.msra.mxu0 %v4742
    %7185 = vmatprep.subr.bf16.mxu0 %v4751
    %7186 = vmatpush1.bf16.msra.mxu0 %v4750
    %7187 = vmatprep.subr.bf16.mxu0 %v4759
    %7188 = vmatpush1.bf16.msra.mxu0 %v4758
    %7189 = vmatprep.subr.bf16.mxu0 %v4767
    %7190 = vmatpush1.bf16.msra.mxu0 %v4766
    %7191 = vmatprep.subr.bf16.mxu0 %v4775
    %7192 = vmatpush1.bf16.msra.mxu0 %v4774
    %7193 = vmatprep.subr.bf16.mxu0 %v4783
    %7194 = vmatpush1.bf16.msra.mxu0 %v4782
    %7195 = vmatprep.subr.bf16.mxu0 %v4791
    %7196 = vmatpush1.bf16.msra.mxu0 %v4790
    %7197 = vmatprep.subr.bf16.mxu0 %v4799
    %7198 = vmatpush1.bf16.msra.mxu0 %v4798
    %7199 = vmatprep.subr.bf16.mxu0 %v4807
    %7200 = vmatpush1.bf16.msra.mxu0 %v4806
    %7201 = vmatprep.subr.bf16.mxu0 %v4815
    %7202 = vmatpush1.bf16.msra.mxu0 %v4814
    %7203 = vmatprep.mubr.bf16.mxu0 %v1209
    %7204 = vmatmul.mubr.bf16.gmra.mrb[0].mxu0 %v1208
    %v7205 = vpop.f32.mrb[0].mxu0
    %v7206 = vadd.f32 %v7163, %v7205
    %v7207 = vpop.f32.mrb[0].mxu0
    %v7208 = vadd.f32 %v7165, %v7207
    %v7209 = vpop.f32.mrb[0].mxu0
    %v7210 = vadd.f32 %v7167, %v7209
    %v7211 = vpop.f32.mrb[0].mxu0
    %v7212 = vadd.f32 %v7169, %v7211
    %7213 = vdwg.mxu0
    %7214 = vmatprep.subr.bf16.mxu0 %v4823
    %7215 = vmatpush1.bf16.msra.mxu0 %v4822
    %7216 = vmatprep.subr.bf16.mxu0 %v4831
    %7217 = vmatpush1.bf16.msra.mxu0 %v4830
    %7218 = vmatprep.subr.bf16.mxu0 %v4839
    %7219 = vmatpush1.bf16.msra.mxu0 %v4838
    %7220 = vmatprep.subr.bf16.mxu0 %v4847
    %7221 = vmatpush1.bf16.msra.mxu0 %v4846
    %7222 = vmatprep.subr.bf16.mxu0 %v4855
    %7223 = vmatpush1.bf16.msra.mxu0 %v4854
    %7224 = vmatprep.subr.bf16.mxu0 %v4863
    %7225 = vmatpush1.bf16.msra.mxu0 %v4862
    %7226 = vmatprep.subr.bf16.mxu0 %v4871
    %7227 = vmatpush1.bf16.msra.mxu0 %v4870
    %7228 = vmatprep.subr.bf16.mxu0 %v4879
    %7229 = vmatpush1.bf16.msra.mxu0 %v4878
    %7230 = vmatprep.subr.bf16.mxu0 %v4887
    %7231 = vmatpush1.bf16.msra.mxu0 %v4886
    %7232 = vmatprep.subr.bf16.mxu0 %v4895
    %7233 = vmatpush1.bf16.msra.mxu0 %v4894
    %7234 = vmatprep.subr.bf16.mxu0 %v4903
    %7235 = vmatpush1.bf16.msra.mxu0 %v4902
    %7236 = vmatprep.subr.bf16.mxu0 %v4911
    %7237 = vmatpush1.bf16.msra.mxu0 %v4910
    %7238 = vmatprep.subr.bf16.mxu0 %v4919
    %7239 = vmatpush1.bf16.msra.mxu0 %v4918
    %7240 = vmatprep.subr.bf16.mxu0 %v4927
    %7241 = vmatpush1.bf16.msra.mxu0 %v4926
    %7242 = vmatprep.subr.bf16.mxu0 %v4935
    %7243 = vmatpush1.bf16.msra.mxu0 %v4934
    %7244 = vmatprep.subr.bf16.mxu0 %v4943
    %7245 = vmatpush1.bf16.msra.mxu0 %v4942
    %7246 = vmatprep.mubr.bf16.mxu0 %v1211
    %7247 = vmatmul.mubr.bf16.gmra.mrb[0].mxu0 %v1210
    %v7248 = vpop.f32.mrb[0].mxu0
    %v7249 = vadd.f32 %v7206, %v7248
    %v7250 = vpop.f32.mrb[0].mxu0
    %v7251 = vadd.f32 %v7208, %v7250
    %v7252 = vpop.f32.mrb[0].mxu0
    %v7253 = vadd.f32 %v7210, %v7252
    %v7254 = vpop.f32.mrb[0].mxu0
    %v7255 = vadd.f32 %v7212, %v7254
    %7256 = vdwg.mxu0
    %7257 = vmatprep.subr.bf16.mxu0 %v4951
    %7258 = vmatpush1.bf16.msra.mxu0 %v4950
    %7259 = vmatprep.subr.bf16.mxu0 %v4959
    %7260 = vmatpush1.bf16.msra.mxu0 %v4958
    %7261 = vmatprep.subr.bf16.mxu0 %v4967
    %7262 = vmatpush1.bf16.msra.mxu0 %v4966
    %7263 = vmatprep.subr.bf16.mxu0 %v4975
    %7264 = vmatpush1.bf16.msra.mxu0 %v4974
    %7265 = vmatprep.subr.bf16.mxu0 %v4983
    %7266 = vmatpush1.bf16.msra.mxu0 %v4982
    %7267 = vmatprep.subr.bf16.mxu0 %v4991
    %7268 = vmatpush1.bf16.msra.mxu0 %v4990
    %7269 = vmatprep.subr.bf16.mxu0 %v4999
    %7270 = vmatpush1.bf16.msra.mxu0 %v4998
    %7271 = vmatprep.subr.bf16.mxu0 %v5007
    %7272 = vmatpush1.bf16.msra.mxu0 %v5006
    %7273 = vmatprep.subr.bf16.mxu0 %v5015
    %7274 = vmatpush1.bf16.msra.mxu0 %v5014
    %7275 = vmatprep.subr.bf16.mxu0 %v5023
    %7276 = vmatpush1.bf16.msra.mxu0 %v5022
    %7277 = vmatprep.subr.bf16.mxu0 %v5031
    %7278 = vmatpush1.bf16.msra.mxu0 %v5030
    %7279 = vmatprep.subr.bf16.mxu0 %v5039
    %7280 = vmatpush1.bf16.msra.mxu0 %v5038
    %7281 = vmatprep.subr.bf16.mxu0 %v5047
    %7282 = vmatpush1.bf16.msra.mxu0 %v5046
    %7283 = vmatprep.subr.bf16.mxu0 %v5055
    %7284 = vmatpush1.bf16.msra.mxu0 %v5054
    %7285 = vmatprep.subr.bf16.mxu0 %v5063
    %7286 = vmatpush1.bf16.msra.mxu0 %v5062
    %7287 = vmatprep.subr.bf16.mxu0 %v5071
    %7288 = vmatpush1.bf16.msra.mxu0 %v5070
    %7289 = vmatprep.mubr.bf16.mxu0 %v1213
    %7290 = vmatmul.mubr.bf16.gmra.mrb[0].mxu0 %v1212
    %v7291 = vpop.f32.mrb[0].mxu0
    %v7292 = vadd.f32 %v7249, %v7291
    %v7293 = vpop.f32.mrb[0].mxu0
    %v7294 = vadd.f32 %v7251, %v7293
    %v7295 = vpop.f32.mrb[0].mxu0
    %v7296 = vadd.f32 %v7253, %v7295
    %v7297 = vpop.f32.mrb[0].mxu0
    %v7298 = vadd.f32 %v7255, %v7297
    %7299 = vdwg.mxu0
    %7300 = vmatprep.subr.bf16.mxu0 %v5079
    %7301 = vmatpush1.bf16.msra.mxu0 %v5078
    %7302 = vmatprep.subr.bf16.mxu0 %v5087
    %7303 = vmatpush1.bf16.msra.mxu0 %v5086
    %7304 = vmatprep.subr.bf16.mxu0 %v5095
    %7305 = vmatpush1.bf16.msra.mxu0 %v5094
    %7306 = vmatprep.subr.bf16.mxu0 %v5103
    %7307 = vmatpush1.bf16.msra.mxu0 %v5102
    %7308 = vmatprep.subr.bf16.mxu0 %v5111
    %7309 = vmatpush1.bf16.msra.mxu0 %v5110
    %7310 = vmatprep.subr.bf16.mxu0 %v5119
    %7311 = vmatpush1.bf16.msra.mxu0 %v5118
    %7312 = vmatprep.subr.bf16.mxu0 %v5127
    %7313 = vmatpush1.bf16.msra.mxu0 %v5126
    %7314 = vmatprep.subr.bf16.mxu0 %v5135
    %7315 = vmatpush1.bf16.msra.mxu0 %v5134
    %7316 = vmatprep.subr.bf16.mxu0 %v5143
    %7317 = vmatpush1.bf16.msra.mxu0 %v5142
    %7318 = vmatprep.subr.bf16.mxu0 %v5151
    %7319 = vmatpush1.bf16.msra.mxu0 %v5150
    %7320 = vmatprep.subr.bf16.mxu0 %v5159
    %7321 = vmatpush1.bf16.msra.mxu0 %v5158
    %7322 = vmatprep.subr.bf16.mxu0 %v5167
    %7323 = vmatpush1.bf16.msra.mxu0 %v5166
    %7324 = vmatprep.subr.bf16.mxu0 %v5175
    %7325 = vmatpush1.bf16.msra.mxu0 %v5174
    %7326 = vmatprep.subr.bf16.mxu0 %v5183
    %7327 = vmatpush1.bf16.msra.mxu0 %v5182
    %7328 = vmatprep.subr.bf16.mxu0 %v5191
    %7329 = vmatpush1.bf16.msra.mxu0 %v5190
    %7330 = vmatprep.subr.bf16.mxu0 %v5199
    %7331 = vmatpush1.bf16.msra.mxu0 %v5198
    %7332 = vmatprep.mubr.bf16.mxu0 %v1215
    %7333 = vmatmul.mubr.bf16.gmra.mrb[0].mxu0 %v1214
    %v7334 = vpop.f32.mrb[0].mxu0
    %v7335 = vadd.f32 %v7292, %v7334
    %v7336 = vpop.f32.mrb[0].mxu0
    %v7337 = vadd.f32 %v7294, %v7336
    %v7338 = vpop.f32.mrb[0].mxu0
    %v7339 = vadd.f32 %v7296, %v7338
    %v7340 = vpop.f32.mrb[0].mxu0
    %v7341 = vadd.f32 %v7298, %v7340
    %7342 = vdwg.mxu0
    %7343 = vmatprep.subr.bf16.mxu0 %v5207
    %7344 = vmatpush1.bf16.msra.mxu0 %v5206
    %7345 = vmatprep.subr.bf16.mxu0 %v5215
    %7346 = vmatpush1.bf16.msra.mxu0 %v5214
    %7347 = vmatprep.subr.bf16.mxu0 %v5223
    %7348 = vmatpush1.bf16.msra.mxu0 %v5222
    %7349 = vmatprep.subr.bf16.mxu0 %v5231
    %7350 = vmatpush1.bf16.msra.mxu0 %v5230
    %7351 = vmatprep.subr.bf16.mxu0 %v5239
    %7352 = vmatpush1.bf16.msra.mxu0 %v5238
    %7353 = vmatprep.subr.bf16.mxu0 %v5247
    %7354 = vmatpush1.bf16.msra.mxu0 %v5246
    %7355 = vmatprep.subr.bf16.mxu0 %v5255
    %7356 = vmatpush1.bf16.msra.mxu0 %v5254
    %7357 = vmatprep.subr.bf16.mxu0 %v5263
    %7358 = vmatpush1.bf16.msra.mxu0 %v5262
    %7359 = vmatprep.subr.bf16.mxu0 %v5271
    %7360 = vmatpush1.bf16.msra.mxu0 %v5270
    %7361 = vmatprep.subr.bf16.mxu0 %v5279
    %7362 = vmatpush1.bf16.msra.mxu0 %v5278
    %7363 = vmatprep.subr.bf16.mxu0 %v5287
    %7364 = vmatpush1.bf16.msra.mxu0 %v5286
    %7365 = vmatprep.subr.bf16.mxu0 %v5295
    %7366 = vmatpush1.bf16.msra.mxu0 %v5294
    %7367 = vmatprep.subr.bf16.mxu0 %v5303
    %7368 = vmatpush1.bf16.msra.mxu0 %v5302
    %7369 = vmatprep.subr.bf16.mxu0 %v5311
    %7370 = vmatpush1.bf16.msra.mxu0 %v5310
    %7371 = vmatprep.subr.bf16.mxu0 %v5319
    %7372 = vmatpush1.bf16.msra.mxu0 %v5318
    %7373 = vmatprep.subr.bf16.mxu0 %v5327
    %7374 = vmatpush1.bf16.msra.mxu0 %v5326
    %7375 = vmatprep.mubr.bf16.mxu0 %v1217
    %7376 = vmatmul.mubr.bf16.gmra.mrb[0].mxu0 %v1216
    %v7377 = vpop.f32.mrb[0].mxu0
    %v7378 = vadd.f32 %v7335, %v7377
    %v7379 = vpop.f32.mrb[0].mxu0
    %v7380 = vadd.f32 %v7337, %v7379
    %v7381 = vpop.f32.mrb[0].mxu0
    %v7382 = vadd.f32 %v7339, %v7381
    %v7383 = vpop.f32.mrb[0].mxu0
    %v7384 = vadd.f32 %v7341, %v7383
    %7385 = vdwg.mxu0
    %7386 = vmatprep.subr.bf16.mxu0 %v4313
    %7387 = vmatpush1.bf16.msra.mxu0 %v4312
    %7388 = vmatprep.subr.bf16.mxu0 %v4321
    %7389 = vmatpush1.bf16.msra.mxu0 %v4320
    %7390 = vmatprep.subr.bf16.mxu0 %v4329
    %7391 = vmatpush1.bf16.msra.mxu0 %v4328
    %7392 = vmatprep.subr.bf16.mxu0 %v4337
    %7393 = vmatpush1.bf16.msra.mxu0 %v4336
    %7394 = vmatprep.subr.bf16.mxu0 %v4345
    %7395 = vmatpush1.bf16.msra.mxu0 %v4344
    %7396 = vmatprep.subr.bf16.mxu0 %v4353
    %7397 = vmatpush1.bf16.msra.mxu0 %v4352
    %7398 = vmatprep.subr.bf16.mxu0 %v4361
    %7399 = vmatpush1.bf16.msra.mxu0 %v4360
    %7400 = vmatprep.subr.bf16.mxu0 %v4369
    %7401 = vmatpush1.bf16.msra.mxu0 %v4368
    %7402 = vmatprep.subr.bf16.mxu0 %v4377
    %7403 = vmatpush1.bf16.msra.mxu0 %v4376
    %7404 = vmatprep.subr.bf16.mxu0 %v4385
    %7405 = vmatpush1.bf16.msra.mxu0 %v4384
    %7406 = vmatprep.subr.bf16.mxu0 %v4393
    %7407 = vmatpush1.bf16.msra.mxu0 %v4392
    %7408 = vmatprep.subr.bf16.mxu0 %v4401
    %7409 = vmatpush1.bf16.msra.mxu0 %v4400
    %7410 = vmatprep.subr.bf16.mxu0 %v4409
    %7411 = vmatpush1.bf16.msra.mxu0 %v4408
    %7412 = vmatprep.subr.bf16.mxu0 %v4417
    %7413 = vmatpush1.bf16.msra.mxu0 %v4416
    %7414 = vmatprep.subr.bf16.mxu0 %v4425
    %7415 = vmatpush1.bf16.msra.mxu0 %v4424
    %7416 = vmatprep.subr.bf16.mxu0 %v4433
    %7417 = vmatpush1.bf16.msra.mxu0 %v4432
    %7418 = vmatprep.mubr.bf16.mxu0 %v1203
    %7419 = vmatmul.mubr.bf16.gmra.mrb[0].mxu0 %v1202
    %v7420 = vpop.f32.mrb[0].mxu0
    %v7421 = vadd.f32 %v1141, %v7420
    %v7422 = vpop.f32.mrb[0].mxu0
    %v7423 = vadd.f32 %v1145, %v7422
    %v7424 = vpop.f32.mrb[0].mxu0
    %v7425 = vadd.f32 %v1141, %v7424
    %v7426 = vpop.f32.mrb[0].mxu0
    %v7427 = vadd.f32 %v1145, %v7426
    %7428 = vdwg.mxu0
    %7429 = vmatprep.subr.bf16.mxu0 %v4441
    %7430 = vmatpush1.bf16.msra.mxu0 %v4440
    %7431 = vmatprep.subr.bf16.mxu0 %v4449
    %7432 = vmatpush1.bf16.msra.mxu0 %v4448
    %7433 = vmatprep.subr.bf16.mxu0 %v4457
    %7434 = vmatpush1.bf16.msra.mxu0 %v4456
    %7435 = vmatprep.subr.bf16.mxu0 %v4465
    %7436 = vmatpush1.bf16.msra.mxu0 %v4464
    %7437 = vmatprep.subr.bf16.mxu0 %v4473
    %7438 = vmatpush1.bf16.msra.mxu0 %v4472
    %7439 = vmatprep.subr.bf16.mxu0 %v4481
    %7440 = vmatpush1.bf16.msra.mxu0 %v4480
    %7441 = vmatprep.subr.bf16.mxu0 %v4489
    %7442 = vmatpush1.bf16.msra.mxu0 %v4488
    %7443 = vmatprep.subr.bf16.mxu0 %v4497
    %7444 = vmatpush1.bf16.msra.mxu0 %v4496
    %7445 = vmatprep.subr.bf16.mxu0 %v4505
    %7446 = vmatpush1.bf16.msra.mxu0 %v4504
    %7447 = vmatprep.subr.bf16.mxu0 %v4513
    %7448 = vmatpush1.bf16.msra.mxu0 %v4512
    %7449 = vmatprep.subr.bf16.mxu0 %v4521
    %7450 = vmatpush1.bf16.msra.mxu0 %v4520
    %7451 = vmatprep.subr.bf16.mxu0 %v4529
    %7452 = vmatpush1.bf16.msra.mxu0 %v4528
    %7453 = vmatprep.subr.bf16.mxu0 %v4537
    %7454 = vmatpush1.bf16.msra.mxu0 %v4536
    %7455 = vmatprep.subr.bf16.mxu0 %v4545
    %7456 = vmatpush1.bf16.msra.mxu0 %v4544
    %7457 = vmatprep.subr.bf16.mxu0 %v4553
    %7458 = vmatpush1.bf16.msra.mxu0 %v4552
    %7459 = vmatprep.subr.bf16.mxu0 %v4561
    %7460 = vmatpush1.bf16.msra.mxu0 %v4560
    %7461 = vmatprep.mubr.bf16.mxu0 %v1205
    %7462 = vmatmul.mubr.bf16.gmra.mrb[0].mxu0 %v1204
    %v7463 = vpop.f32.mrb[0].mxu0
    %v7464 = vadd.f32 %v7421, %v7463
    %v7465 = vpop.f32.mrb[0].mxu0
    %v7466 = vadd.f32 %v7423, %v7465
    %v7467 = vpop.f32.mrb[0].mxu0
    %v7468 = vadd.f32 %v7425, %v7467
    %v7469 = vpop.f32.mrb[0].mxu0
    %v7470 = vadd.f32 %v7427, %v7469
    %7471 = vdwg.mxu0
    %7472 = vmatprep.subr.bf16.mxu0 %v4569
    %7473 = vmatpush1.bf16.msra.mxu0 %v4568
    %7474 = vmatprep.subr.bf16.mxu0 %v4577
    %7475 = vmatpush1.bf16.msra.mxu0 %v4576
    %7476 = vmatprep.subr.bf16.mxu0 %v4585
    %7477 = vmatpush1.bf16.msra.mxu0 %v4584
    %7478 = vmatprep.subr.bf16.mxu0 %v4593
    %7479 = vmatpush1.bf16.msra.mxu0 %v4592
    %7480 = vmatprep.subr.bf16.mxu0 %v4601
    %7481 = vmatpush1.bf16.msra.mxu0 %v4600
    %7482 = vmatprep.subr.bf16.mxu0 %v4609
    %7483 = vmatpush1.bf16.msra.mxu0 %v4608
    %7484 = vmatprep.subr.bf16.mxu0 %v4617
    %7485 = vmatpush1.bf16.msra.mxu0 %v4616
    %7486 = vmatprep.subr.bf16.mxu0 %v4625
    %7487 = vmatpush1.bf16.msra.mxu0 %v4624
    %7488 = vmatprep.subr.bf16.mxu0 %v4633
    %7489 = vmatpush1.bf16.msra.mxu0 %v4632
    %7490 = vmatprep.subr.bf16.mxu0 %v4641
    %7491 = vmatpush1.bf16.msra.mxu0 %v4640
    %7492 = vmatprep.subr.bf16.mxu0 %v4649
    %7493 = vmatpush1.bf16.msra.mxu0 %v4648
    %7494 = vmatprep.subr.bf16.mxu0 %v4657
    %7495 = vmatpush1.bf16.msra.mxu0 %v4656
    %7496 = vmatprep.subr.bf16.mxu0 %v4665
    %7497 = vmatpush1.bf16.msra.mxu0 %v4664
    %7498 = vmatprep.subr.bf16.mxu0 %v4673
    %7499 = vmatpush1.bf16.msra.mxu0 %v4672
    %7500 = vmatprep.subr.bf16.mxu0 %v4681
    %7501 = vmatpush1.bf16.msra.mxu0 %v4680
    %7502 = vmatprep.subr.bf16.mxu0 %v4689
    %7503 = vmatpush1.bf16.msra.mxu0 %v4688
    %7504 = vmatprep.mubr.bf16.mxu0 %v1207
    %7505 = vmatmul.mubr.bf16.gmra.mrb[0].mxu0 %v1206
    %v7506 = vpop.f32.mrb[0].mxu0
    %v7507 = vadd.f32 %v7464, %v7506
    %v7508 = vpop.f32.mrb[0].mxu0
    %v7509 = vadd.f32 %v7466, %v7508
    %v7510 = vpop.f32.mrb[0].mxu0
    %v7511 = vadd.f32 %v7468, %v7510
    %v7512 = vpop.f32.mrb[0].mxu0
    %v7513 = vadd.f32 %v7470, %v7512
    %7514 = vdwg.mxu0
    %7515 = vmatprep.subr.bf16.mxu0 %v4697
    %7516 = vmatpush1.bf16.msra.mxu0 %v4696
    %7517 = vmatprep.subr.bf16.mxu0 %v4705
    %7518 = vmatpush1.bf16.msra.mxu0 %v4704
    %7519 = vmatprep.subr.bf16.mxu0 %v4713
    %7520 = vmatpush1.bf16.msra.mxu0 %v4712
    %7521 = vmatprep.subr.bf16.mxu0 %v4721
    %7522 = vmatpush1.bf16.msra.mxu0 %v4720
    %7523 = vmatprep.subr.bf16.mxu0 %v4729
    %7524 = vmatpush1.bf16.msra.mxu0 %v4728
    %7525 = vmatprep.subr.bf16.mxu0 %v4737
    %7526 = vmatpush1.bf16.msra.mxu0 %v4736
    %7527 = vmatprep.subr.bf16.mxu0 %v4745
    %7528 = vmatpush1.bf16.msra.mxu0 %v4744
    %7529 = vmatprep.subr.bf16.mxu0 %v4753
    %7530 = vmatpush1.bf16.msra.mxu0 %v4752
    %7531 = vmatprep.subr.bf16.mxu0 %v4761
    %7532 = vmatpush1.bf16.msra.mxu0 %v4760
    %7533 = vmatprep.subr.bf16.mxu0 %v4769
    %7534 = vmatpush1.bf16.msra.mxu0 %v4768
    %7535 = vmatprep.subr.bf16.mxu0 %v4777
    %7536 = vmatpush1.bf16.msra.mxu0 %v4776
    %7537 = vmatprep.subr.bf16.mxu0 %v4785
    %7538 = vmatpush1.bf16.msra.mxu0 %v4784
    %7539 = vmatprep.subr.bf16.mxu0 %v4793
    %7540 = vmatpush1.bf16.msra.mxu0 %v4792
    %7541 = vmatprep.subr.bf16.mxu0 %v4801
    %7542 = vmatpush1.bf16.msra.mxu0 %v4800
    %7543 = vmatprep.subr.bf16.mxu0 %v4809
    %7544 = vmatpush1.bf16.msra.mxu0 %v4808
    %7545 = vmatprep.subr.bf16.mxu0 %v4817
    %7546 = vmatpush1.bf16.msra.mxu0 %v4816
    %7547 = vmatprep.mubr.bf16.mxu0 %v1209
    %7548 = vmatmul.mubr.bf16.gmra.mrb[0].mxu0 %v1208
    %v7549 = vpop.f32.mrb[0].mxu0
    %v7550 = vadd.f32 %v7507, %v7549
    %v7551 = vpop.f32.mrb[0].mxu0
    %v7552 = vadd.f32 %v7509, %v7551
    %v7553 = vpop.f32.mrb[0].mxu0
    %v7554 = vadd.f32 %v7511, %v7553
    %v7555 = vpop.f32.mrb[0].mxu0
    %v7556 = vadd.f32 %v7513, %v7555
    %7557 = vdwg.mxu0
    %7558 = vmatprep.subr.bf16.mxu0 %v4825
    %7559 = vmatpush1.bf16.msra.mxu0 %v4824
    %7560 = vmatprep.subr.bf16.mxu0 %v4833
    %7561 = vmatpush1.bf16.msra.mxu0 %v4832
    %7562 = vmatprep.subr.bf16.mxu0 %v4841
    %7563 = vmatpush1.bf16.msra.mxu0 %v4840
    %7564 = vmatprep.subr.bf16.mxu0 %v4849
    %7565 = vmatpush1.bf16.msra.mxu0 %v4848
    %7566 = vmatprep.subr.bf16.mxu0 %v4857
    %7567 = vmatpush1.bf16.msra.mxu0 %v4856
    %7568 = vmatprep.subr.bf16.mxu0 %v4865
    %7569 = vmatpush1.bf16.msra.mxu0 %v4864
    %7570 = vmatprep.subr.bf16.mxu0 %v4873
    %7571 = vmatpush1.bf16.msra.mxu0 %v4872
    %7572 = vmatprep.subr.bf16.mxu0 %v4881
    %7573 = vmatpush1.bf16.msra.mxu0 %v4880
    %7574 = vmatprep.subr.bf16.mxu0 %v4889
    %7575 = vmatpush1.bf16.msra.mxu0 %v4888
    %7576 = vmatprep.subr.bf16.mxu0 %v4897
    %7577 = vmatpush1.bf16.msra.mxu0 %v4896
    %7578 = vmatprep.subr.bf16.mxu0 %v4905
    %7579 = vmatpush1.bf16.msra.mxu0 %v4904
    %7580 = vmatprep.subr.bf16.mxu0 %v4913
    %7581 = vmatpush1.bf16.msra.mxu0 %v4912
    %7582 = vmatprep.subr.bf16.mxu0 %v4921
    %7583 = vmatpush1.bf16.msra.mxu0 %v4920
    %7584 = vmatprep.subr.bf16.mxu0 %v4929
    %7585 = vmatpush1.bf16.msra.mxu0 %v4928
    %7586 = vmatprep.subr.bf16.mxu0 %v4937
    %7587 = vmatpush1.bf16.msra.mxu0 %v4936
    %7588 = vmatprep.subr.bf16.mxu0 %v4945
    %7589 = vmatpush1.bf16.msra.mxu0 %v4944
    %7590 = vmatprep.mubr.bf16.mxu0 %v1211
    %7591 = vmatmul.mubr.bf16.gmra.mrb[0].mxu0 %v1210
    %v7592 = vpop.f32.mrb[0].mxu0
    %v7593 = vadd.f32 %v7550, %v7592
    %v7594 = vpop.f32.mrb[0].mxu0
    %v7595 = vadd.f32 %v7552, %v7594
    %v7596 = vpop.f32.mrb[0].mxu0
    %v7597 = vadd.f32 %v7554, %v7596
    %v7598 = vpop.f32.mrb[0].mxu0
    %v7599 = vadd.f32 %v7556, %v7598
    %7600 = vdwg.mxu0
    %7601 = vmatprep.subr.bf16.mxu0 %v4953
    %7602 = vmatpush1.bf16.msra.mxu0 %v4952
    %7603 = vmatprep.subr.bf16.mxu0 %v4961
    %7604 = vmatpush1.bf16.msra.mxu0 %v4960
    %7605 = vmatprep.subr.bf16.mxu0 %v4969
    %7606 = vmatpush1.bf16.msra.mxu0 %v4968
    %7607 = vmatprep.subr.bf16.mxu0 %v4977
    %7608 = vmatpush1.bf16.msra.mxu0 %v4976
    %7609 = vmatprep.subr.bf16.mxu0 %v4985
    %7610 = vmatpush1.bf16.msra.mxu0 %v4984
    %7611 = vmatprep.subr.bf16.mxu0 %v4993
    %7612 = vmatpush1.bf16.msra.mxu0 %v4992
    %7613 = vmatprep.subr.bf16.mxu0 %v5001
    %7614 = vmatpush1.bf16.msra.mxu0 %v5000
    %7615 = vmatprep.subr.bf16.mxu0 %v5009
    %7616 = vmatpush1.bf16.msra.mxu0 %v5008
    %7617 = vmatprep.subr.bf16.mxu0 %v5017
    %7618 = vmatpush1.bf16.msra.mxu0 %v5016
    %7619 = vmatprep.subr.bf16.mxu0 %v5025
    %7620 = vmatpush1.bf16.msra.mxu0 %v5024
    %7621 = vmatprep.subr.bf16.mxu0 %v5033
    %7622 = vmatpush1.bf16.msra.mxu0 %v5032
    %7623 = vmatprep.subr.bf16.mxu0 %v5041
    %7624 = vmatpush1.bf16.msra.mxu0 %v5040
    %7625 = vmatprep.subr.bf16.mxu0 %v5049
    %7626 = vmatpush1.bf16.msra.mxu0 %v5048
    %7627 = vmatprep.subr.bf16.mxu0 %v5057
    %7628 = vmatpush1.bf16.msra.mxu0 %v5056
    %7629 = vmatprep.subr.bf16.mxu0 %v5065
    %7630 = vmatpush1.bf16.msra.mxu0 %v5064
    %7631 = vmatprep.subr.bf16.mxu0 %v5073
    %7632 = vmatpush1.bf16.msra.mxu0 %v5072
    %7633 = vmatprep.mubr.bf16.mxu0 %v1213
    %7634 = vmatmul.mubr.bf16.gmra.mrb[0].mxu0 %v1212
    %v7635 = vpop.f32.mrb[0].mxu0
    %v7636 = vadd.f32 %v7593, %v7635
    %v7637 = vpop.f32.mrb[0].mxu0
    %v7638 = vadd.f32 %v7595, %v7637
    %v7639 = vpop.f32.mrb[0].mxu0
    %v7640 = vadd.f32 %v7597, %v7639
    %v7641 = vpop.f32.mrb[0].mxu0
    %v7642 = vadd.f32 %v7599, %v7641
    %7643 = vdwg.mxu0
    %7644 = vmatprep.subr.bf16.mxu0 %v5081
    %7645 = vmatpush1.bf16.msra.mxu0 %v5080
    %7646 = vmatprep.subr.bf16.mxu0 %v5089
    %7647 = vmatpush1.bf16.msra.mxu0 %v5088
    %7648 = vmatprep.subr.bf16.mxu0 %v5097
    %7649 = vmatpush1.bf16.msra.mxu0 %v5096
    %7650 = vmatprep.subr.bf16.mxu0 %v5105
    %7651 = vmatpush1.bf16.msra.mxu0 %v5104
    %7652 = vmatprep.subr.bf16.mxu0 %v5113
    %7653 = vmatpush1.bf16.msra.mxu0 %v5112
    %7654 = vmatprep.subr.bf16.mxu0 %v5121
    %7655 = vmatpush1.bf16.msra.mxu0 %v5120
    %7656 = vmatprep.subr.bf16.mxu0 %v5129
    %7657 = vmatpush1.bf16.msra.mxu0 %v5128
    %7658 = vmatprep.subr.bf16.mxu0 %v5137
    %7659 = vmatpush1.bf16.msra.mxu0 %v5136
    %7660 = vmatprep.subr.bf16.mxu0 %v5145
    %7661 = vmatpush1.bf16.msra.mxu0 %v5144
    %7662 = vmatprep.subr.bf16.mxu0 %v5153
    %7663 = vmatpush1.bf16.msra.mxu0 %v5152
    %7664 = vmatprep.subr.bf16.mxu0 %v5161
    %7665 = vmatpush1.bf16.msra.mxu0 %v5160
    %7666 = vmatprep.subr.bf16.mxu0 %v5169
    %7667 = vmatpush1.bf16.msra.mxu0 %v5168
    %7668 = vmatprep.subr.bf16.mxu0 %v5177
    %7669 = vmatpush1.bf16.msra.mxu0 %v5176
    %7670 = vmatprep.subr.bf16.mxu0 %v5185
    %7671 = vmatpush1.bf16.msra.mxu0 %v5184
    %7672 = vmatprep.subr.bf16.mxu0 %v5193
    %7673 = vmatpush1.bf16.msra.mxu0 %v5192
    %7674 = vmatprep.subr.bf16.mxu0 %v5201
    %7675 = vmatpush1.bf16.msra.mxu0 %v5200
    %7676 = vmatprep.mubr.bf16.mxu0 %v1215
    %7677 = vmatmul.mubr.bf16.gmra.mrb[0].mxu0 %v1214
    %v7678 = vpop.f32.mrb[0].mxu0
    %v7679 = vadd.f32 %v7636, %v7678
    %v7680 = vpop.f32.mrb[0].mxu0
    %v7681 = vadd.f32 %v7638, %v7680
    %v7682 = vpop.f32.mrb[0].mxu0
    %v7683 = vadd.f32 %v7640, %v7682
    %v7684 = vpop.f32.mrb[0].mxu0
    %v7685 = vadd.f32 %v7642, %v7684
    %7686 = vdwg.mxu0
    %7687 = vmatprep.subr.bf16.mxu0 %v5209
    %7688 = vmatpush1.bf16.msra.mxu0 %v5208
    %7689 = vmatprep.subr.bf16.mxu0 %v5217
    %7690 = vmatpush1.bf16.msra.mxu0 %v5216
    %7691 = vmatprep.subr.bf16.mxu0 %v5225
    %7692 = vmatpush1.bf16.msra.mxu0 %v5224
    %7693 = vmatprep.subr.bf16.mxu0 %v5233
    %7694 = vmatpush1.bf16.msra.mxu0 %v5232
    %7695 = vmatprep.subr.bf16.mxu0 %v5241
    %7696 = vmatpush1.bf16.msra.mxu0 %v5240
    %7697 = vmatprep.subr.bf16.mxu0 %v5249
    %7698 = vmatpush1.bf16.msra.mxu0 %v5248
    %7699 = vmatprep.subr.bf16.mxu0 %v5257
    %7700 = vmatpush1.bf16.msra.mxu0 %v5256
    %7701 = vmatprep.subr.bf16.mxu0 %v5265
    %7702 = vmatpush1.bf16.msra.mxu0 %v5264
    %7703 = vmatprep.subr.bf16.mxu0 %v5273
    %7704 = vmatpush1.bf16.msra.mxu0 %v5272
    %7705 = vmatprep.subr.bf16.mxu0 %v5281
    %7706 = vmatpush1.bf16.msra.mxu0 %v5280
    %7707 = vmatprep.subr.bf16.mxu0 %v5289
    %7708 = vmatpush1.bf16.msra.mxu0 %v5288
    %7709 = vmatprep.subr.bf16.mxu0 %v5297
    %7710 = vmatpush1.bf16.msra.mxu0 %v5296
    %7711 = vmatprep.subr.bf16.mxu0 %v5305
    %7712 = vmatpush1.bf16.msra.mxu0 %v5304
    %7713 = vmatprep.subr.bf16.mxu0 %v5313
    %7714 = vmatpush1.bf16.msra.mxu0 %v5312
    %7715 = vmatprep.subr.bf16.mxu0 %v5321
    %7716 = vmatpush1.bf16.msra.mxu0 %v5320
    %7717 = vmatprep.subr.bf16.mxu0 %v5329
    %7718 = vmatpush1.bf16.msra.mxu0 %v5328
    %7719 = vmatprep.mubr.bf16.mxu0 %v1217
    %7720 = vmatmul.mubr.bf16.gmra.mrb[0].mxu0 %v1216
    %v7721 = vpop.f32.mrb[0].mxu0
    %v7722 = vadd.f32 %v7679, %v7721
    %v7723 = vpop.f32.mrb[0].mxu0
    %v7724 = vadd.f32 %v7681, %v7723
    %v7725 = vpop.f32.mrb[0].mxu0
    %v7726 = vadd.f32 %v7683, %v7725
    %v7727 = vpop.f32.mrb[0].mxu0
    %v7728 = vadd.f32 %v7685, %v7727
    %7729 = vdwg.mxu0
    %v7730 = vmax.f32 %v6690, 0.0
    %v7731 = vmax.f32 %v6692, 0.0
    %v7732 = vmax.f32 %v7034, 0.0
    %v7733 = vmax.f32 %v7036, 0.0
    %v7734 = vmax.f32 %v7378, 0.0
    %v7735 = vmax.f32 %v7380, 0.0
    %v7736 = vmax.f32 %v7722, 0.0
    %v7737 = vmax.f32 %v7724, 0.0
    %v7738 = vmax.f32 %v6694, 0.0
    %v7739 = vmax.f32 %v6696, 0.0
    %v7740 = vmax.f32 %v7038, 0.0
    %v7741 = vmax.f32 %v7040, 0.0
    %v7742 = vmax.f32 %v7382, 0.0
    %v7743 = vmax.f32 %v7384, 0.0
    %v7744 = vmax.f32 %v7726, 0.0
    %v7745 = vmax.f32 %v7728, 0.0
    %v7746 = vpack.c.bf16 %v7738, %v7730
    %v7747 = vpack.c.bf16 %v7739, %v7731
    %v7748 = vpack.c.bf16 %v7740, %v7732
    %v7749 = vpack.c.bf16 %v7741, %v7733
    %v7750 = vpack.c.bf16 %v7742, %v7734
    %v7751 = vpack.c.bf16 %v7743, %v7735
    %v7752 = vpack.c.bf16 %v7744, %v7736
    %v7753 = vpack.c.bf16 %v7745, %v7737
    %v7754 = vld [vmem:[#allocation6] sm:$0xf]
    %v7755 = vld [vmem:[#allocation6 + $0x4] sm:$0xf]
    %v7756 = vld [vmem:[#allocation6 + $0x8] sm:$0xf]
    %v7757 = vld [vmem:[#allocation6 + $0xc] sm:$0xf]
    %v7758 = vld [vmem:[#allocation6 + $0x10] sm:$0xf]
    %v7759 = vld [vmem:[#allocation6 + $0x14] sm:$0xf]
    %v7760 = vld [vmem:[#allocation6 + $0x18] sm:$0xf]
    %v7761 = vld [vmem:[#allocation6 + $0x1c] sm:$0xf]
    %v7762 = vld [vmem:[#allocation6 + $0x20] sm:$0xf]
    %v7763 = vld [vmem:[#allocation6 + $0x24] sm:$0xf]
    %v7764 = vld [vmem:[#allocation6 + $0x28] sm:$0xf]
    %v7765 = vld [vmem:[#allocation6 + $0x2c] sm:$0xf]
    %v7766 = vld [vmem:[#allocation6 + $0x30] sm:$0xf]
    %v7767 = vld [vmem:[#allocation6 + $0x34] sm:$0xf]
    %v7768 = vld [vmem:[#allocation6 + $0x38] sm:$0xf]
    %v7769 = vld [vmem:[#allocation6 + $0x3c] sm:$0xf]
    %v7770 = vld [vmem:[#allocation6 + $0x40] sm:$0xf]
    %v7771 = vld [vmem:[#allocation6 + $0x44] sm:$0xf]
    %v7772 = vld [vmem:[#allocation6 + $0x48] sm:$0xf]
    %v7773 = vld [vmem:[#allocation6 + $0x4c] sm:$0xf]
    %v7774 = vld [vmem:[#allocation6 + $0x50] sm:$0xf]
    %v7775 = vld [vmem:[#allocation6 + $0x54] sm:$0xf]
    %v7776 = vld [vmem:[#allocation6 + $0x58] sm:$0xf]
    %v7777 = vld [vmem:[#allocation6 + $0x5c] sm:$0xf]
    %v7778 = vld [vmem:[#allocation6 + $0x60] sm:$0xf]
    %v7779 = vld [vmem:[#allocation6 + $0x64] sm:$0xf]
    %v7780 = vld [vmem:[#allocation6 + $0x68] sm:$0xf]
    %v7781 = vld [vmem:[#allocation6 + $0x6c] sm:$0xf]
    %v7782 = vld [vmem:[#allocation6 + $0x70] sm:$0xf]
    %v7783 = vld [vmem:[#allocation6 + $0x74] sm:$0xf]
    %v7784 = vld [vmem:[#allocation6 + $0x78] sm:$0xf]
    %v7785 = vld [vmem:[#allocation6 + $0x7c] sm:$0xf]
    %v7786 = vld [vmem:[#allocation6 + $0x80] sm:$0xf]
    %v7787 = vld [vmem:[#allocation6 + $0x84] sm:$0xf]
    %v7788 = vld [vmem:[#allocation6 + $0x88] sm:$0xf]
    %v7789 = vld [vmem:[#allocation6 + $0x8c] sm:$0xf]
    %v7790 = vld [vmem:[#allocation6 + $0x90] sm:$0xf]
    %v7791 = vld [vmem:[#allocation6 + $0x94] sm:$0xf]
    %v7792 = vld [vmem:[#allocation6 + $0x98] sm:$0xf]
    %v7793 = vld [vmem:[#allocation6 + $0x9c] sm:$0xf]
    %v7794 = vld [vmem:[#allocation6 + $0xa0] sm:$0xf]
    %v7795 = vld [vmem:[#allocation6 + $0xa4] sm:$0xf]
    %v7796 = vld [vmem:[#allocation6 + $0xa8] sm:$0xf]
    %v7797 = vld [vmem:[#allocation6 + $0xac] sm:$0xf]
    %v7798 = vld [vmem:[#allocation6 + $0xb0] sm:$0xf]
    %v7799 = vld [vmem:[#allocation6 + $0xb4] sm:$0xf]
    %v7800 = vld [vmem:[#allocation6 + $0xb8] sm:$0xf]
    %v7801 = vld [vmem:[#allocation6 + $0xbc] sm:$0xf]
    %v7802 = vld [vmem:[#allocation6 + $0xc0] sm:$0xf]
    %v7803 = vld [vmem:[#allocation6 + $0xc4] sm:$0xf]
    %v7804 = vld [vmem:[#allocation6 + $0xc8] sm:$0xf]
    %v7805 = vld [vmem:[#allocation6 + $0xcc] sm:$0xf]
    %v7806 = vld [vmem:[#allocation6 + $0xd0] sm:$0xf]
    %v7807 = vld [vmem:[#allocation6 + $0xd4] sm:$0xf]
    %v7808 = vld [vmem:[#allocation6 + $0xd8] sm:$0xf]
    %v7809 = vld [vmem:[#allocation6 + $0xdc] sm:$0xf]
    %v7810 = vld [vmem:[#allocation6 + $0xe0] sm:$0xf]
    %v7811 = vld [vmem:[#allocation6 + $0xe4] sm:$0xf]
    %v7812 = vld [vmem:[#allocation6 + $0xe8] sm:$0xf]
    %v7813 = vld [vmem:[#allocation6 + $0xec] sm:$0xf]
    %v7814 = vld [vmem:[#allocation6 + $0xf0] sm:$0xf]
    %v7815 = vld [vmem:[#allocation6 + $0xf4] sm:$0xf]
    %v7816 = vld [vmem:[#allocation6 + $0xf8] sm:$0xf]
    %v7817 = vld [vmem:[#allocation6 + $0xfc] sm:$0xf]
    %v7818 = vld [vmem:[#allocation6 + $0x100] sm:$0xf]
    %v7819 = vld [vmem:[#allocation6 + $0x104] sm:$0xf]
    %v7820 = vld [vmem:[#allocation6 + $0x108] sm:$0xf]
    %v7821 = vld [vmem:[#allocation6 + $0x10c] sm:$0xf]
    %v7822 = vld [vmem:[#allocation6 + $0x110] sm:$0xf]
    %v7823 = vld [vmem:[#allocation6 + $0x114] sm:$0xf]
    %v7824 = vld [vmem:[#allocation6 + $0x118] sm:$0xf]
    %v7825 = vld [vmem:[#allocation6 + $0x11c] sm:$0xf]
    %v7826 = vld [vmem:[#allocation6 + $0x120] sm:$0xf]
    %v7827 = vld [vmem:[#allocation6 + $0x124] sm:$0xf]
    %v7828 = vld [vmem:[#allocation6 + $0x128] sm:$0xf]
    %v7829 = vld [vmem:[#allocation6 + $0x12c] sm:$0xf]
    %v7830 = vld [vmem:[#allocation6 + $0x130] sm:$0xf]
    %v7831 = vld [vmem:[#allocation6 + $0x134] sm:$0xf]
    %v7832 = vld [vmem:[#allocation6 + $0x138] sm:$0xf]
    %v7833 = vld [vmem:[#allocation6 + $0x13c] sm:$0xf]
    %v7834 = vld [vmem:[#allocation6 + $0x140] sm:$0xf]
    %v7835 = vld [vmem:[#allocation6 + $0x144] sm:$0xf]
    %v7836 = vld [vmem:[#allocation6 + $0x148] sm:$0xf]
    %v7837 = vld [vmem:[#allocation6 + $0x14c] sm:$0xf]
    %v7838 = vld [vmem:[#allocation6 + $0x150] sm:$0xf]
    %v7839 = vld [vmem:[#allocation6 + $0x154] sm:$0xf]
    %v7840 = vld [vmem:[#allocation6 + $0x158] sm:$0xf]
    %v7841 = vld [vmem:[#allocation6 + $0x15c] sm:$0xf]
    %v7842 = vld [vmem:[#allocation6 + $0x160] sm:$0xf]
    %v7843 = vld [vmem:[#allocation6 + $0x164] sm:$0xf]
    %v7844 = vld [vmem:[#allocation6 + $0x168] sm:$0xf]
    %v7845 = vld [vmem:[#allocation6 + $0x16c] sm:$0xf]
    %v7846 = vld [vmem:[#allocation6 + $0x170] sm:$0xf]
    %v7847 = vld [vmem:[#allocation6 + $0x174] sm:$0xf]
    %v7848 = vld [vmem:[#allocation6 + $0x178] sm:$0xf]
    %v7849 = vld [vmem:[#allocation6 + $0x17c] sm:$0xf]
    %v7850 = vld [vmem:[#allocation6 + $0x180] sm:$0xf]
    %v7851 = vld [vmem:[#allocation6 + $0x184] sm:$0xf]
    %v7852 = vld [vmem:[#allocation6 + $0x188] sm:$0xf]
    %v7853 = vld [vmem:[#allocation6 + $0x18c] sm:$0xf]
    %v7854 = vld [vmem:[#allocation6 + $0x190] sm:$0xf]
    %v7855 = vld [vmem:[#allocation6 + $0x194] sm:$0xf]
    %v7856 = vld [vmem:[#allocation6 + $0x198] sm:$0xf]
    %v7857 = vld [vmem:[#allocation6 + $0x19c] sm:$0xf]
    %v7858 = vld [vmem:[#allocation6 + $0x1a0] sm:$0xf]
    %v7859 = vld [vmem:[#allocation6 + $0x1a4] sm:$0xf]
    %v7860 = vld [vmem:[#allocation6 + $0x1a8] sm:$0xf]
    %v7861 = vld [vmem:[#allocation6 + $0x1ac] sm:$0xf]
    %v7862 = vld [vmem:[#allocation6 + $0x1b0] sm:$0xf]
    %v7863 = vld [vmem:[#allocation6 + $0x1b4] sm:$0xf]
    %v7864 = vld [vmem:[#allocation6 + $0x1b8] sm:$0xf]
    %v7865 = vld [vmem:[#allocation6 + $0x1bc] sm:$0xf]
    %v7866 = vld [vmem:[#allocation6 + $0x1c0] sm:$0xf]
    %v7867 = vld [vmem:[#allocation6 + $0x1c4] sm:$0xf]
    %v7868 = vld [vmem:[#allocation6 + $0x1c8] sm:$0xf]
    %v7869 = vld [vmem:[#allocation6 + $0x1cc] sm:$0xf]
    %v7870 = vld [vmem:[#allocation6 + $0x1d0] sm:$0xf]
    %v7871 = vld [vmem:[#allocation6 + $0x1d4] sm:$0xf]
    %v7872 = vld [vmem:[#allocation6 + $0x1d8] sm:$0xf]
    %v7873 = vld [vmem:[#allocation6 + $0x1dc] sm:$0xf]
    %v7874 = vld [vmem:[#allocation6 + $0x1e0] sm:$0xf]
    %v7875 = vld [vmem:[#allocation6 + $0x1e4] sm:$0xf]
    %v7876 = vld [vmem:[#allocation6 + $0x1e8] sm:$0xf]
    %v7877 = vld [vmem:[#allocation6 + $0x1ec] sm:$0xf]
    %v7878 = vld [vmem:[#allocation6 + $0x1f0] sm:$0xf]
    %v7879 = vld [vmem:[#allocation6 + $0x1f4] sm:$0xf]
    %v7880 = vld [vmem:[#allocation6 + $0x1f8] sm:$0xf]
    %v7881 = vld [vmem:[#allocation6 + $0x1fc] sm:$0xf]
    %v7882 = vld [vmem:[#allocation7] sm:$0x1]
    %v7884 = vlaneseq
    %v7885 = vshrl.u32 %v7884, 7
    %v7886 = vsub.s32 0, %v7885
    %v7887 = vrot.slane %v7882, %v7886
    %v8017 = vunpack.c.l.b16 %v7754
    %v8018 = vunpack.c.l.b16 %v7755
    %v8019 = vunpack.c.l.b16 %v7756
    %v8020 = vunpack.c.l.b16 %v7757
    %v8021 = vunpack.c.l.b16 %v7758
    %v8022 = vunpack.c.l.b16 %v7759
    %v8023 = vunpack.c.l.b16 %v7760
    %v8024 = vunpack.c.l.b16 %v7761
    %v8025 = vunpack.c.l.b16 %v7762
    %v8026 = vunpack.c.l.b16 %v7763
    %v8027 = vunpack.c.l.b16 %v7764
    %v8028 = vunpack.c.l.b16 %v7765
    %v8029 = vunpack.c.l.b16 %v7766
    %v8030 = vunpack.c.l.b16 %v7767
    %v8031 = vunpack.c.l.b16 %v7768
    %v8032 = vunpack.c.l.b16 %v7769
    %v8033 = vunpack.c.l.b16 %v7770
    %v8034 = vunpack.c.l.b16 %v7771
    %v8035 = vunpack.c.l.b16 %v7772
    %v8036 = vunpack.c.l.b16 %v7773
    %v8037 = vunpack.c.l.b16 %v7774
    %v8038 = vunpack.c.l.b16 %v7775
    %v8039 = vunpack.c.l.b16 %v7776
    %v8040 = vunpack.c.l.b16 %v7777
    %v8041 = vunpack.c.l.b16 %v7778
    %v8042 = vunpack.c.l.b16 %v7779
    %v8043 = vunpack.c.l.b16 %v7780
    %v8044 = vunpack.c.l.b16 %v7781
    %v8045 = vunpack.c.l.b16 %v7782
    %v8046 = vunpack.c.l.b16 %v7783
    %v8047 = vunpack.c.l.b16 %v7784
    %v8048 = vunpack.c.l.b16 %v7785
    %v8049 = vunpack.c.l.b16 %v7786
    %v8050 = vunpack.c.l.b16 %v7787
    %v8051 = vunpack.c.l.b16 %v7788
    %v8052 = vunpack.c.l.b16 %v7789
    %v8053 = vunpack.c.l.b16 %v7790
    %v8054 = vunpack.c.l.b16 %v7791
    %v8055 = vunpack.c.l.b16 %v7792
    %v8056 = vunpack.c.l.b16 %v7793
    %v8057 = vunpack.c.l.b16 %v7794
    %v8058 = vunpack.c.l.b16 %v7795
    %v8059 = vunpack.c.l.b16 %v7796
    %v8060 = vunpack.c.l.b16 %v7797
    %v8061 = vunpack.c.l.b16 %v7798
    %v8062 = vunpack.c.l.b16 %v7799
    %v8063 = vunpack.c.l.b16 %v7800
    %v8064 = vunpack.c.l.b16 %v7801
    %v8065 = vunpack.c.l.b16 %v7802
    %v8066 = vunpack.c.l.b16 %v7803
    %v8067 = vunpack.c.l.b16 %v7804
    %v8068 = vunpack.c.l.b16 %v7805
    %v8069 = vunpack.c.l.b16 %v7806
    %v8070 = vunpack.c.l.b16 %v7807
    %v8071 = vunpack.c.l.b16 %v7808
    %v8072 = vunpack.c.l.b16 %v7809
    %v8073 = vunpack.c.l.b16 %v7810
    %v8074 = vunpack.c.l.b16 %v7811
    %v8075 = vunpack.c.l.b16 %v7812
    %v8076 = vunpack.c.l.b16 %v7813
    %v8077 = vunpack.c.l.b16 %v7814
    %v8078 = vunpack.c.l.b16 %v7815
    %v8079 = vunpack.c.l.b16 %v7816
    %v8080 = vunpack.c.l.b16 %v7817
    %v8081 = vunpack.c.l.b16 %v7818
    %v8082 = vunpack.c.l.b16 %v7819
    %v8083 = vunpack.c.l.b16 %v7820
    %v8084 = vunpack.c.l.b16 %v7821
    %v8085 = vunpack.c.l.b16 %v7822
    %v8086 = vunpack.c.l.b16 %v7823
    %v8087 = vunpack.c.l.b16 %v7824
    %v8088 = vunpack.c.l.b16 %v7825
    %v8089 = vunpack.c.l.b16 %v7826
    %v8090 = vunpack.c.l.b16 %v7827
    %v8091 = vunpack.c.l.b16 %v7828
    %v8092 = vunpack.c.l.b16 %v7829
    %v8093 = vunpack.c.l.b16 %v7830
    %v8094 = vunpack.c.l.b16 %v7831
    %v8095 = vunpack.c.l.b16 %v7832
    %v8096 = vunpack.c.l.b16 %v7833
    %v8097 = vunpack.c.l.b16 %v7834
    %v8098 = vunpack.c.l.b16 %v7835
    %v8099 = vunpack.c.l.b16 %v7836
    %v8100 = vunpack.c.l.b16 %v7837
    %v8101 = vunpack.c.l.b16 %v7838
    %v8102 = vunpack.c.l.b16 %v7839
    %v8103 = vunpack.c.l.b16 %v7840
    %v8104 = vunpack.c.l.b16 %v7841
    %v8105 = vunpack.c.l.b16 %v7842
    %v8106 = vunpack.c.l.b16 %v7843
    %v8107 = vunpack.c.l.b16 %v7844
    %v8108 = vunpack.c.l.b16 %v7845
    %v8109 = vunpack.c.l.b16 %v7846
    %v8110 = vunpack.c.l.b16 %v7847
    %v8111 = vunpack.c.l.b16 %v7848
    %v8112 = vunpack.c.l.b16 %v7849
    %v8113 = vunpack.c.l.b16 %v7850
    %v8114 = vunpack.c.l.b16 %v7851
    %v8115 = vunpack.c.l.b16 %v7852
    %v8116 = vunpack.c.l.b16 %v7853
    %v8117 = vunpack.c.l.b16 %v7854
    %v8118 = vunpack.c.l.b16 %v7855
    %v8119 = vunpack.c.l.b16 %v7856
    %v8120 = vunpack.c.l.b16 %v7857
    %v8121 = vunpack.c.l.b16 %v7858
    %v8122 = vunpack.c.l.b16 %v7859
    %v8123 = vunpack.c.l.b16 %v7860
    %v8124 = vunpack.c.l.b16 %v7861
    %v8125 = vunpack.c.l.b16 %v7862
    %v8126 = vunpack.c.l.b16 %v7863
    %v8127 = vunpack.c.l.b16 %v7864
    %v8128 = vunpack.c.l.b16 %v7865
    %v8129 = vunpack.c.l.b16 %v7866
    %v8130 = vunpack.c.l.b16 %v7867
    %v8131 = vunpack.c.l.b16 %v7868
    %v8132 = vunpack.c.l.b16 %v7869
    %v8133 = vunpack.c.l.b16 %v7870
    %v8134 = vunpack.c.l.b16 %v7871
    %v8135 = vunpack.c.l.b16 %v7872
    %v8136 = vunpack.c.l.b16 %v7873
    %v8137 = vunpack.c.l.b16 %v7874
    %v8138 = vunpack.c.l.b16 %v7875
    %v8139 = vunpack.c.l.b16 %v7876
    %v8140 = vunpack.c.l.b16 %v7877
    %v8141 = vunpack.c.l.b16 %v7878
    %v8142 = vunpack.c.l.b16 %v7879
    %v8143 = vunpack.c.l.b16 %v7880
    %v8144 = vunpack.c.l.b16 %v7881
    %v8145 = vpack.c.b16 %v8018, %v8017
    %v8146 = vpack.c.b16 %v8020, %v8019
    %v8147 = vpack.c.b16 %v8022, %v8021
    %v8148 = vpack.c.b16 %v8024, %v8023
    %v8149 = vpack.c.b16 %v8026, %v8025
    %v8150 = vpack.c.b16 %v8028, %v8027
    %v8151 = vpack.c.b16 %v8030, %v8029
    %v8152 = vpack.c.b16 %v8032, %v8031
    %v8153 = vpack.c.b16 %v8034, %v8033
    %v8154 = vpack.c.b16 %v8036, %v8035
    %v8155 = vpack.c.b16 %v8038, %v8037
    %v8156 = vpack.c.b16 %v8040, %v8039
    %v8157 = vpack.c.b16 %v8042, %v8041
    %v8158 = vpack.c.b16 %v8044, %v8043
    %v8159 = vpack.c.b16 %v8046, %v8045
    %v8160 = vpack.c.b16 %v8048, %v8047
    %v8161 = vpack.c.b16 %v8050, %v8049
    %v8162 = vpack.c.b16 %v8052, %v8051
    %v8163 = vpack.c.b16 %v8054, %v8053
    %v8164 = vpack.c.b16 %v8056, %v8055
    %v8165 = vpack.c.b16 %v8058, %v8057
    %v8166 = vpack.c.b16 %v8060, %v8059
    %v8167 = vpack.c.b16 %v8062, %v8061
    %v8168 = vpack.c.b16 %v8064, %v8063
    %v8169 = vpack.c.b16 %v8066, %v8065
    %v8170 = vpack.c.b16 %v8068, %v8067
    %v8171 = vpack.c.b16 %v8070, %v8069
    %v8172 = vpack.c.b16 %v8072, %v8071
    %v8173 = vpack.c.b16 %v8074, %v8073
    %v8174 = vpack.c.b16 %v8076, %v8075
    %v8175 = vpack.c.b16 %v8078, %v8077
    %v8176 = vpack.c.b16 %v8080, %v8079
    %v8177 = vpack.c.b16 %v8082, %v8081
    %v8178 = vpack.c.b16 %v8084, %v8083
    %v8179 = vpack.c.b16 %v8086, %v8085
    %v8180 = vpack.c.b16 %v8088, %v8087
    %v8181 = vpack.c.b16 %v8090, %v8089
    %v8182 = vpack.c.b16 %v8092, %v8091
    %v8183 = vpack.c.b16 %v8094, %v8093
    %v8184 = vpack.c.b16 %v8096, %v8095
    %v8185 = vpack.c.b16 %v8098, %v8097
    %v8186 = vpack.c.b16 %v8100, %v8099
    %v8187 = vpack.c.b16 %v8102, %v8101
    %v8188 = vpack.c.b16 %v8104, %v8103
    %v8189 = vpack.c.b16 %v8106, %v8105
    %v8190 = vpack.c.b16 %v8108, %v8107
    %v8191 = vpack.c.b16 %v8110, %v8109
    %v8192 = vpack.c.b16 %v8112, %v8111
    %v8193 = vpack.c.b16 %v8114, %v8113
    %v8194 = vpack.c.b16 %v8116, %v8115
    %v8195 = vpack.c.b16 %v8118, %v8117
    %v8196 = vpack.c.b16 %v8120, %v8119
    %v8197 = vpack.c.b16 %v8122, %v8121
    %v8198 = vpack.c.b16 %v8124, %v8123
    %v8199 = vpack.c.b16 %v8126, %v8125
    %v8200 = vpack.c.b16 %v8128, %v8127
    %v8201 = vpack.c.b16 %v8130, %v8129
    %v8202 = vpack.c.b16 %v8132, %v8131
    %v8203 = vpack.c.b16 %v8134, %v8133
    %v8204 = vpack.c.b16 %v8136, %v8135
    %v8205 = vpack.c.b16 %v8138, %v8137
    %v8206 = vpack.c.b16 %v8140, %v8139
    %v8207 = vpack.c.b16 %v8142, %v8141
    %v8208 = vpack.c.b16 %v8144, %v8143
    %8273 = vmatprep.subr.bf16.mxu0 0
    %8274 = vmatpush1.bf16.msra.mxu0 %v8145
    %8275 = vmatprep.subr.bf16.mxu0 0
    %8276 = vmatpush1.bf16.msra.mxu0 %v8146
    %8277 = vmatprep.subr.bf16.mxu0 0
    %8278 = vmatpush1.bf16.msra.mxu0 %v8147
    %8279 = vmatprep.subr.bf16.mxu0 0
    %8280 = vmatpush1.bf16.msra.mxu0 %v8148
    %8281 = vmatprep.subr.bf16.mxu0 0
    %8282 = vmatpush1.bf16.msra.mxu0 %v8149
    %8283 = vmatprep.subr.bf16.mxu0 0
    %8284 = vmatpush1.bf16.msra.mxu0 %v8150
    %8285 = vmatprep.subr.bf16.mxu0 0
    %8286 = vmatpush1.bf16.msra.mxu0 %v8151
    %8287 = vmatprep.subr.bf16.mxu0 0
    %8288 = vmatpush1.bf16.msra.mxu0 %v8152
    %8289 = vmatprep.subr.bf16.mxu0 0
    %8290 = vmatpush1.bf16.msra.mxu0 %v8153
    %8291 = vmatprep.subr.bf16.mxu0 0
    %8292 = vmatpush1.bf16.msra.mxu0 %v8154
    %8293 = vmatprep.subr.bf16.mxu0 0
    %8294 = vmatpush1.bf16.msra.mxu0 %v8155
    %8295 = vmatprep.subr.bf16.mxu0 0
    %8296 = vmatpush1.bf16.msra.mxu0 %v8156
    %8297 = vmatprep.subr.bf16.mxu0 0
    %8298 = vmatpush1.bf16.msra.mxu0 %v8157
    %8299 = vmatprep.subr.bf16.mxu0 0
    %8300 = vmatpush1.bf16.msra.mxu0 %v8158
    %8301 = vmatprep.subr.bf16.mxu0 0
    %8302 = vmatpush1.bf16.msra.mxu0 %v8159
    %8303 = vmatprep.subr.bf16.mxu0 0
    %8304 = vmatpush1.bf16.msra.mxu0 %v8160
    %8305 = vmatprep.mubr.bf16.mxu0 %v7747
    %8306 = vmatmul.mubr.bf16.gmra.mrb[0].mxu0 %v7746
    %v8307 = vpop.f32.mrb[0].mxu0
    %v8308 = vadd.f32 %v7887, %v8307
    %v8309 = vpop.f32.mrb[0].mxu0
    %v8310 = vpop.f32.mrb[0].mxu0
    %v8311 = vadd.f32 %v7887, %v8310
    %v8312 = vpop.f32.mrb[0].mxu0
    %8313 = vdwg.mxu0
    %8314 = vmatprep.subr.bf16.mxu0 0
    %8315 = vmatpush1.bf16.msra.mxu0 %v8161
    %8316 = vmatprep.subr.bf16.mxu0 0
    %8317 = vmatpush1.bf16.msra.mxu0 %v8162
    %8318 = vmatprep.subr.bf16.mxu0 0
    %8319 = vmatpush1.bf16.msra.mxu0 %v8163
    %8320 = vmatprep.subr.bf16.mxu0 0
    %8321 = vmatpush1.bf16.msra.mxu0 %v8164
    %8322 = vmatprep.subr.bf16.mxu0 0
    %8323 = vmatpush1.bf16.msra.mxu0 %v8165
    %8324 = vmatprep.subr.bf16.mxu0 0
    %8325 = vmatpush1.bf16.msra.mxu0 %v8166
    %8326 = vmatprep.subr.bf16.mxu0 0
    %8327 = vmatpush1.bf16.msra.mxu0 %v8167
    %8328 = vmatprep.subr.bf16.mxu0 0
    %8329 = vmatpush1.bf16.msra.mxu0 %v8168
    %8330 = vmatprep.subr.bf16.mxu0 0
    %8331 = vmatpush1.bf16.msra.mxu0 %v8169
    %8332 = vmatprep.subr.bf16.mxu0 0
    %8333 = vmatpush1.bf16.msra.mxu0 %v8170
    %8334 = vmatprep.subr.bf16.mxu0 0
    %8335 = vmatpush1.bf16.msra.mxu0 %v8171
    %8336 = vmatprep.subr.bf16.mxu0 0
    %8337 = vmatpush1.bf16.msra.mxu0 %v8172
    %8338 = vmatprep.subr.bf16.mxu0 0
    %8339 = vmatpush1.bf16.msra.mxu0 %v8173
    %8340 = vmatprep.subr.bf16.mxu0 0
    %8341 = vmatpush1.bf16.msra.mxu0 %v8174
    %8342 = vmatprep.subr.bf16.mxu0 0
    %8343 = vmatpush1.bf16.msra.mxu0 %v8175
    %8344 = vmatprep.subr.bf16.mxu0 0
    %8345 = vmatpush1.bf16.msra.mxu0 %v8176
    %8346 = vmatprep.mubr.bf16.mxu0 %v7749
    %8347 = vmatmul.mubr.bf16.gmra.mrb[0].mxu0 %v7748
    %v8348 = vpop.f32.mrb[0].mxu0
    %v8349 = vadd.f32 %v8308, %v8348
    %v8350 = vpop.f32.mrb[0].mxu0
    %v8351 = vpop.f32.mrb[0].mxu0
    %v8352 = vadd.f32 %v8311, %v8351
    %v8353 = vpop.f32.mrb[0].mxu0
    %8354 = vdwg.mxu0
    %8355 = vmatprep.subr.bf16.mxu0 0
    %8356 = vmatpush1.bf16.msra.mxu0 %v8177
    %8357 = vmatprep.subr.bf16.mxu0 0
    %8358 = vmatpush1.bf16.msra.mxu0 %v8178
    %8359 = vmatprep.subr.bf16.mxu0 0
    %8360 = vmatpush1.bf16.msra.mxu0 %v8179
    %8361 = vmatprep.subr.bf16.mxu0 0
    %8362 = vmatpush1.bf16.msra.mxu0 %v8180
    %8363 = vmatprep.subr.bf16.mxu0 0
    %8364 = vmatpush1.bf16.msra.mxu0 %v8181
    %8365 = vmatprep.subr.bf16.mxu0 0
    %8366 = vmatpush1.bf16.msra.mxu0 %v8182
    %8367 = vmatprep.subr.bf16.mxu0 0
    %8368 = vmatpush1.bf16.msra.mxu0 %v8183
    %8369 = vmatprep.subr.bf16.mxu0 0
    %8370 = vmatpush1.bf16.msra.mxu0 %v8184
    %8371 = vmatprep.subr.bf16.mxu0 0
    %8372 = vmatpush1.bf16.msra.mxu0 %v8185
    %8373 = vmatprep.subr.bf16.mxu0 0
    %8374 = vmatpush1.bf16.msra.mxu0 %v8186
    %8375 = vmatprep.subr.bf16.mxu0 0
    %8376 = vmatpush1.bf16.msra.mxu0 %v8187
    %8377 = vmatprep.subr.bf16.mxu0 0
    %8378 = vmatpush1.bf16.msra.mxu0 %v8188
    %8379 = vmatprep.subr.bf16.mxu0 0
    %8380 = vmatpush1.bf16.msra.mxu0 %v8189
    %8381 = vmatprep.subr.bf16.mxu0 0
    %8382 = vmatpush1.bf16.msra.mxu0 %v8190
    %8383 = vmatprep.subr.bf16.mxu0 0
    %8384 = vmatpush1.bf16.msra.mxu0 %v8191
    %8385 = vmatprep.subr.bf16.mxu0 0
    %8386 = vmatpush1.bf16.msra.mxu0 %v8192
    %8387 = vmatprep.mubr.bf16.mxu0 %v7751
    %8388 = vmatmul.mubr.bf16.gmra.mrb[0].mxu0 %v7750
    %v8389 = vpop.f32.mrb[0].mxu0
    %v8390 = vadd.f32 %v8349, %v8389
    %v8391 = vpop.f32.mrb[0].mxu0
    %v8392 = vpop.f32.mrb[0].mxu0
    %v8393 = vadd.f32 %v8352, %v8392
    %v8394 = vpop.f32.mrb[0].mxu0
    %8395 = vdwg.mxu0
    %8396 = vmatprep.subr.bf16.mxu0 0
    %8397 = vmatpush1.bf16.msra.mxu0 %v8193
    %8398 = vmatprep.subr.bf16.mxu0 0
    %8399 = vmatpush1.bf16.msra.mxu0 %v8194
    %8400 = vmatprep.subr.bf16.mxu0 0
    %8401 = vmatpush1.bf16.msra.mxu0 %v8195
    %8402 = vmatprep.subr.bf16.mxu0 0
    %8403 = vmatpush1.bf16.msra.mxu0 %v8196
    %8404 = vmatprep.subr.bf16.mxu0 0
    %8405 = vmatpush1.bf16.msra.mxu0 %v8197
    %8406 = vmatprep.subr.bf16.mxu0 0
    %8407 = vmatpush1.bf16.msra.mxu0 %v8198
    %8408 = vmatprep.subr.bf16.mxu0 0
    %8409 = vmatpush1.bf16.msra.mxu0 %v8199
    %8410 = vmatprep.subr.bf16.mxu0 0
    %8411 = vmatpush1.bf16.msra.mxu0 %v8200
    %8412 = vmatprep.subr.bf16.mxu0 0
    %8413 = vmatpush1.bf16.msra.mxu0 %v8201
    %8414 = vmatprep.subr.bf16.mxu0 0
    %8415 = vmatpush1.bf16.msra.mxu0 %v8202
    %8416 = vmatprep.subr.bf16.mxu0 0
    %8417 = vmatpush1.bf16.msra.mxu0 %v8203
    %8418 = vmatprep.subr.bf16.mxu0 0
    %8419 = vmatpush1.bf16.msra.mxu0 %v8204
    %8420 = vmatprep.subr.bf16.mxu0 0
    %8421 = vmatpush1.bf16.msra.mxu0 %v8205
    %8422 = vmatprep.subr.bf16.mxu0 0
    %8423 = vmatpush1.bf16.msra.mxu0 %v8206
    %8424 = vmatprep.subr.bf16.mxu0 0
    %8425 = vmatpush1.bf16.msra.mxu0 %v8207
    %8426 = vmatprep.subr.bf16.mxu0 0
    %8427 = vmatpush1.bf16.msra.mxu0 %v8208
    %8428 = vmatprep.mubr.bf16.mxu0 %v7753
    %8429 = vmatmul.mubr.bf16.gmra.mrb[0].mxu0 %v7752
    %v8430 = vpop.f32.mrb[0].mxu0
    %v8431 = vadd.f32 %v8390, %v8430
    %v8432 = vpop.f32.mrb[0].mxu0
    %v8433 = vpop.f32.mrb[0].mxu0
    %v8434 = vadd.f32 %v8393, %v8433
    %v8435 = vpop.f32.mrb[0].mxu0
    %8436 = vdwg.mxu0
    %8437 = vst [vmem:[%s5] sm:$0xff] %v8431
    %8438 = vst [vmem:[%s5 + $0x8] sm:$0xff] %v8434
    // Predicated region
    $region38: #{trash_classifier_head.1} parent=1 // pred_check
      _
    $region39: #{trash_classifier_head.1} parent=1 // pred_check_branch
      %8440 = sbr.rel (0) target = $region41
    $region40: #{trash_classifier_head.1} parent=1 // pred_region
      _
    $region41: #{trash_classifier_head.1} parent=1 // pred_fallthru
      _
    // Predicated region
    $region42: #{trash_classifier_head.1} parent=1 // pred_check
      _
    $region43: #{trash_classifier_head.1} parent=1 // pred_check_branch
      %8442 = sbr.rel (0) target = $region45
    $region44: #{trash_classifier_head.1} parent=1 // pred_region
      _
    $region45: #{trash_classifier_head.1} parent=1 // pred_fallthru
      _
    %8443 = vsyncpa [#allocation3], 1
    %8444 = vsyncpa [#allocation5], 1
    %8445 = vsyncpa [#allocation8], 1

</llo_original>
